<compile_context>
chip_gen: v7x
topology: tpu7x:2x2x1
jax: 0.10.0
libtpu: 0.0.40
codegen_flags: <defaults>
</compile_context>

<pallas_src>
import functools

import numpy as np

import jax
import jax.numpy as jnp
from jax.experimental import pallas as pl
from jax.experimental.pallas import tpu as pltpu


# (cin, cout, stride, has_bn) for c1..c8; all convs are 3x3 with padding=1.
_LAYER_CFG = [
    (3, 8, 2, True),
    (8, 8, 1, True),
    (8, 16, 2, True),
    (16, 16, 1, True),
    (16, 32, 2, True),
    (32, 32, 1, True),
    (32, 64, 2, True),
    (64, 64, 2, False),   # c8: no ReLU/BN; dropout + flatten afterwards
]
_EPS = 1e-5


def _conv_out(size, stride):
    return (size + 2 - 3) // stride + 1


def _spatial_dims(h0, w0):
    dims, h, w = [], h0, w0
    for (_, _, s, _) in _LAYER_CFG:
        ho, wo = _conv_out(h, s), _conv_out(w, s)
        dims.append((h, w, ho, wo))
        h, w = ho, wo
    return dims


# ----------------------------------------------------------------------------
# Fused Pallas kernel: all 8 conv layers in one invocation.
# ----------------------------------------------------------------------------
def _cnn64_kernel(*refs, meta, n_batch, dropout_p):
    """meta: per-layer static tuple (cout, ho, wo, wblk, has_bn)."""
    idx = 0
    if dropout_p > 0.0:
        seed_ref = refs[idx]
        idx += 1
    a_ref = refs[idx]
    idx += 1
    o_ref = refs[-1]

    # Activation matrix (UN-padded): (N*Hin, Win*Cin), rows=(n,h), cols=(w,cin).
    a = a_ref[...]                                # bf16, carried in bf16

    for (cout, ho, wo, wblk, has_bn) in meta:
        wcol_ref = refs[idx]        # (Win*Cin, 3*wblk)  bf16, 3 h-taps merged
        g_ref = refs[idx + 1]       # (3, N*Ho, N*Hin)   bf16 0/1 row gather
        b_ref = refs[idx + 2]       # (1, wblk)          f32 bias, pre-expanded
        idx += 3
        if has_bn:
            gb_ref = refs[idx]      # (2, cout)          f32 [gamma; beta]
            r_ref = refs[idx + 1]   # (wblk, cout)       f32 0/1 lanes->channel
            rt_ref = refs[idx + 2]  # (cout, wblk)       f32 0/1 channel->lanes
            idx += 3

        # ---- conv: one merged-tap bf16 MXU matmul --------------------------
        b_all = jnp.dot(a, wcol_ref[...],
                        preferred_element_type=jnp.float32)   # (N*Hin, 3*wblk)
        b_bf = b_all.astype(jnp.bfloat16)

        # ---- h-stride / h-pad gather: three tiny bf16 0/1 matmuls ----------
        y = None
        for dh in range(3):
            y_dh = jnp.dot(g_ref[dh], b_bf[:, dh * wblk:(dh + 1) * wblk],
                           preferred_element_type=jnp.float32)  # (N*Ho, wblk)
            y = y_dh if y is None else y + y_dh

        y = y + b_ref[...]                          # bias (pre-expanded, bcast rows)

        if has_bn:
            y = jnp.maximum(y, 0.0)                 # ReLU (f32, VPU)

            # BatchNorm (training-mode batch stats, biased variance).
            inv_m = 1.0 / float(n_batch * ho * wo)
            s1 = jnp.sum(y, axis=0, keepdims=True)          # (1, wblk)  XLU
            s2 = jnp.sum(y * y, axis=0, keepdims=True)      # (1, wblk)
            stats = jnp.dot(jnp.concatenate([s1, s2], axis=0), r_ref[...],
                            preferred_element_type=jnp.float32)   # (2, cout)
            mean = stats[0:1] * inv_m
            var = stats[1:2] * inv_m - mean * mean
            gb = gb_ref[...]
            scale_c = gb[0:1] * jax.lax.rsqrt(var + _EPS)    # (1, cout)
            shift_c = gb[1:2] - mean * scale_c
            # Broadcast per-channel scale/shift to the folded (w,c) lane axis
            # with one tiny exact 0/1 matmul (replaces wo-way lane concats).
            ssw = jnp.dot(jnp.concatenate([scale_c, shift_c], axis=0), rt_ref[...],
                          preferred_element_type=jnp.float32)     # (2, wblk)
            y = y * ssw[0:1] + ssw[1:2]
            a = y.astype(jnp.bfloat16)              # carry next layer in bf16
        else:
            # Last layer (c8): dropout (in-kernel PRNG), then write the output.
            if dropout_p > 0.0:
                pltpu.prng_seed(seed_ref[0])
                bits = pltpu.bitcast(pltpu.prng_random_bits(y.shape), jnp.uint32)
                thresh = jnp.uint32(min(int((1.0 - dropout_p) * (2 ** 32)),
                                        (2 ** 32) - 1))
                y = jnp.where(bits < thresh, y * (1.0 / (1.0 - dropout_p)), 0.0)
            o_ref[...] = y


# ----------------------------------------------------------------------------
# Wrapper-side constant / weight-matrix construction (all padding folded here).
# ----------------------------------------------------------------------------
def _build_wcol_all(w_hwio, stride, win, wo, cout, wblk):
    """For each h-tap dh, fold (w-taps, Cin)->(Wo, Cout) incl. w-stride AND
    w-padding into one lane-dense matrix (out-of-range w-taps simply dropped).
    The three taps are concatenated along lanes -> (win*cin, 3*wblk) bf16."""
    blocks = []
    for dh in range(3):
        m = None
        for dw in range(3):
            e = np.zeros((win, wo), np.float32)
            for j in range(wo):
                w_in = stride * j + dw - 1
                if 0 <= w_in < win:
                    e[w_in, j] = 1.0
            term = jnp.kron(jnp.asarray(e), w_hwio[dh, dw])   # (win*cin, wo*cout)
            m = term if m is None else m + term
        if wblk > wo * cout:
            m = jnp.pad(m, ((0, 0), (0, wblk - wo * cout)))
        blocks.append(m)
    return jnp.concatenate(blocks, axis=1).astype(jnp.bfloat16)


def _row_gather(n, hin, ho, stride):
    """G[dh, n*Ho+i, n*Hin + (stride*i + dh - 1)] = 1 for in-range taps;
    out-of-range taps (h-padding) become all-zero rows.  0/1 exact in bf16."""
    g = np.zeros((3, n * ho, n * hin), np.float32)
    for dh in range(3):
        for nb in range(n):
            for i in range(ho):
                h_in = stride * i + dh - 1
                if 0 <= h_in < hin:
                    g[dh, nb * ho + i, nb * hin + h_in] = 1.0
    return jnp.asarray(g).astype(jnp.bfloat16)


def _chan_reduce(cout, wo, wblk):
    """R[(j, c), c'] = (c == c'): reduces the folded (w, c) lane axis to channels."""
    r = np.zeros((wblk, cout), np.float32)
    r[:wo * cout, :] = np.tile(np.eye(cout, dtype=np.float32), (wo, 1))
    return jnp.asarray(r)


def _chan_bcast(cout, wo, wblk):
    """RT[c', (j, c)] = (c == c'): broadcasts per-channel values to folded lanes."""
    rt = np.zeros((cout, wblk), np.float32)
    rt[:, :wo * cout] = np.tile(np.eye(cout, dtype=np.float32), (1, wo))
    return jnp.asarray(rt)


def init_params(key):
    params = []
    for (cin, cout, _s, _bn) in _LAYER_CFG:
        key, kw, kb = jax.random.split(key, 3)
        bound = 1.0 / np.sqrt(9 * cin)
        w = jax.random.uniform(kw, (3, 3, cin, cout), jnp.float32, -bound, bound)
        b = jax.random.uniform(kb, (1, cout), jnp.float32, -bound, bound)
        gamma = jnp.ones((1, cout), jnp.float32)
        beta = jnp.zeros((1, cout), jnp.float32)
        params.append((w, b, gamma, beta))
    return params


# ----------------------------------------------------------------------------
# Full forward.
# ----------------------------------------------------------------------------
def cnn64_forward(x_nchw, params, dropout_p=0.0, dropout_seed=0):
    x = jnp.transpose(x_nchw, (0, 2, 3, 1)).astype(jnp.float32)   # NCHW -> NHWC
    n, h0, w0, c0 = x.shape
    dims = _spatial_dims(h0, w0)

    # Layer-1 input: NO spatial pre-padding (padding is folded into Wcol / G);
    # fold (w, cin) into the lane axis and carry activations in bf16.
    a0 = x.reshape(n * h0, w0 * c0).astype(jnp.bfloat16)

    vmem = pl.BlockSpec(memory_space=pltpu.MemorySpace.VMEM)
    smem = pl.BlockSpec(memory_space=pltpu.MemorySpace.SMEM)
    inputs, in_specs, meta = [], [], []

    if dropout_p > 0.0:
        inputs.append(jnp.asarray([dropout_seed], jnp.int32))
        in_specs.append(smem)

    inputs.append(a0)
    in_specs.append(vmem)

    for li, ((cin, cout, stride, has_bn), (hin, win, ho, wo)) in enumerate(
            zip(_LAYER_CFG, dims)):
        w, b, gamma, beta = params[li]
        wblk = -(-(wo * cout) // 128) * 128                 # lane-dense block width
        b_exp = jnp.pad(jnp.tile(b, (1, wo)), ((0, 0), (0, wblk - wo * cout)))
        inputs += [_build_wcol_all(w, stride, win, wo, cout, wblk),
                   _row_gather(n, hin, ho, stride),
                   b_exp]
        in_specs += [vmem] * 3
        if has_bn:
            inputs += [jnp.concatenate([gamma, beta], axis=0),
                       _chan_reduce(cout, wo, wblk),
                       _chan_bcast(cout, wo, wblk)]
            in_specs += [vmem] * 3
        meta.append((cout, ho, wo, wblk, has_bn))

    ho_l, wo_l = dims[-1][2], dims[-1][3]
    cout_l = _LAYER_CFG[-1][1]
    wblk_l = meta[-1][3]

    kernel = functools.partial(_cnn64_kernel, meta=tuple(meta), n_batch=n,
                               dropout_p=float(dropout_p))
    out = pl.pallas_call(
        kernel,
        out_shape=jax.ShapeDtypeStruct((n * ho_l, wblk_l), jnp.float32),
        in_specs=in_specs,
        out_specs=vmem,
    )(*inputs)

    # Drop the lane padding; flatten to (N, -1).  For the spec'd 32x32 input
    # H=W=1 after c8, so this equals PyTorch's NCHW x.view(N, -1).
    out = out[:, :wo_l * cout_l]
    return out.reshape(n, -1)


# ----------------------------------------------------------------------------
if __name__ == "__main__":
    key = jax.random.PRNGKey(0)
    kx, kp = jax.random.split(key)

    # "input is 3x32x32 images" -- small deterministic batch of 2.
    x = jax.random.normal(kx, (2, 3, 32, 32), jnp.float32)
    params = init_params(kp)

    out = jax.block_until_ready(cnn64_forward(x, params, dropout_p=0.0))

    assert out.shape == (2, 64), out.shape
    assert bool(jnp.all(jnp.isfinite(out)))
    print("KERNEL_OK")
</pallas_src>

<mosaic_0001>
module attributes {stable_mosaic.version = 11 : i64} {
  func.func @_cnn64_kernel(%arg0: memref<64x96xbf16, #tpu.memory_space<vmem>>, %arg1: memref<96x384xbf16, #tpu.memory_space<vmem>>, %arg2: memref<3x32x64xbf16, #tpu.memory_space<vmem>>, %arg3: memref<1x128xf32, #tpu.memory_space<vmem>>, %arg4: memref<2x8xf32, #tpu.memory_space<vmem>>, %arg5: memref<128x8xf32, #tpu.memory_space<vmem>>, %arg6: memref<8x128xf32, #tpu.memory_space<vmem>>, %arg7: memref<128x384xbf16, #tpu.memory_space<vmem>>, %arg8: memref<3x32x32xbf16, #tpu.memory_space<vmem>>, %arg9: memref<1x128xf32, #tpu.memory_space<vmem>>, %arg10: memref<2x8xf32, #tpu.memory_space<vmem>>, %arg11: memref<128x8xf32, #tpu.memory_space<vmem>>, %arg12: memref<8x128xf32, #tpu.memory_space<vmem>>, %arg13: memref<128x384xbf16, #tpu.memory_space<vmem>>, %arg14: memref<3x16x32xbf16, #tpu.memory_space<vmem>>, %arg15: memref<1x128xf32, #tpu.memory_space<vmem>>, %arg16: memref<2x16xf32, #tpu.memory_space<vmem>>, %arg17: memref<128x16xf32, #tpu.memory_space<vmem>>, %arg18: memref<16x128xf32, #tpu.memory_space<vmem>>, %arg19: memref<128x384xbf16, #tpu.memory_space<vmem>>, %arg20: memref<3x16x16xbf16, #tpu.memory_space<vmem>>, %arg21: memref<1x128xf32, #tpu.memory_space<vmem>>, %arg22: memref<2x16xf32, #tpu.memory_space<vmem>>, %arg23: memref<128x16xf32, #tpu.memory_space<vmem>>, %arg24: memref<16x128xf32, #tpu.memory_space<vmem>>, %arg25: memref<128x384xbf16, #tpu.memory_space<vmem>>, %arg26: memref<3x8x16xbf16, #tpu.memory_space<vmem>>, %arg27: memref<1x128xf32, #tpu.memory_space<vmem>>, %arg28: memref<2x32xf32, #tpu.memory_space<vmem>>, %arg29: memref<128x32xf32, #tpu.memory_space<vmem>>, %arg30: memref<32x128xf32, #tpu.memory_space<vmem>>, %arg31: memref<128x384xbf16, #tpu.memory_space<vmem>>, %arg32: memref<3x8x8xbf16, #tpu.memory_space<vmem>>, %arg33: memref<1x128xf32, #tpu.memory_space<vmem>>, %arg34: memref<2x32xf32, #tpu.memory_space<vmem>>, %arg35: memref<128x32xf32, #tpu.memory_space<vmem>>, %arg36: memref<32x128xf32, #tpu.memory_space<vmem>>, %arg37: memref<128x384xbf16, #tpu.memory_space<vmem>>, %arg38: memref<3x4x8xbf16, #tpu.memory_space<vmem>>, %arg39: memref<1x128xf32, #tpu.memory_space<vmem>>, %arg40: memref<2x64xf32, #tpu.memory_space<vmem>>, %arg41: memref<128x64xf32, #tpu.memory_space<vmem>>, %arg42: memref<64x128xf32, #tpu.memory_space<vmem>>, %arg43: memref<128x384xbf16, #tpu.memory_space<vmem>>, %arg44: memref<3x2x4xbf16, #tpu.memory_space<vmem>>, %arg45: memref<1x128xf32, #tpu.memory_space<vmem>>, %arg46: memref<2x128xf32, #tpu.memory_space<vmem>>) attributes {dimension_semantics = [], scalar_prefetch = 0 : i64, scratch_operands = 0 : i64, tpu.core_type = #tpu.core_type<tc>} {
    %c0 = arith.constant 0 : index
    %c0_0 = arith.constant 0 : index
    %0 = vector.load %arg0[%c0, %c0_0] : memref<64x96xbf16, #tpu.memory_space<vmem>>, vector<64x96xbf16>
    %c0_1 = arith.constant 0 : index
    %c0_2 = arith.constant 0 : index
    %1 = vector.load %arg1[%c0_1, %c0_2] : memref<96x384xbf16, #tpu.memory_space<vmem>>, vector<96x384xbf16>
    %cst = arith.constant dense<0.000000e+00> : vector<64x384xf32>
    %2 = tpu.matmul %0, %1, %cst {dimension_numbers = #tpu.dot_dimension_numbers<[1], [0], [0], [1], [0, 0, 1, 1], [], []>} : vector<64x96xbf16>, vector<96x384xbf16>, vector<64x384xf32> -> vector<64x384xf32>
    %3 = arith.truncf %2 : vector<64x384xf32> to vector<64x384xbf16>
    %c0_3 = arith.constant 0 : index
    %c0_4 = arith.constant 0 : index
    %c0_5 = arith.constant 0 : index
    %4 = vector.load %arg2[%c0_3, %c0_4, %c0_5] : memref<3x32x64xbf16, #tpu.memory_space<vmem>>, vector<1x32x64xbf16>
    %5 = vector.shape_cast %4 : vector<1x32x64xbf16> to vector<32x64xbf16>
    %6 = vector.extract_strided_slice %3 {offsets = [0, 0], sizes = [64, 128], strides = [1, 1]} : vector<64x384xbf16> to vector<64x128xbf16>
    %cst_6 = arith.constant dense<0.000000e+00> : vector<32x128xf32>
    %7 = tpu.matmul %5, %6, %cst_6 {dimension_numbers = #tpu.dot_dimension_numbers<[1], [0], [0], [1], [0, 0, 1, 1], [], []>} : vector<32x64xbf16>, vector<64x128xbf16>, vector<32x128xf32> -> vector<32x128xf32>
    %c1 = arith.constant 1 : index
    %c0_7 = arith.constant 0 : index
    %c0_8 = arith.constant 0 : index
    %8 = vector.load %arg2[%c1, %c0_7, %c0_8] : memref<3x32x64xbf16, #tpu.memory_space<vmem>>, vector<1x32x64xbf16>
    %9 = vector.shape_cast %8 : vector<1x32x64xbf16> to vector<32x64xbf16>
    %10 = vector.extract_strided_slice %3 {offsets = [0, 128], sizes = [64, 128], strides = [1, 1]} : vector<64x384xbf16> to vector<64x128xbf16>
    %cst_9 = arith.constant dense<0.000000e+00> : vector<32x128xf32>
    %11 = tpu.matmul %9, %10, %cst_9 {dimension_numbers = #tpu.dot_dimension_numbers<[1], [0], [0], [1], [0, 0, 1, 1], [], []>} : vector<32x64xbf16>, vector<64x128xbf16>, vector<32x128xf32> -> vector<32x128xf32>
    %12 = arith.addf %7, %11 : vector<32x128xf32>
    %c2 = arith.constant 2 : index
    %c0_10 = arith.constant 0 : index
    %c0_11 = arith.constant 0 : index
    %13 = vector.load %arg2[%c2, %c0_10, %c0_11] : memref<3x32x64xbf16, #tpu.memory_space<vmem>>, vector<1x32x64xbf16>
    %14 = vector.shape_cast %13 : vector<1x32x64xbf16> to vector<32x64xbf16>
    %15 = vector.extract_strided_slice %3 {offsets = [0, 256], sizes = [64, 128], strides = [1, 1]} : vector<64x384xbf16> to vector<64x128xbf16>
    %cst_12 = arith.constant dense<0.000000e+00> : vector<32x128xf32>
    %16 = tpu.matmul %14, %15, %cst_12 {dimension_numbers = #tpu.dot_dimension_numbers<[1], [0], [0], [1], [0, 0, 1, 1], [], []>} : vector<32x64xbf16>, vector<64x128xbf16>, vector<32x128xf32> -> vector<32x128xf32>
    %17 = arith.addf %12, %16 : vector<32x128xf32>
    %c0_13 = arith.constant 0 : index
    %c0_14 = arith.constant 0 : index
    %18 = vector.load %arg3[%c0_13, %c0_14] : memref<1x128xf32, #tpu.memory_space<vmem>>, vector<1x128xf32>
    %19 = vector.broadcast %18 : vector<1x128xf32> to vector<32x128xf32>
    %20 = arith.addf %17, %19 : vector<32x128xf32>
    %cst_15 = arith.constant 0.000000e+00 : f32
    %21 = vector.broadcast %cst_15 : f32 to vector<32x128xf32>
    %22 = arith.maximumf %20, %21 : vector<32x128xf32>
    %cst_16 = arith.constant dense<0.000000e+00> : vector<128xf32>
    %23 = vector.multi_reduction <add>, %22, %cst_16 [0] : vector<32x128xf32> to vector<128xf32>
    %24 = vector.shape_cast %23 : vector<128xf32> to vector<1x128xf32>
    %25 = arith.mulf %22, %22 : vector<32x128xf32>
    %cst_17 = arith.constant dense<0.000000e+00> : vector<128xf32>
    %26 = vector.multi_reduction <add>, %25, %cst_17 [0] : vector<32x128xf32> to vector<128xf32>
    %27 = vector.shape_cast %26 : vector<128xf32> to vector<1x128xf32>
    %28 = tpu.concatenate %24, %27 in 0 : vector<1x128xf32>, vector<1x128xf32> -> vector<2x128xf32>
    %c0_18 = arith.constant 0 : index
    %c0_19 = arith.constant 0 : index
    %29 = vector.load %arg5[%c0_18, %c0_19] : memref<128x8xf32, #tpu.memory_space<vmem>>, vector<128x8xf32>
    %cst_20 = arith.constant dense<0.000000e+00> : vector<2x8xf32>
    %30 = tpu.matmul %28, %29, %cst_20 {dimension_numbers = #tpu.dot_dimension_numbers<[1], [0], [0], [1], [0, 0, 1, 1], [], []>} : vector<2x128xf32>, vector<128x8xf32>, vector<2x8xf32> -> vector<2x8xf32>
    %31 = vector.extract_strided_slice %30 {offsets = [0, 0], sizes = [1, 8], strides = [1, 1]} : vector<2x8xf32> to vector<1x8xf32>
    %cst_21 = arith.constant 0.001953125 : f32
    %32 = vector.broadcast %cst_21 : f32 to vector<1x8xf32>
    %33 = arith.mulf %31, %32 : vector<1x8xf32>
    %34 = vector.extract_strided_slice %30 {offsets = [1, 0], sizes = [1, 8], strides = [1, 1]} : vector<2x8xf32> to vector<1x8xf32>
    %cst_22 = arith.constant 0.001953125 : f32
    %35 = vector.broadcast %cst_22 : f32 to vector<1x8xf32>
    %36 = arith.mulf %34, %35 : vector<1x8xf32>
    %37 = arith.mulf %33, %33 : vector<1x8xf32>
    %38 = arith.subf %36, %37 : vector<1x8xf32>
    %c0_23 = arith.constant 0 : index
    %c0_24 = arith.constant 0 : index
    %39 = vector.load %arg4[%c0_23, %c0_24] : memref<2x8xf32, #tpu.memory_space<vmem>>, vector<2x8xf32>
    %40 = vector.extract_strided_slice %39 {offsets = [0, 0], sizes = [1, 8], strides = [1, 1]} : vector<2x8xf32> to vector<1x8xf32>
    %cst_25 = arith.constant 9.99999974E-6 : f32
    %41 = vector.broadcast %cst_25 : f32 to vector<1x8xf32>
    %42 = arith.addf %38, %41 : vector<1x8xf32>
    %43 = math.rsqrt %42 : vector<1x8xf32>
    %44 = arith.mulf %40, %43 : vector<1x8xf32>
    %45 = vector.extract_strided_slice %39 {offsets = [1, 0], sizes = [1, 8], strides = [1, 1]} : vector<2x8xf32> to vector<1x8xf32>
    %46 = arith.mulf %33, %44 : vector<1x8xf32>
    %47 = arith.subf %45, %46 : vector<1x8xf32>
    %48 = tpu.concatenate %44, %47 in 0 : vector<1x8xf32>, vector<1x8xf32> -> vector<2x8xf32>
    %c0_26 = arith.constant 0 : index
    %c0_27 = arith.constant 0 : index
    %49 = vector.load %arg6[%c0_26, %c0_27] : memref<8x128xf32, #tpu.memory_space<vmem>>, vector<8x128xf32>
    %cst_28 = arith.constant dense<0.000000e+00> : vector<2x128xf32>
    %50 = tpu.matmul %48, %49, %cst_28 {dimension_numbers = #tpu.dot_dimension_numbers<[1], [0], [0], [1], [0, 0, 1, 1], [], []>} : vector<2x8xf32>, vector<8x128xf32>, vector<2x128xf32> -> vector<2x128xf32>
    %51 = vector.extract_strided_slice %50 {offsets = [0, 0], sizes = [1, 128], strides = [1, 1]} : vector<2x128xf32> to vector<1x128xf32>
    %52 = vector.broadcast %51 : vector<1x128xf32> to vector<32x128xf32>
    %53 = arith.mulf %22, %52 : vector<32x128xf32>
    %54 = vector.extract_strided_slice %50 {offsets = [1, 0], sizes = [1, 128], strides = [1, 1]} : vector<2x128xf32> to vector<1x128xf32>
    %55 = vector.broadcast %54 : vector<1x128xf32> to vector<32x128xf32>
    %56 = arith.addf %53, %55 : vector<32x128xf32>
    %57 = arith.truncf %56 : vector<32x128xf32> to vector<32x128xbf16>
    %c0_29 = arith.constant 0 : index
    %c0_30 = arith.constant 0 : index
    %58 = vector.load %arg7[%c0_29, %c0_30] : memref<128x384xbf16, #tpu.memory_space<vmem>>, vector<128x384xbf16>
    %cst_31 = arith.constant dense<0.000000e+00> : vector<32x384xf32>
    %59 = tpu.matmul %57, %58, %cst_31 {dimension_numbers = #tpu.dot_dimension_numbers<[1], [0], [0], [1], [0, 0, 1, 1], [], []>} : vector<32x128xbf16>, vector<128x384xbf16>, vector<32x384xf32> -> vector<32x384xf32>
    %60 = arith.truncf %59 : vector<32x384xf32> to vector<32x384xbf16>
    %c0_32 = arith.constant 0 : index
    %c0_33 = arith.constant 0 : index
    %c0_34 = arith.constant 0 : index
    %61 = vector.load %arg8[%c0_32, %c0_33, %c0_34] : memref<3x32x32xbf16, #tpu.memory_space<vmem>>, vector<1x32x32xbf16>
    %62 = vector.shape_cast %61 : vector<1x32x32xbf16> to vector<32x32xbf16>
    %63 = vector.extract_strided_slice %60 {offsets = [0, 0], sizes = [32, 128], strides = [1, 1]} : vector<32x384xbf16> to vector<32x128xbf16>
    %cst_35 = arith.constant dense<0.000000e+00> : vector<32x128xf32>
    %64 = tpu.matmul %62, %63, %cst_35 {dimension_numbers = #tpu.dot_dimension_numbers<[1], [0], [0], [1], [0, 0, 1, 1], [], []>} : vector<32x32xbf16>, vector<32x128xbf16>, vector<32x128xf32> -> vector<32x128xf32>
    %c1_36 = arith.constant 1 : index
    %c0_37 = arith.constant 0 : index
    %c0_38 = arith.constant 0 : index
    %65 = vector.load %arg8[%c1_36, %c0_37, %c0_38] : memref<3x32x32xbf16, #tpu.memory_space<vmem>>, vector<1x32x32xbf16>
    %66 = vector.shape_cast %65 : vector<1x32x32xbf16> to vector<32x32xbf16>
    %67 = vector.extract_strided_slice %60 {offsets = [0, 128], sizes = [32, 128], strides = [1, 1]} : vector<32x384xbf16> to vector<32x128xbf16>
    %cst_39 = arith.constant dense<0.000000e+00> : vector<32x128xf32>
    %68 = tpu.matmul %66, %67, %cst_39 {dimension_numbers = #tpu.dot_dimension_numbers<[1], [0], [0], [1], [0, 0, 1, 1], [], []>} : vector<32x32xbf16>, vector<32x128xbf16>, vector<32x128xf32> -> vector<32x128xf32>
    %69 = arith.addf %64, %68 : vector<32x128xf32>
    %c2_40 = arith.constant 2 : index
    %c0_41 = arith.constant 0 : index
    %c0_42 = arith.constant 0 : index
    %70 = vector.load %arg8[%c2_40, %c0_41, %c0_42] : memref<3x32x32xbf16, #tpu.memory_space<vmem>>, vector<1x32x32xbf16>
    %71 = vector.shape_cast %70 : vector<1x32x32xbf16> to vector<32x32xbf16>
    %72 = vector.extract_strided_slice %60 {offsets = [0, 256], sizes = [32, 128], strides = [1, 1]} : vector<32x384xbf16> to vector<32x128xbf16>
    %cst_43 = arith.constant dense<0.000000e+00> : vector<32x128xf32>
    %73 = tpu.matmul %71, %72, %cst_43 {dimension_numbers = #tpu.dot_dimension_numbers<[1], [0], [0], [1], [0, 0, 1, 1], [], []>} : vector<32x32xbf16>, vector<32x128xbf16>, vector<32x128xf32> -> vector<32x128xf32>
    %74 = arith.addf %69, %73 : vector<32x128xf32>
    %c0_44 = arith.constant 0 : index
    %c0_45 = arith.constant 0 : index
    %75 = vector.load %arg9[%c0_44, %c0_45] : memref<1x128xf32, #tpu.memory_space<vmem>>, vector<1x128xf32>
    %76 = vector.broadcast %75 : vector<1x128xf32> to vector<32x128xf32>
    %77 = arith.addf %74, %76 : vector<32x128xf32>
    %cst_46 = arith.constant 0.000000e+00 : f32
    %78 = vector.broadcast %cst_46 : f32 to vector<32x128xf32>
    %79 = arith.maximumf %77, %78 : vector<32x128xf32>
    %cst_47 = arith.constant dense<0.000000e+00> : vector<128xf32>
    %80 = vector.multi_reduction <add>, %79, %cst_47 [0] : vector<32x128xf32> to vector<128xf32>
    %81 = vector.shape_cast %80 : vector<128xf32> to vector<1x128xf32>
    %82 = arith.mulf %79, %79 : vector<32x128xf32>
    %cst_48 = arith.constant dense<0.000000e+00> : vector<128xf32>
    %83 = vector.multi_reduction <add>, %82, %cst_48 [0] : vector<32x128xf32> to vector<128xf32>
    %84 = vector.shape_cast %83 : vector<128xf32> to vector<1x128xf32>
    %85 = tpu.concatenate %81, %84 in 0 : vector<1x128xf32>, vector<1x128xf32> -> vector<2x128xf32>
    %c0_49 = arith.constant 0 : index
    %c0_50 = arith.constant 0 : index
    %86 = vector.load %arg11[%c0_49, %c0_50] : memref<128x8xf32, #tpu.memory_space<vmem>>, vector<128x8xf32>
    %cst_51 = arith.constant dense<0.000000e+00> : vector<2x8xf32>
    %87 = tpu.matmul %85, %86, %cst_51 {dimension_numbers = #tpu.dot_dimension_numbers<[1], [0], [0], [1], [0, 0, 1, 1], [], []>} : vector<2x128xf32>, vector<128x8xf32>, vector<2x8xf32> -> vector<2x8xf32>
    %88 = vector.extract_strided_slice %87 {offsets = [0, 0], sizes = [1, 8], strides = [1, 1]} : vector<2x8xf32> to vector<1x8xf32>
    %cst_52 = arith.constant 0.001953125 : f32
    %89 = vector.broadcast %cst_52 : f32 to vector<1x8xf32>
    %90 = arith.mulf %88, %89 : vector<1x8xf32>
    %91 = vector.extract_strided_slice %87 {offsets = [1, 0], sizes = [1, 8], strides = [1, 1]} : vector<2x8xf32> to vector<1x8xf32>
    %cst_53 = arith.constant 0.001953125 : f32
    %92 = vector.broadcast %cst_53 : f32 to vector<1x8xf32>
    %93 = arith.mulf %91, %92 : vector<1x8xf32>
    %94 = arith.mulf %90, %90 : vector<1x8xf32>
    %95 = arith.subf %93, %94 : vector<1x8xf32>
    %c0_54 = arith.constant 0 : index
    %c0_55 = arith.constant 0 : index
    %96 = vector.load %arg10[%c0_54, %c0_55] : memref<2x8xf32, #tpu.memory_space<vmem>>, vector<2x8xf32>
    %97 = vector.extract_strided_slice %96 {offsets = [0, 0], sizes = [1, 8], strides = [1, 1]} : vector<2x8xf32> to vector<1x8xf32>
    %cst_56 = arith.constant 9.99999974E-6 : f32
    %98 = vector.broadcast %cst_56 : f32 to vector<1x8xf32>
    %99 = arith.addf %95, %98 : vector<1x8xf32>
    %100 = math.rsqrt %99 : vector<1x8xf32>
    %101 = arith.mulf %97, %100 : vector<1x8xf32>
    %102 = vector.extract_strided_slice %96 {offsets = [1, 0], sizes = [1, 8], strides = [1, 1]} : vector<2x8xf32> to vector<1x8xf32>
    %103 = arith.mulf %90, %101 : vector<1x8xf32>
    %104 = arith.subf %102, %103 : vector<1x8xf32>
    %105 = tpu.concatenate %101, %104 in 0 : vector<1x8xf32>, vector<1x8xf32> -> vector<2x8xf32>
    %c0_57 = arith.constant 0 : index
    %c0_58 = arith.constant 0 : index
    %106 = vector.load %arg12[%c0_57, %c0_58] : memref<8x128xf32, #tpu.memory_space<vmem>>, vector<8x128xf32>
    %cst_59 = arith.constant dense<0.000000e+00> : vector<2x128xf32>
    %107 = tpu.matmul %105, %106, %cst_59 {dimension_numbers = #tpu.dot_dimension_numbers<[1], [0], [0], [1], [0, 0, 1, 1], [], []>} : vector<2x8xf32>, vector<8x128xf32>, vector<2x128xf32> -> vector<2x128xf32>
    %108 = vector.extract_strided_slice %107 {offsets = [0, 0], sizes = [1, 128], strides = [1, 1]} : vector<2x128xf32> to vector<1x128xf32>
    %109 = vector.broadcast %108 : vector<1x128xf32> to vector<32x128xf32>
    %110 = arith.mulf %79, %109 : vector<32x128xf32>
    %111 = vector.extract_strided_slice %107 {offsets = [1, 0], sizes = [1, 128], strides = [1, 1]} : vector<2x128xf32> to vector<1x128xf32>
    %112 = vector.broadcast %111 : vector<1x128xf32> to vector<32x128xf32>
    %113 = arith.addf %110, %112 : vector<32x128xf32>
    %114 = arith.truncf %113 : vector<32x128xf32> to vector<32x128xbf16>
    %c0_60 = arith.constant 0 : index
    %c0_61 = arith.constant 0 : index
    %115 = vector.load %arg13[%c0_60, %c0_61] : memref<128x384xbf16, #tpu.memory_space<vmem>>, vector<128x384xbf16>
    %cst_62 = arith.constant dense<0.000000e+00> : vector<32x384xf32>
    %116 = tpu.matmul %114, %115, %cst_62 {dimension_numbers = #tpu.dot_dimension_numbers<[1], [0], [0], [1], [0, 0, 1, 1], [], []>} : vector<32x128xbf16>, vector<128x384xbf16>, vector<32x384xf32> -> vector<32x384xf32>
    %117 = arith.truncf %116 : vector<32x384xf32> to vector<32x384xbf16>
    %c0_63 = arith.constant 0 : index
    %c0_64 = arith.constant 0 : index
    %c0_65 = arith.constant 0 : index
    %118 = vector.load %arg14[%c0_63, %c0_64, %c0_65] : memref<3x16x32xbf16, #tpu.memory_space<vmem>>, vector<1x16x32xbf16>
    %119 = vector.shape_cast %118 : vector<1x16x32xbf16> to vector<16x32xbf16>
    %120 = vector.extract_strided_slice %117 {offsets = [0, 0], sizes = [32, 128], strides = [1, 1]} : vector<32x384xbf16> to vector<32x128xbf16>
    %cst_66 = arith.constant dense<0.000000e+00> : vector<16x128xf32>
    %121 = tpu.matmul %119, %120, %cst_66 {dimension_numbers = #tpu.dot_dimension_numbers<[1], [0], [0], [1], [0, 0, 1, 1], [], []>} : vector<16x32xbf16>, vector<32x128xbf16>, vector<16x128xf32> -> vector<16x128xf32>
    %c1_67 = arith.constant 1 : index
    %c0_68 = arith.constant 0 : index
    %c0_69 = arith.constant 0 : index
    %122 = vector.load %arg14[%c1_67, %c0_68, %c0_69] : memref<3x16x32xbf16, #tpu.memory_space<vmem>>, vector<1x16x32xbf16>
    %123 = vector.shape_cast %122 : vector<1x16x32xbf16> to vector<16x32xbf16>
    %124 = vector.extract_strided_slice %117 {offsets = [0, 128], sizes = [32, 128], strides = [1, 1]} : vector<32x384xbf16> to vector<32x128xbf16>
    %cst_70 = arith.constant dense<0.000000e+00> : vector<16x128xf32>
    %125 = tpu.matmul %123, %124, %cst_70 {dimension_numbers = #tpu.dot_dimension_numbers<[1], [0], [0], [1], [0, 0, 1, 1], [], []>} : vector<16x32xbf16>, vector<32x128xbf16>, vector<16x128xf32> -> vector<16x128xf32>
    %126 = arith.addf %121, %125 : vector<16x128xf32>
    %c2_71 = arith.constant 2 : index
    %c0_72 = arith.constant 0 : index
    %c0_73 = arith.constant 0 : index
    %127 = vector.load %arg14[%c2_71, %c0_72, %c0_73] : memref<3x16x32xbf16, #tpu.memory_space<vmem>>, vector<1x16x32xbf16>
    %128 = vector.shape_cast %127 : vector<1x16x32xbf16> to vector<16x32xbf16>
    %129 = vector.extract_strided_slice %117 {offsets = [0, 256], sizes = [32, 128], strides = [1, 1]} : vector<32x384xbf16> to vector<32x128xbf16>
    %cst_74 = arith.constant dense<0.000000e+00> : vector<16x128xf32>
    %130 = tpu.matmul %128, %129, %cst_74 {dimension_numbers = #tpu.dot_dimension_numbers<[1], [0], [0], [1], [0, 0, 1, 1], [], []>} : vector<16x32xbf16>, vector<32x128xbf16>, vector<16x128xf32> -> vector<16x128xf32>
    %131 = arith.addf %126, %130 : vector<16x128xf32>
    %c0_75 = arith.constant 0 : index
    %c0_76 = arith.constant 0 : index
    %132 = vector.load %arg15[%c0_75, %c0_76] : memref<1x128xf32, #tpu.memory_space<vmem>>, vector<1x128xf32>
    %133 = vector.broadcast %132 : vector<1x128xf32> to vector<16x128xf32>
    %134 = arith.addf %131, %133 : vector<16x128xf32>
    %cst_77 = arith.constant 0.000000e+00 : f32
    %135 = vector.broadcast %cst_77 : f32 to vector<16x128xf32>
    %136 = arith.maximumf %134, %135 : vector<16x128xf32>
    %cst_78 = arith.constant dense<0.000000e+00> : vector<128xf32>
    %137 = vector.multi_reduction <add>, %136, %cst_78 [0] : vector<16x128xf32> to vector<128xf32>
    %138 = vector.shape_cast %137 : vector<128xf32> to vector<1x128xf32>
    %139 = arith.mulf %136, %136 : vector<16x128xf32>
    %cst_79 = arith.constant dense<0.000000e+00> : vector<128xf32>
    %140 = vector.multi_reduction <add>, %139, %cst_79 [0] : vector<16x128xf32> to vector<128xf32>
    %141 = vector.shape_cast %140 : vector<128xf32> to vector<1x128xf32>
    %142 = tpu.concatenate %138, %141 in 0 : vector<1x128xf32>, vector<1x128xf32> -> vector<2x128xf32>
    %c0_80 = arith.constant 0 : index
    %c0_81 = arith.constant 0 : index
    %143 = vector.load %arg17[%c0_80, %c0_81] : memref<128x16xf32, #tpu.memory_space<vmem>>, vector<128x16xf32>
    %cst_82 = arith.constant dense<0.000000e+00> : vector<2x16xf32>
    %144 = tpu.matmul %142, %143, %cst_82 {dimension_numbers = #tpu.dot_dimension_numbers<[1], [0], [0], [1], [0, 0, 1, 1], [], []>} : vector<2x128xf32>, vector<128x16xf32>, vector<2x16xf32> -> vector<2x16xf32>
    %145 = vector.extract_strided_slice %144 {offsets = [0, 0], sizes = [1, 16], strides = [1, 1]} : vector<2x16xf32> to vector<1x16xf32>
    %cst_83 = arith.constant 7.812500e-03 : f32
    %146 = vector.broadcast %cst_83 : f32 to vector<1x16xf32>
    %147 = arith.mulf %145, %146 : vector<1x16xf32>
    %148 = vector.extract_strided_slice %144 {offsets = [1, 0], sizes = [1, 16], strides = [1, 1]} : vector<2x16xf32> to vector<1x16xf32>
    %cst_84 = arith.constant 7.812500e-03 : f32
    %149 = vector.broadcast %cst_84 : f32 to vector<1x16xf32>
    %150 = arith.mulf %148, %149 : vector<1x16xf32>
    %151 = arith.mulf %147, %147 : vector<1x16xf32>
    %152 = arith.subf %150, %151 : vector<1x16xf32>
    %c0_85 = arith.constant 0 : index
    %c0_86 = arith.constant 0 : index
    %153 = vector.load %arg16[%c0_85, %c0_86] : memref<2x16xf32, #tpu.memory_space<vmem>>, vector<2x16xf32>
    %154 = vector.extract_strided_slice %153 {offsets = [0, 0], sizes = [1, 16], strides = [1, 1]} : vector<2x16xf32> to vector<1x16xf32>
    %cst_87 = arith.constant 9.99999974E-6 : f32
    %155 = vector.broadcast %cst_87 : f32 to vector<1x16xf32>
    %156 = arith.addf %152, %155 : vector<1x16xf32>
    %157 = math.rsqrt %156 : vector<1x16xf32>
    %158 = arith.mulf %154, %157 : vector<1x16xf32>
    %159 = vector.extract_strided_slice %153 {offsets = [1, 0], sizes = [1, 16], strides = [1, 1]} : vector<2x16xf32> to vector<1x16xf32>
    %160 = arith.mulf %147, %158 : vector<1x16xf32>
    %161 = arith.subf %159, %160 : vector<1x16xf32>
    %162 = tpu.concatenate %158, %161 in 0 : vector<1x16xf32>, vector<1x16xf32> -> vector<2x16xf32>
    %c0_88 = arith.constant 0 : index
    %c0_89 = arith.constant 0 : index
    %163 = vector.load %arg18[%c0_88, %c0_89] : memref<16x128xf32, #tpu.memory_space<vmem>>, vector<16x128xf32>
    %cst_90 = arith.constant dense<0.000000e+00> : vector<2x128xf32>
    %164 = tpu.matmul %162, %163, %cst_90 {dimension_numbers = #tpu.dot_dimension_numbers<[1], [0], [0], [1], [0, 0, 1, 1], [], []>} : vector<2x16xf32>, vector<16x128xf32>, vector<2x128xf32> -> vector<2x128xf32>
    %165 = vector.extract_strided_slice %164 {offsets = [0, 0], sizes = [1, 128], strides = [1, 1]} : vector<2x128xf32> to vector<1x128xf32>
    %166 = vector.broadcast %165 : vector<1x128xf32> to vector<16x128xf32>
    %167 = arith.mulf %136, %166 : vector<16x128xf32>
    %168 = vector.extract_strided_slice %164 {offsets = [1, 0], sizes = [1, 128], strides = [1, 1]} : vector<2x128xf32> to vector<1x128xf32>
    %169 = vector.broadcast %168 : vector<1x128xf32> to vector<16x128xf32>
    %170 = arith.addf %167, %169 : vector<16x128xf32>
    %171 = arith.truncf %170 : vector<16x128xf32> to vector<16x128xbf16>
    %c0_91 = arith.constant 0 : index
    %c0_92 = arith.constant 0 : index
    %172 = vector.load %arg19[%c0_91, %c0_92] : memref<128x384xbf16, #tpu.memory_space<vmem>>, vector<128x384xbf16>
    %cst_93 = arith.constant dense<0.000000e+00> : vector<16x384xf32>
    %173 = tpu.matmul %171, %172, %cst_93 {dimension_numbers = #tpu.dot_dimension_numbers<[1], [0], [0], [1], [0, 0, 1, 1], [], []>} : vector<16x128xbf16>, vector<128x384xbf16>, vector<16x384xf32> -> vector<16x384xf32>
    %174 = arith.truncf %173 : vector<16x384xf32> to vector<16x384xbf16>
    %c0_94 = arith.constant 0 : index
    %c0_95 = arith.constant 0 : index
    %c0_96 = arith.constant 0 : index
    %175 = vector.load %arg20[%c0_94, %c0_95, %c0_96] : memref<3x16x16xbf16, #tpu.memory_space<vmem>>, vector<1x16x16xbf16>
    %176 = vector.shape_cast %175 : vector<1x16x16xbf16> to vector<16x16xbf16>
    %177 = vector.extract_strided_slice %174 {offsets = [0, 0], sizes = [16, 128], strides = [1, 1]} : vector<16x384xbf16> to vector<16x128xbf16>
    %cst_97 = arith.constant dense<0.000000e+00> : vector<16x128xf32>
    %178 = tpu.matmul %176, %177, %cst_97 {dimension_numbers = #tpu.dot_dimension_numbers<[1], [0], [0], [1], [0, 0, 1, 1], [], []>} : vector<16x16xbf16>, vector<16x128xbf16>, vector<16x128xf32> -> vector<16x128xf32>
    %c1_98 = arith.constant 1 : index
    %c0_99 = arith.constant 0 : index
    %c0_100 = arith.constant 0 : index
    %179 = vector.load %arg20[%c1_98, %c0_99, %c0_100] : memref<3x16x16xbf16, #tpu.memory_space<vmem>>, vector<1x16x16xbf16>
    %180 = vector.shape_cast %179 : vector<1x16x16xbf16> to vector<16x16xbf16>
    %181 = vector.extract_strided_slice %174 {offsets = [0, 128], sizes = [16, 128], strides = [1, 1]} : vector<16x384xbf16> to vector<16x128xbf16>
    %cst_101 = arith.constant dense<0.000000e+00> : vector<16x128xf32>
    %182 = tpu.matmul %180, %181, %cst_101 {dimension_numbers = #tpu.dot_dimension_numbers<[1], [0], [0], [1], [0, 0, 1, 1], [], []>} : vector<16x16xbf16>, vector<16x128xbf16>, vector<16x128xf32> -> vector<16x128xf32>
    %183 = arith.addf %178, %182 : vector<16x128xf32>
    %c2_102 = arith.constant 2 : index
    %c0_103 = arith.constant 0 : index
    %c0_104 = arith.constant 0 : index
    %184 = vector.load %arg20[%c2_102, %c0_103, %c0_104] : memref<3x16x16xbf16, #tpu.memory_space<vmem>>, vector<1x16x16xbf16>
    %185 = vector.shape_cast %184 : vector<1x16x16xbf16> to vector<16x16xbf16>
    %186 = vector.extract_strided_slice %174 {offsets = [0, 256], sizes = [16, 128], strides = [1, 1]} : vector<16x384xbf16> to vector<16x128xbf16>
    %cst_105 = arith.constant dense<0.000000e+00> : vector<16x128xf32>
    %187 = tpu.matmul %185, %186, %cst_105 {dimension_numbers = #tpu.dot_dimension_numbers<[1], [0], [0], [1], [0, 0, 1, 1], [], []>} : vector<16x16xbf16>, vector<16x128xbf16>, vector<16x128xf32> -> vector<16x128xf32>
    %188 = arith.addf %183, %187 : vector<16x128xf32>
    %c0_106 = arith.constant 0 : index
    %c0_107 = arith.constant 0 : index
    %189 = vector.load %arg21[%c0_106, %c0_107] : memref<1x128xf32, #tpu.memory_space<vmem>>, vector<1x128xf32>
    %190 = vector.broadcast %189 : vector<1x128xf32> to vector<16x128xf32>
    %191 = arith.addf %188, %190 : vector<16x128xf32>
    %cst_108 = arith.constant 0.000000e+00 : f32
    %192 = vector.broadcast %cst_108 : f32 to vector<16x128xf32>
    %193 = arith.maximumf %191, %192 : vector<16x128xf32>
    %cst_109 = arith.constant dense<0.000000e+00> : vector<128xf32>
    %194 = vector.multi_reduction <add>, %193, %cst_109 [0] : vector<16x128xf32> to vector<128xf32>
    %195 = vector.shape_cast %194 : vector<128xf32> to vector<1x128xf32>
    %196 = arith.mulf %193, %193 : vector<16x128xf32>
    %cst_110 = arith.constant dense<0.000000e+00> : vector<128xf32>
    %197 = vector.multi_reduction <add>, %196, %cst_110 [0] : vector<16x128xf32> to vector<128xf32>
    %198 = vector.shape_cast %197 : vector<128xf32> to vector<1x128xf32>
    %199 = tpu.concatenate %195, %198 in 0 : vector<1x128xf32>, vector<1x128xf32> -> vector<2x128xf32>
    %c0_111 = arith.constant 0 : index
    %c0_112 = arith.constant 0 : index
    %200 = vector.load %arg23[%c0_111, %c0_112] : memref<128x16xf32, #tpu.memory_space<vmem>>, vector<128x16xf32>
    %cst_113 = arith.constant dense<0.000000e+00> : vector<2x16xf32>
    %201 = tpu.matmul %199, %200, %cst_113 {dimension_numbers = #tpu.dot_dimension_numbers<[1], [0], [0], [1], [0, 0, 1, 1], [], []>} : vector<2x128xf32>, vector<128x16xf32>, vector<2x16xf32> -> vector<2x16xf32>
    %202 = vector.extract_strided_slice %201 {offsets = [0, 0], sizes = [1, 16], strides = [1, 1]} : vector<2x16xf32> to vector<1x16xf32>
    %cst_114 = arith.constant 7.812500e-03 : f32
    %203 = vector.broadcast %cst_114 : f32 to vector<1x16xf32>
    %204 = arith.mulf %202, %203 : vector<1x16xf32>
    %205 = vector.extract_strided_slice %201 {offsets = [1, 0], sizes = [1, 16], strides = [1, 1]} : vector<2x16xf32> to vector<1x16xf32>
    %cst_115 = arith.constant 7.812500e-03 : f32
    %206 = vector.broadcast %cst_115 : f32 to vector<1x16xf32>
    %207 = arith.mulf %205, %206 : vector<1x16xf32>
    %208 = arith.mulf %204, %204 : vector<1x16xf32>
    %209 = arith.subf %207, %208 : vector<1x16xf32>
    %c0_116 = arith.constant 0 : index
    %c0_117 = arith.constant 0 : index
    %210 = vector.load %arg22[%c0_116, %c0_117] : memref<2x16xf32, #tpu.memory_space<vmem>>, vector<2x16xf32>
    %211 = vector.extract_strided_slice %210 {offsets = [0, 0], sizes = [1, 16], strides = [1, 1]} : vector<2x16xf32> to vector<1x16xf32>
    %cst_118 = arith.constant 9.99999974E-6 : f32
    %212 = vector.broadcast %cst_118 : f32 to vector<1x16xf32>
    %213 = arith.addf %209, %212 : vector<1x16xf32>
    %214 = math.rsqrt %213 : vector<1x16xf32>
    %215 = arith.mulf %211, %214 : vector<1x16xf32>
    %216 = vector.extract_strided_slice %210 {offsets = [1, 0], sizes = [1, 16], strides = [1, 1]} : vector<2x16xf32> to vector<1x16xf32>
    %217 = arith.mulf %204, %215 : vector<1x16xf32>
    %218 = arith.subf %216, %217 : vector<1x16xf32>
    %219 = tpu.concatenate %215, %218 in 0 : vector<1x16xf32>, vector<1x16xf32> -> vector<2x16xf32>
    %c0_119 = arith.constant 0 : index
    %c0_120 = arith.constant 0 : index
    %220 = vector.load %arg24[%c0_119, %c0_120] : memref<16x128xf32, #tpu.memory_space<vmem>>, vector<16x128xf32>
    %cst_121 = arith.constant dense<0.000000e+00> : vector<2x128xf32>
    %221 = tpu.matmul %219, %220, %cst_121 {dimension_numbers = #tpu.dot_dimension_numbers<[1], [0], [0], [1], [0, 0, 1, 1], [], []>} : vector<2x16xf32>, vector<16x128xf32>, vector<2x128xf32> -> vector<2x128xf32>
    %222 = vector.extract_strided_slice %221 {offsets = [0, 0], sizes = [1, 128], strides = [1, 1]} : vector<2x128xf32> to vector<1x128xf32>
    %223 = vector.broadcast %222 : vector<1x128xf32> to vector<16x128xf32>
    %224 = arith.mulf %193, %223 : vector<16x128xf32>
    %225 = vector.extract_strided_slice %221 {offsets = [1, 0], sizes = [1, 128], strides = [1, 1]} : vector<2x128xf32> to vector<1x128xf32>
    %226 = vector.broadcast %225 : vector<1x128xf32> to vector<16x128xf32>
    %227 = arith.addf %224, %226 : vector<16x128xf32>
    %228 = arith.truncf %227 : vector<16x128xf32> to vector<16x128xbf16>
    %c0_122 = arith.constant 0 : index
    %c0_123 = arith.constant 0 : index
    %229 = vector.load %arg25[%c0_122, %c0_123] : memref<128x384xbf16, #tpu.memory_space<vmem>>, vector<128x384xbf16>
    %cst_124 = arith.constant dense<0.000000e+00> : vector<16x384xf32>
    %230 = tpu.matmul %228, %229, %cst_124 {dimension_numbers = #tpu.dot_dimension_numbers<[1], [0], [0], [1], [0, 0, 1, 1], [], []>} : vector<16x128xbf16>, vector<128x384xbf16>, vector<16x384xf32> -> vector<16x384xf32>
    %231 = arith.truncf %230 : vector<16x384xf32> to vector<16x384xbf16>
    %c0_125 = arith.constant 0 : index
    %c0_126 = arith.constant 0 : index
    %c0_127 = arith.constant 0 : index
    %232 = vector.load %arg26[%c0_125, %c0_126, %c0_127] : memref<3x8x16xbf16, #tpu.memory_space<vmem>>, vector<1x8x16xbf16>
    %233 = vector.shape_cast %232 : vector<1x8x16xbf16> to vector<8x16xbf16>
    %234 = vector.extract_strided_slice %231 {offsets = [0, 0], sizes = [16, 128], strides = [1, 1]} : vector<16x384xbf16> to vector<16x128xbf16>
    %cst_128 = arith.constant dense<0.000000e+00> : vector<8x128xf32>
    %235 = tpu.matmul %233, %234, %cst_128 {dimension_numbers = #tpu.dot_dimension_numbers<[1], [0], [0], [1], [0, 0, 1, 1], [], []>} : vector<8x16xbf16>, vector<16x128xbf16>, vector<8x128xf32> -> vector<8x128xf32>
    %c1_129 = arith.constant 1 : index
    %c0_130 = arith.constant 0 : index
    %c0_131 = arith.constant 0 : index
    %236 = vector.load %arg26[%c1_129, %c0_130, %c0_131] : memref<3x8x16xbf16, #tpu.memory_space<vmem>>, vector<1x8x16xbf16>
    %237 = vector.shape_cast %236 : vector<1x8x16xbf16> to vector<8x16xbf16>
    %238 = vector.extract_strided_slice %231 {offsets = [0, 128], sizes = [16, 128], strides = [1, 1]} : vector<16x384xbf16> to vector<16x128xbf16>
    %cst_132 = arith.constant dense<0.000000e+00> : vector<8x128xf32>
    %239 = tpu.matmul %237, %238, %cst_132 {dimension_numbers = #tpu.dot_dimension_numbers<[1], [0], [0], [1], [0, 0, 1, 1], [], []>} : vector<8x16xbf16>, vector<16x128xbf16>, vector<8x128xf32> -> vector<8x128xf32>
    %240 = arith.addf %235, %239 : vector<8x128xf32>
    %c2_133 = arith.constant 2 : index
    %c0_134 = arith.constant 0 : index
    %c0_135 = arith.constant 0 : index
    %241 = vector.load %arg26[%c2_133, %c0_134, %c0_135] : memref<3x8x16xbf16, #tpu.memory_space<vmem>>, vector<1x8x16xbf16>
    %242 = vector.shape_cast %241 : vector<1x8x16xbf16> to vector<8x16xbf16>
    %243 = vector.extract_strided_slice %231 {offsets = [0, 256], sizes = [16, 128], strides = [1, 1]} : vector<16x384xbf16> to vector<16x128xbf16>
    %cst_136 = arith.constant dense<0.000000e+00> : vector<8x128xf32>
    %244 = tpu.matmul %242, %243, %cst_136 {dimension_numbers = #tpu.dot_dimension_numbers<[1], [0], [0], [1], [0, 0, 1, 1], [], []>} : vector<8x16xbf16>, vector<16x128xbf16>, vector<8x128xf32> -> vector<8x128xf32>
    %245 = arith.addf %240, %244 : vector<8x128xf32>
    %c0_137 = arith.constant 0 : index
    %c0_138 = arith.constant 0 : index
    %246 = vector.load %arg27[%c0_137, %c0_138] : memref<1x128xf32, #tpu.memory_space<vmem>>, vector<1x128xf32>
    %247 = vector.broadcast %246 : vector<1x128xf32> to vector<8x128xf32>
    %248 = arith.addf %245, %247 : vector<8x128xf32>
    %cst_139 = arith.constant 0.000000e+00 : f32
    %249 = vector.broadcast %cst_139 : f32 to vector<8x128xf32>
    %250 = arith.maximumf %248, %249 : vector<8x128xf32>
    %cst_140 = arith.constant dense<0.000000e+00> : vector<128xf32>
    %251 = vector.multi_reduction <add>, %250, %cst_140 [0] : vector<8x128xf32> to vector<128xf32>
    %252 = vector.shape_cast %251 : vector<128xf32> to vector<1x128xf32>
    %253 = arith.mulf %250, %250 : vector<8x128xf32>
    %cst_141 = arith.constant dense<0.000000e+00> : vector<128xf32>
    %254 = vector.multi_reduction <add>, %253, %cst_141 [0] : vector<8x128xf32> to vector<128xf32>
    %255 = vector.shape_cast %254 : vector<128xf32> to vector<1x128xf32>
    %256 = tpu.concatenate %252, %255 in 0 : vector<1x128xf32>, vector<1x128xf32> -> vector<2x128xf32>
    %c0_142 = arith.constant 0 : index
    %c0_143 = arith.constant 0 : index
    %257 = vector.load %arg29[%c0_142, %c0_143] : memref<128x32xf32, #tpu.memory_space<vmem>>, vector<128x32xf32>
    %cst_144 = arith.constant dense<0.000000e+00> : vector<2x32xf32>
    %258 = tpu.matmul %256, %257, %cst_144 {dimension_numbers = #tpu.dot_dimension_numbers<[1], [0], [0], [1], [0, 0, 1, 1], [], []>} : vector<2x128xf32>, vector<128x32xf32>, vector<2x32xf32> -> vector<2x32xf32>
    %259 = vector.extract_strided_slice %258 {offsets = [0, 0], sizes = [1, 32], strides = [1, 1]} : vector<2x32xf32> to vector<1x32xf32>
    %cst_145 = arith.constant 3.125000e-02 : f32
    %260 = vector.broadcast %cst_145 : f32 to vector<1x32xf32>
    %261 = arith.mulf %259, %260 : vector<1x32xf32>
    %262 = vector.extract_strided_slice %258 {offsets = [1, 0], sizes = [1, 32], strides = [1, 1]} : vector<2x32xf32> to vector<1x32xf32>
    %cst_146 = arith.constant 3.125000e-02 : f32
    %263 = vector.broadcast %cst_146 : f32 to vector<1x32xf32>
    %264 = arith.mulf %262, %263 : vector<1x32xf32>
    %265 = arith.mulf %261, %261 : vector<1x32xf32>
    %266 = arith.subf %264, %265 : vector<1x32xf32>
    %c0_147 = arith.constant 0 : index
    %c0_148 = arith.constant 0 : index
    %267 = vector.load %arg28[%c0_147, %c0_148] : memref<2x32xf32, #tpu.memory_space<vmem>>, vector<2x32xf32>
    %268 = vector.extract_strided_slice %267 {offsets = [0, 0], sizes = [1, 32], strides = [1, 1]} : vector<2x32xf32> to vector<1x32xf32>
    %cst_149 = arith.constant 9.99999974E-6 : f32
    %269 = vector.broadcast %cst_149 : f32 to vector<1x32xf32>
    %270 = arith.addf %266, %269 : vector<1x32xf32>
    %271 = math.rsqrt %270 : vector<1x32xf32>
    %272 = arith.mulf %268, %271 : vector<1x32xf32>
    %273 = vector.extract_strided_slice %267 {offsets = [1, 0], sizes = [1, 32], strides = [1, 1]} : vector<2x32xf32> to vector<1x32xf32>
    %274 = arith.mulf %261, %272 : vector<1x32xf32>
    %275 = arith.subf %273, %274 : vector<1x32xf32>
    %276 = tpu.concatenate %272, %275 in 0 : vector<1x32xf32>, vector<1x32xf32> -> vector<2x32xf32>
    %c0_150 = arith.constant 0 : index
    %c0_151 = arith.constant 0 : index
    %277 = vector.load %arg30[%c0_150, %c0_151] : memref<32x128xf32, #tpu.memory_space<vmem>>, vector<32x128xf32>
    %cst_152 = arith.constant dense<0.000000e+00> : vector<2x128xf32>
    %278 = tpu.matmul %276, %277, %cst_152 {dimension_numbers = #tpu.dot_dimension_numbers<[1], [0], [0], [1], [0, 0, 1, 1], [], []>} : vector<2x32xf32>, vector<32x128xf32>, vector<2x128xf32> -> vector<2x128xf32>
    %279 = vector.extract_strided_slice %278 {offsets = [0, 0], sizes = [1, 128], strides = [1, 1]} : vector<2x128xf32> to vector<1x128xf32>
    %280 = vector.broadcast %279 : vector<1x128xf32> to vector<8x128xf32>
    %281 = arith.mulf %250, %280 : vector<8x128xf32>
    %282 = vector.extract_strided_slice %278 {offsets = [1, 0], sizes = [1, 128], strides = [1, 1]} : vector<2x128xf32> to vector<1x128xf32>
    %283 = vector.broadcast %282 : vector<1x128xf32> to vector<8x128xf32>
    %284 = arith.addf %281, %283 : vector<8x128xf32>
    %285 = arith.truncf %284 : vector<8x128xf32> to vector<8x128xbf16>
    %c0_153 = arith.constant 0 : index
    %c0_154 = arith.constant 0 : index
    %286 = vector.load %arg31[%c0_153, %c0_154] : memref<128x384xbf16, #tpu.memory_space<vmem>>, vector<128x384xbf16>
    %cst_155 = arith.constant dense<0.000000e+00> : vector<8x384xf32>
    %287 = tpu.matmul %285, %286, %cst_155 {dimension_numbers = #tpu.dot_dimension_numbers<[1], [0], [0], [1], [0, 0, 1, 1], [], []>} : vector<8x128xbf16>, vector<128x384xbf16>, vector<8x384xf32> -> vector<8x384xf32>
    %288 = arith.truncf %287 : vector<8x384xf32> to vector<8x384xbf16>
    %c0_156 = arith.constant 0 : index
    %c0_157 = arith.constant 0 : index
    %c0_158 = arith.constant 0 : index
    %289 = vector.load %arg32[%c0_156, %c0_157, %c0_158] : memref<3x8x8xbf16, #tpu.memory_space<vmem>>, vector<1x8x8xbf16>
    %290 = vector.shape_cast %289 : vector<1x8x8xbf16> to vector<8x8xbf16>
    %291 = vector.extract_strided_slice %288 {offsets = [0, 0], sizes = [8, 128], strides = [1, 1]} : vector<8x384xbf16> to vector<8x128xbf16>
    %cst_159 = arith.constant dense<0.000000e+00> : vector<8x128xf32>
    %292 = tpu.matmul %290, %291, %cst_159 {dimension_numbers = #tpu.dot_dimension_numbers<[1], [0], [0], [1], [0, 0, 1, 1], [], []>} : vector<8x8xbf16>, vector<8x128xbf16>, vector<8x128xf32> -> vector<8x128xf32>
    %c1_160 = arith.constant 1 : index
    %c0_161 = arith.constant 0 : index
    %c0_162 = arith.constant 0 : index
    %293 = vector.load %arg32[%c1_160, %c0_161, %c0_162] : memref<3x8x8xbf16, #tpu.memory_space<vmem>>, vector<1x8x8xbf16>
    %294 = vector.shape_cast %293 : vector<1x8x8xbf16> to vector<8x8xbf16>
    %295 = vector.extract_strided_slice %288 {offsets = [0, 128], sizes = [8, 128], strides = [1, 1]} : vector<8x384xbf16> to vector<8x128xbf16>
    %cst_163 = arith.constant dense<0.000000e+00> : vector<8x128xf32>
    %296 = tpu.matmul %294, %295, %cst_163 {dimension_numbers = #tpu.dot_dimension_numbers<[1], [0], [0], [1], [0, 0, 1, 1], [], []>} : vector<8x8xbf16>, vector<8x128xbf16>, vector<8x128xf32> -> vector<8x128xf32>
    %297 = arith.addf %292, %296 : vector<8x128xf32>
    %c2_164 = arith.constant 2 : index
    %c0_165 = arith.constant 0 : index
    %c0_166 = arith.constant 0 : index
    %298 = vector.load %arg32[%c2_164, %c0_165, %c0_166] : memref<3x8x8xbf16, #tpu.memory_space<vmem>>, vector<1x8x8xbf16>
    %299 = vector.shape_cast %298 : vector<1x8x8xbf16> to vector<8x8xbf16>
    %300 = vector.extract_strided_slice %288 {offsets = [0, 256], sizes = [8, 128], strides = [1, 1]} : vector<8x384xbf16> to vector<8x128xbf16>
    %cst_167 = arith.constant dense<0.000000e+00> : vector<8x128xf32>
    %301 = tpu.matmul %299, %300, %cst_167 {dimension_numbers = #tpu.dot_dimension_numbers<[1], [0], [0], [1], [0, 0, 1, 1], [], []>} : vector<8x8xbf16>, vector<8x128xbf16>, vector<8x128xf32> -> vector<8x128xf32>
    %302 = arith.addf %297, %301 : vector<8x128xf32>
    %c0_168 = arith.constant 0 : index
    %c0_169 = arith.constant 0 : index
    %303 = vector.load %arg33[%c0_168, %c0_169] : memref<1x128xf32, #tpu.memory_space<vmem>>, vector<1x128xf32>
    %304 = vector.broadcast %303 : vector<1x128xf32> to vector<8x128xf32>
    %305 = arith.addf %302, %304 : vector<8x128xf32>
    %cst_170 = arith.constant 0.000000e+00 : f32
    %306 = vector.broadcast %cst_170 : f32 to vector<8x128xf32>
    %307 = arith.maximumf %305, %306 : vector<8x128xf32>
    %cst_171 = arith.constant dense<0.000000e+00> : vector<128xf32>
    %308 = vector.multi_reduction <add>, %307, %cst_171 [0] : vector<8x128xf32> to vector<128xf32>
    %309 = vector.shape_cast %308 : vector<128xf32> to vector<1x128xf32>
    %310 = arith.mulf %307, %307 : vector<8x128xf32>
    %cst_172 = arith.constant dense<0.000000e+00> : vector<128xf32>
    %311 = vector.multi_reduction <add>, %310, %cst_172 [0] : vector<8x128xf32> to vector<128xf32>
    %312 = vector.shape_cast %311 : vector<128xf32> to vector<1x128xf32>
    %313 = tpu.concatenate %309, %312 in 0 : vector<1x128xf32>, vector<1x128xf32> -> vector<2x128xf32>
    %c0_173 = arith.constant 0 : index
    %c0_174 = arith.constant 0 : index
    %314 = vector.load %arg35[%c0_173, %c0_174] : memref<128x32xf32, #tpu.memory_space<vmem>>, vector<128x32xf32>
    %cst_175 = arith.constant dense<0.000000e+00> : vector<2x32xf32>
    %315 = tpu.matmul %313, %314, %cst_175 {dimension_numbers = #tpu.dot_dimension_numbers<[1], [0], [0], [1], [0, 0, 1, 1], [], []>} : vector<2x128xf32>, vector<128x32xf32>, vector<2x32xf32> -> vector<2x32xf32>
    %316 = vector.extract_strided_slice %315 {offsets = [0, 0], sizes = [1, 32], strides = [1, 1]} : vector<2x32xf32> to vector<1x32xf32>
    %cst_176 = arith.constant 3.125000e-02 : f32
    %317 = vector.broadcast %cst_176 : f32 to vector<1x32xf32>
    %318 = arith.mulf %316, %317 : vector<1x32xf32>
    %319 = vector.extract_strided_slice %315 {offsets = [1, 0], sizes = [1, 32], strides = [1, 1]} : vector<2x32xf32> to vector<1x32xf32>
    %cst_177 = arith.constant 3.125000e-02 : f32
    %320 = vector.broadcast %cst_177 : f32 to vector<1x32xf32>
    %321 = arith.mulf %319, %320 : vector<1x32xf32>
    %322 = arith.mulf %318, %318 : vector<1x32xf32>
    %323 = arith.subf %321, %322 : vector<1x32xf32>
    %c0_178 = arith.constant 0 : index
    %c0_179 = arith.constant 0 : index
    %324 = vector.load %arg34[%c0_178, %c0_179] : memref<2x32xf32, #tpu.memory_space<vmem>>, vector<2x32xf32>
    %325 = vector.extract_strided_slice %324 {offsets = [0, 0], sizes = [1, 32], strides = [1, 1]} : vector<2x32xf32> to vector<1x32xf32>
    %cst_180 = arith.constant 9.99999974E-6 : f32
    %326 = vector.broadcast %cst_180 : f32 to vector<1x32xf32>
    %327 = arith.addf %323, %326 : vector<1x32xf32>
    %328 = math.rsqrt %327 : vector<1x32xf32>
    %329 = arith.mulf %325, %328 : vector<1x32xf32>
    %330 = vector.extract_strided_slice %324 {offsets = [1, 0], sizes = [1, 32], strides = [1, 1]} : vector<2x32xf32> to vector<1x32xf32>
    %331 = arith.mulf %318, %329 : vector<1x32xf32>
    %332 = arith.subf %330, %331 : vector<1x32xf32>
    %333 = tpu.concatenate %329, %332 in 0 : vector<1x32xf32>, vector<1x32xf32> -> vector<2x32xf32>
    %c0_181 = arith.constant 0 : index
    %c0_182 = arith.constant 0 : index
    %334 = vector.load %arg36[%c0_181, %c0_182] : memref<32x128xf32, #tpu.memory_space<vmem>>, vector<32x128xf32>
    %cst_183 = arith.constant dense<0.000000e+00> : vector<2x128xf32>
    %335 = tpu.matmul %333, %334, %cst_183 {dimension_numbers = #tpu.dot_dimension_numbers<[1], [0], [0], [1], [0, 0, 1, 1], [], []>} : vector<2x32xf32>, vector<32x128xf32>, vector<2x128xf32> -> vector<2x128xf32>
    %336 = vector.extract_strided_slice %335 {offsets = [0, 0], sizes = [1, 128], strides = [1, 1]} : vector<2x128xf32> to vector<1x128xf32>
    %337 = vector.broadcast %336 : vector<1x128xf32> to vector<8x128xf32>
    %338 = arith.mulf %307, %337 : vector<8x128xf32>
    %339 = vector.extract_strided_slice %335 {offsets = [1, 0], sizes = [1, 128], strides = [1, 1]} : vector<2x128xf32> to vector<1x128xf32>
    %340 = vector.broadcast %339 : vector<1x128xf32> to vector<8x128xf32>
    %341 = arith.addf %338, %340 : vector<8x128xf32>
    %342 = arith.truncf %341 : vector<8x128xf32> to vector<8x128xbf16>
    %c0_184 = arith.constant 0 : index
    %c0_185 = arith.constant 0 : index
    %343 = vector.load %arg37[%c0_184, %c0_185] : memref<128x384xbf16, #tpu.memory_space<vmem>>, vector<128x384xbf16>
    %cst_186 = arith.constant dense<0.000000e+00> : vector<8x384xf32>
    %344 = tpu.matmul %342, %343, %cst_186 {dimension_numbers = #tpu.dot_dimension_numbers<[1], [0], [0], [1], [0, 0, 1, 1], [], []>} : vector<8x128xbf16>, vector<128x384xbf16>, vector<8x384xf32> -> vector<8x384xf32>
    %345 = arith.truncf %344 : vector<8x384xf32> to vector<8x384xbf16>
    %c0_187 = arith.constant 0 : index
    %c0_188 = arith.constant 0 : index
    %c0_189 = arith.constant 0 : index
    %346 = vector.load %arg38[%c0_187, %c0_188, %c0_189] : memref<3x4x8xbf16, #tpu.memory_space<vmem>>, vector<1x4x8xbf16>
    %347 = vector.shape_cast %346 : vector<1x4x8xbf16> to vector<4x8xbf16>
    %348 = vector.extract_strided_slice %345 {offsets = [0, 0], sizes = [8, 128], strides = [1, 1]} : vector<8x384xbf16> to vector<8x128xbf16>
    %cst_190 = arith.constant dense<0.000000e+00> : vector<4x128xf32>
    %349 = tpu.matmul %347, %348, %cst_190 {dimension_numbers = #tpu.dot_dimension_numbers<[1], [0], [0], [1], [0, 0, 1, 1], [], []>} : vector<4x8xbf16>, vector<8x128xbf16>, vector<4x128xf32> -> vector<4x128xf32>
    %c1_191 = arith.constant 1 : index
    %c0_192 = arith.constant 0 : index
    %c0_193 = arith.constant 0 : index
    %350 = vector.load %arg38[%c1_191, %c0_192, %c0_193] : memref<3x4x8xbf16, #tpu.memory_space<vmem>>, vector<1x4x8xbf16>
    %351 = vector.shape_cast %350 : vector<1x4x8xbf16> to vector<4x8xbf16>
    %352 = vector.extract_strided_slice %345 {offsets = [0, 128], sizes = [8, 128], strides = [1, 1]} : vector<8x384xbf16> to vector<8x128xbf16>
    %cst_194 = arith.constant dense<0.000000e+00> : vector<4x128xf32>
    %353 = tpu.matmul %351, %352, %cst_194 {dimension_numbers = #tpu.dot_dimension_numbers<[1], [0], [0], [1], [0, 0, 1, 1], [], []>} : vector<4x8xbf16>, vector<8x128xbf16>, vector<4x128xf32> -> vector<4x128xf32>
    %354 = arith.addf %349, %353 : vector<4x128xf32>
    %c2_195 = arith.constant 2 : index
    %c0_196 = arith.constant 0 : index
    %c0_197 = arith.constant 0 : index
    %355 = vector.load %arg38[%c2_195, %c0_196, %c0_197] : memref<3x4x8xbf16, #tpu.memory_space<vmem>>, vector<1x4x8xbf16>
    %356 = vector.shape_cast %355 : vector<1x4x8xbf16> to vector<4x8xbf16>
    %357 = vector.extract_strided_slice %345 {offsets = [0, 256], sizes = [8, 128], strides = [1, 1]} : vector<8x384xbf16> to vector<8x128xbf16>
    %cst_198 = arith.constant dense<0.000000e+00> : vector<4x128xf32>
    %358 = tpu.matmul %356, %357, %cst_198 {dimension_numbers = #tpu.dot_dimension_numbers<[1], [0], [0], [1], [0, 0, 1, 1], [], []>} : vector<4x8xbf16>, vector<8x128xbf16>, vector<4x128xf32> -> vector<4x128xf32>
    %359 = arith.addf %354, %358 : vector<4x128xf32>
    %c0_199 = arith.constant 0 : index
    %c0_200 = arith.constant 0 : index
    %360 = vector.load %arg39[%c0_199, %c0_200] : memref<1x128xf32, #tpu.memory_space<vmem>>, vector<1x128xf32>
    %361 = vector.broadcast %360 : vector<1x128xf32> to vector<4x128xf32>
    %362 = arith.addf %359, %361 : vector<4x128xf32>
    %cst_201 = arith.constant 0.000000e+00 : f32
    %363 = vector.broadcast %cst_201 : f32 to vector<4x128xf32>
    %364 = arith.maximumf %362, %363 : vector<4x128xf32>
    %cst_202 = arith.constant dense<0.000000e+00> : vector<128xf32>
    %365 = vector.multi_reduction <add>, %364, %cst_202 [0] : vector<4x128xf32> to vector<128xf32>
    %366 = vector.shape_cast %365 : vector<128xf32> to vector<1x128xf32>
    %367 = arith.mulf %364, %364 : vector<4x128xf32>
    %cst_203 = arith.constant dense<0.000000e+00> : vector<128xf32>
    %368 = vector.multi_reduction <add>, %367, %cst_203 [0] : vector<4x128xf32> to vector<128xf32>
    %369 = vector.shape_cast %368 : vector<128xf32> to vector<1x128xf32>
    %370 = tpu.concatenate %366, %369 in 0 : vector<1x128xf32>, vector<1x128xf32> -> vector<2x128xf32>
    %c0_204 = arith.constant 0 : index
    %c0_205 = arith.constant 0 : index
    %371 = vector.load %arg41[%c0_204, %c0_205] : memref<128x64xf32, #tpu.memory_space<vmem>>, vector<128x64xf32>
    %cst_206 = arith.constant dense<0.000000e+00> : vector<2x64xf32>
    %372 = tpu.matmul %370, %371, %cst_206 {dimension_numbers = #tpu.dot_dimension_numbers<[1], [0], [0], [1], [0, 0, 1, 1], [], []>} : vector<2x128xf32>, vector<128x64xf32>, vector<2x64xf32> -> vector<2x64xf32>
    %373 = vector.extract_strided_slice %372 {offsets = [0, 0], sizes = [1, 64], strides = [1, 1]} : vector<2x64xf32> to vector<1x64xf32>
    %cst_207 = arith.constant 1.250000e-01 : f32
    %374 = vector.broadcast %cst_207 : f32 to vector<1x64xf32>
    %375 = arith.mulf %373, %374 : vector<1x64xf32>
    %376 = vector.extract_strided_slice %372 {offsets = [1, 0], sizes = [1, 64], strides = [1, 1]} : vector<2x64xf32> to vector<1x64xf32>
    %cst_208 = arith.constant 1.250000e-01 : f32
    %377 = vector.broadcast %cst_208 : f32 to vector<1x64xf32>
    %378 = arith.mulf %376, %377 : vector<1x64xf32>
    %379 = arith.mulf %375, %375 : vector<1x64xf32>
    %380 = arith.subf %378, %379 : vector<1x64xf32>
    %c0_209 = arith.constant 0 : index
    %c0_210 = arith.constant 0 : index
    %381 = vector.load %arg40[%c0_209, %c0_210] : memref<2x64xf32, #tpu.memory_space<vmem>>, vector<2x64xf32>
    %382 = vector.extract_strided_slice %381 {offsets = [0, 0], sizes = [1, 64], strides = [1, 1]} : vector<2x64xf32> to vector<1x64xf32>
    %cst_211 = arith.constant 9.99999974E-6 : f32
    %383 = vector.broadcast %cst_211 : f32 to vector<1x64xf32>
    %384 = arith.addf %380, %383 : vector<1x64xf32>
    %385 = math.rsqrt %384 : vector<1x64xf32>
    %386 = arith.mulf %382, %385 : vector<1x64xf32>
    %387 = vector.extract_strided_slice %381 {offsets = [1, 0], sizes = [1, 64], strides = [1, 1]} : vector<2x64xf32> to vector<1x64xf32>
    %388 = arith.mulf %375, %386 : vector<1x64xf32>
    %389 = arith.subf %387, %388 : vector<1x64xf32>
    %390 = tpu.concatenate %386, %389 in 0 : vector<1x64xf32>, vector<1x64xf32> -> vector<2x64xf32>
    %c0_212 = arith.constant 0 : index
    %c0_213 = arith.constant 0 : index
    %391 = vector.load %arg42[%c0_212, %c0_213] : memref<64x128xf32, #tpu.memory_space<vmem>>, vector<64x128xf32>
    %cst_214 = arith.constant dense<0.000000e+00> : vector<2x128xf32>
    %392 = tpu.matmul %390, %391, %cst_214 {dimension_numbers = #tpu.dot_dimension_numbers<[1], [0], [0], [1], [0, 0, 1, 1], [], []>} : vector<2x64xf32>, vector<64x128xf32>, vector<2x128xf32> -> vector<2x128xf32>
    %393 = vector.extract_strided_slice %392 {offsets = [0, 0], sizes = [1, 128], strides = [1, 1]} : vector<2x128xf32> to vector<1x128xf32>
    %394 = vector.broadcast %393 : vector<1x128xf32> to vector<4x128xf32>
    %395 = arith.mulf %364, %394 : vector<4x128xf32>
    %396 = vector.extract_strided_slice %392 {offsets = [1, 0], sizes = [1, 128], strides = [1, 1]} : vector<2x128xf32> to vector<1x128xf32>
    %397 = vector.broadcast %396 : vector<1x128xf32> to vector<4x128xf32>
    %398 = arith.addf %395, %397 : vector<4x128xf32>
    %399 = arith.truncf %398 : vector<4x128xf32> to vector<4x128xbf16>
    %c0_215 = arith.constant 0 : index
    %c0_216 = arith.constant 0 : index
    %400 = vector.load %arg43[%c0_215, %c0_216] : memref<128x384xbf16, #tpu.memory_space<vmem>>, vector<128x384xbf16>
    %cst_217 = arith.constant dense<0.000000e+00> : vector<4x384xf32>
    %401 = tpu.matmul %399, %400, %cst_217 {dimension_numbers = #tpu.dot_dimension_numbers<[1], [0], [0], [1], [0, 0, 1, 1], [], []>} : vector<4x128xbf16>, vector<128x384xbf16>, vector<4x384xf32> -> vector<4x384xf32>
    %402 = arith.truncf %401 : vector<4x384xf32> to vector<4x384xbf16>
    %c0_218 = arith.constant 0 : index
    %c0_219 = arith.constant 0 : index
    %c0_220 = arith.constant 0 : index
    %403 = vector.load %arg44[%c0_218, %c0_219, %c0_220] : memref<3x2x4xbf16, #tpu.memory_space<vmem>>, vector<1x2x4xbf16>
    %404 = vector.shape_cast %403 : vector<1x2x4xbf16> to vector<2x4xbf16>
    %405 = vector.extract_strided_slice %402 {offsets = [0, 0], sizes = [4, 128], strides = [1, 1]} : vector<4x384xbf16> to vector<4x128xbf16>
    %cst_221 = arith.constant dense<0.000000e+00> : vector<2x128xf32>
    %406 = tpu.matmul %404, %405, %cst_221 {dimension_numbers = #tpu.dot_dimension_numbers<[1], [0], [0], [1], [0, 0, 1, 1], [], []>} : vector<2x4xbf16>, vector<4x128xbf16>, vector<2x128xf32> -> vector<2x128xf32>
    %c1_222 = arith.constant 1 : index
    %c0_223 = arith.constant 0 : index
    %c0_224 = arith.constant 0 : index
    %407 = vector.load %arg44[%c1_222, %c0_223, %c0_224] : memref<3x2x4xbf16, #tpu.memory_space<vmem>>, vector<1x2x4xbf16>
    %408 = vector.shape_cast %407 : vector<1x2x4xbf16> to vector<2x4xbf16>
    %409 = vector.extract_strided_slice %402 {offsets = [0, 128], sizes = [4, 128], strides = [1, 1]} : vector<4x384xbf16> to vector<4x128xbf16>
    %cst_225 = arith.constant dense<0.000000e+00> : vector<2x128xf32>
    %410 = tpu.matmul %408, %409, %cst_225 {dimension_numbers = #tpu.dot_dimension_numbers<[1], [0], [0], [1], [0, 0, 1, 1], [], []>} : vector<2x4xbf16>, vector<4x128xbf16>, vector<2x128xf32> -> vector<2x128xf32>
    %411 = arith.addf %406, %410 : vector<2x128xf32>
    %c2_226 = arith.constant 2 : index
    %c0_227 = arith.constant 0 : index
    %c0_228 = arith.constant 0 : index
    %412 = vector.load %arg44[%c2_226, %c0_227, %c0_228] : memref<3x2x4xbf16, #tpu.memory_space<vmem>>, vector<1x2x4xbf16>
    %413 = vector.shape_cast %412 : vector<1x2x4xbf16> to vector<2x4xbf16>
    %414 = vector.extract_strided_slice %402 {offsets = [0, 256], sizes = [4, 128], strides = [1, 1]} : vector<4x384xbf16> to vector<4x128xbf16>
    %cst_229 = arith.constant dense<0.000000e+00> : vector<2x128xf32>
    %415 = tpu.matmul %413, %414, %cst_229 {dimension_numbers = #tpu.dot_dimension_numbers<[1], [0], [0], [1], [0, 0, 1, 1], [], []>} : vector<2x4xbf16>, vector<4x128xbf16>, vector<2x128xf32> -> vector<2x128xf32>
    %416 = arith.addf %411, %415 : vector<2x128xf32>
    %c0_230 = arith.constant 0 : index
    %c0_231 = arith.constant 0 : index
    %417 = vector.load %arg45[%c0_230, %c0_231] : memref<1x128xf32, #tpu.memory_space<vmem>>, vector<1x128xf32>
    %418 = vector.broadcast %417 : vector<1x128xf32> to vector<2x128xf32>
    %419 = arith.addf %416, %418 : vector<2x128xf32>
    %c0_232 = arith.constant 0 : index
    %c0_233 = arith.constant 0 : index
    %420 = vector.load %arg46[%c0_232, %c0_233] : memref<2x128xf32, #tpu.memory_space<vmem>>, vector<2x128xf32>
    tpu.vector_store %arg46[%c0_232, %c0_233], %419 {strides = array<i32>} : memref<2x128xf32, #tpu.memory_space<vmem>>, vector<2x128xf32>,
    return
  }
}

</mosaic_0001>

<llo_original>
// kernel: tpu_custom_call.1
$region0: #{tpu_custom_call.1}
  #allocation0 [shape = 'u32[]', space=smem, size = 0x4, offset = 0x4, fixed_abs, tag = 'smem constant byte address 0x4 - core index']
  #allocation1 [shape = 'u32[144,128]{1,0:T(1,128)}', space=vmem, size = 0x12000, scoped, tag = 'internal scratch']
  %s0 = inlined_call_operand.smem [shape: u32[47], index: -1, kind: input, shape index: {}]
  %s1 = sld [smem:[%s0]]
  %s2 = scalar_lea.smem %s0, 1
  %s3 = sld [smem:[%s2]]
  %s4 = scalar_lea.smem %s0, 2
  %s5 = sld [smem:[%s4]]
  %s6 = scalar_lea.smem %s0, 3
  %s7 = sld [smem:[%s6]]
  %s8 = scalar_lea.smem %s0, 4
  %s9 = sld [smem:[%s8]]
  %s10 = scalar_lea.smem %s0, 5
  %s11 = sld [smem:[%s10]]
  %s12 = scalar_lea.smem %s0, 6
  %s13 = sld [smem:[%s12]]
  %s14 = scalar_lea.smem %s0, 7
  %s15 = sld [smem:[%s14]]
  %s16 = scalar_lea.smem %s0, 8
  %s17 = sld [smem:[%s16]]
  %s18 = scalar_lea.smem %s0, 9
  %s19 = sld [smem:[%s18]]
  %s20 = scalar_lea.smem %s0, 10
  %s21 = sld [smem:[%s20]]
  %s22 = scalar_lea.smem %s0, 11
  %s23 = sld [smem:[%s22]]
  %s24 = scalar_lea.smem %s0, 12
  %s25 = sld [smem:[%s24]]
  %s26 = scalar_lea.smem %s0, 13
  %s27 = sld [smem:[%s26]]
  %s28 = scalar_lea.smem %s0, 14
  %s29 = sld [smem:[%s28]]
  %s30 = scalar_lea.smem %s0, 15
  %s31 = sld [smem:[%s30]]
  %s32 = scalar_lea.smem %s0, 16
  %s33 = sld [smem:[%s32]]
  %s34 = scalar_lea.smem %s0, 17
  %s35 = sld [smem:[%s34]]
  %s36 = scalar_lea.smem %s0, 18
  %s37 = sld [smem:[%s36]]
  %s38 = scalar_lea.smem %s0, 19
  %s39 = sld [smem:[%s38]]
  %s40 = scalar_lea.smem %s0, 20
  %s41 = sld [smem:[%s40]]
  %s42 = scalar_lea.smem %s0, 21
  %s43 = sld [smem:[%s42]]
  %s44 = scalar_lea.smem %s0, 22
  %s45 = sld [smem:[%s44]]
  %s46 = scalar_lea.smem %s0, 23
  %s47 = sld [smem:[%s46]]
  %s48 = scalar_lea.smem %s0, 24
  %s49 = sld [smem:[%s48]]
  %s50 = scalar_lea.smem %s0, 25
  %s51 = sld [smem:[%s50]]
  %s52 = scalar_lea.smem %s0, 26
  %s53 = sld [smem:[%s52]]
  %s54 = scalar_lea.smem %s0, 27
  %s55 = sld [smem:[%s54]]
  %s56 = scalar_lea.smem %s0, 28
  %s57 = sld [smem:[%s56]]
  %s58 = scalar_lea.smem %s0, 29
  %s59 = sld [smem:[%s58]]
  %s60 = scalar_lea.smem %s0, 30
  %s61 = sld [smem:[%s60]]
  %s62 = scalar_lea.smem %s0, 31
  %s63 = sld [smem:[%s62]]
  %s64 = scalar_lea.smem %s0, 32
  %s65 = sld [smem:[%s64]]
  %s66 = scalar_lea.smem %s0, 33
  %s67 = sld [smem:[%s66]]
  %s68 = scalar_lea.smem %s0, 34
  %s69 = sld [smem:[%s68]]
  %s70 = scalar_lea.smem %s0, 35
  %s71 = sld [smem:[%s70]]
  %s72 = scalar_lea.smem %s0, 36
  %s73 = sld [smem:[%s72]]
  %s74 = scalar_lea.smem %s0, 37
  %s75 = sld [smem:[%s74]]
  %s76 = scalar_lea.smem %s0, 38
  %s77 = sld [smem:[%s76]]
  %s78 = scalar_lea.smem %s0, 39
  %s79 = sld [smem:[%s78]]
  %s80 = scalar_lea.smem %s0, 40
  %s81 = sld [smem:[%s80]]
  %s82 = scalar_lea.smem %s0, 41
  %s83 = sld [smem:[%s82]]
  %s84 = scalar_lea.smem %s0, 42
  %s85 = sld [smem:[%s84]]
  %s86 = scalar_lea.smem %s0, 43
  %s87 = sld [smem:[%s86]]
  %s88 = scalar_lea.smem %s0, 44
  %s89 = sld [smem:[%s88]]
  %s90 = scalar_lea.smem %s0, 45
  %s91 = sld [smem:[%s90]]
  %s92 = scalar_lea.smem %s0, 46
  %s93 = sld [smem:[%s92]]
  %s94 = sld [smem:[#allocation0]]
  $region314: #{tpu_custom_call.1} parent=0
    _
  %s96 = ssub.s32 1, %s94
  %s97 = scalar_select 0, %s96, %s94
  $region1: #{tpu_custom_call.1} parent=0
    #allocation2 [shape = 'u8[16384]{0}', space=vmem, size = 0x4000, scoped, tag = 'input window, operand 0, single buffered']
    #allocation3 [shape = 's32[1]{0}', space=sflag, size = 0x4, scoped, tag = 'scoped memory for tpu_custom_call.1']
    #allocation4 [shape = 's32[1]{0}', space=sflag, size = 0x4, scoped, tag = 'scoped memory for tpu_custom_call.1']
    #allocation5 [shape = 'u8[73728]{0}', space=vmem, size = 0x12000, scoped, tag = 'input window, operand 1, single buffered']
    #allocation6 [shape = 's32[1]{0}', space=sflag, size = 0x4, scoped, tag = 'scoped memory for tpu_custom_call.1']
    #allocation7 [shape = 'u8[24576]{0}', space=vmem, size = 0x6000, scoped, tag = 'input window, operand 2, single buffered']
    #allocation8 [shape = 'u8[512]{0}', space=vmem, size = 0x400, scoped, tag = 'input window, operand 3, single buffered']
    #allocation9 [shape = 's32[1]{0}', space=sflag, size = 0x4, scoped, tag = 'scoped memory for tpu_custom_call.1']
    #allocation10 [shape = 'u8[1024]{0}', space=vmem, size = 0x400, scoped, tag = 'input window, operand 4, single buffered']
    #allocation11 [shape = 'u8[4096]{0}', space=vmem, size = 0x1000, scoped, tag = 'input window, operand 6, single buffered']
    #allocation12 [shape = 's32[1]{0}', space=sflag, size = 0x4, scoped, tag = 'scoped memory for tpu_custom_call.1']
    #allocation13 [shape = 'u8[24576]{0}', space=vmem, size = 0x6000, scoped, tag = 'input window, operand 8, single buffered']
    #allocation14 [shape = 'u8[512]{0}', space=vmem, size = 0x400, scoped, tag = 'input window, operand 9, single buffered']
    #allocation15 [shape = 's32[1]{0}', space=sflag, size = 0x4, scoped, tag = 'scoped memory for tpu_custom_call.1']
    #allocation16 [shape = 'u8[1024]{0}', space=vmem, size = 0x400, scoped, tag = 'input window, operand 10, single buffered']
    #allocation17 [shape = 'u8[4096]{0}', space=vmem, size = 0x1000, scoped, tag = 'input window, operand 12, single buffered']
    #allocation18 [shape = 's32[1]{0}', space=sflag, size = 0x4, scoped, tag = 'scoped memory for tpu_custom_call.1']
    #allocation19 [shape = 'u8[12288]{0}', space=vmem, size = 0x3000, scoped, tag = 'input window, operand 14, single buffered']
    #allocation20 [shape = 'u8[512]{0}', space=vmem, size = 0x400, scoped, tag = 'input window, operand 15, single buffered']
    #allocation21 [shape = 's32[1]{0}', space=sflag, size = 0x4, scoped, tag = 'scoped memory for tpu_custom_call.1']
    #allocation22 [shape = 'u8[1024]{0}', space=vmem, size = 0x400, scoped, tag = 'input window, operand 16, single buffered']
    #allocation23 [shape = 'u8[8192]{0}', space=vmem, size = 0x2000, scoped, tag = 'input window, operand 18, single buffered']
    #allocation24 [shape = 's32[1]{0}', space=sflag, size = 0x4, scoped, tag = 'scoped memory for tpu_custom_call.1']
    #allocation25 [shape = 'u8[12288]{0}', space=vmem, size = 0x3000, scoped, tag = 'input window, operand 20, single buffered']
    #allocation26 [shape = 'u8[512]{0}', space=vmem, size = 0x400, scoped, tag = 'input window, operand 21, single buffered']
    #allocation27 [shape = 's32[1]{0}', space=sflag, size = 0x4, scoped, tag = 'scoped memory for tpu_custom_call.1']
    #allocation28 [shape = 'u8[1024]{0}', space=vmem, size = 0x400, scoped, tag = 'input window, operand 22, single buffered']
    #allocation29 [shape = 'u8[8192]{0}', space=vmem, size = 0x2000, scoped, tag = 'input window, operand 24, single buffered']
    #allocation30 [shape = 's32[1]{0}', space=sflag, size = 0x4, scoped, tag = 'scoped memory for tpu_custom_call.1']
    #allocation31 [shape = 'u8[6144]{0}', space=vmem, size = 0x1800, scoped, tag = 'input window, operand 26, single buffered']
    #allocation32 [shape = 'u8[512]{0}', space=vmem, size = 0x400, scoped, tag = 'input window, operand 27, single buffered']
    #allocation33 [shape = 's32[1]{0}', space=sflag, size = 0x4, scoped, tag = 'scoped memory for tpu_custom_call.1']
    #allocation34 [shape = 'u8[1024]{0}', space=vmem, size = 0x400, scoped, tag = 'input window, operand 28, single buffered']
    #allocation35 [shape = 'u8[16384]{0}', space=vmem, size = 0x4000, scoped, tag = 'input window, operand 30, single buffered']
    #allocation36 [shape = 's32[1]{0}', space=sflag, size = 0x4, scoped, tag = 'scoped memory for tpu_custom_call.1']
    #allocation37 [shape = 'u8[6144]{0}', space=vmem, size = 0x1800, scoped, tag = 'input window, operand 32, single buffered']
    #allocation38 [shape = 'u8[512]{0}', space=vmem, size = 0x400, scoped, tag = 'input window, operand 33, single buffered']
    #allocation39 [shape = 's32[1]{0}', space=sflag, size = 0x4, scoped, tag = 'scoped memory for tpu_custom_call.1']
    #allocation40 [shape = 'u8[1024]{0}', space=vmem, size = 0x400, scoped, tag = 'input window, operand 34, single buffered']
    #allocation41 [shape = 'u8[16384]{0}', space=vmem, size = 0x4000, scoped, tag = 'input window, operand 36, single buffered']
    #allocation42 [shape = 's32[1]{0}', space=sflag, size = 0x4, scoped, tag = 'scoped memory for tpu_custom_call.1']
    #allocation43 [shape = 'u8[3072]{0}', space=vmem, size = 0xc00, scoped, tag = 'input window, operand 38, single buffered']
    #allocation44 [shape = 'u8[512]{0}', space=vmem, size = 0x400, scoped, tag = 'input window, operand 39, single buffered']
    #allocation45 [shape = 's32[1]{0}', space=sflag, size = 0x4, scoped, tag = 'scoped memory for tpu_custom_call.1']
    #allocation46 [shape = 'u8[32768]{0}', space=vmem, size = 0x8000, scoped, tag = 'input window, operand 42, single buffered']
    #allocation47 [shape = 'u8[98304]{0}', space=vmem, size = 0x18000, scoped, tag = 'input window, operand 43, single buffered']
    #allocation48 [shape = 's32[1]{0}', space=sflag, size = 0x4, scoped, tag = 'scoped memory for tpu_custom_call.1']
    #allocation49 [shape = 'u8[1024]{0}', space=vmem, size = 0x400, scoped, tag = 'output window, operand 0, single buffered']
    %98 = vsyncpa [#allocation3], 0
    %99 = vsyncpa [#allocation6], 0
    %100 = vsyncpa [#allocation9], 0
    %101 = vsyncpa [#allocation12], 0
    %102 = vsyncpa [#allocation15], 0
    %103 = vsyncpa [#allocation18], 0
    %104 = vsyncpa [#allocation21], 0
    %105 = vsyncpa [#allocation24], 0
    %106 = vsyncpa [#allocation27], 0
    %107 = vsyncpa [#allocation30], 0
    %108 = vsyncpa [#allocation33], 0
    %109 = vsyncpa [#allocation36], 0
    %110 = vsyncpa [#allocation39], 0
    %111 = vsyncpa [#allocation42], 0
    %112 = vsyncpa [#allocation45], 0
    %113 = vsyncpa [#allocation48], 0
    %114 = vsyncpa [#allocation4], 0
    // Predicated region
    $region2: #{tpu_custom_call.1} parent=1 // pred_check
      _
    $region3: #{tpu_custom_call.1} parent=1 // pred_check_branch
      %116 = sbr.rel (0) target = $region5
    $region4: #{tpu_custom_call.1} parent=1 // pred_region
      %s118 = ssub.s32 512, 512
      %119 = vsyncadd [#allocation3], %s118
      %s120 = sshll.u32 [#allocation2], 4
      %s121 = int_to_ptr.vmem [resolvable:$true] %s120
      %126 = dma.hbm_to_vmem [thread:$0]  %s1, 512, %s121, [#allocation3], 64, 64, 4
    $region5: #{tpu_custom_call.1} parent=1 // pred_fallthru
      _
    // Predicated region
    $region6: #{tpu_custom_call.1} parent=1 // pred_check
      _
    $region7: #{tpu_custom_call.1} parent=1 // pred_check_branch
      %128 = sbr.rel (0) target = $region9
    $region8: #{tpu_custom_call.1} parent=1 // pred_region
      %s130 = ssub.s32 2304, 2304
      %131 = vsyncadd [#allocation6], %s130
      %s132 = sshll.u32 [#allocation5], 4
      %s133 = int_to_ptr.vmem [resolvable:$true] %s132
      %138 = dma.hbm_to_vmem [thread:$0]  %s3, 2304, %s133, [#allocation6], 192, 192, 12
    $region9: #{tpu_custom_call.1} parent=1 // pred_fallthru
      _
    // Predicated region
    $region10: #{tpu_custom_call.1} parent=1 // pred_check
      _
    $region11: #{tpu_custom_call.1} parent=1 // pred_check_branch
      %140 = sbr.rel (0) target = $region13
    $region12: #{tpu_custom_call.1} parent=1 // pred_region
      %s142 = ssub.s32 768, 768
      %143 = vsyncadd [#allocation6], %s142
      %s144 = sshll.u32 [#allocation7], 4
      %s145 = int_to_ptr.vmem [resolvable:$true] %s144
      %150 = dma.hbm_to_vmem [thread:$0]  %s5, 768, %s145, [#allocation6], 64, 64, 4
    $region13: #{tpu_custom_call.1} parent=1 // pred_fallthru
      _
    // Predicated region
    $region14: #{tpu_custom_call.1} parent=1 // pred_check
      _
    $region15: #{tpu_custom_call.1} parent=1 // pred_check_branch
      %152 = sbr.rel (0) target = $region17
    $region16: #{tpu_custom_call.1} parent=1 // pred_region
      %s154 = ssub.s32 16, 16
      %155 = vsyncadd [#allocation9], %s154
      %s157 = sshll.u32 [#allocation8], 4
      %s158 = int_to_ptr.vmem [resolvable:$true] %s157
      %160 = dma.hbm_to_vmem [thread:$0]  %s7, 16, %s158, [#allocation9]
    $region17: #{tpu_custom_call.1} parent=1 // pred_fallthru
      _
    // Predicated region
    $region18: #{tpu_custom_call.1} parent=1 // pred_check
      _
    $region19: #{tpu_custom_call.1} parent=1 // pred_check_branch
      %162 = sbr.rel (0) target = $region21
    $region20: #{tpu_custom_call.1} parent=1 // pred_region
      %s164 = ssub.s32 32, 32
      %165 = vsyncadd [#allocation9], %s164
      %s167 = sshll.u32 [#allocation10], 4
      %s168 = int_to_ptr.vmem [resolvable:$true] %s167
      %170 = dma.hbm_to_vmem [thread:$0]  %s9, 32, %s168, [#allocation9]
    $region21: #{tpu_custom_call.1} parent=1 // pred_fallthru
      _
    // Predicated region
    $region22: #{tpu_custom_call.1} parent=1 // pred_check
      _
    $region23: #{tpu_custom_call.1} parent=1 // pred_check_branch
      %172 = sbr.rel (0) target = $region25
    $region24: #{tpu_custom_call.1} parent=1 // pred_region
      _
    $region25: #{tpu_custom_call.1} parent=1 // pred_fallthru
      _
    // Predicated region
    $region26: #{tpu_custom_call.1} parent=1 // pred_check
      _
    $region27: #{tpu_custom_call.1} parent=1 // pred_check_branch
      %174 = sbr.rel (0) target = $region29
    $region28: #{tpu_custom_call.1} parent=1 // pred_region
      %s176 = ssub.s32 128, 128
      %177 = vsyncadd [#allocation12], %s176
      %s179 = sshll.u32 [#allocation11], 4
      %s180 = int_to_ptr.vmem [resolvable:$true] %s179
      %182 = dma.hbm_to_vmem [thread:$0]  %s13, 128, %s180, [#allocation12]
    $region29: #{tpu_custom_call.1} parent=1 // pred_fallthru
      _
    // Predicated region
    $region30: #{tpu_custom_call.1} parent=1 // pred_check
      _
    $region31: #{tpu_custom_call.1} parent=1 // pred_check_branch
      %184 = sbr.rel (0) target = $region33
    $region32: #{tpu_custom_call.1} parent=1 // pred_region
      _
    $region33: #{tpu_custom_call.1} parent=1 // pred_fallthru
      _
    // Predicated region
    $region34: #{tpu_custom_call.1} parent=1 // pred_check
      _
    $region35: #{tpu_custom_call.1} parent=1 // pred_check_branch
      %186 = sbr.rel (0) target = $region37
    $region36: #{tpu_custom_call.1} parent=1 // pred_region
      %s188 = ssub.s32 768, 768
      %189 = vsyncadd [#allocation12], %s188
      %s190 = sshll.u32 [#allocation13], 4
      %s191 = int_to_ptr.vmem [resolvable:$true] %s190
      %196 = dma.hbm_to_vmem [thread:$0]  %s17, 768, %s191, [#allocation12], 64, 64, 4
    $region37: #{tpu_custom_call.1} parent=1 // pred_fallthru
      _
    // Predicated region
    $region38: #{tpu_custom_call.1} parent=1 // pred_check
      _
    $region39: #{tpu_custom_call.1} parent=1 // pred_check_branch
      %198 = sbr.rel (0) target = $region41
    $region40: #{tpu_custom_call.1} parent=1 // pred_region
      %s200 = ssub.s32 16, 16
      %201 = vsyncadd [#allocation15], %s200
      %s203 = sshll.u32 [#allocation14], 4
      %s204 = int_to_ptr.vmem [resolvable:$true] %s203
      %206 = dma.hbm_to_vmem [thread:$0]  %s19, 16, %s204, [#allocation15]
    $region41: #{tpu_custom_call.1} parent=1 // pred_fallthru
      _
    // Predicated region
    $region42: #{tpu_custom_call.1} parent=1 // pred_check
      _
    $region43: #{tpu_custom_call.1} parent=1 // pred_check_branch
      %208 = sbr.rel (0) target = $region45
    $region44: #{tpu_custom_call.1} parent=1 // pred_region
      %s210 = ssub.s32 32, 32
      %211 = vsyncadd [#allocation15], %s210
      %s213 = sshll.u32 [#allocation16], 4
      %s214 = int_to_ptr.vmem [resolvable:$true] %s213
      %216 = dma.hbm_to_vmem [thread:$0]  %s21, 32, %s214, [#allocation15]
    $region45: #{tpu_custom_call.1} parent=1 // pred_fallthru
      _
    // Predicated region
    $region46: #{tpu_custom_call.1} parent=1 // pred_check
      _
    $region47: #{tpu_custom_call.1} parent=1 // pred_check_branch
      %218 = sbr.rel (0) target = $region49
    $region48: #{tpu_custom_call.1} parent=1 // pred_region
      _
    $region49: #{tpu_custom_call.1} parent=1 // pred_fallthru
      _
    // Predicated region
    $region50: #{tpu_custom_call.1} parent=1 // pred_check
      _
    $region51: #{tpu_custom_call.1} parent=1 // pred_check_branch
      %220 = sbr.rel (0) target = $region53
    $region52: #{tpu_custom_call.1} parent=1 // pred_region
      %s222 = ssub.s32 128, 128
      %223 = vsyncadd [#allocation18], %s222
      %s225 = sshll.u32 [#allocation17], 4
      %s226 = int_to_ptr.vmem [resolvable:$true] %s225
      %228 = dma.hbm_to_vmem [thread:$0]  %s25, 128, %s226, [#allocation18]
    $region53: #{tpu_custom_call.1} parent=1 // pred_fallthru
      _
    // Predicated region
    $region54: #{tpu_custom_call.1} parent=1 // pred_check
      _
    $region55: #{tpu_custom_call.1} parent=1 // pred_check_branch
      %230 = sbr.rel (0) target = $region57
    $region56: #{tpu_custom_call.1} parent=1 // pred_region
      _
    $region57: #{tpu_custom_call.1} parent=1 // pred_fallthru
      _
    // Predicated region
    $region58: #{tpu_custom_call.1} parent=1 // pred_check
      _
    $region59: #{tpu_custom_call.1} parent=1 // pred_check_branch
      %232 = sbr.rel (0) target = $region61
    $region60: #{tpu_custom_call.1} parent=1 // pred_region
      %s234 = ssub.s32 384, 384
      %235 = vsyncadd [#allocation18], %s234
      %s236 = sshll.u32 [#allocation19], 4
      %s237 = int_to_ptr.vmem [resolvable:$true] %s236
      %242 = dma.hbm_to_vmem [thread:$0]  %s29, 384, %s237, [#allocation18], 64, 64, 4
    $region61: #{tpu_custom_call.1} parent=1 // pred_fallthru
      _
    // Predicated region
    $region62: #{tpu_custom_call.1} parent=1 // pred_check
      _
    $region63: #{tpu_custom_call.1} parent=1 // pred_check_branch
      %244 = sbr.rel (0) target = $region65
    $region64: #{tpu_custom_call.1} parent=1 // pred_region
      %s246 = ssub.s32 16, 16
      %247 = vsyncadd [#allocation21], %s246
      %s249 = sshll.u32 [#allocation20], 4
      %s250 = int_to_ptr.vmem [resolvable:$true] %s249
      %252 = dma.hbm_to_vmem [thread:$0]  %s31, 16, %s250, [#allocation21]
    $region65: #{tpu_custom_call.1} parent=1 // pred_fallthru
      _
    // Predicated region
    $region66: #{tpu_custom_call.1} parent=1 // pred_check
      _
    $region67: #{tpu_custom_call.1} parent=1 // pred_check_branch
      %254 = sbr.rel (0) target = $region69
    $region68: #{tpu_custom_call.1} parent=1 // pred_region
      %s256 = ssub.s32 32, 32
      %257 = vsyncadd [#allocation21], %s256
      %s259 = sshll.u32 [#allocation22], 4
      %s260 = int_to_ptr.vmem [resolvable:$true] %s259
      %262 = dma.hbm_to_vmem [thread:$0]  %s33, 32, %s260, [#allocation21]
    $region69: #{tpu_custom_call.1} parent=1 // pred_fallthru
      _
    // Predicated region
    $region70: #{tpu_custom_call.1} parent=1 // pred_check
      _
    $region71: #{tpu_custom_call.1} parent=1 // pred_check_branch
      %264 = sbr.rel (0) target = $region73
    $region72: #{tpu_custom_call.1} parent=1 // pred_region
      _
    $region73: #{tpu_custom_call.1} parent=1 // pred_fallthru
      _
    // Predicated region
    $region74: #{tpu_custom_call.1} parent=1 // pred_check
      _
    $region75: #{tpu_custom_call.1} parent=1 // pred_check_branch
      %266 = sbr.rel (0) target = $region77
    $region76: #{tpu_custom_call.1} parent=1 // pred_region
      %s268 = ssub.s32 256, 256
      %269 = vsyncadd [#allocation24], %s268
      %s270 = sshll.u32 [#allocation23], 4
      %s271 = int_to_ptr.vmem [resolvable:$true] %s270
      %276 = dma.hbm_to_vmem [thread:$0]  %s37, 256, %s271, [#allocation24], 128, 128, 8
    $region77: #{tpu_custom_call.1} parent=1 // pred_fallthru
      _
    // Predicated region
    $region78: #{tpu_custom_call.1} parent=1 // pred_check
      _
    $region79: #{tpu_custom_call.1} parent=1 // pred_check_branch
      %278 = sbr.rel (0) target = $region81
    $region80: #{tpu_custom_call.1} parent=1 // pred_region
      _
    $region81: #{tpu_custom_call.1} parent=1 // pred_fallthru
      _
    // Predicated region
    $region82: #{tpu_custom_call.1} parent=1 // pred_check
      _
    $region83: #{tpu_custom_call.1} parent=1 // pred_check_branch
      %280 = sbr.rel (0) target = $region85
    $region84: #{tpu_custom_call.1} parent=1 // pred_region
      %s282 = ssub.s32 384, 384
      %283 = vsyncadd [#allocation24], %s282
      %s284 = sshll.u32 [#allocation25], 4
      %s285 = int_to_ptr.vmem [resolvable:$true] %s284
      %290 = dma.hbm_to_vmem [thread:$0]  %s41, 384, %s285, [#allocation24], 64, 64, 4
    $region85: #{tpu_custom_call.1} parent=1 // pred_fallthru
      _
    // Predicated region
    $region86: #{tpu_custom_call.1} parent=1 // pred_check
      _
    $region87: #{tpu_custom_call.1} parent=1 // pred_check_branch
      %292 = sbr.rel (0) target = $region89
    $region88: #{tpu_custom_call.1} parent=1 // pred_region
      %s294 = ssub.s32 16, 16
      %295 = vsyncadd [#allocation27], %s294
      %s297 = sshll.u32 [#allocation26], 4
      %s298 = int_to_ptr.vmem [resolvable:$true] %s297
      %300 = dma.hbm_to_vmem [thread:$0]  %s43, 16, %s298, [#allocation27]
    $region89: #{tpu_custom_call.1} parent=1 // pred_fallthru
      _
    // Predicated region
    $region90: #{tpu_custom_call.1} parent=1 // pred_check
      _
    $region91: #{tpu_custom_call.1} parent=1 // pred_check_branch
      %302 = sbr.rel (0) target = $region93
    $region92: #{tpu_custom_call.1} parent=1 // pred_region
      %s304 = ssub.s32 32, 32
      %305 = vsyncadd [#allocation27], %s304
      %s307 = sshll.u32 [#allocation28], 4
      %s308 = int_to_ptr.vmem [resolvable:$true] %s307
      %310 = dma.hbm_to_vmem [thread:$0]  %s45, 32, %s308, [#allocation27]
    $region93: #{tpu_custom_call.1} parent=1 // pred_fallthru
      _
    // Predicated region
    $region94: #{tpu_custom_call.1} parent=1 // pred_check
      _
    $region95: #{tpu_custom_call.1} parent=1 // pred_check_branch
      %312 = sbr.rel (0) target = $region97
    $region96: #{tpu_custom_call.1} parent=1 // pred_region
      _
    $region97: #{tpu_custom_call.1} parent=1 // pred_fallthru
      _
    // Predicated region
    $region98: #{tpu_custom_call.1} parent=1 // pred_check
      _
    $region99: #{tpu_custom_call.1} parent=1 // pred_check_branch
      %314 = sbr.rel (0) target = $region101
    $region100: #{tpu_custom_call.1} parent=1 // pred_region
      %s316 = ssub.s32 256, 256
      %317 = vsyncadd [#allocation30], %s316
      %s318 = sshll.u32 [#allocation29], 4
      %s319 = int_to_ptr.vmem [resolvable:$true] %s318
      %324 = dma.hbm_to_vmem [thread:$0]  %s49, 256, %s319, [#allocation30], 128, 128, 8
    $region101: #{tpu_custom_call.1} parent=1 // pred_fallthru
      _
    // Predicated region
    $region102: #{tpu_custom_call.1} parent=1 // pred_check
      _
    $region103: #{tpu_custom_call.1} parent=1 // pred_check_branch
      %326 = sbr.rel (0) target = $region105
    $region104: #{tpu_custom_call.1} parent=1 // pred_region
      _
    $region105: #{tpu_custom_call.1} parent=1 // pred_fallthru
      _
    // Predicated region
    $region106: #{tpu_custom_call.1} parent=1 // pred_check
      _
    $region107: #{tpu_custom_call.1} parent=1 // pred_check_branch
      %328 = sbr.rel (0) target = $region109
    $region108: #{tpu_custom_call.1} parent=1 // pred_region
      %s330 = ssub.s32 192, 192
      %331 = vsyncadd [#allocation30], %s330
      %s332 = sshll.u32 [#allocation31], 4
      %s333 = int_to_ptr.vmem [resolvable:$true] %s332
      %338 = dma.hbm_to_vmem [thread:$0]  %s53, 192, %s333, [#allocation30], 64, 64, 4
    $region109: #{tpu_custom_call.1} parent=1 // pred_fallthru
      _
    // Predicated region
    $region110: #{tpu_custom_call.1} parent=1 // pred_check
      _
    $region111: #{tpu_custom_call.1} parent=1 // pred_check_branch
      %340 = sbr.rel (0) target = $region113
    $region112: #{tpu_custom_call.1} parent=1 // pred_region
      %s342 = ssub.s32 16, 16
      %343 = vsyncadd [#allocation33], %s342
      %s345 = sshll.u32 [#allocation32], 4
      %s346 = int_to_ptr.vmem [resolvable:$true] %s345
      %348 = dma.hbm_to_vmem [thread:$0]  %s55, 16, %s346, [#allocation33]
    $region113: #{tpu_custom_call.1} parent=1 // pred_fallthru
      _
    // Predicated region
    $region114: #{tpu_custom_call.1} parent=1 // pred_check
      _
    $region115: #{tpu_custom_call.1} parent=1 // pred_check_branch
      %350 = sbr.rel (0) target = $region117
    $region116: #{tpu_custom_call.1} parent=1 // pred_region
      %s352 = ssub.s32 32, 32
      %353 = vsyncadd [#allocation33], %s352
      %s355 = sshll.u32 [#allocation34], 4
      %s356 = int_to_ptr.vmem [resolvable:$true] %s355
      %358 = dma.hbm_to_vmem [thread:$0]  %s57, 32, %s356, [#allocation33]
    $region117: #{tpu_custom_call.1} parent=1 // pred_fallthru
      _
    // Predicated region
    $region118: #{tpu_custom_call.1} parent=1 // pred_check
      _
    $region119: #{tpu_custom_call.1} parent=1 // pred_check_branch
      %360 = sbr.rel (0) target = $region121
    $region120: #{tpu_custom_call.1} parent=1 // pred_region
      _
    $region121: #{tpu_custom_call.1} parent=1 // pred_fallthru
      _
    // Predicated region
    $region122: #{tpu_custom_call.1} parent=1 // pred_check
      _
    $region123: #{tpu_custom_call.1} parent=1 // pred_check_branch
      %362 = sbr.rel (0) target = $region125
    $region124: #{tpu_custom_call.1} parent=1 // pred_region
      %s364 = ssub.s32 512, 512
      %365 = vsyncadd [#allocation36], %s364
      %s366 = sshll.u32 [#allocation35], 4
      %s367 = int_to_ptr.vmem [resolvable:$true] %s366
      %372 = dma.hbm_to_vmem [thread:$0]  %s61, 512, %s367, [#allocation36], 128, 128, 8
    $region125: #{tpu_custom_call.1} parent=1 // pred_fallthru
      _
    // Predicated region
    $region126: #{tpu_custom_call.1} parent=1 // pred_check
      _
    $region127: #{tpu_custom_call.1} parent=1 // pred_check_branch
      %374 = sbr.rel (0) target = $region129
    $region128: #{tpu_custom_call.1} parent=1 // pred_region
      _
    $region129: #{tpu_custom_call.1} parent=1 // pred_fallthru
      _
    // Predicated region
    $region130: #{tpu_custom_call.1} parent=1 // pred_check
      _
    $region131: #{tpu_custom_call.1} parent=1 // pred_check_branch
      %376 = sbr.rel (0) target = $region133
    $region132: #{tpu_custom_call.1} parent=1 // pred_region
      %s378 = ssub.s32 192, 192
      %379 = vsyncadd [#allocation36], %s378
      %s380 = sshll.u32 [#allocation37], 4
      %s381 = int_to_ptr.vmem [resolvable:$true] %s380
      %386 = dma.hbm_to_vmem [thread:$0]  %s65, 192, %s381, [#allocation36], 64, 64, 4
    $region133: #{tpu_custom_call.1} parent=1 // pred_fallthru
      _
    // Predicated region
    $region134: #{tpu_custom_call.1} parent=1 // pred_check
      _
    $region135: #{tpu_custom_call.1} parent=1 // pred_check_branch
      %388 = sbr.rel (0) target = $region137
    $region136: #{tpu_custom_call.1} parent=1 // pred_region
      %s390 = ssub.s32 16, 16
      %391 = vsyncadd [#allocation39], %s390
      %s393 = sshll.u32 [#allocation38], 4
      %s394 = int_to_ptr.vmem [resolvable:$true] %s393
      %396 = dma.hbm_to_vmem [thread:$0]  %s67, 16, %s394, [#allocation39]
    $region137: #{tpu_custom_call.1} parent=1 // pred_fallthru
      _
    // Predicated region
    $region138: #{tpu_custom_call.1} parent=1 // pred_check
      _
    $region139: #{tpu_custom_call.1} parent=1 // pred_check_branch
      %398 = sbr.rel (0) target = $region141
    $region140: #{tpu_custom_call.1} parent=1 // pred_region
      %s400 = ssub.s32 32, 32
      %401 = vsyncadd [#allocation39], %s400
      %s403 = sshll.u32 [#allocation40], 4
      %s404 = int_to_ptr.vmem [resolvable:$true] %s403
      %406 = dma.hbm_to_vmem [thread:$0]  %s69, 32, %s404, [#allocation39]
    $region141: #{tpu_custom_call.1} parent=1 // pred_fallthru
      _
    // Predicated region
    $region142: #{tpu_custom_call.1} parent=1 // pred_check
      _
    $region143: #{tpu_custom_call.1} parent=1 // pred_check_branch
      %408 = sbr.rel (0) target = $region145
    $region144: #{tpu_custom_call.1} parent=1 // pred_region
      _
    $region145: #{tpu_custom_call.1} parent=1 // pred_fallthru
      _
    // Predicated region
    $region146: #{tpu_custom_call.1} parent=1 // pred_check
      _
    $region147: #{tpu_custom_call.1} parent=1 // pred_check_branch
      %410 = sbr.rel (0) target = $region149
    $region148: #{tpu_custom_call.1} parent=1 // pred_region
      %s412 = ssub.s32 512, 512
      %413 = vsyncadd [#allocation42], %s412
      %s414 = sshll.u32 [#allocation41], 4
      %s415 = int_to_ptr.vmem [resolvable:$true] %s414
      %420 = dma.hbm_to_vmem [thread:$0]  %s73, 512, %s415, [#allocation42], 128, 128, 8
    $region149: #{tpu_custom_call.1} parent=1 // pred_fallthru
      _
    // Predicated region
    $region150: #{tpu_custom_call.1} parent=1 // pred_check
      _
    $region151: #{tpu_custom_call.1} parent=1 // pred_check_branch
      %422 = sbr.rel (0) target = $region153
    $region152: #{tpu_custom_call.1} parent=1 // pred_region
      _
    $region153: #{tpu_custom_call.1} parent=1 // pred_fallthru
      _
    // Predicated region
    $region154: #{tpu_custom_call.1} parent=1 // pred_check
      _
    $region155: #{tpu_custom_call.1} parent=1 // pred_check_branch
      %424 = sbr.rel (0) target = $region157
    $region156: #{tpu_custom_call.1} parent=1 // pred_region
      %s426 = ssub.s32 96, 96
      %427 = vsyncadd [#allocation42], %s426
      %s428 = sshll.u32 [#allocation43], 4
      %s429 = int_to_ptr.vmem [resolvable:$true] %s428
      %434 = dma.hbm_to_vmem [thread:$0]  %s77, 96, %s429, [#allocation42], 32, 32, 2
    $region157: #{tpu_custom_call.1} parent=1 // pred_fallthru
      _
    // Predicated region
    $region158: #{tpu_custom_call.1} parent=1 // pred_check
      _
    $region159: #{tpu_custom_call.1} parent=1 // pred_check_branch
      %436 = sbr.rel (0) target = $region161
    $region160: #{tpu_custom_call.1} parent=1 // pred_region
      %s438 = ssub.s32 16, 16
      %439 = vsyncadd [#allocation45], %s438
      %s441 = sshll.u32 [#allocation44], 4
      %s442 = int_to_ptr.vmem [resolvable:$true] %s441
      %444 = dma.hbm_to_vmem [thread:$0]  %s79, 16, %s442, [#allocation45]
    $region161: #{tpu_custom_call.1} parent=1 // pred_fallthru
      _
    // Predicated region
    $region162: #{tpu_custom_call.1} parent=1 // pred_check
      _
    $region163: #{tpu_custom_call.1} parent=1 // pred_check_branch
      %446 = sbr.rel (0) target = $region165
    $region164: #{tpu_custom_call.1} parent=1 // pred_region
      _
    $region165: #{tpu_custom_call.1} parent=1 // pred_fallthru
      _
    // Predicated region
    $region166: #{tpu_custom_call.1} parent=1 // pred_check
      _
    $region167: #{tpu_custom_call.1} parent=1 // pred_check_branch
      %448 = sbr.rel (0) target = $region169
    $region168: #{tpu_custom_call.1} parent=1 // pred_region
      _
    $region169: #{tpu_custom_call.1} parent=1 // pred_fallthru
      _
    // Predicated region
    $region170: #{tpu_custom_call.1} parent=1 // pred_check
      _
    $region171: #{tpu_custom_call.1} parent=1 // pred_check_branch
      %450 = sbr.rel (0) target = $region173
    $region172: #{tpu_custom_call.1} parent=1 // pred_region
      %s452 = ssub.s32 1024, 1024
      %453 = vsyncadd [#allocation45], %s452
      %s454 = sshll.u32 [#allocation46], 4
      %s455 = int_to_ptr.vmem [resolvable:$true] %s454
      %460 = dma.hbm_to_vmem [thread:$0]  %s85, 1024, %s455, [#allocation45], 128, 128, 8
    $region173: #{tpu_custom_call.1} parent=1 // pred_fallthru
      _
    // Predicated region
    $region174: #{tpu_custom_call.1} parent=1 // pred_check
      _
    $region175: #{tpu_custom_call.1} parent=1 // pred_check_branch
      %462 = sbr.rel (0) target = $region177
    $region176: #{tpu_custom_call.1} parent=1 // pred_region
      %s464 = ssub.s32 3072, 3072
      %465 = vsyncadd [#allocation48], %s464
      %s466 = sshll.u32 [#allocation47], 4
      %s467 = int_to_ptr.vmem [resolvable:$true] %s466
      %472 = dma.hbm_to_vmem [thread:$0]  %s87, 3072, %s467, [#allocation48], 192, 192, 12
    $region177: #{tpu_custom_call.1} parent=1 // pred_fallthru
      _
    // Predicated region
    $region178: #{tpu_custom_call.1} parent=1 // pred_check
      _
    $region179: #{tpu_custom_call.1} parent=1 // pred_check_branch
      %474 = sbr.rel (0) target = $region181
    $region180: #{tpu_custom_call.1} parent=1 // pred_region
      _
    $region181: #{tpu_custom_call.1} parent=1 // pred_fallthru
      _
    // Predicated region
    $region182: #{tpu_custom_call.1} parent=1 // pred_check
      _
    $region183: #{tpu_custom_call.1} parent=1 // pred_check_branch
      %476 = sbr.rel (0) target = $region185
    $region184: #{tpu_custom_call.1} parent=1 // pred_region
      _
    $region185: #{tpu_custom_call.1} parent=1 // pred_fallthru
      _
    // Predicated region
    $region186: #{tpu_custom_call.1} parent=1 // pred_check
      _
    $region187: #{tpu_custom_call.1} parent=1 // pred_check_branch
      %478 = sbr.rel (0) target = $region189
    $region188: #{tpu_custom_call.1} parent=1 // pred_region
      %479 = dma.done [#allocation3], 512
    $region189: #{tpu_custom_call.1} parent=1 // pred_fallthru
      _
    // Predicated region
    $region190: #{tpu_custom_call.1} parent=1 // pred_check
      _
    $region191: #{tpu_custom_call.1} parent=1 // pred_check_branch
      %481 = sbr.rel (0) target = $region193
    $region192: #{tpu_custom_call.1} parent=1 // pred_region
      %482 = dma.done [#allocation6], 2304
    $region193: #{tpu_custom_call.1} parent=1 // pred_fallthru
      _
    // Predicated region
    $region194: #{tpu_custom_call.1} parent=1 // pred_check
      _
    $region195: #{tpu_custom_call.1} parent=1 // pred_check_branch
      %484 = sbr.rel (0) target = $region197
    $region196: #{tpu_custom_call.1} parent=1 // pred_region
      %485 = dma.done [#allocation6], 768
    $region197: #{tpu_custom_call.1} parent=1 // pred_fallthru
      _
    // Predicated region
    $region198: #{tpu_custom_call.1} parent=1 // pred_check
      _
    $region199: #{tpu_custom_call.1} parent=1 // pred_check_branch
      %487 = sbr.rel (0) target = $region201
    $region200: #{tpu_custom_call.1} parent=1 // pred_region
      %488 = dma.done [#allocation9], 16
    $region201: #{tpu_custom_call.1} parent=1 // pred_fallthru
      _
    // Predicated region
    $region202: #{tpu_custom_call.1} parent=1 // pred_check
      _
    $region203: #{tpu_custom_call.1} parent=1 // pred_check_branch
      %490 = sbr.rel (0) target = $region205
    $region204: #{tpu_custom_call.1} parent=1 // pred_region
      %491 = dma.done [#allocation9], 32
    $region205: #{tpu_custom_call.1} parent=1 // pred_fallthru
      _
    // Predicated region
    $region206: #{tpu_custom_call.1} parent=1 // pred_check
      _
    $region207: #{tpu_custom_call.1} parent=1 // pred_check_branch
      %493 = sbr.rel (0) target = $region209
    $region208: #{tpu_custom_call.1} parent=1 // pred_region
      %494 = dma.done [#allocation12], 128
    $region209: #{tpu_custom_call.1} parent=1 // pred_fallthru
      _
    // Predicated region
    $region210: #{tpu_custom_call.1} parent=1 // pred_check
      _
    $region211: #{tpu_custom_call.1} parent=1 // pred_check_branch
      %496 = sbr.rel (0) target = $region213
    $region212: #{tpu_custom_call.1} parent=1 // pred_region
      %497 = dma.done [#allocation12], 768
    $region213: #{tpu_custom_call.1} parent=1 // pred_fallthru
      _
    // Predicated region
    $region214: #{tpu_custom_call.1} parent=1 // pred_check
      _
    $region215: #{tpu_custom_call.1} parent=1 // pred_check_branch
      %499 = sbr.rel (0) target = $region217
    $region216: #{tpu_custom_call.1} parent=1 // pred_region
      %500 = dma.done [#allocation15], 16
    $region217: #{tpu_custom_call.1} parent=1 // pred_fallthru
      _
    // Predicated region
    $region218: #{tpu_custom_call.1} parent=1 // pred_check
      _
    $region219: #{tpu_custom_call.1} parent=1 // pred_check_branch
      %502 = sbr.rel (0) target = $region221
    $region220: #{tpu_custom_call.1} parent=1 // pred_region
      %503 = dma.done [#allocation15], 32
    $region221: #{tpu_custom_call.1} parent=1 // pred_fallthru
      _
    // Predicated region
    $region222: #{tpu_custom_call.1} parent=1 // pred_check
      _
    $region223: #{tpu_custom_call.1} parent=1 // pred_check_branch
      %505 = sbr.rel (0) target = $region225
    $region224: #{tpu_custom_call.1} parent=1 // pred_region
      %506 = dma.done [#allocation18], 128
    $region225: #{tpu_custom_call.1} parent=1 // pred_fallthru
      _
    // Predicated region
    $region226: #{tpu_custom_call.1} parent=1 // pred_check
      _
    $region227: #{tpu_custom_call.1} parent=1 // pred_check_branch
      %508 = sbr.rel (0) target = $region229
    $region228: #{tpu_custom_call.1} parent=1 // pred_region
      %509 = dma.done [#allocation18], 384
    $region229: #{tpu_custom_call.1} parent=1 // pred_fallthru
      _
    // Predicated region
    $region230: #{tpu_custom_call.1} parent=1 // pred_check
      _
    $region231: #{tpu_custom_call.1} parent=1 // pred_check_branch
      %511 = sbr.rel (0) target = $region233
    $region232: #{tpu_custom_call.1} parent=1 // pred_region
      %512 = dma.done [#allocation21], 16
    $region233: #{tpu_custom_call.1} parent=1 // pred_fallthru
      _
    // Predicated region
    $region234: #{tpu_custom_call.1} parent=1 // pred_check
      _
    $region235: #{tpu_custom_call.1} parent=1 // pred_check_branch
      %514 = sbr.rel (0) target = $region237
    $region236: #{tpu_custom_call.1} parent=1 // pred_region
      %515 = dma.done [#allocation21], 32
    $region237: #{tpu_custom_call.1} parent=1 // pred_fallthru
      _
    // Predicated region
    $region238: #{tpu_custom_call.1} parent=1 // pred_check
      _
    $region239: #{tpu_custom_call.1} parent=1 // pred_check_branch
      %517 = sbr.rel (0) target = $region241
    $region240: #{tpu_custom_call.1} parent=1 // pred_region
      %518 = dma.done [#allocation24], 256
    $region241: #{tpu_custom_call.1} parent=1 // pred_fallthru
      _
    // Predicated region
    $region242: #{tpu_custom_call.1} parent=1 // pred_check
      _
    $region243: #{tpu_custom_call.1} parent=1 // pred_check_branch
      %520 = sbr.rel (0) target = $region245
    $region244: #{tpu_custom_call.1} parent=1 // pred_region
      %521 = dma.done [#allocation24], 384
    $region245: #{tpu_custom_call.1} parent=1 // pred_fallthru
      _
    // Predicated region
    $region246: #{tpu_custom_call.1} parent=1 // pred_check
      _
    $region247: #{tpu_custom_call.1} parent=1 // pred_check_branch
      %523 = sbr.rel (0) target = $region249
    $region248: #{tpu_custom_call.1} parent=1 // pred_region
      %524 = dma.done [#allocation27], 16
    $region249: #{tpu_custom_call.1} parent=1 // pred_fallthru
      _
    // Predicated region
    $region250: #{tpu_custom_call.1} parent=1 // pred_check
      _
    $region251: #{tpu_custom_call.1} parent=1 // pred_check_branch
      %526 = sbr.rel (0) target = $region253
    $region252: #{tpu_custom_call.1} parent=1 // pred_region
      %527 = dma.done [#allocation27], 32
    $region253: #{tpu_custom_call.1} parent=1 // pred_fallthru
      _
    // Predicated region
    $region254: #{tpu_custom_call.1} parent=1 // pred_check
      _
    $region255: #{tpu_custom_call.1} parent=1 // pred_check_branch
      %529 = sbr.rel (0) target = $region257
    $region256: #{tpu_custom_call.1} parent=1 // pred_region
      %530 = dma.done [#allocation30], 256
    $region257: #{tpu_custom_call.1} parent=1 // pred_fallthru
      _
    // Predicated region
    $region258: #{tpu_custom_call.1} parent=1 // pred_check
      _
    $region259: #{tpu_custom_call.1} parent=1 // pred_check_branch
      %532 = sbr.rel (0) target = $region261
    $region260: #{tpu_custom_call.1} parent=1 // pred_region
      %533 = dma.done [#allocation30], 192
    $region261: #{tpu_custom_call.1} parent=1 // pred_fallthru
      _
    // Predicated region
    $region262: #{tpu_custom_call.1} parent=1 // pred_check
      _
    $region263: #{tpu_custom_call.1} parent=1 // pred_check_branch
      %535 = sbr.rel (0) target = $region265
    $region264: #{tpu_custom_call.1} parent=1 // pred_region
      %536 = dma.done [#allocation33], 16
    $region265: #{tpu_custom_call.1} parent=1 // pred_fallthru
      _
    // Predicated region
    $region266: #{tpu_custom_call.1} parent=1 // pred_check
      _
    $region267: #{tpu_custom_call.1} parent=1 // pred_check_branch
      %538 = sbr.rel (0) target = $region269
    $region268: #{tpu_custom_call.1} parent=1 // pred_region
      %539 = dma.done [#allocation33], 32
    $region269: #{tpu_custom_call.1} parent=1 // pred_fallthru
      _
    // Predicated region
    $region270: #{tpu_custom_call.1} parent=1 // pred_check
      _
    $region271: #{tpu_custom_call.1} parent=1 // pred_check_branch
      %541 = sbr.rel (0) target = $region273
    $region272: #{tpu_custom_call.1} parent=1 // pred_region
      %542 = dma.done [#allocation36], 512
    $region273: #{tpu_custom_call.1} parent=1 // pred_fallthru
      _
    // Predicated region
    $region274: #{tpu_custom_call.1} parent=1 // pred_check
      _
    $region275: #{tpu_custom_call.1} parent=1 // pred_check_branch
      %544 = sbr.rel (0) target = $region277
    $region276: #{tpu_custom_call.1} parent=1 // pred_region
      %545 = dma.done [#allocation36], 192
    $region277: #{tpu_custom_call.1} parent=1 // pred_fallthru
      _
    // Predicated region
    $region278: #{tpu_custom_call.1} parent=1 // pred_check
      _
    $region279: #{tpu_custom_call.1} parent=1 // pred_check_branch
      %547 = sbr.rel (0) target = $region281
    $region280: #{tpu_custom_call.1} parent=1 // pred_region
      %548 = dma.done [#allocation39], 16
    $region281: #{tpu_custom_call.1} parent=1 // pred_fallthru
      _
    // Predicated region
    $region282: #{tpu_custom_call.1} parent=1 // pred_check
      _
    $region283: #{tpu_custom_call.1} parent=1 // pred_check_branch
      %550 = sbr.rel (0) target = $region285
    $region284: #{tpu_custom_call.1} parent=1 // pred_region
      %551 = dma.done [#allocation39], 32
    $region285: #{tpu_custom_call.1} parent=1 // pred_fallthru
      _
    // Predicated region
    $region286: #{tpu_custom_call.1} parent=1 // pred_check
      _
    $region287: #{tpu_custom_call.1} parent=1 // pred_check_branch
      %553 = sbr.rel (0) target = $region289
    $region288: #{tpu_custom_call.1} parent=1 // pred_region
      %554 = dma.done [#allocation42], 512
    $region289: #{tpu_custom_call.1} parent=1 // pred_fallthru
      _
    // Predicated region
    $region290: #{tpu_custom_call.1} parent=1 // pred_check
      _
    $region291: #{tpu_custom_call.1} parent=1 // pred_check_branch
      %556 = sbr.rel (0) target = $region293
    $region292: #{tpu_custom_call.1} parent=1 // pred_region
      %557 = dma.done [#allocation42], 96
    $region293: #{tpu_custom_call.1} parent=1 // pred_fallthru
      _
    // Predicated region
    $region294: #{tpu_custom_call.1} parent=1 // pred_check
      _
    $region295: #{tpu_custom_call.1} parent=1 // pred_check_branch
      %559 = sbr.rel (0) target = $region297
    $region296: #{tpu_custom_call.1} parent=1 // pred_region
      %560 = dma.done [#allocation45], 16
    $region297: #{tpu_custom_call.1} parent=1 // pred_fallthru
      _
    // Predicated region
    $region298: #{tpu_custom_call.1} parent=1 // pred_check
      _
    $region299: #{tpu_custom_call.1} parent=1 // pred_check_branch
      %562 = sbr.rel (0) target = $region301
    $region300: #{tpu_custom_call.1} parent=1 // pred_region
      %563 = dma.done [#allocation45], 1024
    $region301: #{tpu_custom_call.1} parent=1 // pred_fallthru
      _
    // Predicated region
    $region302: #{tpu_custom_call.1} parent=1 // pred_check
      _
    $region303: #{tpu_custom_call.1} parent=1 // pred_check_branch
      %565 = sbr.rel (0) target = $region305
    $region304: #{tpu_custom_call.1} parent=1 // pred_region
      %566 = dma.done [#allocation48], 3072
    $region305: #{tpu_custom_call.1} parent=1 // pred_fallthru
      _
    %v568 = vld [vmem:[#allocation2] sm:$0xf]
    %v569 = vld [vmem:[#allocation2 + $0x4] sm:$0xf]
    %v570 = vld [vmem:[#allocation2 + $0x8] sm:$0xf]
    %v571 = vld [vmem:[#allocation2 + $0xc] sm:$0xf]
    %v572 = vld [vmem:[#allocation2 + $0x10] sm:$0xf]
    %v573 = vld [vmem:[#allocation2 + $0x14] sm:$0xf]
    %v574 = vld [vmem:[#allocation2 + $0x18] sm:$0xf]
    %v575 = vld [vmem:[#allocation2 + $0x1c] sm:$0xf]
    %v576 = vld [vmem:[#allocation5] sm:$0xff]
    %v577 = vld [vmem:[#allocation5 + $0x8] sm:$0xf]
    %v578 = vld [vmem:[#allocation5 + $0xc] sm:$0xff]
    %v579 = vld [vmem:[#allocation5 + $0x14] sm:$0xf]
    %v580 = vld [vmem:[#allocation5 + $0x18] sm:$0xff]
    %v581 = vld [vmem:[#allocation5 + $0x20] sm:$0xf]
    %v582 = vld [vmem:[#allocation5 + $0x24] sm:$0xff]
    %v583 = vld [vmem:[#allocation5 + $0x2c] sm:$0xf]
    %v584 = vld [vmem:[#allocation5 + $0x30] sm:$0xff]
    %v585 = vld [vmem:[#allocation5 + $0x38] sm:$0xf]
    %v586 = vld [vmem:[#allocation5 + $0x3c] sm:$0xff]
    %v587 = vld [vmem:[#allocation5 + $0x44] sm:$0xf]
    %v588 = vld [vmem:[#allocation5 + $0x48] sm:$0xff]
    %v589 = vld [vmem:[#allocation5 + $0x50] sm:$0xf]
    %v590 = vld [vmem:[#allocation5 + $0x54] sm:$0xff]
    %v591 = vld [vmem:[#allocation5 + $0x5c] sm:$0xf]
    %v592 = vld [vmem:[#allocation5 + $0x60] sm:$0xff]
    %v593 = vld [vmem:[#allocation5 + $0x68] sm:$0xf]
    %v594 = vld [vmem:[#allocation5 + $0x6c] sm:$0xff]
    %v595 = vld [vmem:[#allocation5 + $0x74] sm:$0xf]
    %v596 = vld [vmem:[#allocation5 + $0x78] sm:$0xff]
    %v597 = vld [vmem:[#allocation5 + $0x80] sm:$0xf]
    %v598 = vld [vmem:[#allocation5 + $0x84] sm:$0xff]
    %v599 = vld [vmem:[#allocation5 + $0x8c] sm:$0xf]
    %v608 = vunpack.c.l.b16 %v568
    %v609 = vunpack.c.l.b16 %v569
    %v610 = vunpack.c.l.b16 %v570
    %v611 = vunpack.c.l.b16 %v571
    %v612 = vunpack.c.l.b16 %v572
    %v613 = vunpack.c.l.b16 %v573
    %v614 = vunpack.c.l.b16 %v574
    %v615 = vunpack.c.l.b16 %v575
    %v616 = vpack.c.b16 %v609, %v608
    %v617 = vpack.c.b16 %v611, %v610
    %v618 = vpack.c.b16 %v613, %v612
    %v619 = vpack.c.b16 %v615, %v614
    %v644 = vunpack.c.l.b16 %v576
    %v645 = vunpack.c.h.b16 %v576
    %v646 = vunpack.c.l.b16 %v577
    %v647 = vunpack.c.l.b16 %v578
    %v648 = vunpack.c.h.b16 %v578
    %v649 = vunpack.c.l.b16 %v579
    %v650 = vunpack.c.l.b16 %v580
    %v651 = vunpack.c.h.b16 %v580
    %v652 = vunpack.c.l.b16 %v581
    %v653 = vunpack.c.l.b16 %v582
    %v654 = vunpack.c.h.b16 %v582
    %v655 = vunpack.c.l.b16 %v583
    %v656 = vunpack.c.l.b16 %v584
    %v657 = vunpack.c.h.b16 %v584
    %v658 = vunpack.c.l.b16 %v585
    %v659 = vunpack.c.l.b16 %v586
    %v660 = vunpack.c.h.b16 %v586
    %v661 = vunpack.c.l.b16 %v587
    %v662 = vunpack.c.l.b16 %v588
    %v663 = vunpack.c.h.b16 %v588
    %v664 = vunpack.c.l.b16 %v589
    %v665 = vunpack.c.l.b16 %v590
    %v666 = vunpack.c.h.b16 %v590
    %v667 = vunpack.c.l.b16 %v591
    %v668 = vunpack.c.l.b16 %v592
    %v669 = vunpack.c.h.b16 %v592
    %v670 = vunpack.c.l.b16 %v593
    %v671 = vunpack.c.l.b16 %v594
    %v672 = vunpack.c.h.b16 %v594
    %v673 = vunpack.c.l.b16 %v595
    %v674 = vunpack.c.l.b16 %v596
    %v675 = vunpack.c.h.b16 %v596
    %v676 = vunpack.c.l.b16 %v597
    %v677 = vunpack.c.l.b16 %v598
    %v678 = vunpack.c.h.b16 %v598
    %v679 = vunpack.c.l.b16 %v599
    %v680 = vpack.c.b16 %v647, %v644
    %v681 = vpack.c.b16 %v648, %v645
    %v682 = vpack.c.b16 %v649, %v646
    %v683 = vpack.c.b16 %v653, %v650
    %v684 = vpack.c.b16 %v654, %v651
    %v685 = vpack.c.b16 %v655, %v652
    %v686 = vpack.c.b16 %v659, %v656
    %v687 = vpack.c.b16 %v660, %v657
    %v688 = vpack.c.b16 %v661, %v658
    %v689 = vpack.c.b16 %v665, %v662
    %v690 = vpack.c.b16 %v666, %v663
    %v691 = vpack.c.b16 %v667, %v664
    %v692 = vpack.c.b16 %v671, %v668
    %v693 = vpack.c.b16 %v672, %v669
    %v694 = vpack.c.b16 %v673, %v670
    %v695 = vpack.c.b16 %v677, %v674
    %v696 = vpack.c.b16 %v678, %v675
    %v697 = vpack.c.b16 %v679, %v676
    %vm716 = vcmask 785408
    %v718 = vsel %vm716, %v616, 0
    %v721 = vsel %vm716, %v617, 0
    %v724 = vsel %vm716, %v618, 0
    %v727 = vsel %vm716, %v619, 0
    %729 = vmatprep.subr.bf16.mxu0 %v681
    %730 = vmatpush1.bf16.msra.mxu0 %v680
    %731 = vmatprep.subr.bf16.mxu0 %v684
    %732 = vmatpush1.bf16.msra.mxu0 %v683
    %733 = vmatprep.subr.bf16.mxu0 %v687
    %734 = vmatpush1.bf16.msra.mxu0 %v686
    %735 = vmatprep.subr.bf16.mxu0 %v690
    %736 = vmatpush1.bf16.msra.mxu0 %v689
    %737 = vmatprep.subr.bf16.mxu0 %v693
    %738 = vmatpush1.bf16.msra.mxu0 %v692
    %739 = vmatprep.subr.bf16.mxu0 %v696
    %740 = vmatpush1.bf16.msra.mxu0 %v695
    %741 = vmatprep.subr.bf16.mxu0 0
    %742 = vmatpush1.bf16.msra.mxu0 0
    %743 = vmatprep.subr.bf16.mxu0 0
    %744 = vmatpush1.bf16.msra.mxu0 0
    %745 = vmatprep.subr.bf16.mxu0 0
    %746 = vmatpush1.bf16.msra.mxu0 0
    %747 = vmatprep.subr.bf16.mxu0 0
    %748 = vmatpush1.bf16.msra.mxu0 0
    %749 = vmatprep.subr.bf16.mxu0 0
    %750 = vmatpush1.bf16.msra.mxu0 0
    %751 = vmatprep.subr.bf16.mxu0 0
    %752 = vmatpush1.bf16.msra.mxu0 0
    %753 = vmatprep.subr.bf16.mxu0 0
    %754 = vmatpush1.bf16.msra.mxu0 0
    %755 = vmatprep.subr.bf16.mxu0 0
    %756 = vmatpush1.bf16.msra.mxu0 0
    %757 = vmatprep.subr.bf16.mxu0 0
    %758 = vmatpush1.bf16.msra.mxu0 0
    %759 = vmatprep.subr.bf16.mxu0 0
    %760 = vmatpush1.bf16.msra.mxu0 0
    %761 = vmatprep.mubr.bf16.mxu0 0
    %762 = vmatmul.mubr.bf16.gmra.mrb[0].mxu0 %v718
    %v763 = vpop.f32.mrb[0].mxu0
    %v764 = vadd.f32 0.0, %v763
    %v765 = vpop.f32.mrb[0].mxu0
    %v766 = vadd.f32 0.0, %v765
    %v767 = vpop.f32.mrb[0].mxu0
    %v768 = vadd.f32 0.0, %v767
    %v769 = vpop.f32.mrb[0].mxu0
    %v770 = vadd.f32 0.0, %v769
    %771 = vmatprep.mubr.bf16.mxu0 0
    %772 = vmatmul.mubr.bf16.gmra.mrb[0].mxu0 %v721
    %v773 = vpop.f32.mrb[0].mxu0
    %v774 = vadd.f32 0.0, %v773
    %v775 = vpop.f32.mrb[0].mxu0
    %v776 = vadd.f32 0.0, %v775
    %v777 = vpop.f32.mrb[0].mxu0
    %v778 = vadd.f32 0.0, %v777
    %v779 = vpop.f32.mrb[0].mxu0
    %v780 = vadd.f32 0.0, %v779
    %781 = vmatprep.mubr.bf16.mxu0 0
    %782 = vmatmul.mubr.bf16.gmra.mrb[0].mxu0 %v724
    %v783 = vpop.f32.mrb[0].mxu0
    %v784 = vadd.f32 0.0, %v783
    %v785 = vpop.f32.mrb[0].mxu0
    %v786 = vadd.f32 0.0, %v785
    %v787 = vpop.f32.mrb[0].mxu0
    %v788 = vadd.f32 0.0, %v787
    %v789 = vpop.f32.mrb[0].mxu0
    %v790 = vadd.f32 0.0, %v789
    %791 = vmatprep.mubr.bf16.mxu0 0
    %792 = vmatmul.mubr.bf16.gmra.mrb[0].mxu0 %v727
    %v793 = vpop.f32.mrb[0].mxu0
    %v794 = vadd.f32 0.0, %v793
    %v795 = vpop.f32.mrb[0].mxu0
    %v796 = vadd.f32 0.0, %v795
    %v797 = vpop.f32.mrb[0].mxu0
    %v798 = vadd.f32 0.0, %v797
    %v799 = vpop.f32.mrb[0].mxu0
    %v800 = vadd.f32 0.0, %v799
    %801 = vdwg.mxu0
    %802 = vmatprep.subr.bf16.mxu0 0
    %803 = vmatpush1.bf16.msra.mxu0 %v682
    %804 = vmatprep.subr.bf16.mxu0 0
    %805 = vmatpush1.bf16.msra.mxu0 %v685
    %806 = vmatprep.subr.bf16.mxu0 0
    %807 = vmatpush1.bf16.msra.mxu0 %v688
    %808 = vmatprep.subr.bf16.mxu0 0
    %809 = vmatpush1.bf16.msra.mxu0 %v691
    %810 = vmatprep.subr.bf16.mxu0 0
    %811 = vmatpush1.bf16.msra.mxu0 %v694
    %812 = vmatprep.subr.bf16.mxu0 0
    %813 = vmatpush1.bf16.msra.mxu0 %v697
    %814 = vmatprep.subr.bf16.mxu0 0
    %815 = vmatpush1.bf16.msra.mxu0 0
    %816 = vmatprep.subr.bf16.mxu0 0
    %817 = vmatpush1.bf16.msra.mxu0 0
    %818 = vmatprep.subr.bf16.mxu0 0
    %819 = vmatpush1.bf16.msra.mxu0 0
    %820 = vmatprep.subr.bf16.mxu0 0
    %821 = vmatpush1.bf16.msra.mxu0 0
    %822 = vmatprep.subr.bf16.mxu0 0
    %823 = vmatpush1.bf16.msra.mxu0 0
    %824 = vmatprep.subr.bf16.mxu0 0
    %825 = vmatpush1.bf16.msra.mxu0 0
    %826 = vmatprep.subr.bf16.mxu0 0
    %827 = vmatpush1.bf16.msra.mxu0 0
    %828 = vmatprep.subr.bf16.mxu0 0
    %829 = vmatpush1.bf16.msra.mxu0 0
    %830 = vmatprep.subr.bf16.mxu0 0
    %831 = vmatpush1.bf16.msra.mxu0 0
    %832 = vmatprep.subr.bf16.mxu0 0
    %833 = vmatpush1.bf16.msra.mxu0 0
    %834 = vmatprep.mubr.bf16.mxu0 0
    %835 = vmatmul.mubr.bf16.gmra.mrb[0].mxu0 %v718
    %v836 = vpop.f32.mrb[0].mxu0
    %v837 = vadd.f32 0.0, %v836
    %v838 = vpop.f32.mrb[0].mxu0
    %v839 = vpop.f32.mrb[0].mxu0
    %v840 = vadd.f32 0.0, %v839
    %v841 = vpop.f32.mrb[0].mxu0
    %842 = vmatprep.mubr.bf16.mxu0 0
    %843 = vmatmul.mubr.bf16.gmra.mrb[0].mxu0 %v721
    %v844 = vpop.f32.mrb[0].mxu0
    %v845 = vadd.f32 0.0, %v844
    %v846 = vpop.f32.mrb[0].mxu0
    %v847 = vpop.f32.mrb[0].mxu0
    %v848 = vadd.f32 0.0, %v847
    %v849 = vpop.f32.mrb[0].mxu0
    %850 = vmatprep.mubr.bf16.mxu0 0
    %851 = vmatmul.mubr.bf16.gmra.mrb[0].mxu0 %v724
    %v852 = vpop.f32.mrb[0].mxu0
    %v853 = vadd.f32 0.0, %v852
    %v854 = vpop.f32.mrb[0].mxu0
    %v855 = vpop.f32.mrb[0].mxu0
    %v856 = vadd.f32 0.0, %v855
    %v857 = vpop.f32.mrb[0].mxu0
    %858 = vmatprep.mubr.bf16.mxu0 0
    %859 = vmatmul.mubr.bf16.gmra.mrb[0].mxu0 %v727
    %v860 = vpop.f32.mrb[0].mxu0
    %v861 = vadd.f32 0.0, %v860
    %v862 = vpop.f32.mrb[0].mxu0
    %v863 = vpop.f32.mrb[0].mxu0
    %v864 = vadd.f32 0.0, %v863
    %v865 = vpop.f32.mrb[0].mxu0
    %866 = vdwg.mxu0
    %v867 = vpack.c.bf16 %v768, %v764
    %v868 = vpack.c.bf16 %v770, %v766
    %v869 = vpack.c.bf16 %v840, %v837
    %v870 = vpack.c.bf16 %v778, %v774
    %v871 = vpack.c.bf16 %v780, %v776
    %v872 = vpack.c.bf16 %v848, %v845
    %v873 = vpack.c.bf16 %v788, %v784
    %v874 = vpack.c.bf16 %v790, %v786
    %v875 = vpack.c.bf16 %v856, %v853
    %v876 = vpack.c.bf16 %v798, %v794
    %v877 = vpack.c.bf16 %v800, %v796
    %v878 = vpack.c.bf16 %v864, %v861
    %v879 = vld [vmem:[#allocation7] sm:$0xf]
    %v880 = vld [vmem:[#allocation7 + $0x4] sm:$0xf]
    %v881 = vld [vmem:[#allocation7 + $0x8] sm:$0xf]
    %v882 = vld [vmem:[#allocation7 + $0xc] sm:$0xf]
    %s883 = scalar_lea.vmem [#allocation7], 16
    %v884 = vld [vmem:[%s883] sm:$0xf]
    %v885 = vld [vmem:[%s883 + $0x4] sm:$0xf]
    %v886 = vld [vmem:[%s883 + $0x8] sm:$0xf]
    %v887 = vld [vmem:[%s883 + $0xc] sm:$0xf]
    %v892 = vunpack.c.l.b16 %v884
    %v893 = vunpack.c.l.b16 %v885
    %v894 = vunpack.c.l.b16 %v886
    %v895 = vunpack.c.l.b16 %v887
    %v896 = vpack.c.b16 %v893, %v892
    %v897 = vpack.c.b16 %v895, %v894
    %vm898 = vcmask 523264
    %v900 = vsel %vm898, %v896, 0
    %v903 = vsel %vm898, %v897, 0
    %905 = vmatprep.subr.bf16.mxu0 0
    %906 = vmatpush1.bf16.msra.mxu0 %v868
    %907 = vmatprep.subr.bf16.mxu0 0
    %908 = vmatpush1.bf16.msra.mxu0 %v871
    %909 = vmatprep.subr.bf16.mxu0 0
    %910 = vmatpush1.bf16.msra.mxu0 %v874
    %911 = vmatprep.subr.bf16.mxu0 0
    %912 = vmatpush1.bf16.msra.mxu0 %v877
    %913 = vmatprep.subr.bf16.mxu0 0
    %914 = vmatpush1.bf16.msra.mxu0 0
    %915 = vmatprep.subr.bf16.mxu0 0
    %916 = vmatpush1.bf16.msra.mxu0 0
    %917 = vmatprep.subr.bf16.mxu0 0
    %918 = vmatpush1.bf16.msra.mxu0 0
    %919 = vmatprep.subr.bf16.mxu0 0
    %920 = vmatpush1.bf16.msra.mxu0 0
    %921 = vmatprep.subr.bf16.mxu0 0
    %922 = vmatpush1.bf16.msra.mxu0 0
    %923 = vmatprep.subr.bf16.mxu0 0
    %924 = vmatpush1.bf16.msra.mxu0 0
    %925 = vmatprep.subr.bf16.mxu0 0
    %926 = vmatpush1.bf16.msra.mxu0 0
    %927 = vmatprep.subr.bf16.mxu0 0
    %928 = vmatpush1.bf16.msra.mxu0 0
    %929 = vmatprep.subr.bf16.mxu0 0
    %930 = vmatpush1.bf16.msra.mxu0 0
    %931 = vmatprep.subr.bf16.mxu0 0
    %932 = vmatpush1.bf16.msra.mxu0 0
    %933 = vmatprep.subr.bf16.mxu0 0
    %934 = vmatpush1.bf16.msra.mxu0 0
    %935 = vmatprep.subr.bf16.mxu0 0
    %936 = vmatpush1.bf16.msra.mxu0 0
    %937 = vmatprep.mubr.bf16.mxu0 0
    %938 = vmatmul.mubr.bf16.gmra.mrb[0].mxu0 %v900
    %v939 = vpop.f32.mrb[0].mxu0
    %v940 = vadd.f32 0.0, %v939
    %v941 = vpop.f32.mrb[0].mxu0
    %v942 = vpop.f32.mrb[0].mxu0
    %v943 = vadd.f32 0.0, %v942
    %v944 = vpop.f32.mrb[0].mxu0
    %945 = vmatprep.mubr.bf16.mxu0 0
    %946 = vmatmul.mubr.bf16.gmra.mrb[0].mxu0 %v903
    %v947 = vpop.f32.mrb[0].mxu0
    %v948 = vadd.f32 0.0, %v947
    %v949 = vpop.f32.mrb[0].mxu0
    %v950 = vpop.f32.mrb[0].mxu0
    %v951 = vadd.f32 0.0, %v950
    %v952 = vpop.f32.mrb[0].mxu0
    %953 = vdwg.mxu0
    %v958 = vunpack.c.l.b16 %v879
    %v959 = vunpack.c.l.b16 %v880
    %v960 = vunpack.c.l.b16 %v881
    %v961 = vunpack.c.l.b16 %v882
    %v962 = vpack.c.b16 %v959, %v958
    %v963 = vpack.c.b16 %v961, %v960
    %v965 = vsel %vm898, %v962, 0
    %v968 = vsel %vm898, %v963, 0
    %970 = vmatprep.subr.bf16.mxu0 0
    %971 = vmatpush1.bf16.msra.mxu0 %v867
    %972 = vmatprep.subr.bf16.mxu0 0
    %973 = vmatpush1.bf16.msra.mxu0 %v870
    %974 = vmatprep.subr.bf16.mxu0 0
    %975 = vmatpush1.bf16.msra.mxu0 %v873
    %976 = vmatprep.subr.bf16.mxu0 0
    %977 = vmatpush1.bf16.msra.mxu0 %v876
    %978 = vmatprep.subr.bf16.mxu0 0
    %979 = vmatpush1.bf16.msra.mxu0 0
    %980 = vmatprep.subr.bf16.mxu0 0
    %981 = vmatpush1.bf16.msra.mxu0 0
    %982 = vmatprep.subr.bf16.mxu0 0
    %983 = vmatpush1.bf16.msra.mxu0 0
    %984 = vmatprep.subr.bf16.mxu0 0
    %985 = vmatpush1.bf16.msra.mxu0 0
    %986 = vmatprep.subr.bf16.mxu0 0
    %987 = vmatpush1.bf16.msra.mxu0 0
    %988 = vmatprep.subr.bf16.mxu0 0
    %989 = vmatpush1.bf16.msra.mxu0 0
    %990 = vmatprep.subr.bf16.mxu0 0
    %991 = vmatpush1.bf16.msra.mxu0 0
    %992 = vmatprep.subr.bf16.mxu0 0
    %993 = vmatpush1.bf16.msra.mxu0 0
    %994 = vmatprep.subr.bf16.mxu0 0
    %995 = vmatpush1.bf16.msra.mxu0 0
    %996 = vmatprep.subr.bf16.mxu0 0
    %997 = vmatpush1.bf16.msra.mxu0 0
    %998 = vmatprep.subr.bf16.mxu0 0
    %999 = vmatpush1.bf16.msra.mxu0 0
    %1000 = vmatprep.subr.bf16.mxu0 0
    %1001 = vmatpush1.bf16.msra.mxu0 0
    %1002 = vmatprep.mubr.bf16.mxu0 0
    %1003 = vmatmul.mubr.bf16.gmra.mrb[0].mxu0 %v965
    %v1004 = vpop.f32.mrb[0].mxu0
    %v1005 = vadd.f32 %v940, %v1004
    %v1006 = vpop.f32.mrb[0].mxu0
    %v1007 = vpop.f32.mrb[0].mxu0
    %v1008 = vadd.f32 %v943, %v1007
    %v1009 = vpop.f32.mrb[0].mxu0
    %1010 = vmatprep.mubr.bf16.mxu0 0
    %1011 = vmatmul.mubr.bf16.gmra.mrb[0].mxu0 %v968
    %v1012 = vpop.f32.mrb[0].mxu0
    %v1013 = vadd.f32 %v948, %v1012
    %v1014 = vpop.f32.mrb[0].mxu0
    %v1015 = vpop.f32.mrb[0].mxu0
    %v1016 = vadd.f32 %v951, %v1015
    %v1017 = vpop.f32.mrb[0].mxu0
    %1018 = vdwg.mxu0
    %s1019 = scalar_lea.vmem [#allocation7], 32
    %v1020 = vld [vmem:[%s1019] sm:$0xf]
    %v1021 = vld [vmem:[%s1019 + $0x4] sm:$0xf]
    %v1022 = vld [vmem:[%s1019 + $0x8] sm:$0xf]
    %v1023 = vld [vmem:[%s1019 + $0xc] sm:$0xf]
    %v1028 = vunpack.c.l.b16 %v1020
    %v1029 = vunpack.c.l.b16 %v1021
    %v1030 = vunpack.c.l.b16 %v1022
    %v1031 = vunpack.c.l.b16 %v1023
    %v1032 = vpack.c.b16 %v1029, %v1028
    %v1033 = vpack.c.b16 %v1031, %v1030
    %v1035 = vsel %vm898, %v1032, 0
    %v1038 = vsel %vm898, %v1033, 0
    %1040 = vmatprep.subr.bf16.mxu0 0
    %1041 = vmatpush1.bf16.msra.mxu0 %v869
    %1042 = vmatprep.subr.bf16.mxu0 0
    %1043 = vmatpush1.bf16.msra.mxu0 %v872
    %1044 = vmatprep.subr.bf16.mxu0 0
    %1045 = vmatpush1.bf16.msra.mxu0 %v875
    %1046 = vmatprep.subr.bf16.mxu0 0
    %1047 = vmatpush1.bf16.msra.mxu0 %v878
    %1048 = vmatprep.subr.bf16.mxu0 0
    %1049 = vmatpush1.bf16.msra.mxu0 0
    %1050 = vmatprep.subr.bf16.mxu0 0
    %1051 = vmatpush1.bf16.msra.mxu0 0
    %1052 = vmatprep.subr.bf16.mxu0 0
    %1053 = vmatpush1.bf16.msra.mxu0 0
    %1054 = vmatprep.subr.bf16.mxu0 0
    %1055 = vmatpush1.bf16.msra.mxu0 0
    %1056 = vmatprep.subr.bf16.mxu0 0
    %1057 = vmatpush1.bf16.msra.mxu0 0
    %1058 = vmatprep.subr.bf16.mxu0 0
    %1059 = vmatpush1.bf16.msra.mxu0 0
    %1060 = vmatprep.subr.bf16.mxu0 0
    %1061 = vmatpush1.bf16.msra.mxu0 0
    %1062 = vmatprep.subr.bf16.mxu0 0
    %1063 = vmatpush1.bf16.msra.mxu0 0
    %1064 = vmatprep.subr.bf16.mxu0 0
    %1065 = vmatpush1.bf16.msra.mxu0 0
    %1066 = vmatprep.subr.bf16.mxu0 0
    %1067 = vmatpush1.bf16.msra.mxu0 0
    %1068 = vmatprep.subr.bf16.mxu0 0
    %1069 = vmatpush1.bf16.msra.mxu0 0
    %1070 = vmatprep.subr.bf16.mxu0 0
    %1071 = vmatpush1.bf16.msra.mxu0 0
    %1072 = vmatprep.mubr.bf16.mxu0 0
    %1073 = vmatmul.mubr.bf16.gmra.mrb[0].mxu0 %v1035
    %v1074 = vpop.f32.mrb[0].mxu0
    %v1075 = vadd.f32 0.0, %v1074
    %v1076 = vpop.f32.mrb[0].mxu0
    %v1077 = vpop.f32.mrb[0].mxu0
    %v1078 = vadd.f32 0.0, %v1077
    %v1079 = vpop.f32.mrb[0].mxu0
    %1080 = vmatprep.mubr.bf16.mxu0 0
    %1081 = vmatmul.mubr.bf16.gmra.mrb[0].mxu0 %v1038
    %v1082 = vpop.f32.mrb[0].mxu0
    %v1083 = vadd.f32 0.0, %v1082
    %v1084 = vpop.f32.mrb[0].mxu0
    %v1085 = vpop.f32.mrb[0].mxu0
    %v1086 = vadd.f32 0.0, %v1085
    %v1087 = vpop.f32.mrb[0].mxu0
    %1088 = vdwg.mxu0
    %v1089 = vadd.f32 %v1005, %v1075
    %v1090 = vadd.f32 %v1008, %v1078
    %v1091 = vadd.f32 %v1013, %v1083
    %v1092 = vadd.f32 %v1016, %v1086
    %v1093 = vld [vmem:[#allocation8] sm:$0x1]
    %v1095 = vlaneseq
    %v1096 = vshrl.u32 %v1095, 7
    %v1097 = vsub.s32 0, %v1096
    %v1098 = vrot.slane %v1093, %v1097
    %v1100 = vadd.f32 %v1089, %v1098
    %v1101 = vadd.f32 %v1090, %v1098
    %v1102 = vadd.f32 %v1091, %v1098
    %v1103 = vadd.f32 %v1092, %v1098
    %v1104 = vmax.f32 %v1100, 0.0
    %v1105 = vmax.f32 %v1101, 0.0
    %v1106 = vmax.f32 %v1102, 0.0
    %v1107 = vmax.f32 %v1103, 0.0
    %v1108 = vadd.f32 %v1104, %v1105
    %v1109 = vadd.f32 %v1108, %v1106
    %v1110 = vadd.f32 %v1109, %v1107
    %v1111 = vrot.slane %v1110, 4
    %v1112 = vadd.f32 %v1110, %v1111
    %v1113 = vrot.slane %v1112, 2
    %v1114 = vadd.f32 %v1112, %v1113
    %v1115 = vrot.slane %v1114, 1
    %v1116 = vadd.f32 %v1114, %v1115
    %v1117 = vmul.f32 %v1104, %v1104
    %v1118 = vmul.f32 %v1105, %v1105
    %v1119 = vmul.f32 %v1106, %v1106
    %v1120 = vmul.f32 %v1107, %v1107
    %v1121 = vadd.f32 %v1117, %v1118
    %v1122 = vadd.f32 %v1121, %v1119
    %v1123 = vadd.f32 %v1122, %v1120
    %v1124 = vrot.slane %v1123, 4
    %v1125 = vadd.f32 %v1123, %v1124
    %v1126 = vrot.slane %v1125, 2
    %v1127 = vadd.f32 %v1125, %v1126
    %v1128 = vrot.slane %v1127, 1
    %v1129 = vadd.f32 %v1127, %v1128
    %vm1130 = vcmask 1040384
    %v1131 = vsel %vm1130, %v1116, %v1129
    %v1132 = vld [vmem:[%s11] sm:$0xff]
    %v1133 = vld [vmem:[%s11 + $0x8] sm:$0xff]
    %v1134 = vld [vmem:[%s11 + $0x10] sm:$0xff]
    %v1135 = vld [vmem:[%s11 + $0x18] sm:$0xff]
    %v1136 = vld [vmem:[%s11 + $0x20] sm:$0xff]
    %v1137 = vld [vmem:[%s11 + $0x28] sm:$0xff]
    %v1138 = vld [vmem:[%s11 + $0x30] sm:$0xff]
    %v1139 = vld [vmem:[%s11 + $0x38] sm:$0xff]
    %v1140 = vld [vmem:[%s11 + $0x40] sm:$0xff]
    %v1141 = vld [vmem:[%s11 + $0x48] sm:$0xff]
    %v1142 = vld [vmem:[%s11 + $0x50] sm:$0xff]
    %v1143 = vld [vmem:[%s11 + $0x58] sm:$0xff]
    %v1144 = vld [vmem:[%s11 + $0x60] sm:$0xff]
    %v1145 = vld [vmem:[%s11 + $0x68] sm:$0xff]
    %v1146 = vld [vmem:[%s11 + $0x70] sm:$0xff]
    %v1147 = vld [vmem:[%s11 + $0x78] sm:$0xff]
    %1148 = vmatprep.subr.mxu0 0.0
    %1149 = vmatpush1.msra.mxu0 %v1132
    %1150 = vmatprep.subr.mxu0 0.0
    %1151 = vmatpush1.msra.mxu0 %v1133
    %1152 = vmatprep.subr.mxu0 0.0
    %1153 = vmatpush1.msra.mxu0 %v1134
    %1154 = vmatprep.subr.mxu0 0.0
    %1155 = vmatpush1.msra.mxu0 %v1135
    %1156 = vmatprep.subr.mxu0 0.0
    %1157 = vmatpush1.msra.mxu0 %v1136
    %1158 = vmatprep.subr.mxu0 0.0
    %1159 = vmatpush1.msra.mxu0 %v1137
    %1160 = vmatprep.subr.mxu0 0.0
    %1161 = vmatpush1.msra.mxu0 %v1138
    %1162 = vmatprep.subr.mxu0 0.0
    %1163 = vmatpush1.msra.mxu0 %v1139
    %1164 = vmatprep.subr.mxu0 0.0
    %1165 = vmatpush1.msra.mxu0 %v1140
    %1166 = vmatprep.subr.mxu0 0.0
    %1167 = vmatpush1.msra.mxu0 %v1141
    %1168 = vmatprep.subr.mxu0 0.0
    %1169 = vmatpush1.msra.mxu0 %v1142
    %1170 = vmatprep.subr.mxu0 0.0
    %1171 = vmatpush1.msra.mxu0 %v1143
    %1172 = vmatprep.subr.mxu0 0.0
    %1173 = vmatpush1.msra.mxu0 %v1144
    %1174 = vmatprep.subr.mxu0 0.0
    %1175 = vmatpush1.msra.mxu0 %v1145
    %1176 = vmatprep.subr.mxu0 0.0
    %1177 = vmatpush1.msra.mxu0 %v1146
    %1178 = vmatprep.subr.mxu0 0.0
    %1179 = vmatpush1.msra.mxu0 %v1147
    %1180 = vmatprep.subr.mxu0 0.0
    %1181 = vmatpush1.msra.mxu0 0.0
    %1182 = vmatprep.subr.mxu0 0.0
    %1183 = vmatpush1.msra.mxu0 0.0
    %1184 = vmatprep.subr.mxu0 0.0
    %1185 = vmatpush1.msra.mxu0 0.0
    %1186 = vmatprep.subr.mxu0 0.0
    %1187 = vmatpush1.msra.mxu0 0.0
    %1188 = vmatprep.subr.mxu0 0.0
    %1189 = vmatpush1.msra.mxu0 0.0
    %1190 = vmatprep.subr.mxu0 0.0
    %1191 = vmatpush1.msra.mxu0 0.0
    %1192 = vmatprep.subr.mxu0 0.0
    %1193 = vmatpush1.msra.mxu0 0.0
    %1194 = vmatprep.subr.mxu0 0.0
    %1195 = vmatpush1.msra.mxu0 0.0
    %1196 = vmatprep.subr.mxu0 0.0
    %1197 = vmatpush1.msra.mxu0 0.0
    %1198 = vmatprep.subr.mxu0 0.0
    %1199 = vmatpush1.msra.mxu0 0.0
    %1200 = vmatprep.subr.mxu0 0.0
    %1201 = vmatpush1.msra.mxu0 0.0
    %1202 = vmatprep.subr.mxu0 0.0
    %1203 = vmatpush1.msra.mxu0 0.0
    %1204 = vmatprep.subr.mxu0 0.0
    %1205 = vmatpush1.msra.mxu0 0.0
    %1206 = vmatprep.subr.mxu0 0.0
    %1207 = vmatpush1.msra.mxu0 0.0
    %1208 = vmatprep.subr.mxu0 0.0
    %1209 = vmatpush1.msra.mxu0 0.0
    %1210 = vmatprep.subr.mxu0 0.0
    %1211 = vmatpush1.msra.mxu0 0.0
    %1212 = vmatprep.mubr.f32.mxu0 0.0
    %1213 = vmatmul.mubr.f32.gmra.mrb[0].mxu0 %v1131
    %v1214 = vpop.f32.mrb[0].mxu0
    %v1215 = vadd.f32 0.0, %v1214
    %v1216 = vpop.f32.mrb[0].mxu0
    %1217 = vdwg.mxu0
    %v1218 = vmul.f32 %v1215, 0.001953125
    %v1219 = vmul.f32 %v1218, %v1218
    %v1221 = vrot.slane %v1219, 7
    %v1223 = vsub.f32 %v1218, %v1221
    %v1224 = vld [vmem:[#allocation10] sm:$0x3]
    %v1225 = vadd.f32 %v1223, 1e-05
    %v1226 = vrsqrt.pop %v1225
    %v1228 = vrot.slane %v1226, 1
    %v1230 = vmul.f32 %v1224, %v1228
    %v1231 = vmul.f32 %v1218, %v1230
    %v1233 = vrot.slane %v1231, 7
    %v1235 = vsub.f32 %v1224, %v1233
    %v1236 = vsel %vm1130, %v1230, %v1235
    %v1237 = vld [vmem:[#allocation11] sm:$0xff]
    %vm1238 = vcmask 64512
    %v1240 = vsel %vm1238, %v1236, 0
    %1242 = vmatprep.subr.mxu0 0.0
    %1243 = vmatpush1.msra.mxu0 %v1237
    %1244 = vmatprep.subr.mxu0 0.0
    %1245 = vmatpush1.msra.mxu0 0.0
    %1246 = vmatprep.subr.mxu0 0.0
    %1247 = vmatpush1.msra.mxu0 0.0
    %1248 = vmatprep.subr.mxu0 0.0
    %1249 = vmatpush1.msra.mxu0 0.0
    %1250 = vmatprep.subr.mxu0 0.0
    %1251 = vmatpush1.msra.mxu0 0.0
    %1252 = vmatprep.subr.mxu0 0.0
    %1253 = vmatpush1.msra.mxu0 0.0
    %1254 = vmatprep.subr.mxu0 0.0
    %1255 = vmatpush1.msra.mxu0 0.0
    %1256 = vmatprep.subr.mxu0 0.0
    %1257 = vmatpush1.msra.mxu0 0.0
    %1258 = vmatprep.subr.mxu0 0.0
    %1259 = vmatpush1.msra.mxu0 0.0
    %1260 = vmatprep.subr.mxu0 0.0
    %1261 = vmatpush1.msra.mxu0 0.0
    %1262 = vmatprep.subr.mxu0 0.0
    %1263 = vmatpush1.msra.mxu0 0.0
    %1264 = vmatprep.subr.mxu0 0.0
    %1265 = vmatpush1.msra.mxu0 0.0
    %1266 = vmatprep.subr.mxu0 0.0
    %1267 = vmatpush1.msra.mxu0 0.0
    %1268 = vmatprep.subr.mxu0 0.0
    %1269 = vmatpush1.msra.mxu0 0.0
    %1270 = vmatprep.subr.mxu0 0.0
    %1271 = vmatpush1.msra.mxu0 0.0
    %1272 = vmatprep.subr.mxu0 0.0
    %1273 = vmatpush1.msra.mxu0 0.0
    %1274 = vmatprep.subr.mxu0 0.0
    %1275 = vmatpush1.msra.mxu0 0.0
    %1276 = vmatprep.subr.mxu0 0.0
    %1277 = vmatpush1.msra.mxu0 0.0
    %1278 = vmatprep.subr.mxu0 0.0
    %1279 = vmatpush1.msra.mxu0 0.0
    %1280 = vmatprep.subr.mxu0 0.0
    %1281 = vmatpush1.msra.mxu0 0.0
    %1282 = vmatprep.subr.mxu0 0.0
    %1283 = vmatpush1.msra.mxu0 0.0
    %1284 = vmatprep.subr.mxu0 0.0
    %1285 = vmatpush1.msra.mxu0 0.0
    %1286 = vmatprep.subr.mxu0 0.0
    %1287 = vmatpush1.msra.mxu0 0.0
    %1288 = vmatprep.subr.mxu0 0.0
    %1289 = vmatpush1.msra.mxu0 0.0
    %1290 = vmatprep.subr.mxu0 0.0
    %1291 = vmatpush1.msra.mxu0 0.0
    %1292 = vmatprep.subr.mxu0 0.0
    %1293 = vmatpush1.msra.mxu0 0.0
    %1294 = vmatprep.subr.mxu0 0.0
    %1295 = vmatpush1.msra.mxu0 0.0
    %1296 = vmatprep.subr.mxu0 0.0
    %1297 = vmatpush1.msra.mxu0 0.0
    %1298 = vmatprep.subr.mxu0 0.0
    %1299 = vmatpush1.msra.mxu0 0.0
    %1300 = vmatprep.subr.mxu0 0.0
    %1301 = vmatpush1.msra.mxu0 0.0
    %1302 = vmatprep.subr.mxu0 0.0
    %1303 = vmatpush1.msra.mxu0 0.0
    %1304 = vmatprep.subr.mxu0 0.0
    %1305 = vmatpush1.msra.mxu0 0.0
    %1306 = vmatprep.mubr.f32.mxu0 0.0
    %1307 = vmatmul.mubr.f32.gmra.mrb[0].mxu0 %v1240
    %v1308 = vpop.f32.mrb[0].mxu0
    %v1309 = vadd.f32 0.0, %v1308
    %v1310 = vpop.f32.mrb[0].mxu0
    %1311 = vdwg.mxu0
    %v1312 = vlaneseq
    %v1313 = vshrl.u32 %v1312, 7
    %v1314 = vsub.s32 0, %v1313
    %v1315 = vrot.slane %v1309, %v1314
    %v1316 = vmul.f32 %v1104, %v1315
    %v1317 = vmul.f32 %v1105, %v1315
    %v1318 = vmul.f32 %v1106, %v1315
    %v1319 = vmul.f32 %v1107, %v1315
    %v1320 = vlaneseq
    %v1321 = vshrl.u32 %v1320, 7
    %v1322 = vsub.s32 1, %v1321
    %v1323 = vrot.slane %v1309, %v1322
    %v1324 = vadd.f32 %v1316, %v1323
    %v1325 = vadd.f32 %v1317, %v1323
    %v1326 = vadd.f32 %v1318, %v1323
    %v1327 = vadd.f32 %v1319, %v1323
    %v1328 = vpack.c.bf16 %v1325, %v1324
    %v1329 = vpack.c.bf16 %v1327, %v1326
    %v1330 = vld [vmem:[%s15] sm:$0xff]
    %v1331 = vld [vmem:[%s15 + $0x8] sm:$0xf]
    %v1332 = vld [vmem:[%s15 + $0xc] sm:$0xff]
    %v1333 = vld [vmem:[%s15 + $0x14] sm:$0xf]
    %v1334 = vld [vmem:[%s15 + $0x18] sm:$0xff]
    %v1335 = vld [vmem:[%s15 + $0x20] sm:$0xf]
    %v1336 = vld [vmem:[%s15 + $0x24] sm:$0xff]
    %v1337 = vld [vmem:[%s15 + $0x2c] sm:$0xf]
    %v1338 = vld [vmem:[%s15 + $0x30] sm:$0xff]
    %v1339 = vld [vmem:[%s15 + $0x38] sm:$0xf]
    %v1340 = vld [vmem:[%s15 + $0x3c] sm:$0xff]
    %v1341 = vld [vmem:[%s15 + $0x44] sm:$0xf]
    %v1342 = vld [vmem:[%s15 + $0x48] sm:$0xff]
    %v1343 = vld [vmem:[%s15 + $0x50] sm:$0xf]
    %v1344 = vld [vmem:[%s15 + $0x54] sm:$0xff]
    %v1345 = vld [vmem:[%s15 + $0x5c] sm:$0xf]
    %v1346 = vld [vmem:[%s15 + $0x60] sm:$0xff]
    %v1347 = vld [vmem:[%s15 + $0x68] sm:$0xf]
    %v1348 = vld [vmem:[%s15 + $0x6c] sm:$0xff]
    %v1349 = vld [vmem:[%s15 + $0x74] sm:$0xf]
    %v1350 = vld [vmem:[%s15 + $0x78] sm:$0xff]
    %v1351 = vld [vmem:[%s15 + $0x80] sm:$0xf]
    %v1352 = vld [vmem:[%s15 + $0x84] sm:$0xff]
    %v1353 = vld [vmem:[%s15 + $0x8c] sm:$0xf]
    %v1354 = vld [vmem:[%s15 + $0x90] sm:$0xff]
    %v1355 = vld [vmem:[%s15 + $0x98] sm:$0xf]
    %v1356 = vld [vmem:[%s15 + $0x9c] sm:$0xff]
    %v1357 = vld [vmem:[%s15 + $0xa4] sm:$0xf]
    %v1358 = vld [vmem:[%s15 + $0xa8] sm:$0xff]
    %v1359 = vld [vmem:[%s15 + $0xb0] sm:$0xf]
    %v1360 = vld [vmem:[%s15 + $0xb4] sm:$0xff]
    %v1361 = vld [vmem:[%s15 + $0xbc] sm:$0xf]
    %v1394 = vunpack.c.l.b16 %v1330
    %v1395 = vunpack.c.h.b16 %v1330
    %v1396 = vunpack.c.l.b16 %v1331
    %v1397 = vunpack.c.l.b16 %v1332
    %v1398 = vunpack.c.h.b16 %v1332
    %v1399 = vunpack.c.l.b16 %v1333
    %v1400 = vunpack.c.l.b16 %v1334
    %v1401 = vunpack.c.h.b16 %v1334
    %v1402 = vunpack.c.l.b16 %v1335
    %v1403 = vunpack.c.l.b16 %v1336
    %v1404 = vunpack.c.h.b16 %v1336
    %v1405 = vunpack.c.l.b16 %v1337
    %v1406 = vunpack.c.l.b16 %v1338
    %v1407 = vunpack.c.h.b16 %v1338
    %v1408 = vunpack.c.l.b16 %v1339
    %v1409 = vunpack.c.l.b16 %v1340
    %v1410 = vunpack.c.h.b16 %v1340
    %v1411 = vunpack.c.l.b16 %v1341
    %v1412 = vunpack.c.l.b16 %v1342
    %v1413 = vunpack.c.h.b16 %v1342
    %v1414 = vunpack.c.l.b16 %v1343
    %v1415 = vunpack.c.l.b16 %v1344
    %v1416 = vunpack.c.h.b16 %v1344
    %v1417 = vunpack.c.l.b16 %v1345
    %v1418 = vunpack.c.l.b16 %v1346
    %v1419 = vunpack.c.h.b16 %v1346
    %v1420 = vunpack.c.l.b16 %v1347
    %v1421 = vunpack.c.l.b16 %v1348
    %v1422 = vunpack.c.h.b16 %v1348
    %v1423 = vunpack.c.l.b16 %v1349
    %v1424 = vunpack.c.l.b16 %v1350
    %v1425 = vunpack.c.h.b16 %v1350
    %v1426 = vunpack.c.l.b16 %v1351
    %v1427 = vunpack.c.l.b16 %v1352
    %v1428 = vunpack.c.h.b16 %v1352
    %v1429 = vunpack.c.l.b16 %v1353
    %v1430 = vunpack.c.l.b16 %v1354
    %v1431 = vunpack.c.h.b16 %v1354
    %v1432 = vunpack.c.l.b16 %v1355
    %v1433 = vunpack.c.l.b16 %v1356
    %v1434 = vunpack.c.h.b16 %v1356
    %v1435 = vunpack.c.l.b16 %v1357
    %v1436 = vunpack.c.l.b16 %v1358
    %v1437 = vunpack.c.h.b16 %v1358
    %v1438 = vunpack.c.l.b16 %v1359
    %v1439 = vunpack.c.l.b16 %v1360
    %v1440 = vunpack.c.h.b16 %v1360
    %v1441 = vunpack.c.l.b16 %v1361
    %v1442 = vpack.c.b16 %v1397, %v1394
    %v1443 = vpack.c.b16 %v1398, %v1395
    %v1444 = vpack.c.b16 %v1399, %v1396
    %v1445 = vpack.c.b16 %v1403, %v1400
    %v1446 = vpack.c.b16 %v1404, %v1401
    %v1447 = vpack.c.b16 %v1405, %v1402
    %v1448 = vpack.c.b16 %v1409, %v1406
    %v1449 = vpack.c.b16 %v1410, %v1407
    %v1450 = vpack.c.b16 %v1411, %v1408
    %v1451 = vpack.c.b16 %v1415, %v1412
    %v1452 = vpack.c.b16 %v1416, %v1413
    %v1453 = vpack.c.b16 %v1417, %v1414
    %v1454 = vpack.c.b16 %v1421, %v1418
    %v1455 = vpack.c.b16 %v1422, %v1419
    %v1456 = vpack.c.b16 %v1423, %v1420
    %v1457 = vpack.c.b16 %v1427, %v1424
    %v1458 = vpack.c.b16 %v1428, %v1425
    %v1459 = vpack.c.b16 %v1429, %v1426
    %v1460 = vpack.c.b16 %v1433, %v1430
    %v1461 = vpack.c.b16 %v1434, %v1431
    %v1462 = vpack.c.b16 %v1435, %v1432
    %v1463 = vpack.c.b16 %v1439, %v1436
    %v1464 = vpack.c.b16 %v1440, %v1437
    %v1465 = vpack.c.b16 %v1441, %v1438
    %1490 = vmatprep.subr.bf16.mxu0 %v1443
    %1491 = vmatpush1.bf16.msra.mxu0 %v1442
    %1492 = vmatprep.subr.bf16.mxu0 %v1446
    %1493 = vmatpush1.bf16.msra.mxu0 %v1445
    %1494 = vmatprep.subr.bf16.mxu0 %v1449
    %1495 = vmatpush1.bf16.msra.mxu0 %v1448
    %1496 = vmatprep.subr.bf16.mxu0 %v1452
    %1497 = vmatpush1.bf16.msra.mxu0 %v1451
    %1498 = vmatprep.subr.bf16.mxu0 %v1455
    %1499 = vmatpush1.bf16.msra.mxu0 %v1454
    %1500 = vmatprep.subr.bf16.mxu0 %v1458
    %1501 = vmatpush1.bf16.msra.mxu0 %v1457
    %1502 = vmatprep.subr.bf16.mxu0 %v1461
    %1503 = vmatpush1.bf16.msra.mxu0 %v1460
    %1504 = vmatprep.subr.bf16.mxu0 %v1464
    %1505 = vmatpush1.bf16.msra.mxu0 %v1463
    %1506 = vmatprep.subr.bf16.mxu0 0
    %1507 = vmatpush1.bf16.msra.mxu0 0
    %1508 = vmatprep.subr.bf16.mxu0 0
    %1509 = vmatpush1.bf16.msra.mxu0 0
    %1510 = vmatprep.subr.bf16.mxu0 0
    %1511 = vmatpush1.bf16.msra.mxu0 0
    %1512 = vmatprep.subr.bf16.mxu0 0
    %1513 = vmatpush1.bf16.msra.mxu0 0
    %1514 = vmatprep.subr.bf16.mxu0 0
    %1515 = vmatpush1.bf16.msra.mxu0 0
    %1516 = vmatprep.subr.bf16.mxu0 0
    %1517 = vmatpush1.bf16.msra.mxu0 0
    %1518 = vmatprep.subr.bf16.mxu0 0
    %1519 = vmatpush1.bf16.msra.mxu0 0
    %1520 = vmatprep.subr.bf16.mxu0 0
    %1521 = vmatpush1.bf16.msra.mxu0 0
    %1522 = vmatprep.mubr.bf16.mxu0 0
    %1523 = vmatmul.mubr.bf16.gmra.mrb[0].mxu0 %v1328
    %v1524 = vpop.f32.mrb[0].mxu0
    %v1525 = vadd.f32 0.0, %v1524
    %v1526 = vpop.f32.mrb[0].mxu0
    %v1527 = vadd.f32 0.0, %v1526
    %v1528 = vpop.f32.mrb[0].mxu0
    %v1529 = vadd.f32 0.0, %v1528
    %v1530 = vpop.f32.mrb[0].mxu0
    %v1531 = vadd.f32 0.0, %v1530
    %1532 = vmatprep.mubr.bf16.mxu0 0
    %1533 = vmatmul.mubr.bf16.gmra.mrb[0].mxu0 %v1329
    %v1534 = vpop.f32.mrb[0].mxu0
    %v1535 = vadd.f32 0.0, %v1534
    %v1536 = vpop.f32.mrb[0].mxu0
    %v1537 = vadd.f32 0.0, %v1536
    %v1538 = vpop.f32.mrb[0].mxu0
    %v1539 = vadd.f32 0.0, %v1538
    %v1540 = vpop.f32.mrb[0].mxu0
    %v1541 = vadd.f32 0.0, %v1540
    %1542 = vdwg.mxu0
    %1543 = vmatprep.subr.bf16.mxu0 0
    %1544 = vmatpush1.bf16.msra.mxu0 %v1444
    %1545 = vmatprep.subr.bf16.mxu0 0
    %1546 = vmatpush1.bf16.msra.mxu0 %v1447
    %1547 = vmatprep.subr.bf16.mxu0 0
    %1548 = vmatpush1.bf16.msra.mxu0 %v1450
    %1549 = vmatprep.subr.bf16.mxu0 0
    %1550 = vmatpush1.bf16.msra.mxu0 %v1453
    %1551 = vmatprep.subr.bf16.mxu0 0
    %1552 = vmatpush1.bf16.msra.mxu0 %v1456
    %1553 = vmatprep.subr.bf16.mxu0 0
    %1554 = vmatpush1.bf16.msra.mxu0 %v1459
    %1555 = vmatprep.subr.bf16.mxu0 0
    %1556 = vmatpush1.bf16.msra.mxu0 %v1462
    %1557 = vmatprep.subr.bf16.mxu0 0
    %1558 = vmatpush1.bf16.msra.mxu0 %v1465
    %1559 = vmatprep.subr.bf16.mxu0 0
    %1560 = vmatpush1.bf16.msra.mxu0 0
    %1561 = vmatprep.subr.bf16.mxu0 0
    %1562 = vmatpush1.bf16.msra.mxu0 0
    %1563 = vmatprep.subr.bf16.mxu0 0
    %1564 = vmatpush1.bf16.msra.mxu0 0
    %1565 = vmatprep.subr.bf16.mxu0 0
    %1566 = vmatpush1.bf16.msra.mxu0 0
    %1567 = vmatprep.subr.bf16.mxu0 0
    %1568 = vmatpush1.bf16.msra.mxu0 0
    %1569 = vmatprep.subr.bf16.mxu0 0
    %1570 = vmatpush1.bf16.msra.mxu0 0
    %1571 = vmatprep.subr.bf16.mxu0 0
    %1572 = vmatpush1.bf16.msra.mxu0 0
    %1573 = vmatprep.subr.bf16.mxu0 0
    %1574 = vmatpush1.bf16.msra.mxu0 0
    %1575 = vmatprep.mubr.bf16.mxu0 0
    %1576 = vmatmul.mubr.bf16.gmra.mrb[0].mxu0 %v1328
    %v1577 = vpop.f32.mrb[0].mxu0
    %v1578 = vadd.f32 0.0, %v1577
    %v1579 = vpop.f32.mrb[0].mxu0
    %v1580 = vpop.f32.mrb[0].mxu0
    %v1581 = vadd.f32 0.0, %v1580
    %v1582 = vpop.f32.mrb[0].mxu0
    %1583 = vmatprep.mubr.bf16.mxu0 0
    %1584 = vmatmul.mubr.bf16.gmra.mrb[0].mxu0 %v1329
    %v1585 = vpop.f32.mrb[0].mxu0
    %v1586 = vadd.f32 0.0, %v1585
    %v1587 = vpop.f32.mrb[0].mxu0
    %v1588 = vpop.f32.mrb[0].mxu0
    %v1589 = vadd.f32 0.0, %v1588
    %v1590 = vpop.f32.mrb[0].mxu0
    %1591 = vdwg.mxu0
    %v1592 = vpack.c.bf16 %v1529, %v1525
    %v1593 = vpack.c.bf16 %v1531, %v1527
    %v1594 = vpack.c.bf16 %v1581, %v1578
    %v1595 = vpack.c.bf16 %v1539, %v1535
    %v1596 = vpack.c.bf16 %v1541, %v1537
    %v1597 = vpack.c.bf16 %v1589, %v1586
    %v1598 = vld [vmem:[#allocation13] sm:$0xf]
    %v1599 = vld [vmem:[#allocation13 + $0x4] sm:$0xf]
    %v1600 = vld [vmem:[#allocation13 + $0x8] sm:$0xf]
    %v1601 = vld [vmem:[#allocation13 + $0xc] sm:$0xf]
    %s1602 = scalar_lea.vmem [#allocation13], 16
    %v1603 = vld [vmem:[%s1602] sm:$0xf]
    %v1604 = vld [vmem:[%s1602 + $0x4] sm:$0xf]
    %v1605 = vld [vmem:[%s1602 + $0x8] sm:$0xf]
    %v1606 = vld [vmem:[%s1602 + $0xc] sm:$0xf]
    %v1611 = vunpack.c.l.b16 %v1603
    %v1612 = vunpack.c.l.b16 %v1604
    %v1613 = vunpack.c.l.b16 %v1605
    %v1614 = vunpack.c.l.b16 %v1606
    %v1615 = vpack.c.b16 %v1612, %v1611
    %v1616 = vpack.c.b16 %v1614, %v1613
    %vm1617 = vcmask 261120
    %v1619 = vsel %vm1617, %v1615, 0
    %v1622 = vsel %vm1617, %v1616, 0
    %1624 = vmatprep.subr.bf16.mxu0 0
    %1625 = vmatpush1.bf16.msra.mxu0 %v1593
    %1626 = vmatprep.subr.bf16.mxu0 0
    %1627 = vmatpush1.bf16.msra.mxu0 %v1596
    %1628 = vmatprep.subr.bf16.mxu0 0
    %1629 = vmatpush1.bf16.msra.mxu0 0
    %1630 = vmatprep.subr.bf16.mxu0 0
    %1631 = vmatpush1.bf16.msra.mxu0 0
    %1632 = vmatprep.subr.bf16.mxu0 0
    %1633 = vmatpush1.bf16.msra.mxu0 0
    %1634 = vmatprep.subr.bf16.mxu0 0
    %1635 = vmatpush1.bf16.msra.mxu0 0
    %1636 = vmatprep.subr.bf16.mxu0 0
    %1637 = vmatpush1.bf16.msra.mxu0 0
    %1638 = vmatprep.subr.bf16.mxu0 0
    %1639 = vmatpush1.bf16.msra.mxu0 0
    %1640 = vmatprep.subr.bf16.mxu0 0
    %1641 = vmatpush1.bf16.msra.mxu0 0
    %1642 = vmatprep.subr.bf16.mxu0 0
    %1643 = vmatpush1.bf16.msra.mxu0 0
    %1644 = vmatprep.subr.bf16.mxu0 0
    %1645 = vmatpush1.bf16.msra.mxu0 0
    %1646 = vmatprep.subr.bf16.mxu0 0
    %1647 = vmatpush1.bf16.msra.mxu0 0
    %1648 = vmatprep.subr.bf16.mxu0 0
    %1649 = vmatpush1.bf16.msra.mxu0 0
    %1650 = vmatprep.subr.bf16.mxu0 0
    %1651 = vmatpush1.bf16.msra.mxu0 0
    %1652 = vmatprep.subr.bf16.mxu0 0
    %1653 = vmatpush1.bf16.msra.mxu0 0
    %1654 = vmatprep.subr.bf16.mxu0 0
    %1655 = vmatpush1.bf16.msra.mxu0 0
    %1656 = vmatprep.mubr.bf16.mxu0 0
    %1657 = vmatmul.mubr.bf16.gmra.mrb[0].mxu0 %v1619
    %v1658 = vpop.f32.mrb[0].mxu0
    %v1659 = vadd.f32 0.0, %v1658
    %v1660 = vpop.f32.mrb[0].mxu0
    %v1661 = vpop.f32.mrb[0].mxu0
    %v1662 = vadd.f32 0.0, %v1661
    %v1663 = vpop.f32.mrb[0].mxu0
    %1664 = vmatprep.mubr.bf16.mxu0 0
    %1665 = vmatmul.mubr.bf16.gmra.mrb[0].mxu0 %v1622
    %v1666 = vpop.f32.mrb[0].mxu0
    %v1667 = vadd.f32 0.0, %v1666
    %v1668 = vpop.f32.mrb[0].mxu0
    %v1669 = vpop.f32.mrb[0].mxu0
    %v1670 = vadd.f32 0.0, %v1669
    %v1671 = vpop.f32.mrb[0].mxu0
    %1672 = vdwg.mxu0
    %v1677 = vunpack.c.l.b16 %v1598
    %v1678 = vunpack.c.l.b16 %v1599
    %v1679 = vunpack.c.l.b16 %v1600
    %v1680 = vunpack.c.l.b16 %v1601
    %v1681 = vpack.c.b16 %v1678, %v1677
    %v1682 = vpack.c.b16 %v1680, %v1679
    %v1684 = vsel %vm1617, %v1681, 0
    %v1687 = vsel %vm1617, %v1682, 0
    %1689 = vmatprep.subr.bf16.mxu0 0
    %1690 = vmatpush1.bf16.msra.mxu0 %v1592
    %1691 = vmatprep.subr.bf16.mxu0 0
    %1692 = vmatpush1.bf16.msra.mxu0 %v1595
    %1693 = vmatprep.subr.bf16.mxu0 0
    %1694 = vmatpush1.bf16.msra.mxu0 0
    %1695 = vmatprep.subr.bf16.mxu0 0
    %1696 = vmatpush1.bf16.msra.mxu0 0
    %1697 = vmatprep.subr.bf16.mxu0 0
    %1698 = vmatpush1.bf16.msra.mxu0 0
    %1699 = vmatprep.subr.bf16.mxu0 0
    %1700 = vmatpush1.bf16.msra.mxu0 0
    %1701 = vmatprep.subr.bf16.mxu0 0
    %1702 = vmatpush1.bf16.msra.mxu0 0
    %1703 = vmatprep.subr.bf16.mxu0 0
    %1704 = vmatpush1.bf16.msra.mxu0 0
    %1705 = vmatprep.subr.bf16.mxu0 0
    %1706 = vmatpush1.bf16.msra.mxu0 0
    %1707 = vmatprep.subr.bf16.mxu0 0
    %1708 = vmatpush1.bf16.msra.mxu0 0
    %1709 = vmatprep.subr.bf16.mxu0 0
    %1710 = vmatpush1.bf16.msra.mxu0 0
    %1711 = vmatprep.subr.bf16.mxu0 0
    %1712 = vmatpush1.bf16.msra.mxu0 0
    %1713 = vmatprep.subr.bf16.mxu0 0
    %1714 = vmatpush1.bf16.msra.mxu0 0
    %1715 = vmatprep.subr.bf16.mxu0 0
    %1716 = vmatpush1.bf16.msra.mxu0 0
    %1717 = vmatprep.subr.bf16.mxu0 0
    %1718 = vmatpush1.bf16.msra.mxu0 0
    %1719 = vmatprep.subr.bf16.mxu0 0
    %1720 = vmatpush1.bf16.msra.mxu0 0
    %1721 = vmatprep.mubr.bf16.mxu0 0
    %1722 = vmatmul.mubr.bf16.gmra.mrb[0].mxu0 %v1684
    %v1723 = vpop.f32.mrb[0].mxu0
    %v1724 = vadd.f32 %v1659, %v1723
    %v1725 = vpop.f32.mrb[0].mxu0
    %v1726 = vpop.f32.mrb[0].mxu0
    %v1727 = vadd.f32 %v1662, %v1726
    %v1728 = vpop.f32.mrb[0].mxu0
    %1729 = vmatprep.mubr.bf16.mxu0 0
    %1730 = vmatmul.mubr.bf16.gmra.mrb[0].mxu0 %v1687
    %v1731 = vpop.f32.mrb[0].mxu0
    %v1732 = vadd.f32 %v1667, %v1731
    %v1733 = vpop.f32.mrb[0].mxu0
    %v1734 = vpop.f32.mrb[0].mxu0
    %v1735 = vadd.f32 %v1670, %v1734
    %v1736 = vpop.f32.mrb[0].mxu0
    %1737 = vdwg.mxu0
    %s1738 = scalar_lea.vmem [#allocation13], 32
    %v1739 = vld [vmem:[%s1738] sm:$0xf]
    %v1740 = vld [vmem:[%s1738 + $0x4] sm:$0xf]
    %v1741 = vld [vmem:[%s1738 + $0x8] sm:$0xf]
    %v1742 = vld [vmem:[%s1738 + $0xc] sm:$0xf]
    %v1747 = vunpack.c.l.b16 %v1739
    %v1748 = vunpack.c.l.b16 %v1740
    %v1749 = vunpack.c.l.b16 %v1741
    %v1750 = vunpack.c.l.b16 %v1742
    %v1751 = vpack.c.b16 %v1748, %v1747
    %v1752 = vpack.c.b16 %v1750, %v1749
    %v1754 = vsel %vm1617, %v1751, 0
    %v1757 = vsel %vm1617, %v1752, 0
    %1759 = vmatprep.subr.bf16.mxu0 0
    %1760 = vmatpush1.bf16.msra.mxu0 %v1594
    %1761 = vmatprep.subr.bf16.mxu0 0
    %1762 = vmatpush1.bf16.msra.mxu0 %v1597
    %1763 = vmatprep.subr.bf16.mxu0 0
    %1764 = vmatpush1.bf16.msra.mxu0 0
    %1765 = vmatprep.subr.bf16.mxu0 0
    %1766 = vmatpush1.bf16.msra.mxu0 0
    %1767 = vmatprep.subr.bf16.mxu0 0
    %1768 = vmatpush1.bf16.msra.mxu0 0
    %1769 = vmatprep.subr.bf16.mxu0 0
    %1770 = vmatpush1.bf16.msra.mxu0 0
    %1771 = vmatprep.subr.bf16.mxu0 0
    %1772 = vmatpush1.bf16.msra.mxu0 0
    %1773 = vmatprep.subr.bf16.mxu0 0
    %1774 = vmatpush1.bf16.msra.mxu0 0
    %1775 = vmatprep.subr.bf16.mxu0 0
    %1776 = vmatpush1.bf16.msra.mxu0 0
    %1777 = vmatprep.subr.bf16.mxu0 0
    %1778 = vmatpush1.bf16.msra.mxu0 0
    %1779 = vmatprep.subr.bf16.mxu0 0
    %1780 = vmatpush1.bf16.msra.mxu0 0
    %1781 = vmatprep.subr.bf16.mxu0 0
    %1782 = vmatpush1.bf16.msra.mxu0 0
    %1783 = vmatprep.subr.bf16.mxu0 0
    %1784 = vmatpush1.bf16.msra.mxu0 0
    %1785 = vmatprep.subr.bf16.mxu0 0
    %1786 = vmatpush1.bf16.msra.mxu0 0
    %1787 = vmatprep.subr.bf16.mxu0 0
    %1788 = vmatpush1.bf16.msra.mxu0 0
    %1789 = vmatprep.subr.bf16.mxu0 0
    %1790 = vmatpush1.bf16.msra.mxu0 0
    %1791 = vmatprep.mubr.bf16.mxu0 0
    %1792 = vmatmul.mubr.bf16.gmra.mrb[0].mxu0 %v1754
    %v1793 = vpop.f32.mrb[0].mxu0
    %v1794 = vadd.f32 0.0, %v1793
    %v1795 = vpop.f32.mrb[0].mxu0
    %v1796 = vpop.f32.mrb[0].mxu0
    %v1797 = vadd.f32 0.0, %v1796
    %v1798 = vpop.f32.mrb[0].mxu0
    %1799 = vmatprep.mubr.bf16.mxu0 0
    %1800 = vmatmul.mubr.bf16.gmra.mrb[0].mxu0 %v1757
    %v1801 = vpop.f32.mrb[0].mxu0
    %v1802 = vadd.f32 0.0, %v1801
    %v1803 = vpop.f32.mrb[0].mxu0
    %v1804 = vpop.f32.mrb[0].mxu0
    %v1805 = vadd.f32 0.0, %v1804
    %v1806 = vpop.f32.mrb[0].mxu0
    %1807 = vdwg.mxu0
    %v1808 = vadd.f32 %v1724, %v1794
    %v1809 = vadd.f32 %v1727, %v1797
    %v1810 = vadd.f32 %v1732, %v1802
    %v1811 = vadd.f32 %v1735, %v1805
    %v1812 = vld [vmem:[#allocation14] sm:$0x1]
    %v1814 = vlaneseq
    %v1815 = vshrl.u32 %v1814, 7
    %v1816 = vsub.s32 0, %v1815
    %v1817 = vrot.slane %v1812, %v1816
    %v1819 = vadd.f32 %v1808, %v1817
    %v1820 = vadd.f32 %v1809, %v1817
    %v1821 = vadd.f32 %v1810, %v1817
    %v1822 = vadd.f32 %v1811, %v1817
    %v1823 = vmax.f32 %v1819, 0.0
    %v1824 = vmax.f32 %v1820, 0.0
    %v1825 = vmax.f32 %v1821, 0.0
    %v1826 = vmax.f32 %v1822, 0.0
    %v1827 = vadd.f32 %v1823, %v1824
    %v1828 = vadd.f32 %v1827, %v1825
    %v1829 = vadd.f32 %v1828, %v1826
    %v1830 = vrot.slane %v1829, 4
    %v1831 = vadd.f32 %v1829, %v1830
    %v1832 = vrot.slane %v1831, 2
    %v1833 = vadd.f32 %v1831, %v1832
    %v1834 = vrot.slane %v1833, 1
    %v1835 = vadd.f32 %v1833, %v1834
    %v1836 = vmul.f32 %v1823, %v1823
    %v1837 = vmul.f32 %v1824, %v1824
    %v1838 = vmul.f32 %v1825, %v1825
    %v1839 = vmul.f32 %v1826, %v1826
    %v1840 = vadd.f32 %v1836, %v1837
    %v1841 = vadd.f32 %v1840, %v1838
    %v1842 = vadd.f32 %v1841, %v1839
    %v1843 = vrot.slane %v1842, 4
    %v1844 = vadd.f32 %v1842, %v1843
    %v1845 = vrot.slane %v1844, 2
    %v1846 = vadd.f32 %v1844, %v1845
    %v1847 = vrot.slane %v1846, 1
    %v1848 = vadd.f32 %v1846, %v1847
    %v1849 = vsel %vm1130, %v1835, %v1848
    %v1850 = vld [vmem:[%s23] sm:$0xff]
    %v1851 = vld [vmem:[%s23 + $0x8] sm:$0xff]
    %v1852 = vld [vmem:[%s23 + $0x10] sm:$0xff]
    %v1853 = vld [vmem:[%s23 + $0x18] sm:$0xff]
    %v1854 = vld [vmem:[%s23 + $0x20] sm:$0xff]
    %v1855 = vld [vmem:[%s23 + $0x28] sm:$0xff]
    %v1856 = vld [vmem:[%s23 + $0x30] sm:$0xff]
    %v1857 = vld [vmem:[%s23 + $0x38] sm:$0xff]
    %v1858 = vld [vmem:[%s23 + $0x40] sm:$0xff]
    %v1859 = vld [vmem:[%s23 + $0x48] sm:$0xff]
    %v1860 = vld [vmem:[%s23 + $0x50] sm:$0xff]
    %v1861 = vld [vmem:[%s23 + $0x58] sm:$0xff]
    %v1862 = vld [vmem:[%s23 + $0x60] sm:$0xff]
    %v1863 = vld [vmem:[%s23 + $0x68] sm:$0xff]
    %v1864 = vld [vmem:[%s23 + $0x70] sm:$0xff]
    %v1865 = vld [vmem:[%s23 + $0x78] sm:$0xff]
    %1866 = vmatprep.subr.mxu0 0.0
    %1867 = vmatpush1.msra.mxu0 %v1850
    %1868 = vmatprep.subr.mxu0 0.0
    %1869 = vmatpush1.msra.mxu0 %v1851
    %1870 = vmatprep.subr.mxu0 0.0
    %1871 = vmatpush1.msra.mxu0 %v1852
    %1872 = vmatprep.subr.mxu0 0.0
    %1873 = vmatpush1.msra.mxu0 %v1853
    %1874 = vmatprep.subr.mxu0 0.0
    %1875 = vmatpush1.msra.mxu0 %v1854
    %1876 = vmatprep.subr.mxu0 0.0
    %1877 = vmatpush1.msra.mxu0 %v1855
    %1878 = vmatprep.subr.mxu0 0.0
    %1879 = vmatpush1.msra.mxu0 %v1856
    %1880 = vmatprep.subr.mxu0 0.0
    %1881 = vmatpush1.msra.mxu0 %v1857
    %1882 = vmatprep.subr.mxu0 0.0
    %1883 = vmatpush1.msra.mxu0 %v1858
    %1884 = vmatprep.subr.mxu0 0.0
    %1885 = vmatpush1.msra.mxu0 %v1859
    %1886 = vmatprep.subr.mxu0 0.0
    %1887 = vmatpush1.msra.mxu0 %v1860
    %1888 = vmatprep.subr.mxu0 0.0
    %1889 = vmatpush1.msra.mxu0 %v1861
    %1890 = vmatprep.subr.mxu0 0.0
    %1891 = vmatpush1.msra.mxu0 %v1862
    %1892 = vmatprep.subr.mxu0 0.0
    %1893 = vmatpush1.msra.mxu0 %v1863
    %1894 = vmatprep.subr.mxu0 0.0
    %1895 = vmatpush1.msra.mxu0 %v1864
    %1896 = vmatprep.subr.mxu0 0.0
    %1897 = vmatpush1.msra.mxu0 %v1865
    %1898 = vmatprep.subr.mxu0 0.0
    %1899 = vmatpush1.msra.mxu0 0.0
    %1900 = vmatprep.subr.mxu0 0.0
    %1901 = vmatpush1.msra.mxu0 0.0
    %1902 = vmatprep.subr.mxu0 0.0
    %1903 = vmatpush1.msra.mxu0 0.0
    %1904 = vmatprep.subr.mxu0 0.0
    %1905 = vmatpush1.msra.mxu0 0.0
    %1906 = vmatprep.subr.mxu0 0.0
    %1907 = vmatpush1.msra.mxu0 0.0
    %1908 = vmatprep.subr.mxu0 0.0
    %1909 = vmatpush1.msra.mxu0 0.0
    %1910 = vmatprep.subr.mxu0 0.0
    %1911 = vmatpush1.msra.mxu0 0.0
    %1912 = vmatprep.subr.mxu0 0.0
    %1913 = vmatpush1.msra.mxu0 0.0
    %1914 = vmatprep.subr.mxu0 0.0
    %1915 = vmatpush1.msra.mxu0 0.0
    %1916 = vmatprep.subr.mxu0 0.0
    %1917 = vmatpush1.msra.mxu0 0.0
    %1918 = vmatprep.subr.mxu0 0.0
    %1919 = vmatpush1.msra.mxu0 0.0
    %1920 = vmatprep.subr.mxu0 0.0
    %1921 = vmatpush1.msra.mxu0 0.0
    %1922 = vmatprep.subr.mxu0 0.0
    %1923 = vmatpush1.msra.mxu0 0.0
    %1924 = vmatprep.subr.mxu0 0.0
    %1925 = vmatpush1.msra.mxu0 0.0
    %1926 = vmatprep.subr.mxu0 0.0
    %1927 = vmatpush1.msra.mxu0 0.0
    %1928 = vmatprep.subr.mxu0 0.0
    %1929 = vmatpush1.msra.mxu0 0.0
    %1930 = vmatprep.mubr.f32.mxu0 0.0
    %1931 = vmatmul.mubr.f32.gmra.mrb[0].mxu0 %v1849
    %v1932 = vpop.f32.mrb[0].mxu0
    %v1933 = vadd.f32 0.0, %v1932
    %v1934 = vpop.f32.mrb[0].mxu0
    %1935 = vdwg.mxu0
    %v1936 = vmul.f32 %v1933, 0.001953125
    %v1937 = vmul.f32 %v1936, %v1936
    %v1939 = vrot.slane %v1937, 7
    %v1941 = vsub.f32 %v1936, %v1939
    %v1942 = vld [vmem:[#allocation16] sm:$0x3]
    %v1943 = vadd.f32 %v1941, 1e-05
    %v1944 = vrsqrt.pop %v1943
    %v1946 = vrot.slane %v1944, 1
    %v1948 = vmul.f32 %v1942, %v1946
    %v1949 = vmul.f32 %v1936, %v1948
    %v1951 = vrot.slane %v1949, 7
    %v1953 = vsub.f32 %v1942, %v1951
    %v1954 = vsel %vm1130, %v1948, %v1953
    %v1955 = vld [vmem:[#allocation17] sm:$0xff]
    %v1957 = vsel %vm1238, %v1954, 0
    %1959 = vmatprep.subr.mxu0 0.0
    %1960 = vmatpush1.msra.mxu0 %v1955
    %1961 = vmatprep.subr.mxu0 0.0
    %1962 = vmatpush1.msra.mxu0 0.0
    %1963 = vmatprep.subr.mxu0 0.0
    %1964 = vmatpush1.msra.mxu0 0.0
    %1965 = vmatprep.subr.mxu0 0.0
    %1966 = vmatpush1.msra.mxu0 0.0
    %1967 = vmatprep.subr.mxu0 0.0
    %1968 = vmatpush1.msra.mxu0 0.0
    %1969 = vmatprep.subr.mxu0 0.0
    %1970 = vmatpush1.msra.mxu0 0.0
    %1971 = vmatprep.subr.mxu0 0.0
    %1972 = vmatpush1.msra.mxu0 0.0
    %1973 = vmatprep.subr.mxu0 0.0
    %1974 = vmatpush1.msra.mxu0 0.0
    %1975 = vmatprep.subr.mxu0 0.0
    %1976 = vmatpush1.msra.mxu0 0.0
    %1977 = vmatprep.subr.mxu0 0.0
    %1978 = vmatpush1.msra.mxu0 0.0
    %1979 = vmatprep.subr.mxu0 0.0
    %1980 = vmatpush1.msra.mxu0 0.0
    %1981 = vmatprep.subr.mxu0 0.0
    %1982 = vmatpush1.msra.mxu0 0.0
    %1983 = vmatprep.subr.mxu0 0.0
    %1984 = vmatpush1.msra.mxu0 0.0
    %1985 = vmatprep.subr.mxu0 0.0
    %1986 = vmatpush1.msra.mxu0 0.0
    %1987 = vmatprep.subr.mxu0 0.0
    %1988 = vmatpush1.msra.mxu0 0.0
    %1989 = vmatprep.subr.mxu0 0.0
    %1990 = vmatpush1.msra.mxu0 0.0
    %1991 = vmatprep.subr.mxu0 0.0
    %1992 = vmatpush1.msra.mxu0 0.0
    %1993 = vmatprep.subr.mxu0 0.0
    %1994 = vmatpush1.msra.mxu0 0.0
    %1995 = vmatprep.subr.mxu0 0.0
    %1996 = vmatpush1.msra.mxu0 0.0
    %1997 = vmatprep.subr.mxu0 0.0
    %1998 = vmatpush1.msra.mxu0 0.0
    %1999 = vmatprep.subr.mxu0 0.0
    %2000 = vmatpush1.msra.mxu0 0.0
    %2001 = vmatprep.subr.mxu0 0.0
    %2002 = vmatpush1.msra.mxu0 0.0
    %2003 = vmatprep.subr.mxu0 0.0
    %2004 = vmatpush1.msra.mxu0 0.0
    %2005 = vmatprep.subr.mxu0 0.0
    %2006 = vmatpush1.msra.mxu0 0.0
    %2007 = vmatprep.subr.mxu0 0.0
    %2008 = vmatpush1.msra.mxu0 0.0
    %2009 = vmatprep.subr.mxu0 0.0
    %2010 = vmatpush1.msra.mxu0 0.0
    %2011 = vmatprep.subr.mxu0 0.0
    %2012 = vmatpush1.msra.mxu0 0.0
    %2013 = vmatprep.subr.mxu0 0.0
    %2014 = vmatpush1.msra.mxu0 0.0
    %2015 = vmatprep.subr.mxu0 0.0
    %2016 = vmatpush1.msra.mxu0 0.0
    %2017 = vmatprep.subr.mxu0 0.0
    %2018 = vmatpush1.msra.mxu0 0.0
    %2019 = vmatprep.subr.mxu0 0.0
    %2020 = vmatpush1.msra.mxu0 0.0
    %2021 = vmatprep.subr.mxu0 0.0
    %2022 = vmatpush1.msra.mxu0 0.0
    %2023 = vmatprep.mubr.f32.mxu0 0.0
    %2024 = vmatmul.mubr.f32.gmra.mrb[0].mxu0 %v1957
    %v2025 = vpop.f32.mrb[0].mxu0
    %v2026 = vadd.f32 0.0, %v2025
    %v2027 = vpop.f32.mrb[0].mxu0
    %2028 = vdwg.mxu0
    %v2029 = vlaneseq
    %v2030 = vshrl.u32 %v2029, 7
    %v2031 = vsub.s32 0, %v2030
    %v2032 = vrot.slane %v2026, %v2031
    %v2033 = vmul.f32 %v1823, %v2032
    %v2034 = vmul.f32 %v1824, %v2032
    %v2035 = vmul.f32 %v1825, %v2032
    %v2036 = vmul.f32 %v1826, %v2032
    %v2037 = vlaneseq
    %v2038 = vshrl.u32 %v2037, 7
    %v2039 = vsub.s32 1, %v2038
    %v2040 = vrot.slane %v2026, %v2039
    %v2041 = vadd.f32 %v2033, %v2040
    %v2042 = vadd.f32 %v2034, %v2040
    %v2043 = vadd.f32 %v2035, %v2040
    %v2044 = vadd.f32 %v2036, %v2040
    %v2045 = vpack.c.bf16 %v2042, %v2041
    %v2046 = vpack.c.bf16 %v2044, %v2043
    %v2047 = vld [vmem:[%s27] sm:$0xff]
    %v2048 = vld [vmem:[%s27 + $0x8] sm:$0xf]
    %v2049 = vld [vmem:[%s27 + $0xc] sm:$0xff]
    %v2050 = vld [vmem:[%s27 + $0x14] sm:$0xf]
    %v2051 = vld [vmem:[%s27 + $0x18] sm:$0xff]
    %v2052 = vld [vmem:[%s27 + $0x20] sm:$0xf]
    %v2053 = vld [vmem:[%s27 + $0x24] sm:$0xff]
    %v2054 = vld [vmem:[%s27 + $0x2c] sm:$0xf]
    %v2055 = vld [vmem:[%s27 + $0x30] sm:$0xff]
    %v2056 = vld [vmem:[%s27 + $0x38] sm:$0xf]
    %v2057 = vld [vmem:[%s27 + $0x3c] sm:$0xff]
    %v2058 = vld [vmem:[%s27 + $0x44] sm:$0xf]
    %v2059 = vld [vmem:[%s27 + $0x48] sm:$0xff]
    %v2060 = vld [vmem:[%s27 + $0x50] sm:$0xf]
    %v2061 = vld [vmem:[%s27 + $0x54] sm:$0xff]
    %v2062 = vld [vmem:[%s27 + $0x5c] sm:$0xf]
    %v2063 = vld [vmem:[%s27 + $0x60] sm:$0xff]
    %v2064 = vld [vmem:[%s27 + $0x68] sm:$0xf]
    %v2065 = vld [vmem:[%s27 + $0x6c] sm:$0xff]
    %v2066 = vld [vmem:[%s27 + $0x74] sm:$0xf]
    %v2067 = vld [vmem:[%s27 + $0x78] sm:$0xff]
    %v2068 = vld [vmem:[%s27 + $0x80] sm:$0xf]
    %v2069 = vld [vmem:[%s27 + $0x84] sm:$0xff]
    %v2070 = vld [vmem:[%s27 + $0x8c] sm:$0xf]
    %v2071 = vld [vmem:[%s27 + $0x90] sm:$0xff]
    %v2072 = vld [vmem:[%s27 + $0x98] sm:$0xf]
    %v2073 = vld [vmem:[%s27 + $0x9c] sm:$0xff]
    %v2074 = vld [vmem:[%s27 + $0xa4] sm:$0xf]
    %v2075 = vld [vmem:[%s27 + $0xa8] sm:$0xff]
    %v2076 = vld [vmem:[%s27 + $0xb0] sm:$0xf]
    %v2077 = vld [vmem:[%s27 + $0xb4] sm:$0xff]
    %v2078 = vld [vmem:[%s27 + $0xbc] sm:$0xf]
    %v2111 = vunpack.c.l.b16 %v2047
    %v2112 = vunpack.c.h.b16 %v2047
    %v2113 = vunpack.c.l.b16 %v2048
    %v2114 = vunpack.c.l.b16 %v2049
    %v2115 = vunpack.c.h.b16 %v2049
    %v2116 = vunpack.c.l.b16 %v2050
    %v2117 = vunpack.c.l.b16 %v2051
    %v2118 = vunpack.c.h.b16 %v2051
    %v2119 = vunpack.c.l.b16 %v2052
    %v2120 = vunpack.c.l.b16 %v2053
    %v2121 = vunpack.c.h.b16 %v2053
    %v2122 = vunpack.c.l.b16 %v2054
    %v2123 = vunpack.c.l.b16 %v2055
    %v2124 = vunpack.c.h.b16 %v2055
    %v2125 = vunpack.c.l.b16 %v2056
    %v2126 = vunpack.c.l.b16 %v2057
    %v2127 = vunpack.c.h.b16 %v2057
    %v2128 = vunpack.c.l.b16 %v2058
    %v2129 = vunpack.c.l.b16 %v2059
    %v2130 = vunpack.c.h.b16 %v2059
    %v2131 = vunpack.c.l.b16 %v2060
    %v2132 = vunpack.c.l.b16 %v2061
    %v2133 = vunpack.c.h.b16 %v2061
    %v2134 = vunpack.c.l.b16 %v2062
    %v2135 = vunpack.c.l.b16 %v2063
    %v2136 = vunpack.c.h.b16 %v2063
    %v2137 = vunpack.c.l.b16 %v2064
    %v2138 = vunpack.c.l.b16 %v2065
    %v2139 = vunpack.c.h.b16 %v2065
    %v2140 = vunpack.c.l.b16 %v2066
    %v2141 = vunpack.c.l.b16 %v2067
    %v2142 = vunpack.c.h.b16 %v2067
    %v2143 = vunpack.c.l.b16 %v2068
    %v2144 = vunpack.c.l.b16 %v2069
    %v2145 = vunpack.c.h.b16 %v2069
    %v2146 = vunpack.c.l.b16 %v2070
    %v2147 = vunpack.c.l.b16 %v2071
    %v2148 = vunpack.c.h.b16 %v2071
    %v2149 = vunpack.c.l.b16 %v2072
    %v2150 = vunpack.c.l.b16 %v2073
    %v2151 = vunpack.c.h.b16 %v2073
    %v2152 = vunpack.c.l.b16 %v2074
    %v2153 = vunpack.c.l.b16 %v2075
    %v2154 = vunpack.c.h.b16 %v2075
    %v2155 = vunpack.c.l.b16 %v2076
    %v2156 = vunpack.c.l.b16 %v2077
    %v2157 = vunpack.c.h.b16 %v2077
    %v2158 = vunpack.c.l.b16 %v2078
    %v2159 = vpack.c.b16 %v2114, %v2111
    %v2160 = vpack.c.b16 %v2115, %v2112
    %v2161 = vpack.c.b16 %v2116, %v2113
    %v2162 = vpack.c.b16 %v2120, %v2117
    %v2163 = vpack.c.b16 %v2121, %v2118
    %v2164 = vpack.c.b16 %v2122, %v2119
    %v2165 = vpack.c.b16 %v2126, %v2123
    %v2166 = vpack.c.b16 %v2127, %v2124
    %v2167 = vpack.c.b16 %v2128, %v2125
    %v2168 = vpack.c.b16 %v2132, %v2129
    %v2169 = vpack.c.b16 %v2133, %v2130
    %v2170 = vpack.c.b16 %v2134, %v2131
    %v2171 = vpack.c.b16 %v2138, %v2135
    %v2172 = vpack.c.b16 %v2139, %v2136
    %v2173 = vpack.c.b16 %v2140, %v2137
    %v2174 = vpack.c.b16 %v2144, %v2141
    %v2175 = vpack.c.b16 %v2145, %v2142
    %v2176 = vpack.c.b16 %v2146, %v2143
    %v2177 = vpack.c.b16 %v2150, %v2147
    %v2178 = vpack.c.b16 %v2151, %v2148
    %v2179 = vpack.c.b16 %v2152, %v2149
    %v2180 = vpack.c.b16 %v2156, %v2153
    %v2181 = vpack.c.b16 %v2157, %v2154
    %v2182 = vpack.c.b16 %v2158, %v2155
    %2207 = vmatprep.subr.bf16.mxu0 %v2160
    %2208 = vmatpush1.bf16.msra.mxu0 %v2159
    %2209 = vmatprep.subr.bf16.mxu0 %v2163
    %2210 = vmatpush1.bf16.msra.mxu0 %v2162
    %2211 = vmatprep.subr.bf16.mxu0 %v2166
    %2212 = vmatpush1.bf16.msra.mxu0 %v2165
    %2213 = vmatprep.subr.bf16.mxu0 %v2169
    %2214 = vmatpush1.bf16.msra.mxu0 %v2168
    %2215 = vmatprep.subr.bf16.mxu0 %v2172
    %2216 = vmatpush1.bf16.msra.mxu0 %v2171
    %2217 = vmatprep.subr.bf16.mxu0 %v2175
    %2218 = vmatpush1.bf16.msra.mxu0 %v2174
    %2219 = vmatprep.subr.bf16.mxu0 %v2178
    %2220 = vmatpush1.bf16.msra.mxu0 %v2177
    %2221 = vmatprep.subr.bf16.mxu0 %v2181
    %2222 = vmatpush1.bf16.msra.mxu0 %v2180
    %2223 = vmatprep.subr.bf16.mxu0 0
    %2224 = vmatpush1.bf16.msra.mxu0 0
    %2225 = vmatprep.subr.bf16.mxu0 0
    %2226 = vmatpush1.bf16.msra.mxu0 0
    %2227 = vmatprep.subr.bf16.mxu0 0
    %2228 = vmatpush1.bf16.msra.mxu0 0
    %2229 = vmatprep.subr.bf16.mxu0 0
    %2230 = vmatpush1.bf16.msra.mxu0 0
    %2231 = vmatprep.subr.bf16.mxu0 0
    %2232 = vmatpush1.bf16.msra.mxu0 0
    %2233 = vmatprep.subr.bf16.mxu0 0
    %2234 = vmatpush1.bf16.msra.mxu0 0
    %2235 = vmatprep.subr.bf16.mxu0 0
    %2236 = vmatpush1.bf16.msra.mxu0 0
    %2237 = vmatprep.subr.bf16.mxu0 0
    %2238 = vmatpush1.bf16.msra.mxu0 0
    %2239 = vmatprep.mubr.bf16.mxu0 0
    %2240 = vmatmul.mubr.bf16.gmra.mrb[0].mxu0 %v2045
    %v2241 = vpop.f32.mrb[0].mxu0
    %v2242 = vadd.f32 0.0, %v2241
    %v2243 = vpop.f32.mrb[0].mxu0
    %v2244 = vadd.f32 0.0, %v2243
    %v2245 = vpop.f32.mrb[0].mxu0
    %v2246 = vadd.f32 0.0, %v2245
    %v2247 = vpop.f32.mrb[0].mxu0
    %v2248 = vadd.f32 0.0, %v2247
    %2249 = vmatprep.mubr.bf16.mxu0 0
    %2250 = vmatmul.mubr.bf16.gmra.mrb[0].mxu0 %v2046
    %v2251 = vpop.f32.mrb[0].mxu0
    %v2252 = vadd.f32 0.0, %v2251
    %v2253 = vpop.f32.mrb[0].mxu0
    %v2254 = vadd.f32 0.0, %v2253
    %v2255 = vpop.f32.mrb[0].mxu0
    %v2256 = vadd.f32 0.0, %v2255
    %v2257 = vpop.f32.mrb[0].mxu0
    %v2258 = vadd.f32 0.0, %v2257
    %2259 = vdwg.mxu0
    %2260 = vmatprep.subr.bf16.mxu0 0
    %2261 = vmatpush1.bf16.msra.mxu0 %v2161
    %2262 = vmatprep.subr.bf16.mxu0 0
    %2263 = vmatpush1.bf16.msra.mxu0 %v2164
    %2264 = vmatprep.subr.bf16.mxu0 0
    %2265 = vmatpush1.bf16.msra.mxu0 %v2167
    %2266 = vmatprep.subr.bf16.mxu0 0
    %2267 = vmatpush1.bf16.msra.mxu0 %v2170
    %2268 = vmatprep.subr.bf16.mxu0 0
    %2269 = vmatpush1.bf16.msra.mxu0 %v2173
    %2270 = vmatprep.subr.bf16.mxu0 0
    %2271 = vmatpush1.bf16.msra.mxu0 %v2176
    %2272 = vmatprep.subr.bf16.mxu0 0
    %2273 = vmatpush1.bf16.msra.mxu0 %v2179
    %2274 = vmatprep.subr.bf16.mxu0 0
    %2275 = vmatpush1.bf16.msra.mxu0 %v2182
    %2276 = vmatprep.subr.bf16.mxu0 0
    %2277 = vmatpush1.bf16.msra.mxu0 0
    %2278 = vmatprep.subr.bf16.mxu0 0
    %2279 = vmatpush1.bf16.msra.mxu0 0
    %2280 = vmatprep.subr.bf16.mxu0 0
    %2281 = vmatpush1.bf16.msra.mxu0 0
    %2282 = vmatprep.subr.bf16.mxu0 0
    %2283 = vmatpush1.bf16.msra.mxu0 0
    %2284 = vmatprep.subr.bf16.mxu0 0
    %2285 = vmatpush1.bf16.msra.mxu0 0
    %2286 = vmatprep.subr.bf16.mxu0 0
    %2287 = vmatpush1.bf16.msra.mxu0 0
    %2288 = vmatprep.subr.bf16.mxu0 0
    %2289 = vmatpush1.bf16.msra.mxu0 0
    %2290 = vmatprep.subr.bf16.mxu0 0
    %2291 = vmatpush1.bf16.msra.mxu0 0
    %2292 = vmatprep.mubr.bf16.mxu0 0
    %2293 = vmatmul.mubr.bf16.gmra.mrb[0].mxu0 %v2045
    %v2294 = vpop.f32.mrb[0].mxu0
    %v2295 = vadd.f32 0.0, %v2294
    %v2296 = vpop.f32.mrb[0].mxu0
    %v2297 = vpop.f32.mrb[0].mxu0
    %v2298 = vadd.f32 0.0, %v2297
    %v2299 = vpop.f32.mrb[0].mxu0
    %2300 = vmatprep.mubr.bf16.mxu0 0
    %2301 = vmatmul.mubr.bf16.gmra.mrb[0].mxu0 %v2046
    %v2302 = vpop.f32.mrb[0].mxu0
    %v2303 = vadd.f32 0.0, %v2302
    %v2304 = vpop.f32.mrb[0].mxu0
    %v2305 = vpop.f32.mrb[0].mxu0
    %v2306 = vadd.f32 0.0, %v2305
    %v2307 = vpop.f32.mrb[0].mxu0
    %2308 = vdwg.mxu0
    %v2309 = vpack.c.bf16 %v2246, %v2242
    %v2310 = vpack.c.bf16 %v2248, %v2244
    %v2311 = vpack.c.bf16 %v2298, %v2295
    %v2312 = vpack.c.bf16 %v2256, %v2252
    %v2313 = vpack.c.bf16 %v2258, %v2254
    %v2314 = vpack.c.bf16 %v2306, %v2303
    %v2315 = vld [vmem:[#allocation19] sm:$0xf]
    %v2316 = vld [vmem:[#allocation19 + $0x4] sm:$0xf]
    %s2317 = scalar_lea.vmem [#allocation19], 8
    %v2318 = vld [vmem:[%s2317] sm:$0xf]
    %v2319 = vld [vmem:[%s2317 + $0x4] sm:$0xf]
    %v2322 = vunpack.c.l.b16 %v2318
    %v2323 = vunpack.c.l.b16 %v2319
    %v2324 = vpack.c.b16 %v2323, %v2322
    %v2326 = vsel %vm1617, %v2324, 0
    %2328 = vmatprep.subr.bf16.mxu0 0
    %2329 = vmatpush1.bf16.msra.mxu0 %v2310
    %2330 = vmatprep.subr.bf16.mxu0 0
    %2331 = vmatpush1.bf16.msra.mxu0 %v2313
    %2332 = vmatprep.subr.bf16.mxu0 0
    %2333 = vmatpush1.bf16.msra.mxu0 0
    %2334 = vmatprep.subr.bf16.mxu0 0
    %2335 = vmatpush1.bf16.msra.mxu0 0
    %2336 = vmatprep.subr.bf16.mxu0 0
    %2337 = vmatpush1.bf16.msra.mxu0 0
    %2338 = vmatprep.subr.bf16.mxu0 0
    %2339 = vmatpush1.bf16.msra.mxu0 0
    %2340 = vmatprep.subr.bf16.mxu0 0
    %2341 = vmatpush1.bf16.msra.mxu0 0
    %2342 = vmatprep.subr.bf16.mxu0 0
    %2343 = vmatpush1.bf16.msra.mxu0 0
    %2344 = vmatprep.subr.bf16.mxu0 0
    %2345 = vmatpush1.bf16.msra.mxu0 0
    %2346 = vmatprep.subr.bf16.mxu0 0
    %2347 = vmatpush1.bf16.msra.mxu0 0
    %2348 = vmatprep.subr.bf16.mxu0 0
    %2349 = vmatpush1.bf16.msra.mxu0 0
    %2350 = vmatprep.subr.bf16.mxu0 0
    %2351 = vmatpush1.bf16.msra.mxu0 0
    %2352 = vmatprep.subr.bf16.mxu0 0
    %2353 = vmatpush1.bf16.msra.mxu0 0
    %2354 = vmatprep.subr.bf16.mxu0 0
    %2355 = vmatpush1.bf16.msra.mxu0 0
    %2356 = vmatprep.subr.bf16.mxu0 0
    %2357 = vmatpush1.bf16.msra.mxu0 0
    %2358 = vmatprep.subr.bf16.mxu0 0
    %2359 = vmatpush1.bf16.msra.mxu0 0
    %2360 = vmatprep.mubr.bf16.mxu0 0
    %2361 = vmatmul.mubr.bf16.gmra.mrb[0].mxu0 %v2326
    %v2362 = vpop.f32.mrb[0].mxu0
    %v2363 = vadd.f32 0.0, %v2362
    %v2364 = vpop.f32.mrb[0].mxu0
    %v2365 = vpop.f32.mrb[0].mxu0
    %v2366 = vadd.f32 0.0, %v2365
    %v2367 = vpop.f32.mrb[0].mxu0
    %2368 = vdwg.mxu0
    %v2371 = vunpack.c.l.b16 %v2315
    %v2372 = vunpack.c.l.b16 %v2316
    %v2373 = vpack.c.b16 %v2372, %v2371
    %v2375 = vsel %vm1617, %v2373, 0
    %2377 = vmatprep.subr.bf16.mxu0 0
    %2378 = vmatpush1.bf16.msra.mxu0 %v2309
    %2379 = vmatprep.subr.bf16.mxu0 0
    %2380 = vmatpush1.bf16.msra.mxu0 %v2312
    %2381 = vmatprep.subr.bf16.mxu0 0
    %2382 = vmatpush1.bf16.msra.mxu0 0
    %2383 = vmatprep.subr.bf16.mxu0 0
    %2384 = vmatpush1.bf16.msra.mxu0 0
    %2385 = vmatprep.subr.bf16.mxu0 0
    %2386 = vmatpush1.bf16.msra.mxu0 0
    %2387 = vmatprep.subr.bf16.mxu0 0
    %2388 = vmatpush1.bf16.msra.mxu0 0
    %2389 = vmatprep.subr.bf16.mxu0 0
    %2390 = vmatpush1.bf16.msra.mxu0 0
    %2391 = vmatprep.subr.bf16.mxu0 0
    %2392 = vmatpush1.bf16.msra.mxu0 0
    %2393 = vmatprep.subr.bf16.mxu0 0
    %2394 = vmatpush1.bf16.msra.mxu0 0
    %2395 = vmatprep.subr.bf16.mxu0 0
    %2396 = vmatpush1.bf16.msra.mxu0 0
    %2397 = vmatprep.subr.bf16.mxu0 0
    %2398 = vmatpush1.bf16.msra.mxu0 0
    %2399 = vmatprep.subr.bf16.mxu0 0
    %2400 = vmatpush1.bf16.msra.mxu0 0
    %2401 = vmatprep.subr.bf16.mxu0 0
    %2402 = vmatpush1.bf16.msra.mxu0 0
    %2403 = vmatprep.subr.bf16.mxu0 0
    %2404 = vmatpush1.bf16.msra.mxu0 0
    %2405 = vmatprep.subr.bf16.mxu0 0
    %2406 = vmatpush1.bf16.msra.mxu0 0
    %2407 = vmatprep.subr.bf16.mxu0 0
    %2408 = vmatpush1.bf16.msra.mxu0 0
    %2409 = vmatprep.mubr.bf16.mxu0 0
    %2410 = vmatmul.mubr.bf16.gmra.mrb[0].mxu0 %v2375
    %v2411 = vpop.f32.mrb[0].mxu0
    %v2412 = vadd.f32 %v2363, %v2411
    %v2413 = vpop.f32.mrb[0].mxu0
    %v2414 = vpop.f32.mrb[0].mxu0
    %v2415 = vadd.f32 %v2366, %v2414
    %v2416 = vpop.f32.mrb[0].mxu0
    %2417 = vdwg.mxu0
    %s2418 = scalar_lea.vmem [#allocation19], 16
    %v2419 = vld [vmem:[%s2418] sm:$0xf]
    %v2420 = vld [vmem:[%s2418 + $0x4] sm:$0xf]
    %v2423 = vunpack.c.l.b16 %v2419
    %v2424 = vunpack.c.l.b16 %v2420
    %v2425 = vpack.c.b16 %v2424, %v2423
    %v2427 = vsel %vm1617, %v2425, 0
    %2429 = vmatprep.subr.bf16.mxu0 0
    %2430 = vmatpush1.bf16.msra.mxu0 %v2311
    %2431 = vmatprep.subr.bf16.mxu0 0
    %2432 = vmatpush1.bf16.msra.mxu0 %v2314
    %2433 = vmatprep.subr.bf16.mxu0 0
    %2434 = vmatpush1.bf16.msra.mxu0 0
    %2435 = vmatprep.subr.bf16.mxu0 0
    %2436 = vmatpush1.bf16.msra.mxu0 0
    %2437 = vmatprep.subr.bf16.mxu0 0
    %2438 = vmatpush1.bf16.msra.mxu0 0
    %2439 = vmatprep.subr.bf16.mxu0 0
    %2440 = vmatpush1.bf16.msra.mxu0 0
    %2441 = vmatprep.subr.bf16.mxu0 0
    %2442 = vmatpush1.bf16.msra.mxu0 0
    %2443 = vmatprep.subr.bf16.mxu0 0
    %2444 = vmatpush1.bf16.msra.mxu0 0
    %2445 = vmatprep.subr.bf16.mxu0 0
    %2446 = vmatpush1.bf16.msra.mxu0 0
    %2447 = vmatprep.subr.bf16.mxu0 0
    %2448 = vmatpush1.bf16.msra.mxu0 0
    %2449 = vmatprep.subr.bf16.mxu0 0
    %2450 = vmatpush1.bf16.msra.mxu0 0
    %2451 = vmatprep.subr.bf16.mxu0 0
    %2452 = vmatpush1.bf16.msra.mxu0 0
    %2453 = vmatprep.subr.bf16.mxu0 0
    %2454 = vmatpush1.bf16.msra.mxu0 0
    %2455 = vmatprep.subr.bf16.mxu0 0
    %2456 = vmatpush1.bf16.msra.mxu0 0
    %2457 = vmatprep.subr.bf16.mxu0 0
    %2458 = vmatpush1.bf16.msra.mxu0 0
    %2459 = vmatprep.subr.bf16.mxu0 0
    %2460 = vmatpush1.bf16.msra.mxu0 0
    %2461 = vmatprep.mubr.bf16.mxu0 0
    %2462 = vmatmul.mubr.bf16.gmra.mrb[0].mxu0 %v2427
    %v2463 = vpop.f32.mrb[0].mxu0
    %v2464 = vadd.f32 0.0, %v2463
    %v2465 = vpop.f32.mrb[0].mxu0
    %v2466 = vpop.f32.mrb[0].mxu0
    %v2467 = vadd.f32 0.0, %v2466
    %v2468 = vpop.f32.mrb[0].mxu0
    %2469 = vdwg.mxu0
    %v2470 = vadd.f32 %v2412, %v2464
    %v2471 = vadd.f32 %v2415, %v2467
    %v2472 = vld [vmem:[#allocation20] sm:$0x1]
    %v2474 = vlaneseq
    %v2475 = vshrl.u32 %v2474, 7
    %v2476 = vsub.s32 0, %v2475
    %v2477 = vrot.slane %v2472, %v2476
    %v2479 = vadd.f32 %v2470, %v2477
    %v2480 = vadd.f32 %v2471, %v2477
    %v2481 = vmax.f32 %v2479, 0.0
    %v2482 = vmax.f32 %v2480, 0.0
    %v2483 = vadd.f32 %v2481, %v2482
    %v2484 = vrot.slane %v2483, 4
    %v2485 = vadd.f32 %v2483, %v2484
    %v2486 = vrot.slane %v2485, 2
    %v2487 = vadd.f32 %v2485, %v2486
    %v2488 = vrot.slane %v2487, 1
    %v2489 = vadd.f32 %v2487, %v2488
    %v2490 = vmul.f32 %v2481, %v2481
    %v2491 = vmul.f32 %v2482, %v2482
    %v2492 = vadd.f32 %v2490, %v2491
    %v2493 = vrot.slane %v2492, 4
    %v2494 = vadd.f32 %v2492, %v2493
    %v2495 = vrot.slane %v2494, 2
    %v2496 = vadd.f32 %v2494, %v2495
    %v2497 = vrot.slane %v2496, 1
    %v2498 = vadd.f32 %v2496, %v2497
    %v2499 = vsel %vm1130, %v2489, %v2498
    %v2500 = vld [vmem:[%s35] sm:$0xff]
    %v2501 = vld [vmem:[%s35 + $0x8] sm:$0xff]
    %v2502 = vld [vmem:[%s35 + $0x10] sm:$0xff]
    %v2503 = vld [vmem:[%s35 + $0x18] sm:$0xff]
    %v2504 = vld [vmem:[%s35 + $0x20] sm:$0xff]
    %v2505 = vld [vmem:[%s35 + $0x28] sm:$0xff]
    %v2506 = vld [vmem:[%s35 + $0x30] sm:$0xff]
    %v2507 = vld [vmem:[%s35 + $0x38] sm:$0xff]
    %v2508 = vld [vmem:[%s35 + $0x40] sm:$0xff]
    %v2509 = vld [vmem:[%s35 + $0x48] sm:$0xff]
    %v2510 = vld [vmem:[%s35 + $0x50] sm:$0xff]
    %v2511 = vld [vmem:[%s35 + $0x58] sm:$0xff]
    %v2512 = vld [vmem:[%s35 + $0x60] sm:$0xff]
    %v2513 = vld [vmem:[%s35 + $0x68] sm:$0xff]
    %v2514 = vld [vmem:[%s35 + $0x70] sm:$0xff]
    %v2515 = vld [vmem:[%s35 + $0x78] sm:$0xff]
    %2516 = vmatprep.subr.mxu0 0.0
    %2517 = vmatpush1.msra.mxu0 %v2500
    %2518 = vmatprep.subr.mxu0 0.0
    %2519 = vmatpush1.msra.mxu0 %v2501
    %2520 = vmatprep.subr.mxu0 0.0
    %2521 = vmatpush1.msra.mxu0 %v2502
    %2522 = vmatprep.subr.mxu0 0.0
    %2523 = vmatpush1.msra.mxu0 %v2503
    %2524 = vmatprep.subr.mxu0 0.0
    %2525 = vmatpush1.msra.mxu0 %v2504
    %2526 = vmatprep.subr.mxu0 0.0
    %2527 = vmatpush1.msra.mxu0 %v2505
    %2528 = vmatprep.subr.mxu0 0.0
    %2529 = vmatpush1.msra.mxu0 %v2506
    %2530 = vmatprep.subr.mxu0 0.0
    %2531 = vmatpush1.msra.mxu0 %v2507
    %2532 = vmatprep.subr.mxu0 0.0
    %2533 = vmatpush1.msra.mxu0 %v2508
    %2534 = vmatprep.subr.mxu0 0.0
    %2535 = vmatpush1.msra.mxu0 %v2509
    %2536 = vmatprep.subr.mxu0 0.0
    %2537 = vmatpush1.msra.mxu0 %v2510
    %2538 = vmatprep.subr.mxu0 0.0
    %2539 = vmatpush1.msra.mxu0 %v2511
    %2540 = vmatprep.subr.mxu0 0.0
    %2541 = vmatpush1.msra.mxu0 %v2512
    %2542 = vmatprep.subr.mxu0 0.0
    %2543 = vmatpush1.msra.mxu0 %v2513
    %2544 = vmatprep.subr.mxu0 0.0
    %2545 = vmatpush1.msra.mxu0 %v2514
    %2546 = vmatprep.subr.mxu0 0.0
    %2547 = vmatpush1.msra.mxu0 %v2515
    %2548 = vmatprep.subr.mxu0 0.0
    %2549 = vmatpush1.msra.mxu0 0.0
    %2550 = vmatprep.subr.mxu0 0.0
    %2551 = vmatpush1.msra.mxu0 0.0
    %2552 = vmatprep.subr.mxu0 0.0
    %2553 = vmatpush1.msra.mxu0 0.0
    %2554 = vmatprep.subr.mxu0 0.0
    %2555 = vmatpush1.msra.mxu0 0.0
    %2556 = vmatprep.subr.mxu0 0.0
    %2557 = vmatpush1.msra.mxu0 0.0
    %2558 = vmatprep.subr.mxu0 0.0
    %2559 = vmatpush1.msra.mxu0 0.0
    %2560 = vmatprep.subr.mxu0 0.0
    %2561 = vmatpush1.msra.mxu0 0.0
    %2562 = vmatprep.subr.mxu0 0.0
    %2563 = vmatpush1.msra.mxu0 0.0
    %2564 = vmatprep.subr.mxu0 0.0
    %2565 = vmatpush1.msra.mxu0 0.0
    %2566 = vmatprep.subr.mxu0 0.0
    %2567 = vmatpush1.msra.mxu0 0.0
    %2568 = vmatprep.subr.mxu0 0.0
    %2569 = vmatpush1.msra.mxu0 0.0
    %2570 = vmatprep.subr.mxu0 0.0
    %2571 = vmatpush1.msra.mxu0 0.0
    %2572 = vmatprep.subr.mxu0 0.0
    %2573 = vmatpush1.msra.mxu0 0.0
    %2574 = vmatprep.subr.mxu0 0.0
    %2575 = vmatpush1.msra.mxu0 0.0
    %2576 = vmatprep.subr.mxu0 0.0
    %2577 = vmatpush1.msra.mxu0 0.0
    %2578 = vmatprep.subr.mxu0 0.0
    %2579 = vmatpush1.msra.mxu0 0.0
    %2580 = vmatprep.mubr.f32.mxu0 0.0
    %2581 = vmatmul.mubr.f32.gmra.mrb[0].mxu0 %v2499
    %v2582 = vpop.f32.mrb[0].mxu0
    %v2583 = vadd.f32 0.0, %v2582
    %v2584 = vpop.f32.mrb[0].mxu0
    %2585 = vdwg.mxu0
    %v2586 = vmul.f32 %v2583, 0.0078125
    %v2587 = vmul.f32 %v2586, %v2586
    %v2589 = vrot.slane %v2587, 7
    %v2591 = vsub.f32 %v2586, %v2589
    %v2592 = vld [vmem:[#allocation22] sm:$0x3]
    %v2593 = vadd.f32 %v2591, 1e-05
    %v2594 = vrsqrt.pop %v2593
    %v2596 = vrot.slane %v2594, 1
    %v2598 = vmul.f32 %v2592, %v2596
    %v2599 = vmul.f32 %v2586, %v2598
    %v2601 = vrot.slane %v2599, 7
    %v2603 = vsub.f32 %v2592, %v2601
    %v2604 = vsel %vm1130, %v2598, %v2603
    %v2605 = vld [vmem:[#allocation23] sm:$0xff]
    %v2606 = vld [vmem:[#allocation23 + $0x8] sm:$0xff]
    %vm2607 = vcmask 130048
    %v2609 = vsel %vm2607, %v2604, 0
    %2611 = vmatprep.subr.mxu0 0.0
    %2612 = vmatpush1.msra.mxu0 %v2605
    %2613 = vmatprep.subr.mxu0 0.0
    %2614 = vmatpush1.msra.mxu0 %v2606
    %2615 = vmatprep.subr.mxu0 0.0
    %2616 = vmatpush1.msra.mxu0 0.0
    %2617 = vmatprep.subr.mxu0 0.0
    %2618 = vmatpush1.msra.mxu0 0.0
    %2619 = vmatprep.subr.mxu0 0.0
    %2620 = vmatpush1.msra.mxu0 0.0
    %2621 = vmatprep.subr.mxu0 0.0
    %2622 = vmatpush1.msra.mxu0 0.0
    %2623 = vmatprep.subr.mxu0 0.0
    %2624 = vmatpush1.msra.mxu0 0.0
    %2625 = vmatprep.subr.mxu0 0.0
    %2626 = vmatpush1.msra.mxu0 0.0
    %2627 = vmatprep.subr.mxu0 0.0
    %2628 = vmatpush1.msra.mxu0 0.0
    %2629 = vmatprep.subr.mxu0 0.0
    %2630 = vmatpush1.msra.mxu0 0.0
    %2631 = vmatprep.subr.mxu0 0.0
    %2632 = vmatpush1.msra.mxu0 0.0
    %2633 = vmatprep.subr.mxu0 0.0
    %2634 = vmatpush1.msra.mxu0 0.0
    %2635 = vmatprep.subr.mxu0 0.0
    %2636 = vmatpush1.msra.mxu0 0.0
    %2637 = vmatprep.subr.mxu0 0.0
    %2638 = vmatpush1.msra.mxu0 0.0
    %2639 = vmatprep.subr.mxu0 0.0
    %2640 = vmatpush1.msra.mxu0 0.0
    %2641 = vmatprep.subr.mxu0 0.0
    %2642 = vmatpush1.msra.mxu0 0.0
    %2643 = vmatprep.subr.mxu0 0.0
    %2644 = vmatpush1.msra.mxu0 0.0
    %2645 = vmatprep.subr.mxu0 0.0
    %2646 = vmatpush1.msra.mxu0 0.0
    %2647 = vmatprep.subr.mxu0 0.0
    %2648 = vmatpush1.msra.mxu0 0.0
    %2649 = vmatprep.subr.mxu0 0.0
    %2650 = vmatpush1.msra.mxu0 0.0
    %2651 = vmatprep.subr.mxu0 0.0
    %2652 = vmatpush1.msra.mxu0 0.0
    %2653 = vmatprep.subr.mxu0 0.0
    %2654 = vmatpush1.msra.mxu0 0.0
    %2655 = vmatprep.subr.mxu0 0.0
    %2656 = vmatpush1.msra.mxu0 0.0
    %2657 = vmatprep.subr.mxu0 0.0
    %2658 = vmatpush1.msra.mxu0 0.0
    %2659 = vmatprep.subr.mxu0 0.0
    %2660 = vmatpush1.msra.mxu0 0.0
    %2661 = vmatprep.subr.mxu0 0.0
    %2662 = vmatpush1.msra.mxu0 0.0
    %2663 = vmatprep.subr.mxu0 0.0
    %2664 = vmatpush1.msra.mxu0 0.0
    %2665 = vmatprep.subr.mxu0 0.0
    %2666 = vmatpush1.msra.mxu0 0.0
    %2667 = vmatprep.subr.mxu0 0.0
    %2668 = vmatpush1.msra.mxu0 0.0
    %2669 = vmatprep.subr.mxu0 0.0
    %2670 = vmatpush1.msra.mxu0 0.0
    %2671 = vmatprep.subr.mxu0 0.0
    %2672 = vmatpush1.msra.mxu0 0.0
    %2673 = vmatprep.subr.mxu0 0.0
    %2674 = vmatpush1.msra.mxu0 0.0
    %2675 = vmatprep.mubr.f32.mxu0 0.0
    %2676 = vmatmul.mubr.f32.gmra.mrb[0].mxu0 %v2609
    %v2677 = vpop.f32.mrb[0].mxu0
    %v2678 = vadd.f32 0.0, %v2677
    %v2679 = vpop.f32.mrb[0].mxu0
    %2680 = vdwg.mxu0
    %v2681 = vlaneseq
    %v2682 = vshrl.u32 %v2681, 7
    %v2683 = vsub.s32 0, %v2682
    %v2684 = vrot.slane %v2678, %v2683
    %v2685 = vmul.f32 %v2481, %v2684
    %v2686 = vmul.f32 %v2482, %v2684
    %v2687 = vlaneseq
    %v2688 = vshrl.u32 %v2687, 7
    %v2689 = vsub.s32 1, %v2688
    %v2690 = vrot.slane %v2678, %v2689
    %v2691 = vadd.f32 %v2685, %v2690
    %v2692 = vadd.f32 %v2686, %v2690
    %v2693 = vpack.c.bf16 %v2692, %v2691
    %v2694 = vld [vmem:[%s39] sm:$0xff]
    %v2695 = vld [vmem:[%s39 + $0x8] sm:$0xf]
    %v2696 = vld [vmem:[%s39 + $0xc] sm:$0xff]
    %v2697 = vld [vmem:[%s39 + $0x14] sm:$0xf]
    %v2698 = vld [vmem:[%s39 + $0x18] sm:$0xff]
    %v2699 = vld [vmem:[%s39 + $0x20] sm:$0xf]
    %v2700 = vld [vmem:[%s39 + $0x24] sm:$0xff]
    %v2701 = vld [vmem:[%s39 + $0x2c] sm:$0xf]
    %v2702 = vld [vmem:[%s39 + $0x30] sm:$0xff]
    %v2703 = vld [vmem:[%s39 + $0x38] sm:$0xf]
    %v2704 = vld [vmem:[%s39 + $0x3c] sm:$0xff]
    %v2705 = vld [vmem:[%s39 + $0x44] sm:$0xf]
    %v2706 = vld [vmem:[%s39 + $0x48] sm:$0xff]
    %v2707 = vld [vmem:[%s39 + $0x50] sm:$0xf]
    %v2708 = vld [vmem:[%s39 + $0x54] sm:$0xff]
    %v2709 = vld [vmem:[%s39 + $0x5c] sm:$0xf]
    %v2710 = vld [vmem:[%s39 + $0x60] sm:$0xff]
    %v2711 = vld [vmem:[%s39 + $0x68] sm:$0xf]
    %v2712 = vld [vmem:[%s39 + $0x6c] sm:$0xff]
    %v2713 = vld [vmem:[%s39 + $0x74] sm:$0xf]
    %v2714 = vld [vmem:[%s39 + $0x78] sm:$0xff]
    %v2715 = vld [vmem:[%s39 + $0x80] sm:$0xf]
    %v2716 = vld [vmem:[%s39 + $0x84] sm:$0xff]
    %v2717 = vld [vmem:[%s39 + $0x8c] sm:$0xf]
    %v2718 = vld [vmem:[%s39 + $0x90] sm:$0xff]
    %v2719 = vld [vmem:[%s39 + $0x98] sm:$0xf]
    %v2720 = vld [vmem:[%s39 + $0x9c] sm:$0xff]
    %v2721 = vld [vmem:[%s39 + $0xa4] sm:$0xf]
    %v2722 = vld [vmem:[%s39 + $0xa8] sm:$0xff]
    %v2723 = vld [vmem:[%s39 + $0xb0] sm:$0xf]
    %v2724 = vld [vmem:[%s39 + $0xb4] sm:$0xff]
    %v2725 = vld [vmem:[%s39 + $0xbc] sm:$0xf]
    %v2758 = vunpack.c.l.b16 %v2694
    %v2759 = vunpack.c.h.b16 %v2694
    %v2760 = vunpack.c.l.b16 %v2695
    %v2761 = vunpack.c.l.b16 %v2696
    %v2762 = vunpack.c.h.b16 %v2696
    %v2763 = vunpack.c.l.b16 %v2697
    %v2764 = vunpack.c.l.b16 %v2698
    %v2765 = vunpack.c.h.b16 %v2698
    %v2766 = vunpack.c.l.b16 %v2699
    %v2767 = vunpack.c.l.b16 %v2700
    %v2768 = vunpack.c.h.b16 %v2700
    %v2769 = vunpack.c.l.b16 %v2701
    %v2770 = vunpack.c.l.b16 %v2702
    %v2771 = vunpack.c.h.b16 %v2702
    %v2772 = vunpack.c.l.b16 %v2703
    %v2773 = vunpack.c.l.b16 %v2704
    %v2774 = vunpack.c.h.b16 %v2704
    %v2775 = vunpack.c.l.b16 %v2705
    %v2776 = vunpack.c.l.b16 %v2706
    %v2777 = vunpack.c.h.b16 %v2706
    %v2778 = vunpack.c.l.b16 %v2707
    %v2779 = vunpack.c.l.b16 %v2708
    %v2780 = vunpack.c.h.b16 %v2708
    %v2781 = vunpack.c.l.b16 %v2709
    %v2782 = vunpack.c.l.b16 %v2710
    %v2783 = vunpack.c.h.b16 %v2710
    %v2784 = vunpack.c.l.b16 %v2711
    %v2785 = vunpack.c.l.b16 %v2712
    %v2786 = vunpack.c.h.b16 %v2712
    %v2787 = vunpack.c.l.b16 %v2713
    %v2788 = vunpack.c.l.b16 %v2714
    %v2789 = vunpack.c.h.b16 %v2714
    %v2790 = vunpack.c.l.b16 %v2715
    %v2791 = vunpack.c.l.b16 %v2716
    %v2792 = vunpack.c.h.b16 %v2716
    %v2793 = vunpack.c.l.b16 %v2717
    %v2794 = vunpack.c.l.b16 %v2718
    %v2795 = vunpack.c.h.b16 %v2718
    %v2796 = vunpack.c.l.b16 %v2719
    %v2797 = vunpack.c.l.b16 %v2720
    %v2798 = vunpack.c.h.b16 %v2720
    %v2799 = vunpack.c.l.b16 %v2721
    %v2800 = vunpack.c.l.b16 %v2722
    %v2801 = vunpack.c.h.b16 %v2722
    %v2802 = vunpack.c.l.b16 %v2723
    %v2803 = vunpack.c.l.b16 %v2724
    %v2804 = vunpack.c.h.b16 %v2724
    %v2805 = vunpack.c.l.b16 %v2725
    %v2806 = vpack.c.b16 %v2761, %v2758
    %v2807 = vpack.c.b16 %v2762, %v2759
    %v2808 = vpack.c.b16 %v2763, %v2760
    %v2809 = vpack.c.b16 %v2767, %v2764
    %v2810 = vpack.c.b16 %v2768, %v2765
    %v2811 = vpack.c.b16 %v2769, %v2766
    %v2812 = vpack.c.b16 %v2773, %v2770
    %v2813 = vpack.c.b16 %v2774, %v2771
    %v2814 = vpack.c.b16 %v2775, %v2772
    %v2815 = vpack.c.b16 %v2779, %v2776
    %v2816 = vpack.c.b16 %v2780, %v2777
    %v2817 = vpack.c.b16 %v2781, %v2778
    %v2818 = vpack.c.b16 %v2785, %v2782
    %v2819 = vpack.c.b16 %v2786, %v2783
    %v2820 = vpack.c.b16 %v2787, %v2784
    %v2821 = vpack.c.b16 %v2791, %v2788
    %v2822 = vpack.c.b16 %v2792, %v2789
    %v2823 = vpack.c.b16 %v2793, %v2790
    %v2824 = vpack.c.b16 %v2797, %v2794
    %v2825 = vpack.c.b16 %v2798, %v2795
    %v2826 = vpack.c.b16 %v2799, %v2796
    %v2827 = vpack.c.b16 %v2803, %v2800
    %v2828 = vpack.c.b16 %v2804, %v2801
    %v2829 = vpack.c.b16 %v2805, %v2802
    %2854 = vmatprep.subr.bf16.mxu0 %v2807
    %2855 = vmatpush1.bf16.msra.mxu0 %v2806
    %2856 = vmatprep.subr.bf16.mxu0 %v2810
    %2857 = vmatpush1.bf16.msra.mxu0 %v2809
    %2858 = vmatprep.subr.bf16.mxu0 %v2813
    %2859 = vmatpush1.bf16.msra.mxu0 %v2812
    %2860 = vmatprep.subr.bf16.mxu0 %v2816
    %2861 = vmatpush1.bf16.msra.mxu0 %v2815
    %2862 = vmatprep.subr.bf16.mxu0 %v2819
    %2863 = vmatpush1.bf16.msra.mxu0 %v2818
    %2864 = vmatprep.subr.bf16.mxu0 %v2822
    %2865 = vmatpush1.bf16.msra.mxu0 %v2821
    %2866 = vmatprep.subr.bf16.mxu0 %v2825
    %2867 = vmatpush1.bf16.msra.mxu0 %v2824
    %2868 = vmatprep.subr.bf16.mxu0 %v2828
    %2869 = vmatpush1.bf16.msra.mxu0 %v2827
    %2870 = vmatprep.subr.bf16.mxu0 0
    %2871 = vmatpush1.bf16.msra.mxu0 0
    %2872 = vmatprep.subr.bf16.mxu0 0
    %2873 = vmatpush1.bf16.msra.mxu0 0
    %2874 = vmatprep.subr.bf16.mxu0 0
    %2875 = vmatpush1.bf16.msra.mxu0 0
    %2876 = vmatprep.subr.bf16.mxu0 0
    %2877 = vmatpush1.bf16.msra.mxu0 0
    %2878 = vmatprep.subr.bf16.mxu0 0
    %2879 = vmatpush1.bf16.msra.mxu0 0
    %2880 = vmatprep.subr.bf16.mxu0 0
    %2881 = vmatpush1.bf16.msra.mxu0 0
    %2882 = vmatprep.subr.bf16.mxu0 0
    %2883 = vmatpush1.bf16.msra.mxu0 0
    %2884 = vmatprep.subr.bf16.mxu0 0
    %2885 = vmatpush1.bf16.msra.mxu0 0
    %2886 = vmatprep.mubr.bf16.mxu0 0
    %2887 = vmatmul.mubr.bf16.gmra.mrb[0].mxu0 %v2693
    %v2888 = vpop.f32.mrb[0].mxu0
    %v2889 = vadd.f32 0.0, %v2888
    %v2890 = vpop.f32.mrb[0].mxu0
    %v2891 = vadd.f32 0.0, %v2890
    %v2892 = vpop.f32.mrb[0].mxu0
    %v2893 = vadd.f32 0.0, %v2892
    %v2894 = vpop.f32.mrb[0].mxu0
    %v2895 = vadd.f32 0.0, %v2894
    %2896 = vdwg.mxu0
    %2897 = vmatprep.subr.bf16.mxu0 0
    %2898 = vmatpush1.bf16.msra.mxu0 %v2808
    %2899 = vmatprep.subr.bf16.mxu0 0
    %2900 = vmatpush1.bf16.msra.mxu0 %v2811
    %2901 = vmatprep.subr.bf16.mxu0 0
    %2902 = vmatpush1.bf16.msra.mxu0 %v2814
    %2903 = vmatprep.subr.bf16.mxu0 0
    %2904 = vmatpush1.bf16.msra.mxu0 %v2817
    %2905 = vmatprep.subr.bf16.mxu0 0
    %2906 = vmatpush1.bf16.msra.mxu0 %v2820
    %2907 = vmatprep.subr.bf16.mxu0 0
    %2908 = vmatpush1.bf16.msra.mxu0 %v2823
    %2909 = vmatprep.subr.bf16.mxu0 0
    %2910 = vmatpush1.bf16.msra.mxu0 %v2826
    %2911 = vmatprep.subr.bf16.mxu0 0
    %2912 = vmatpush1.bf16.msra.mxu0 %v2829
    %2913 = vmatprep.subr.bf16.mxu0 0
    %2914 = vmatpush1.bf16.msra.mxu0 0
    %2915 = vmatprep.subr.bf16.mxu0 0
    %2916 = vmatpush1.bf16.msra.mxu0 0
    %2917 = vmatprep.subr.bf16.mxu0 0
    %2918 = vmatpush1.bf16.msra.mxu0 0
    %2919 = vmatprep.subr.bf16.mxu0 0
    %2920 = vmatpush1.bf16.msra.mxu0 0
    %2921 = vmatprep.subr.bf16.mxu0 0
    %2922 = vmatpush1.bf16.msra.mxu0 0
    %2923 = vmatprep.subr.bf16.mxu0 0
    %2924 = vmatpush1.bf16.msra.mxu0 0
    %2925 = vmatprep.subr.bf16.mxu0 0
    %2926 = vmatpush1.bf16.msra.mxu0 0
    %2927 = vmatprep.subr.bf16.mxu0 0
    %2928 = vmatpush1.bf16.msra.mxu0 0
    %2929 = vmatprep.mubr.bf16.mxu0 0
    %2930 = vmatmul.mubr.bf16.gmra.mrb[0].mxu0 %v2693
    %v2931 = vpop.f32.mrb[0].mxu0
    %v2932 = vadd.f32 0.0, %v2931
    %v2933 = vpop.f32.mrb[0].mxu0
    %v2934 = vpop.f32.mrb[0].mxu0
    %v2935 = vadd.f32 0.0, %v2934
    %v2936 = vpop.f32.mrb[0].mxu0
    %2937 = vdwg.mxu0
    %v2938 = vpack.c.bf16 %v2893, %v2889
    %v2939 = vpack.c.bf16 %v2895, %v2891
    %v2940 = vpack.c.bf16 %v2935, %v2932
    %v2941 = vld [vmem:[#allocation25] sm:$0xf]
    %v2942 = vld [vmem:[#allocation25 + $0x4] sm:$0xf]
    %s2943 = scalar_lea.vmem [#allocation25], 8
    %v2944 = vld [vmem:[%s2943] sm:$0xf]
    %v2945 = vld [vmem:[%s2943 + $0x4] sm:$0xf]
    %v2948 = vunpack.c.l.b16 %v2944
    %v2949 = vunpack.c.l.b16 %v2945
    %v2950 = vpack.c.b16 %v2949, %v2948
    %v2952 = vsel %vm2607, %v2950, 0
    %2954 = vmatprep.subr.bf16.mxu0 0
    %2955 = vmatpush1.bf16.msra.mxu0 %v2939
    %2956 = vmatprep.subr.bf16.mxu0 0
    %2957 = vmatpush1.bf16.msra.mxu0 0
    %2958 = vmatprep.subr.bf16.mxu0 0
    %2959 = vmatpush1.bf16.msra.mxu0 0
    %2960 = vmatprep.subr.bf16.mxu0 0
    %2961 = vmatpush1.bf16.msra.mxu0 0
    %2962 = vmatprep.subr.bf16.mxu0 0
    %2963 = vmatpush1.bf16.msra.mxu0 0
    %2964 = vmatprep.subr.bf16.mxu0 0
    %2965 = vmatpush1.bf16.msra.mxu0 0
    %2966 = vmatprep.subr.bf16.mxu0 0
    %2967 = vmatpush1.bf16.msra.mxu0 0
    %2968 = vmatprep.subr.bf16.mxu0 0
    %2969 = vmatpush1.bf16.msra.mxu0 0
    %2970 = vmatprep.subr.bf16.mxu0 0
    %2971 = vmatpush1.bf16.msra.mxu0 0
    %2972 = vmatprep.subr.bf16.mxu0 0
    %2973 = vmatpush1.bf16.msra.mxu0 0
    %2974 = vmatprep.subr.bf16.mxu0 0
    %2975 = vmatpush1.bf16.msra.mxu0 0
    %2976 = vmatprep.subr.bf16.mxu0 0
    %2977 = vmatpush1.bf16.msra.mxu0 0
    %2978 = vmatprep.subr.bf16.mxu0 0
    %2979 = vmatpush1.bf16.msra.mxu0 0
    %2980 = vmatprep.subr.bf16.mxu0 0
    %2981 = vmatpush1.bf16.msra.mxu0 0
    %2982 = vmatprep.subr.bf16.mxu0 0
    %2983 = vmatpush1.bf16.msra.mxu0 0
    %2984 = vmatprep.subr.bf16.mxu0 0
    %2985 = vmatpush1.bf16.msra.mxu0 0
    %2986 = vmatprep.mubr.bf16.mxu0 0
    %2987 = vmatmul.mubr.bf16.gmra.mrb[0].mxu0 %v2952
    %v2988 = vpop.f32.mrb[0].mxu0
    %v2989 = vadd.f32 0.0, %v2988
    %v2990 = vpop.f32.mrb[0].mxu0
    %v2991 = vpop.f32.mrb[0].mxu0
    %v2992 = vadd.f32 0.0, %v2991
    %v2993 = vpop.f32.mrb[0].mxu0
    %2994 = vdwg.mxu0
    %v2997 = vunpack.c.l.b16 %v2941
    %v2998 = vunpack.c.l.b16 %v2942
    %v2999 = vpack.c.b16 %v2998, %v2997
    %v3001 = vsel %vm2607, %v2999, 0
    %3003 = vmatprep.subr.bf16.mxu0 0
    %3004 = vmatpush1.bf16.msra.mxu0 %v2938
    %3005 = vmatprep.subr.bf16.mxu0 0
    %3006 = vmatpush1.bf16.msra.mxu0 0
    %3007 = vmatprep.subr.bf16.mxu0 0
    %3008 = vmatpush1.bf16.msra.mxu0 0
    %3009 = vmatprep.subr.bf16.mxu0 0
    %3010 = vmatpush1.bf16.msra.mxu0 0
    %3011 = vmatprep.subr.bf16.mxu0 0
    %3012 = vmatpush1.bf16.msra.mxu0 0
    %3013 = vmatprep.subr.bf16.mxu0 0
    %3014 = vmatpush1.bf16.msra.mxu0 0
    %3015 = vmatprep.subr.bf16.mxu0 0
    %3016 = vmatpush1.bf16.msra.mxu0 0
    %3017 = vmatprep.subr.bf16.mxu0 0
    %3018 = vmatpush1.bf16.msra.mxu0 0
    %3019 = vmatprep.subr.bf16.mxu0 0
    %3020 = vmatpush1.bf16.msra.mxu0 0
    %3021 = vmatprep.subr.bf16.mxu0 0
    %3022 = vmatpush1.bf16.msra.mxu0 0
    %3023 = vmatprep.subr.bf16.mxu0 0
    %3024 = vmatpush1.bf16.msra.mxu0 0
    %3025 = vmatprep.subr.bf16.mxu0 0
    %3026 = vmatpush1.bf16.msra.mxu0 0
    %3027 = vmatprep.subr.bf16.mxu0 0
    %3028 = vmatpush1.bf16.msra.mxu0 0
    %3029 = vmatprep.subr.bf16.mxu0 0
    %3030 = vmatpush1.bf16.msra.mxu0 0
    %3031 = vmatprep.subr.bf16.mxu0 0
    %3032 = vmatpush1.bf16.msra.mxu0 0
    %3033 = vmatprep.subr.bf16.mxu0 0
    %3034 = vmatpush1.bf16.msra.mxu0 0
    %3035 = vmatprep.mubr.bf16.mxu0 0
    %3036 = vmatmul.mubr.bf16.gmra.mrb[0].mxu0 %v3001
    %v3037 = vpop.f32.mrb[0].mxu0
    %v3038 = vadd.f32 %v2989, %v3037
    %v3039 = vpop.f32.mrb[0].mxu0
    %v3040 = vpop.f32.mrb[0].mxu0
    %v3041 = vadd.f32 %v2992, %v3040
    %v3042 = vpop.f32.mrb[0].mxu0
    %3043 = vdwg.mxu0
    %s3044 = scalar_lea.vmem [#allocation25], 16
    %v3045 = vld [vmem:[%s3044] sm:$0xf]
    %v3046 = vld [vmem:[%s3044 + $0x4] sm:$0xf]
    %v3049 = vunpack.c.l.b16 %v3045
    %v3050 = vunpack.c.l.b16 %v3046
    %v3051 = vpack.c.b16 %v3050, %v3049
    %v3053 = vsel %vm2607, %v3051, 0
    %3055 = vmatprep.subr.bf16.mxu0 0
    %3056 = vmatpush1.bf16.msra.mxu0 %v2940
    %3057 = vmatprep.subr.bf16.mxu0 0
    %3058 = vmatpush1.bf16.msra.mxu0 0
    %3059 = vmatprep.subr.bf16.mxu0 0
    %3060 = vmatpush1.bf16.msra.mxu0 0
    %3061 = vmatprep.subr.bf16.mxu0 0
    %3062 = vmatpush1.bf16.msra.mxu0 0
    %3063 = vmatprep.subr.bf16.mxu0 0
    %3064 = vmatpush1.bf16.msra.mxu0 0
    %3065 = vmatprep.subr.bf16.mxu0 0
    %3066 = vmatpush1.bf16.msra.mxu0 0
    %3067 = vmatprep.subr.bf16.mxu0 0
    %3068 = vmatpush1.bf16.msra.mxu0 0
    %3069 = vmatprep.subr.bf16.mxu0 0
    %3070 = vmatpush1.bf16.msra.mxu0 0
    %3071 = vmatprep.subr.bf16.mxu0 0
    %3072 = vmatpush1.bf16.msra.mxu0 0
    %3073 = vmatprep.subr.bf16.mxu0 0
    %3074 = vmatpush1.bf16.msra.mxu0 0
    %3075 = vmatprep.subr.bf16.mxu0 0
    %3076 = vmatpush1.bf16.msra.mxu0 0
    %3077 = vmatprep.subr.bf16.mxu0 0
    %3078 = vmatpush1.bf16.msra.mxu0 0
    %3079 = vmatprep.subr.bf16.mxu0 0
    %3080 = vmatpush1.bf16.msra.mxu0 0
    %3081 = vmatprep.subr.bf16.mxu0 0
    %3082 = vmatpush1.bf16.msra.mxu0 0
    %3083 = vmatprep.subr.bf16.mxu0 0
    %3084 = vmatpush1.bf16.msra.mxu0 0
    %3085 = vmatprep.subr.bf16.mxu0 0
    %3086 = vmatpush1.bf16.msra.mxu0 0
    %3087 = vmatprep.mubr.bf16.mxu0 0
    %3088 = vmatmul.mubr.bf16.gmra.mrb[0].mxu0 %v3053
    %v3089 = vpop.f32.mrb[0].mxu0
    %v3090 = vadd.f32 0.0, %v3089
    %v3091 = vpop.f32.mrb[0].mxu0
    %v3092 = vpop.f32.mrb[0].mxu0
    %v3093 = vadd.f32 0.0, %v3092
    %v3094 = vpop.f32.mrb[0].mxu0
    %3095 = vdwg.mxu0
    %v3096 = vadd.f32 %v3038, %v3090
    %v3097 = vadd.f32 %v3041, %v3093
    %v3098 = vld [vmem:[#allocation26] sm:$0x1]
    %v3100 = vlaneseq
    %v3101 = vshrl.u32 %v3100, 7
    %v3102 = vsub.s32 0, %v3101
    %v3103 = vrot.slane %v3098, %v3102
    %v3105 = vadd.f32 %v3096, %v3103
    %v3106 = vadd.f32 %v3097, %v3103
    %v3107 = vmax.f32 %v3105, 0.0
    %v3108 = vmax.f32 %v3106, 0.0
    %v3109 = vadd.f32 %v3107, %v3108
    %v3110 = vrot.slane %v3109, 4
    %v3111 = vadd.f32 %v3109, %v3110
    %v3112 = vrot.slane %v3111, 2
    %v3113 = vadd.f32 %v3111, %v3112
    %v3114 = vrot.slane %v3113, 1
    %v3115 = vadd.f32 %v3113, %v3114
    %v3116 = vmul.f32 %v3107, %v3107
    %v3117 = vmul.f32 %v3108, %v3108
    %v3118 = vadd.f32 %v3116, %v3117
    %v3119 = vrot.slane %v3118, 4
    %v3120 = vadd.f32 %v3118, %v3119
    %v3121 = vrot.slane %v3120, 2
    %v3122 = vadd.f32 %v3120, %v3121
    %v3123 = vrot.slane %v3122, 1
    %v3124 = vadd.f32 %v3122, %v3123
    %v3125 = vsel %vm1130, %v3115, %v3124
    %v3126 = vld [vmem:[%s47] sm:$0xff]
    %v3127 = vld [vmem:[%s47 + $0x8] sm:$0xff]
    %v3128 = vld [vmem:[%s47 + $0x10] sm:$0xff]
    %v3129 = vld [vmem:[%s47 + $0x18] sm:$0xff]
    %v3130 = vld [vmem:[%s47 + $0x20] sm:$0xff]
    %v3131 = vld [vmem:[%s47 + $0x28] sm:$0xff]
    %v3132 = vld [vmem:[%s47 + $0x30] sm:$0xff]
    %v3133 = vld [vmem:[%s47 + $0x38] sm:$0xff]
    %v3134 = vld [vmem:[%s47 + $0x40] sm:$0xff]
    %v3135 = vld [vmem:[%s47 + $0x48] sm:$0xff]
    %v3136 = vld [vmem:[%s47 + $0x50] sm:$0xff]
    %v3137 = vld [vmem:[%s47 + $0x58] sm:$0xff]
    %v3138 = vld [vmem:[%s47 + $0x60] sm:$0xff]
    %v3139 = vld [vmem:[%s47 + $0x68] sm:$0xff]
    %v3140 = vld [vmem:[%s47 + $0x70] sm:$0xff]
    %v3141 = vld [vmem:[%s47 + $0x78] sm:$0xff]
    %3142 = vmatprep.subr.mxu0 0.0
    %3143 = vmatpush1.msra.mxu0 %v3126
    %3144 = vmatprep.subr.mxu0 0.0
    %3145 = vmatpush1.msra.mxu0 %v3127
    %3146 = vmatprep.subr.mxu0 0.0
    %3147 = vmatpush1.msra.mxu0 %v3128
    %3148 = vmatprep.subr.mxu0 0.0
    %3149 = vmatpush1.msra.mxu0 %v3129
    %3150 = vmatprep.subr.mxu0 0.0
    %3151 = vmatpush1.msra.mxu0 %v3130
    %3152 = vmatprep.subr.mxu0 0.0
    %3153 = vmatpush1.msra.mxu0 %v3131
    %3154 = vmatprep.subr.mxu0 0.0
    %3155 = vmatpush1.msra.mxu0 %v3132
    %3156 = vmatprep.subr.mxu0 0.0
    %3157 = vmatpush1.msra.mxu0 %v3133
    %3158 = vmatprep.subr.mxu0 0.0
    %3159 = vmatpush1.msra.mxu0 %v3134
    %3160 = vmatprep.subr.mxu0 0.0
    %3161 = vmatpush1.msra.mxu0 %v3135
    %3162 = vmatprep.subr.mxu0 0.0
    %3163 = vmatpush1.msra.mxu0 %v3136
    %3164 = vmatprep.subr.mxu0 0.0
    %3165 = vmatpush1.msra.mxu0 %v3137
    %3166 = vmatprep.subr.mxu0 0.0
    %3167 = vmatpush1.msra.mxu0 %v3138
    %3168 = vmatprep.subr.mxu0 0.0
    %3169 = vmatpush1.msra.mxu0 %v3139
    %3170 = vmatprep.subr.mxu0 0.0
    %3171 = vmatpush1.msra.mxu0 %v3140
    %3172 = vmatprep.subr.mxu0 0.0
    %3173 = vmatpush1.msra.mxu0 %v3141
    %3174 = vmatprep.subr.mxu0 0.0
    %3175 = vmatpush1.msra.mxu0 0.0
    %3176 = vmatprep.subr.mxu0 0.0
    %3177 = vmatpush1.msra.mxu0 0.0
    %3178 = vmatprep.subr.mxu0 0.0
    %3179 = vmatpush1.msra.mxu0 0.0
    %3180 = vmatprep.subr.mxu0 0.0
    %3181 = vmatpush1.msra.mxu0 0.0
    %3182 = vmatprep.subr.mxu0 0.0
    %3183 = vmatpush1.msra.mxu0 0.0
    %3184 = vmatprep.subr.mxu0 0.0
    %3185 = vmatpush1.msra.mxu0 0.0
    %3186 = vmatprep.subr.mxu0 0.0
    %3187 = vmatpush1.msra.mxu0 0.0
    %3188 = vmatprep.subr.mxu0 0.0
    %3189 = vmatpush1.msra.mxu0 0.0
    %3190 = vmatprep.subr.mxu0 0.0
    %3191 = vmatpush1.msra.mxu0 0.0
    %3192 = vmatprep.subr.mxu0 0.0
    %3193 = vmatpush1.msra.mxu0 0.0
    %3194 = vmatprep.subr.mxu0 0.0
    %3195 = vmatpush1.msra.mxu0 0.0
    %3196 = vmatprep.subr.mxu0 0.0
    %3197 = vmatpush1.msra.mxu0 0.0
    %3198 = vmatprep.subr.mxu0 0.0
    %3199 = vmatpush1.msra.mxu0 0.0
    %3200 = vmatprep.subr.mxu0 0.0
    %3201 = vmatpush1.msra.mxu0 0.0
    %3202 = vmatprep.subr.mxu0 0.0
    %3203 = vmatpush1.msra.mxu0 0.0
    %3204 = vmatprep.subr.mxu0 0.0
    %3205 = vmatpush1.msra.mxu0 0.0
    %3206 = vmatprep.mubr.f32.mxu0 0.0
    %3207 = vmatmul.mubr.f32.gmra.mrb[0].mxu0 %v3125
    %v3208 = vpop.f32.mrb[0].mxu0
    %v3209 = vadd.f32 0.0, %v3208
    %v3210 = vpop.f32.mrb[0].mxu0
    %3211 = vdwg.mxu0
    %v3212 = vmul.f32 %v3209, 0.0078125
    %v3213 = vmul.f32 %v3212, %v3212
    %v3215 = vrot.slane %v3213, 7
    %v3217 = vsub.f32 %v3212, %v3215
    %v3218 = vld [vmem:[#allocation28] sm:$0x3]
    %v3219 = vadd.f32 %v3217, 1e-05
    %v3220 = vrsqrt.pop %v3219
    %v3222 = vrot.slane %v3220, 1
    %v3224 = vmul.f32 %v3218, %v3222
    %v3225 = vmul.f32 %v3212, %v3224
    %v3227 = vrot.slane %v3225, 7
    %v3229 = vsub.f32 %v3218, %v3227
    %v3230 = vsel %vm1130, %v3224, %v3229
    %v3231 = vld [vmem:[#allocation29] sm:$0xff]
    %v3232 = vld [vmem:[#allocation29 + $0x8] sm:$0xff]
    %v3234 = vsel %vm2607, %v3230, 0
    %3236 = vmatprep.subr.mxu0 0.0
    %3237 = vmatpush1.msra.mxu0 %v3231
    %3238 = vmatprep.subr.mxu0 0.0
    %3239 = vmatpush1.msra.mxu0 %v3232
    %3240 = vmatprep.subr.mxu0 0.0
    %3241 = vmatpush1.msra.mxu0 0.0
    %3242 = vmatprep.subr.mxu0 0.0
    %3243 = vmatpush1.msra.mxu0 0.0
    %3244 = vmatprep.subr.mxu0 0.0
    %3245 = vmatpush1.msra.mxu0 0.0
    %3246 = vmatprep.subr.mxu0 0.0
    %3247 = vmatpush1.msra.mxu0 0.0
    %3248 = vmatprep.subr.mxu0 0.0
    %3249 = vmatpush1.msra.mxu0 0.0
    %3250 = vmatprep.subr.mxu0 0.0
    %3251 = vmatpush1.msra.mxu0 0.0
    %3252 = vmatprep.subr.mxu0 0.0
    %3253 = vmatpush1.msra.mxu0 0.0
    %3254 = vmatprep.subr.mxu0 0.0
    %3255 = vmatpush1.msra.mxu0 0.0
    %3256 = vmatprep.subr.mxu0 0.0
    %3257 = vmatpush1.msra.mxu0 0.0
    %3258 = vmatprep.subr.mxu0 0.0
    %3259 = vmatpush1.msra.mxu0 0.0
    %3260 = vmatprep.subr.mxu0 0.0
    %3261 = vmatpush1.msra.mxu0 0.0
    %3262 = vmatprep.subr.mxu0 0.0
    %3263 = vmatpush1.msra.mxu0 0.0
    %3264 = vmatprep.subr.mxu0 0.0
    %3265 = vmatpush1.msra.mxu0 0.0
    %3266 = vmatprep.subr.mxu0 0.0
    %3267 = vmatpush1.msra.mxu0 0.0
    %3268 = vmatprep.subr.mxu0 0.0
    %3269 = vmatpush1.msra.mxu0 0.0
    %3270 = vmatprep.subr.mxu0 0.0
    %3271 = vmatpush1.msra.mxu0 0.0
    %3272 = vmatprep.subr.mxu0 0.0
    %3273 = vmatpush1.msra.mxu0 0.0
    %3274 = vmatprep.subr.mxu0 0.0
    %3275 = vmatpush1.msra.mxu0 0.0
    %3276 = vmatprep.subr.mxu0 0.0
    %3277 = vmatpush1.msra.mxu0 0.0
    %3278 = vmatprep.subr.mxu0 0.0
    %3279 = vmatpush1.msra.mxu0 0.0
    %3280 = vmatprep.subr.mxu0 0.0
    %3281 = vmatpush1.msra.mxu0 0.0
    %3282 = vmatprep.subr.mxu0 0.0
    %3283 = vmatpush1.msra.mxu0 0.0
    %3284 = vmatprep.subr.mxu0 0.0
    %3285 = vmatpush1.msra.mxu0 0.0
    %3286 = vmatprep.subr.mxu0 0.0
    %3287 = vmatpush1.msra.mxu0 0.0
    %3288 = vmatprep.subr.mxu0 0.0
    %3289 = vmatpush1.msra.mxu0 0.0
    %3290 = vmatprep.subr.mxu0 0.0
    %3291 = vmatpush1.msra.mxu0 0.0
    %3292 = vmatprep.subr.mxu0 0.0
    %3293 = vmatpush1.msra.mxu0 0.0
    %3294 = vmatprep.subr.mxu0 0.0
    %3295 = vmatpush1.msra.mxu0 0.0
    %3296 = vmatprep.subr.mxu0 0.0
    %3297 = vmatpush1.msra.mxu0 0.0
    %3298 = vmatprep.subr.mxu0 0.0
    %3299 = vmatpush1.msra.mxu0 0.0
    %3300 = vmatprep.mubr.f32.mxu0 0.0
    %3301 = vmatmul.mubr.f32.gmra.mrb[0].mxu0 %v3234
    %v3302 = vpop.f32.mrb[0].mxu0
    %v3303 = vadd.f32 0.0, %v3302
    %v3304 = vpop.f32.mrb[0].mxu0
    %3305 = vdwg.mxu0
    %v3306 = vlaneseq
    %v3307 = vshrl.u32 %v3306, 7
    %v3308 = vsub.s32 0, %v3307
    %v3309 = vrot.slane %v3303, %v3308
    %v3310 = vmul.f32 %v3107, %v3309
    %v3311 = vmul.f32 %v3108, %v3309
    %v3312 = vlaneseq
    %v3313 = vshrl.u32 %v3312, 7
    %v3314 = vsub.s32 1, %v3313
    %v3315 = vrot.slane %v3303, %v3314
    %v3316 = vadd.f32 %v3310, %v3315
    %v3317 = vadd.f32 %v3311, %v3315
    %v3318 = vpack.c.bf16 %v3317, %v3316
    %v3319 = vld [vmem:[%s51] sm:$0xff]
    %v3320 = vld [vmem:[%s51 + $0x8] sm:$0xf]
    %v3321 = vld [vmem:[%s51 + $0xc] sm:$0xff]
    %v3322 = vld [vmem:[%s51 + $0x14] sm:$0xf]
    %v3323 = vld [vmem:[%s51 + $0x18] sm:$0xff]
    %v3324 = vld [vmem:[%s51 + $0x20] sm:$0xf]
    %v3325 = vld [vmem:[%s51 + $0x24] sm:$0xff]
    %v3326 = vld [vmem:[%s51 + $0x2c] sm:$0xf]
    %v3327 = vld [vmem:[%s51 + $0x30] sm:$0xff]
    %v3328 = vld [vmem:[%s51 + $0x38] sm:$0xf]
    %v3329 = vld [vmem:[%s51 + $0x3c] sm:$0xff]
    %v3330 = vld [vmem:[%s51 + $0x44] sm:$0xf]
    %v3331 = vld [vmem:[%s51 + $0x48] sm:$0xff]
    %v3332 = vld [vmem:[%s51 + $0x50] sm:$0xf]
    %v3333 = vld [vmem:[%s51 + $0x54] sm:$0xff]
    %v3334 = vld [vmem:[%s51 + $0x5c] sm:$0xf]
    %v3335 = vld [vmem:[%s51 + $0x60] sm:$0xff]
    %v3336 = vld [vmem:[%s51 + $0x68] sm:$0xf]
    %v3337 = vld [vmem:[%s51 + $0x6c] sm:$0xff]
    %v3338 = vld [vmem:[%s51 + $0x74] sm:$0xf]
    %v3339 = vld [vmem:[%s51 + $0x78] sm:$0xff]
    %v3340 = vld [vmem:[%s51 + $0x80] sm:$0xf]
    %v3341 = vld [vmem:[%s51 + $0x84] sm:$0xff]
    %v3342 = vld [vmem:[%s51 + $0x8c] sm:$0xf]
    %v3343 = vld [vmem:[%s51 + $0x90] sm:$0xff]
    %v3344 = vld [vmem:[%s51 + $0x98] sm:$0xf]
    %v3345 = vld [vmem:[%s51 + $0x9c] sm:$0xff]
    %v3346 = vld [vmem:[%s51 + $0xa4] sm:$0xf]
    %v3347 = vld [vmem:[%s51 + $0xa8] sm:$0xff]
    %v3348 = vld [vmem:[%s51 + $0xb0] sm:$0xf]
    %v3349 = vld [vmem:[%s51 + $0xb4] sm:$0xff]
    %v3350 = vld [vmem:[%s51 + $0xbc] sm:$0xf]
    %v3383 = vunpack.c.l.b16 %v3319
    %v3384 = vunpack.c.h.b16 %v3319
    %v3385 = vunpack.c.l.b16 %v3320
    %v3386 = vunpack.c.l.b16 %v3321
    %v3387 = vunpack.c.h.b16 %v3321
    %v3388 = vunpack.c.l.b16 %v3322
    %v3389 = vunpack.c.l.b16 %v3323
    %v3390 = vunpack.c.h.b16 %v3323
    %v3391 = vunpack.c.l.b16 %v3324
    %v3392 = vunpack.c.l.b16 %v3325
    %v3393 = vunpack.c.h.b16 %v3325
    %v3394 = vunpack.c.l.b16 %v3326
    %v3395 = vunpack.c.l.b16 %v3327
    %v3396 = vunpack.c.h.b16 %v3327
    %v3397 = vunpack.c.l.b16 %v3328
    %v3398 = vunpack.c.l.b16 %v3329
    %v3399 = vunpack.c.h.b16 %v3329
    %v3400 = vunpack.c.l.b16 %v3330
    %v3401 = vunpack.c.l.b16 %v3331
    %v3402 = vunpack.c.h.b16 %v3331
    %v3403 = vunpack.c.l.b16 %v3332
    %v3404 = vunpack.c.l.b16 %v3333
    %v3405 = vunpack.c.h.b16 %v3333
    %v3406 = vunpack.c.l.b16 %v3334
    %v3407 = vunpack.c.l.b16 %v3335
    %v3408 = vunpack.c.h.b16 %v3335
    %v3409 = vunpack.c.l.b16 %v3336
    %v3410 = vunpack.c.l.b16 %v3337
    %v3411 = vunpack.c.h.b16 %v3337
    %v3412 = vunpack.c.l.b16 %v3338
    %v3413 = vunpack.c.l.b16 %v3339
    %v3414 = vunpack.c.h.b16 %v3339
    %v3415 = vunpack.c.l.b16 %v3340
    %v3416 = vunpack.c.l.b16 %v3341
    %v3417 = vunpack.c.h.b16 %v3341
    %v3418 = vunpack.c.l.b16 %v3342
    %v3419 = vunpack.c.l.b16 %v3343
    %v3420 = vunpack.c.h.b16 %v3343
    %v3421 = vunpack.c.l.b16 %v3344
    %v3422 = vunpack.c.l.b16 %v3345
    %v3423 = vunpack.c.h.b16 %v3345
    %v3424 = vunpack.c.l.b16 %v3346
    %v3425 = vunpack.c.l.b16 %v3347
    %v3426 = vunpack.c.h.b16 %v3347
    %v3427 = vunpack.c.l.b16 %v3348
    %v3428 = vunpack.c.l.b16 %v3349
    %v3429 = vunpack.c.h.b16 %v3349
    %v3430 = vunpack.c.l.b16 %v3350
    %v3431 = vpack.c.b16 %v3386, %v3383
    %v3432 = vpack.c.b16 %v3387, %v3384
    %v3433 = vpack.c.b16 %v3388, %v3385
    %v3434 = vpack.c.b16 %v3392, %v3389
    %v3435 = vpack.c.b16 %v3393, %v3390
    %v3436 = vpack.c.b16 %v3394, %v3391
    %v3437 = vpack.c.b16 %v3398, %v3395
    %v3438 = vpack.c.b16 %v3399, %v3396
    %v3439 = vpack.c.b16 %v3400, %v3397
    %v3440 = vpack.c.b16 %v3404, %v3401
    %v3441 = vpack.c.b16 %v3405, %v3402
    %v3442 = vpack.c.b16 %v3406, %v3403
    %v3443 = vpack.c.b16 %v3410, %v3407
    %v3444 = vpack.c.b16 %v3411, %v3408
    %v3445 = vpack.c.b16 %v3412, %v3409
    %v3446 = vpack.c.b16 %v3416, %v3413
    %v3447 = vpack.c.b16 %v3417, %v3414
    %v3448 = vpack.c.b16 %v3418, %v3415
    %v3449 = vpack.c.b16 %v3422, %v3419
    %v3450 = vpack.c.b16 %v3423, %v3420
    %v3451 = vpack.c.b16 %v3424, %v3421
    %v3452 = vpack.c.b16 %v3428, %v3425
    %v3453 = vpack.c.b16 %v3429, %v3426
    %v3454 = vpack.c.b16 %v3430, %v3427
    %3479 = vmatprep.subr.bf16.mxu0 %v3432
    %3480 = vmatpush1.bf16.msra.mxu0 %v3431
    %3481 = vmatprep.subr.bf16.mxu0 %v3435
    %3482 = vmatpush1.bf16.msra.mxu0 %v3434
    %3483 = vmatprep.subr.bf16.mxu0 %v3438
    %3484 = vmatpush1.bf16.msra.mxu0 %v3437
    %3485 = vmatprep.subr.bf16.mxu0 %v3441
    %3486 = vmatpush1.bf16.msra.mxu0 %v3440
    %3487 = vmatprep.subr.bf16.mxu0 %v3444
    %3488 = vmatpush1.bf16.msra.mxu0 %v3443
    %3489 = vmatprep.subr.bf16.mxu0 %v3447
    %3490 = vmatpush1.bf16.msra.mxu0 %v3446
    %3491 = vmatprep.subr.bf16.mxu0 %v3450
    %3492 = vmatpush1.bf16.msra.mxu0 %v3449
    %3493 = vmatprep.subr.bf16.mxu0 %v3453
    %3494 = vmatpush1.bf16.msra.mxu0 %v3452
    %3495 = vmatprep.subr.bf16.mxu0 0
    %3496 = vmatpush1.bf16.msra.mxu0 0
    %3497 = vmatprep.subr.bf16.mxu0 0
    %3498 = vmatpush1.bf16.msra.mxu0 0
    %3499 = vmatprep.subr.bf16.mxu0 0
    %3500 = vmatpush1.bf16.msra.mxu0 0
    %3501 = vmatprep.subr.bf16.mxu0 0
    %3502 = vmatpush1.bf16.msra.mxu0 0
    %3503 = vmatprep.subr.bf16.mxu0 0
    %3504 = vmatpush1.bf16.msra.mxu0 0
    %3505 = vmatprep.subr.bf16.mxu0 0
    %3506 = vmatpush1.bf16.msra.mxu0 0
    %3507 = vmatprep.subr.bf16.mxu0 0
    %3508 = vmatpush1.bf16.msra.mxu0 0
    %3509 = vmatprep.subr.bf16.mxu0 0
    %3510 = vmatpush1.bf16.msra.mxu0 0
    %3511 = vmatprep.mubr.bf16.mxu0 0
    %3512 = vmatmul.mubr.bf16.gmra.mrb[0].mxu0 %v3318
    %v3513 = vpop.f32.mrb[0].mxu0
    %v3514 = vadd.f32 0.0, %v3513
    %v3515 = vpop.f32.mrb[0].mxu0
    %v3516 = vadd.f32 0.0, %v3515
    %v3517 = vpop.f32.mrb[0].mxu0
    %v3518 = vadd.f32 0.0, %v3517
    %v3519 = vpop.f32.mrb[0].mxu0
    %v3520 = vadd.f32 0.0, %v3519
    %3521 = vdwg.mxu0
    %3522 = vmatprep.subr.bf16.mxu0 0
    %3523 = vmatpush1.bf16.msra.mxu0 %v3433
    %3524 = vmatprep.subr.bf16.mxu0 0
    %3525 = vmatpush1.bf16.msra.mxu0 %v3436
    %3526 = vmatprep.subr.bf16.mxu0 0
    %3527 = vmatpush1.bf16.msra.mxu0 %v3439
    %3528 = vmatprep.subr.bf16.mxu0 0
    %3529 = vmatpush1.bf16.msra.mxu0 %v3442
    %3530 = vmatprep.subr.bf16.mxu0 0
    %3531 = vmatpush1.bf16.msra.mxu0 %v3445
    %3532 = vmatprep.subr.bf16.mxu0 0
    %3533 = vmatpush1.bf16.msra.mxu0 %v3448
    %3534 = vmatprep.subr.bf16.mxu0 0
    %3535 = vmatpush1.bf16.msra.mxu0 %v3451
    %3536 = vmatprep.subr.bf16.mxu0 0
    %3537 = vmatpush1.bf16.msra.mxu0 %v3454
    %3538 = vmatprep.subr.bf16.mxu0 0
    %3539 = vmatpush1.bf16.msra.mxu0 0
    %3540 = vmatprep.subr.bf16.mxu0 0
    %3541 = vmatpush1.bf16.msra.mxu0 0
    %3542 = vmatprep.subr.bf16.mxu0 0
    %3543 = vmatpush1.bf16.msra.mxu0 0
    %3544 = vmatprep.subr.bf16.mxu0 0
    %3545 = vmatpush1.bf16.msra.mxu0 0
    %3546 = vmatprep.subr.bf16.mxu0 0
    %3547 = vmatpush1.bf16.msra.mxu0 0
    %3548 = vmatprep.subr.bf16.mxu0 0
    %3549 = vmatpush1.bf16.msra.mxu0 0
    %3550 = vmatprep.subr.bf16.mxu0 0
    %3551 = vmatpush1.bf16.msra.mxu0 0
    %3552 = vmatprep.subr.bf16.mxu0 0
    %3553 = vmatpush1.bf16.msra.mxu0 0
    %3554 = vmatprep.mubr.bf16.mxu0 0
    %3555 = vmatmul.mubr.bf16.gmra.mrb[0].mxu0 %v3318
    %v3556 = vpop.f32.mrb[0].mxu0
    %v3557 = vadd.f32 0.0, %v3556
    %v3558 = vpop.f32.mrb[0].mxu0
    %v3559 = vpop.f32.mrb[0].mxu0
    %v3560 = vadd.f32 0.0, %v3559
    %v3561 = vpop.f32.mrb[0].mxu0
    %3562 = vdwg.mxu0
    %v3563 = vpack.c.bf16 %v3518, %v3514
    %v3564 = vpack.c.bf16 %v3520, %v3516
    %v3565 = vpack.c.bf16 %v3560, %v3557
    %v3566 = vld [vmem:[#allocation31] sm:$0xf]
    %s3567 = scalar_lea.vmem [#allocation31], 4
    %v3568 = vld [vmem:[%s3567] sm:$0xf]
    %v3570 = vsel %vm2607, %v3568, 0
    %3572 = vmatprep.subr.bf16.mxu0 0
    %3573 = vmatpush1.bf16.msra.mxu0 %v3564
    %3574 = vmatprep.subr.bf16.mxu0 0
    %3575 = vmatpush1.bf16.msra.mxu0 0
    %3576 = vmatprep.subr.bf16.mxu0 0
    %3577 = vmatpush1.bf16.msra.mxu0 0
    %3578 = vmatprep.subr.bf16.mxu0 0
    %3579 = vmatpush1.bf16.msra.mxu0 0
    %3580 = vmatprep.subr.bf16.mxu0 0
    %3581 = vmatpush1.bf16.msra.mxu0 0
    %3582 = vmatprep.subr.bf16.mxu0 0
    %3583 = vmatpush1.bf16.msra.mxu0 0
    %3584 = vmatprep.subr.bf16.mxu0 0
    %3585 = vmatpush1.bf16.msra.mxu0 0
    %3586 = vmatprep.subr.bf16.mxu0 0
    %3587 = vmatpush1.bf16.msra.mxu0 0
    %3588 = vmatprep.subr.bf16.mxu0 0
    %3589 = vmatpush1.bf16.msra.mxu0 0
    %3590 = vmatprep.subr.bf16.mxu0 0
    %3591 = vmatpush1.bf16.msra.mxu0 0
    %3592 = vmatprep.subr.bf16.mxu0 0
    %3593 = vmatpush1.bf16.msra.mxu0 0
    %3594 = vmatprep.subr.bf16.mxu0 0
    %3595 = vmatpush1.bf16.msra.mxu0 0
    %3596 = vmatprep.subr.bf16.mxu0 0
    %3597 = vmatpush1.bf16.msra.mxu0 0
    %3598 = vmatprep.subr.bf16.mxu0 0
    %3599 = vmatpush1.bf16.msra.mxu0 0
    %3600 = vmatprep.subr.bf16.mxu0 0
    %3601 = vmatpush1.bf16.msra.mxu0 0
    %3602 = vmatprep.subr.bf16.mxu0 0
    %3603 = vmatpush1.bf16.msra.mxu0 0
    %3604 = vmatprep.mubr.bf16.mxu0 0
    %3605 = vmatmul.mubr.bf16.gmra.mrb[0].mxu0 %v3570
    %v3606 = vpop.f32.mrb[0].mxu0
    %v3607 = vadd.f32 0.0, %v3606
    %v3608 = vpop.f32.mrb[0].mxu0
    %v3609 = vpop.f32.mrb[0].mxu0
    %v3610 = vpop.f32.mrb[0].mxu0
    %3611 = vdwg.mxu0
    %v3613 = vsel %vm2607, %v3566, 0
    %3615 = vmatprep.subr.bf16.mxu0 0
    %3616 = vmatpush1.bf16.msra.mxu0 %v3563
    %3617 = vmatprep.subr.bf16.mxu0 0
    %3618 = vmatpush1.bf16.msra.mxu0 0
    %3619 = vmatprep.subr.bf16.mxu0 0
    %3620 = vmatpush1.bf16.msra.mxu0 0
    %3621 = vmatprep.subr.bf16.mxu0 0
    %3622 = vmatpush1.bf16.msra.mxu0 0
    %3623 = vmatprep.subr.bf16.mxu0 0
    %3624 = vmatpush1.bf16.msra.mxu0 0
    %3625 = vmatprep.subr.bf16.mxu0 0
    %3626 = vmatpush1.bf16.msra.mxu0 0
    %3627 = vmatprep.subr.bf16.mxu0 0
    %3628 = vmatpush1.bf16.msra.mxu0 0
    %3629 = vmatprep.subr.bf16.mxu0 0
    %3630 = vmatpush1.bf16.msra.mxu0 0
    %3631 = vmatprep.subr.bf16.mxu0 0
    %3632 = vmatpush1.bf16.msra.mxu0 0
    %3633 = vmatprep.subr.bf16.mxu0 0
    %3634 = vmatpush1.bf16.msra.mxu0 0
    %3635 = vmatprep.subr.bf16.mxu0 0
    %3636 = vmatpush1.bf16.msra.mxu0 0
    %3637 = vmatprep.subr.bf16.mxu0 0
    %3638 = vmatpush1.bf16.msra.mxu0 0
    %3639 = vmatprep.subr.bf16.mxu0 0
    %3640 = vmatpush1.bf16.msra.mxu0 0
    %3641 = vmatprep.subr.bf16.mxu0 0
    %3642 = vmatpush1.bf16.msra.mxu0 0
    %3643 = vmatprep.subr.bf16.mxu0 0
    %3644 = vmatpush1.bf16.msra.mxu0 0
    %3645 = vmatprep.subr.bf16.mxu0 0
    %3646 = vmatpush1.bf16.msra.mxu0 0
    %3647 = vmatprep.mubr.bf16.mxu0 0
    %3648 = vmatmul.mubr.bf16.gmra.mrb[0].mxu0 %v3613
    %v3649 = vpop.f32.mrb[0].mxu0
    %v3650 = vadd.f32 %v3607, %v3649
    %v3651 = vpop.f32.mrb[0].mxu0
    %v3652 = vpop.f32.mrb[0].mxu0
    %v3653 = vpop.f32.mrb[0].mxu0
    %3654 = vdwg.mxu0
    %s3655 = scalar_lea.vmem [#allocation31], 8
    %v3656 = vld [vmem:[%s3655] sm:$0xf]
    %v3658 = vsel %vm2607, %v3656, 0
    %3660 = vmatprep.subr.bf16.mxu0 0
    %3661 = vmatpush1.bf16.msra.mxu0 %v3565
    %3662 = vmatprep.subr.bf16.mxu0 0
    %3663 = vmatpush1.bf16.msra.mxu0 0
    %3664 = vmatprep.subr.bf16.mxu0 0
    %3665 = vmatpush1.bf16.msra.mxu0 0
    %3666 = vmatprep.subr.bf16.mxu0 0
    %3667 = vmatpush1.bf16.msra.mxu0 0
    %3668 = vmatprep.subr.bf16.mxu0 0
    %3669 = vmatpush1.bf16.msra.mxu0 0
    %3670 = vmatprep.subr.bf16.mxu0 0
    %3671 = vmatpush1.bf16.msra.mxu0 0
    %3672 = vmatprep.subr.bf16.mxu0 0
    %3673 = vmatpush1.bf16.msra.mxu0 0
    %3674 = vmatprep.subr.bf16.mxu0 0
    %3675 = vmatpush1.bf16.msra.mxu0 0
    %3676 = vmatprep.subr.bf16.mxu0 0
    %3677 = vmatpush1.bf16.msra.mxu0 0
    %3678 = vmatprep.subr.bf16.mxu0 0
    %3679 = vmatpush1.bf16.msra.mxu0 0
    %3680 = vmatprep.subr.bf16.mxu0 0
    %3681 = vmatpush1.bf16.msra.mxu0 0
    %3682 = vmatprep.subr.bf16.mxu0 0
    %3683 = vmatpush1.bf16.msra.mxu0 0
    %3684 = vmatprep.subr.bf16.mxu0 0
    %3685 = vmatpush1.bf16.msra.mxu0 0
    %3686 = vmatprep.subr.bf16.mxu0 0
    %3687 = vmatpush1.bf16.msra.mxu0 0
    %3688 = vmatprep.subr.bf16.mxu0 0
    %3689 = vmatpush1.bf16.msra.mxu0 0
    %3690 = vmatprep.subr.bf16.mxu0 0
    %3691 = vmatpush1.bf16.msra.mxu0 0
    %3692 = vmatprep.mubr.bf16.mxu0 0
    %3693 = vmatmul.mubr.bf16.gmra.mrb[0].mxu0 %v3658
    %v3694 = vpop.f32.mrb[0].mxu0
    %v3695 = vadd.f32 0.0, %v3694
    %v3696 = vpop.f32.mrb[0].mxu0
    %v3697 = vpop.f32.mrb[0].mxu0
    %v3698 = vpop.f32.mrb[0].mxu0
    %3699 = vdwg.mxu0
    %v3700 = vadd.f32 %v3650, %v3695
    %v3701 = vld [vmem:[#allocation32] sm:$0x1]
    %v3703 = vlaneseq
    %v3704 = vshrl.u32 %v3703, 7
    %v3705 = vsub.s32 0, %v3704
    %v3706 = vrot.slane %v3701, %v3705
    %v3708 = vadd.f32 %v3700, %v3706
    %v3709 = vmax.f32 %v3708, 0.0
    %v3710 = vrot.slane %v3709, 4
    %v3711 = vadd.f32 %v3709, %v3710
    %v3712 = vrot.slane %v3711, 2
    %v3713 = vadd.f32 %v3711, %v3712
    %v3714 = vrot.slane %v3713, 1
    %v3715 = vadd.f32 %v3713, %v3714
    %v3716 = vmul.f32 %v3709, %v3709
    %v3717 = vrot.slane %v3716, 4
    %v3718 = vadd.f32 %v3716, %v3717
    %v3719 = vrot.slane %v3718, 2
    %v3720 = vadd.f32 %v3718, %v3719
    %v3721 = vrot.slane %v3720, 1
    %v3722 = vadd.f32 %v3720, %v3721
    %v3723 = vsel %vm1130, %v3715, %v3722
    %v3724 = vld [vmem:[%s59] sm:$0xff]
    %v3725 = vld [vmem:[%s59 + $0x8] sm:$0xff]
    %v3726 = vld [vmem:[%s59 + $0x10] sm:$0xff]
    %v3727 = vld [vmem:[%s59 + $0x18] sm:$0xff]
    %v3728 = vld [vmem:[%s59 + $0x20] sm:$0xff]
    %v3729 = vld [vmem:[%s59 + $0x28] sm:$0xff]
    %v3730 = vld [vmem:[%s59 + $0x30] sm:$0xff]
    %v3731 = vld [vmem:[%s59 + $0x38] sm:$0xff]
    %v3732 = vld [vmem:[%s59 + $0x40] sm:$0xff]
    %v3733 = vld [vmem:[%s59 + $0x48] sm:$0xff]
    %v3734 = vld [vmem:[%s59 + $0x50] sm:$0xff]
    %v3735 = vld [vmem:[%s59 + $0x58] sm:$0xff]
    %v3736 = vld [vmem:[%s59 + $0x60] sm:$0xff]
    %v3737 = vld [vmem:[%s59 + $0x68] sm:$0xff]
    %v3738 = vld [vmem:[%s59 + $0x70] sm:$0xff]
    %v3739 = vld [vmem:[%s59 + $0x78] sm:$0xff]
    %3740 = vmatprep.subr.mxu0 0.0
    %3741 = vmatpush1.msra.mxu0 %v3724
    %3742 = vmatprep.subr.mxu0 0.0
    %3743 = vmatpush1.msra.mxu0 %v3725
    %3744 = vmatprep.subr.mxu0 0.0
    %3745 = vmatpush1.msra.mxu0 %v3726
    %3746 = vmatprep.subr.mxu0 0.0
    %3747 = vmatpush1.msra.mxu0 %v3727
    %3748 = vmatprep.subr.mxu0 0.0
    %3749 = vmatpush1.msra.mxu0 %v3728
    %3750 = vmatprep.subr.mxu0 0.0
    %3751 = vmatpush1.msra.mxu0 %v3729
    %3752 = vmatprep.subr.mxu0 0.0
    %3753 = vmatpush1.msra.mxu0 %v3730
    %3754 = vmatprep.subr.mxu0 0.0
    %3755 = vmatpush1.msra.mxu0 %v3731
    %3756 = vmatprep.subr.mxu0 0.0
    %3757 = vmatpush1.msra.mxu0 %v3732
    %3758 = vmatprep.subr.mxu0 0.0
    %3759 = vmatpush1.msra.mxu0 %v3733
    %3760 = vmatprep.subr.mxu0 0.0
    %3761 = vmatpush1.msra.mxu0 %v3734
    %3762 = vmatprep.subr.mxu0 0.0
    %3763 = vmatpush1.msra.mxu0 %v3735
    %3764 = vmatprep.subr.mxu0 0.0
    %3765 = vmatpush1.msra.mxu0 %v3736
    %3766 = vmatprep.subr.mxu0 0.0
    %3767 = vmatpush1.msra.mxu0 %v3737
    %3768 = vmatprep.subr.mxu0 0.0
    %3769 = vmatpush1.msra.mxu0 %v3738
    %3770 = vmatprep.subr.mxu0 0.0
    %3771 = vmatpush1.msra.mxu0 %v3739
    %3772 = vmatprep.subr.mxu0 0.0
    %3773 = vmatpush1.msra.mxu0 0.0
    %3774 = vmatprep.subr.mxu0 0.0
    %3775 = vmatpush1.msra.mxu0 0.0
    %3776 = vmatprep.subr.mxu0 0.0
    %3777 = vmatpush1.msra.mxu0 0.0
    %3778 = vmatprep.subr.mxu0 0.0
    %3779 = vmatpush1.msra.mxu0 0.0
    %3780 = vmatprep.subr.mxu0 0.0
    %3781 = vmatpush1.msra.mxu0 0.0
    %3782 = vmatprep.subr.mxu0 0.0
    %3783 = vmatpush1.msra.mxu0 0.0
    %3784 = vmatprep.subr.mxu0 0.0
    %3785 = vmatpush1.msra.mxu0 0.0
    %3786 = vmatprep.subr.mxu0 0.0
    %3787 = vmatpush1.msra.mxu0 0.0
    %3788 = vmatprep.subr.mxu0 0.0
    %3789 = vmatpush1.msra.mxu0 0.0
    %3790 = vmatprep.subr.mxu0 0.0
    %3791 = vmatpush1.msra.mxu0 0.0
    %3792 = vmatprep.subr.mxu0 0.0
    %3793 = vmatpush1.msra.mxu0 0.0
    %3794 = vmatprep.subr.mxu0 0.0
    %3795 = vmatpush1.msra.mxu0 0.0
    %3796 = vmatprep.subr.mxu0 0.0
    %3797 = vmatpush1.msra.mxu0 0.0
    %3798 = vmatprep.subr.mxu0 0.0
    %3799 = vmatpush1.msra.mxu0 0.0
    %3800 = vmatprep.subr.mxu0 0.0
    %3801 = vmatpush1.msra.mxu0 0.0
    %3802 = vmatprep.subr.mxu0 0.0
    %3803 = vmatpush1.msra.mxu0 0.0
    %3804 = vmatprep.mubr.f32.mxu0 0.0
    %3805 = vmatmul.mubr.f32.gmra.mrb[0].mxu0 %v3723
    %v3806 = vpop.f32.mrb[0].mxu0
    %v3807 = vadd.f32 0.0, %v3806
    %v3808 = vpop.f32.mrb[0].mxu0
    %3809 = vdwg.mxu0
    %v3810 = vmul.f32 %v3807, 0.03125
    %v3811 = vmul.f32 %v3810, %v3810
    %v3813 = vrot.slane %v3811, 7
    %v3815 = vsub.f32 %v3810, %v3813
    %v3816 = vld [vmem:[#allocation34] sm:$0x3]
    %v3817 = vadd.f32 %v3815, 1e-05
    %v3818 = vrsqrt.pop %v3817
    %v3820 = vrot.slane %v3818, 1
    %v3822 = vmul.f32 %v3816, %v3820
    %v3823 = vmul.f32 %v3810, %v3822
    %v3825 = vrot.slane %v3823, 7
    %v3827 = vsub.f32 %v3816, %v3825
    %v3828 = vsel %vm1130, %v3822, %v3827
    %v3829 = vld [vmem:[#allocation35] sm:$0xff]
    %v3830 = vld [vmem:[#allocation35 + $0x8] sm:$0xff]
    %v3831 = vld [vmem:[#allocation35 + $0x10] sm:$0xff]
    %v3832 = vld [vmem:[#allocation35 + $0x18] sm:$0xff]
    %v3834 = vsel %vm1617, %v3828, 0
    %3836 = vmatprep.subr.mxu0 0.0
    %3837 = vmatpush1.msra.mxu0 %v3829
    %3838 = vmatprep.subr.mxu0 0.0
    %3839 = vmatpush1.msra.mxu0 %v3830
    %3840 = vmatprep.subr.mxu0 0.0
    %3841 = vmatpush1.msra.mxu0 %v3831
    %3842 = vmatprep.subr.mxu0 0.0
    %3843 = vmatpush1.msra.mxu0 %v3832
    %3844 = vmatprep.subr.mxu0 0.0
    %3845 = vmatpush1.msra.mxu0 0.0
    %3846 = vmatprep.subr.mxu0 0.0
    %3847 = vmatpush1.msra.mxu0 0.0
    %3848 = vmatprep.subr.mxu0 0.0
    %3849 = vmatpush1.msra.mxu0 0.0
    %3850 = vmatprep.subr.mxu0 0.0
    %3851 = vmatpush1.msra.mxu0 0.0
    %3852 = vmatprep.subr.mxu0 0.0
    %3853 = vmatpush1.msra.mxu0 0.0
    %3854 = vmatprep.subr.mxu0 0.0
    %3855 = vmatpush1.msra.mxu0 0.0
    %3856 = vmatprep.subr.mxu0 0.0
    %3857 = vmatpush1.msra.mxu0 0.0
    %3858 = vmatprep.subr.mxu0 0.0
    %3859 = vmatpush1.msra.mxu0 0.0
    %3860 = vmatprep.subr.mxu0 0.0
    %3861 = vmatpush1.msra.mxu0 0.0
    %3862 = vmatprep.subr.mxu0 0.0
    %3863 = vmatpush1.msra.mxu0 0.0
    %3864 = vmatprep.subr.mxu0 0.0
    %3865 = vmatpush1.msra.mxu0 0.0
    %3866 = vmatprep.subr.mxu0 0.0
    %3867 = vmatpush1.msra.mxu0 0.0
    %3868 = vmatprep.subr.mxu0 0.0
    %3869 = vmatpush1.msra.mxu0 0.0
    %3870 = vmatprep.subr.mxu0 0.0
    %3871 = vmatpush1.msra.mxu0 0.0
    %3872 = vmatprep.subr.mxu0 0.0
    %3873 = vmatpush1.msra.mxu0 0.0
    %3874 = vmatprep.subr.mxu0 0.0
    %3875 = vmatpush1.msra.mxu0 0.0
    %3876 = vmatprep.subr.mxu0 0.0
    %3877 = vmatpush1.msra.mxu0 0.0
    %3878 = vmatprep.subr.mxu0 0.0
    %3879 = vmatpush1.msra.mxu0 0.0
    %3880 = vmatprep.subr.mxu0 0.0
    %3881 = vmatpush1.msra.mxu0 0.0
    %3882 = vmatprep.subr.mxu0 0.0
    %3883 = vmatpush1.msra.mxu0 0.0
    %3884 = vmatprep.subr.mxu0 0.0
    %3885 = vmatpush1.msra.mxu0 0.0
    %3886 = vmatprep.subr.mxu0 0.0
    %3887 = vmatpush1.msra.mxu0 0.0
    %3888 = vmatprep.subr.mxu0 0.0
    %3889 = vmatpush1.msra.mxu0 0.0
    %3890 = vmatprep.subr.mxu0 0.0
    %3891 = vmatpush1.msra.mxu0 0.0
    %3892 = vmatprep.subr.mxu0 0.0
    %3893 = vmatpush1.msra.mxu0 0.0
    %3894 = vmatprep.subr.mxu0 0.0
    %3895 = vmatpush1.msra.mxu0 0.0
    %3896 = vmatprep.subr.mxu0 0.0
    %3897 = vmatpush1.msra.mxu0 0.0
    %3898 = vmatprep.subr.mxu0 0.0
    %3899 = vmatpush1.msra.mxu0 0.0
    %3900 = vmatprep.mubr.f32.mxu0 0.0
    %3901 = vmatmul.mubr.f32.gmra.mrb[0].mxu0 %v3834
    %v3902 = vpop.f32.mrb[0].mxu0
    %v3903 = vadd.f32 0.0, %v3902
    %v3904 = vpop.f32.mrb[0].mxu0
    %3905 = vdwg.mxu0
    %v3906 = vlaneseq
    %v3907 = vshrl.u32 %v3906, 7
    %v3908 = vsub.s32 0, %v3907
    %v3909 = vrot.slane %v3903, %v3908
    %v3910 = vmul.f32 %v3709, %v3909
    %v3911 = vlaneseq
    %v3912 = vshrl.u32 %v3911, 7
    %v3913 = vsub.s32 1, %v3912
    %v3914 = vrot.slane %v3903, %v3913
    %v3915 = vadd.f32 %v3910, %v3914
    %v3916 = vpack.c.bf16 %v3915, %v3915
    %v3917 = vld [vmem:[%s63] sm:$0xff]
    %v3918 = vld [vmem:[%s63 + $0x8] sm:$0xf]
    %v3919 = vld [vmem:[%s63 + $0xc] sm:$0xff]
    %v3920 = vld [vmem:[%s63 + $0x14] sm:$0xf]
    %v3921 = vld [vmem:[%s63 + $0x18] sm:$0xff]
    %v3922 = vld [vmem:[%s63 + $0x20] sm:$0xf]
    %v3923 = vld [vmem:[%s63 + $0x24] sm:$0xff]
    %v3924 = vld [vmem:[%s63 + $0x2c] sm:$0xf]
    %v3925 = vld [vmem:[%s63 + $0x30] sm:$0xff]
    %v3926 = vld [vmem:[%s63 + $0x38] sm:$0xf]
    %v3927 = vld [vmem:[%s63 + $0x3c] sm:$0xff]
    %v3928 = vld [vmem:[%s63 + $0x44] sm:$0xf]
    %v3929 = vld [vmem:[%s63 + $0x48] sm:$0xff]
    %v3930 = vld [vmem:[%s63 + $0x50] sm:$0xf]
    %v3931 = vld [vmem:[%s63 + $0x54] sm:$0xff]
    %v3932 = vld [vmem:[%s63 + $0x5c] sm:$0xf]
    %v3933 = vld [vmem:[%s63 + $0x60] sm:$0xff]
    %v3934 = vld [vmem:[%s63 + $0x68] sm:$0xf]
    %v3935 = vld [vmem:[%s63 + $0x6c] sm:$0xff]
    %v3936 = vld [vmem:[%s63 + $0x74] sm:$0xf]
    %v3937 = vld [vmem:[%s63 + $0x78] sm:$0xff]
    %v3938 = vld [vmem:[%s63 + $0x80] sm:$0xf]
    %v3939 = vld [vmem:[%s63 + $0x84] sm:$0xff]
    %v3940 = vld [vmem:[%s63 + $0x8c] sm:$0xf]
    %v3941 = vld [vmem:[%s63 + $0x90] sm:$0xff]
    %v3942 = vld [vmem:[%s63 + $0x98] sm:$0xf]
    %v3943 = vld [vmem:[%s63 + $0x9c] sm:$0xff]
    %v3944 = vld [vmem:[%s63 + $0xa4] sm:$0xf]
    %v3945 = vld [vmem:[%s63 + $0xa8] sm:$0xff]
    %v3946 = vld [vmem:[%s63 + $0xb0] sm:$0xf]
    %v3947 = vld [vmem:[%s63 + $0xb4] sm:$0xff]
    %v3948 = vld [vmem:[%s63 + $0xbc] sm:$0xf]
    %v3981 = vunpack.c.l.b16 %v3917
    %v3982 = vunpack.c.h.b16 %v3917
    %v3983 = vunpack.c.l.b16 %v3918
    %v3984 = vunpack.c.l.b16 %v3919
    %v3985 = vunpack.c.h.b16 %v3919
    %v3986 = vunpack.c.l.b16 %v3920
    %v3987 = vunpack.c.l.b16 %v3921
    %v3988 = vunpack.c.h.b16 %v3921
    %v3989 = vunpack.c.l.b16 %v3922
    %v3990 = vunpack.c.l.b16 %v3923
    %v3991 = vunpack.c.h.b16 %v3923
    %v3992 = vunpack.c.l.b16 %v3924
    %v3993 = vunpack.c.l.b16 %v3925
    %v3994 = vunpack.c.h.b16 %v3925
    %v3995 = vunpack.c.l.b16 %v3926
    %v3996 = vunpack.c.l.b16 %v3927
    %v3997 = vunpack.c.h.b16 %v3927
    %v3998 = vunpack.c.l.b16 %v3928
    %v3999 = vunpack.c.l.b16 %v3929
    %v4000 = vunpack.c.h.b16 %v3929
    %v4001 = vunpack.c.l.b16 %v3930
    %v4002 = vunpack.c.l.b16 %v3931
    %v4003 = vunpack.c.h.b16 %v3931
    %v4004 = vunpack.c.l.b16 %v3932
    %v4005 = vunpack.c.l.b16 %v3933
    %v4006 = vunpack.c.h.b16 %v3933
    %v4007 = vunpack.c.l.b16 %v3934
    %v4008 = vunpack.c.l.b16 %v3935
    %v4009 = vunpack.c.h.b16 %v3935
    %v4010 = vunpack.c.l.b16 %v3936
    %v4011 = vunpack.c.l.b16 %v3937
    %v4012 = vunpack.c.h.b16 %v3937
    %v4013 = vunpack.c.l.b16 %v3938
    %v4014 = vunpack.c.l.b16 %v3939
    %v4015 = vunpack.c.h.b16 %v3939
    %v4016 = vunpack.c.l.b16 %v3940
    %v4017 = vunpack.c.l.b16 %v3941
    %v4018 = vunpack.c.h.b16 %v3941
    %v4019 = vunpack.c.l.b16 %v3942
    %v4020 = vunpack.c.l.b16 %v3943
    %v4021 = vunpack.c.h.b16 %v3943
    %v4022 = vunpack.c.l.b16 %v3944
    %v4023 = vunpack.c.l.b16 %v3945
    %v4024 = vunpack.c.h.b16 %v3945
    %v4025 = vunpack.c.l.b16 %v3946
    %v4026 = vunpack.c.l.b16 %v3947
    %v4027 = vunpack.c.h.b16 %v3947
    %v4028 = vunpack.c.l.b16 %v3948
    %v4029 = vpack.c.b16 %v3984, %v3981
    %v4030 = vpack.c.b16 %v3985, %v3982
    %v4031 = vpack.c.b16 %v3986, %v3983
    %v4032 = vpack.c.b16 %v3990, %v3987
    %v4033 = vpack.c.b16 %v3991, %v3988
    %v4034 = vpack.c.b16 %v3992, %v3989
    %v4035 = vpack.c.b16 %v3996, %v3993
    %v4036 = vpack.c.b16 %v3997, %v3994
    %v4037 = vpack.c.b16 %v3998, %v3995
    %v4038 = vpack.c.b16 %v4002, %v3999
    %v4039 = vpack.c.b16 %v4003, %v4000
    %v4040 = vpack.c.b16 %v4004, %v4001
    %v4041 = vpack.c.b16 %v4008, %v4005
    %v4042 = vpack.c.b16 %v4009, %v4006
    %v4043 = vpack.c.b16 %v4010, %v4007
    %v4044 = vpack.c.b16 %v4014, %v4011
    %v4045 = vpack.c.b16 %v4015, %v4012
    %v4046 = vpack.c.b16 %v4016, %v4013
    %v4047 = vpack.c.b16 %v4020, %v4017
    %v4048 = vpack.c.b16 %v4021, %v4018
    %v4049 = vpack.c.b16 %v4022, %v4019
    %v4050 = vpack.c.b16 %v4026, %v4023
    %v4051 = vpack.c.b16 %v4027, %v4024
    %v4052 = vpack.c.b16 %v4028, %v4025
    %4077 = vmatprep.subr.bf16.mxu0 %v4030
    %4078 = vmatpush1.bf16.msra.mxu0 %v4029
    %4079 = vmatprep.subr.bf16.mxu0 %v4033
    %4080 = vmatpush1.bf16.msra.mxu0 %v4032
    %4081 = vmatprep.subr.bf16.mxu0 %v4036
    %4082 = vmatpush1.bf16.msra.mxu0 %v4035
    %4083 = vmatprep.subr.bf16.mxu0 %v4039
    %4084 = vmatpush1.bf16.msra.mxu0 %v4038
    %4085 = vmatprep.subr.bf16.mxu0 %v4042
    %4086 = vmatpush1.bf16.msra.mxu0 %v4041
    %4087 = vmatprep.subr.bf16.mxu0 %v4045
    %4088 = vmatpush1.bf16.msra.mxu0 %v4044
    %4089 = vmatprep.subr.bf16.mxu0 %v4048
    %4090 = vmatpush1.bf16.msra.mxu0 %v4047
    %4091 = vmatprep.subr.bf16.mxu0 %v4051
    %4092 = vmatpush1.bf16.msra.mxu0 %v4050
    %4093 = vmatprep.subr.bf16.mxu0 0
    %4094 = vmatpush1.bf16.msra.mxu0 0
    %4095 = vmatprep.subr.bf16.mxu0 0
    %4096 = vmatpush1.bf16.msra.mxu0 0
    %4097 = vmatprep.subr.bf16.mxu0 0
    %4098 = vmatpush1.bf16.msra.mxu0 0
    %4099 = vmatprep.subr.bf16.mxu0 0
    %4100 = vmatpush1.bf16.msra.mxu0 0
    %4101 = vmatprep.subr.bf16.mxu0 0
    %4102 = vmatpush1.bf16.msra.mxu0 0
    %4103 = vmatprep.subr.bf16.mxu0 0
    %4104 = vmatpush1.bf16.msra.mxu0 0
    %4105 = vmatprep.subr.bf16.mxu0 0
    %4106 = vmatpush1.bf16.msra.mxu0 0
    %4107 = vmatprep.subr.bf16.mxu0 0
    %4108 = vmatpush1.bf16.msra.mxu0 0
    %4109 = vmatprep.mubr.bf16.mxu0 0
    %4110 = vmatmul.mubr.bf16.gmra.mrb[0].mxu0 %v3916
    %v4111 = vpop.f32.mrb[0].mxu0
    %v4112 = vadd.f32 0.0, %v4111
    %v4113 = vpop.f32.mrb[0].mxu0
    %v4114 = vadd.f32 0.0, %v4113
    %v4115 = vpop.f32.mrb[0].mxu0
    %v4116 = vpop.f32.mrb[0].mxu0
    %4117 = vdwg.mxu0
    %4118 = vmatprep.subr.bf16.mxu0 0
    %4119 = vmatpush1.bf16.msra.mxu0 %v4031
    %4120 = vmatprep.subr.bf16.mxu0 0
    %4121 = vmatpush1.bf16.msra.mxu0 %v4034
    %4122 = vmatprep.subr.bf16.mxu0 0
    %4123 = vmatpush1.bf16.msra.mxu0 %v4037
    %4124 = vmatprep.subr.bf16.mxu0 0
    %4125 = vmatpush1.bf16.msra.mxu0 %v4040
    %4126 = vmatprep.subr.bf16.mxu0 0
    %4127 = vmatpush1.bf16.msra.mxu0 %v4043
    %4128 = vmatprep.subr.bf16.mxu0 0
    %4129 = vmatpush1.bf16.msra.mxu0 %v4046
    %4130 = vmatprep.subr.bf16.mxu0 0
    %4131 = vmatpush1.bf16.msra.mxu0 %v4049
    %4132 = vmatprep.subr.bf16.mxu0 0
    %4133 = vmatpush1.bf16.msra.mxu0 %v4052
    %4134 = vmatprep.subr.bf16.mxu0 0
    %4135 = vmatpush1.bf16.msra.mxu0 0
    %4136 = vmatprep.subr.bf16.mxu0 0
    %4137 = vmatpush1.bf16.msra.mxu0 0
    %4138 = vmatprep.subr.bf16.mxu0 0
    %4139 = vmatpush1.bf16.msra.mxu0 0
    %4140 = vmatprep.subr.bf16.mxu0 0
    %4141 = vmatpush1.bf16.msra.mxu0 0
    %4142 = vmatprep.subr.bf16.mxu0 0
    %4143 = vmatpush1.bf16.msra.mxu0 0
    %4144 = vmatprep.subr.bf16.mxu0 0
    %4145 = vmatpush1.bf16.msra.mxu0 0
    %4146 = vmatprep.subr.bf16.mxu0 0
    %4147 = vmatpush1.bf16.msra.mxu0 0
    %4148 = vmatprep.subr.bf16.mxu0 0
    %4149 = vmatpush1.bf16.msra.mxu0 0
    %4150 = vmatprep.mubr.bf16.mxu0 0
    %4151 = vmatmul.mubr.bf16.gmra.mrb[0].mxu0 %v3916
    %v4152 = vpop.f32.mrb[0].mxu0
    %v4153 = vadd.f32 0.0, %v4152
    %v4154 = vpop.f32.mrb[0].mxu0
    %v4155 = vpop.f32.mrb[0].mxu0
    %v4156 = vpop.f32.mrb[0].mxu0
    %4157 = vdwg.mxu0
    %v4158 = vpack.c.bf16 %v4112, %v4112
    %v4159 = vpack.c.bf16 %v4114, %v4114
    %v4160 = vpack.c.bf16 %v4153, %v4153
    %v4161 = vld [vmem:[#allocation37] sm:$0xf]
    %s4162 = scalar_lea.vmem [#allocation37], 4
    %v4163 = vld [vmem:[%s4162] sm:$0xf]
    %v4165 = vsel %vm1238, %v4163, 0
    %vm4167 = vcmask 1043456
    %v4169 = vsel %vm4167, %v4159, 0
    %4171 = vmatprep.subr.bf16.mxu0 0
    %4172 = vmatpush1.bf16.msra.mxu0 %v4169
    %4173 = vmatprep.subr.bf16.mxu0 0
    %4174 = vmatpush1.bf16.msra.mxu0 0
    %4175 = vmatprep.subr.bf16.mxu0 0
    %4176 = vmatpush1.bf16.msra.mxu0 0
    %4177 = vmatprep.subr.bf16.mxu0 0
    %4178 = vmatpush1.bf16.msra.mxu0 0
    %4179 = vmatprep.subr.bf16.mxu0 0
    %4180 = vmatpush1.bf16.msra.mxu0 0
    %4181 = vmatprep.subr.bf16.mxu0 0
    %4182 = vmatpush1.bf16.msra.mxu0 0
    %4183 = vmatprep.subr.bf16.mxu0 0
    %4184 = vmatpush1.bf16.msra.mxu0 0
    %4185 = vmatprep.subr.bf16.mxu0 0
    %4186 = vmatpush1.bf16.msra.mxu0 0
    %4187 = vmatprep.subr.bf16.mxu0 0
    %4188 = vmatpush1.bf16.msra.mxu0 0
    %4189 = vmatprep.subr.bf16.mxu0 0
    %4190 = vmatpush1.bf16.msra.mxu0 0
    %4191 = vmatprep.subr.bf16.mxu0 0
    %4192 = vmatpush1.bf16.msra.mxu0 0
    %4193 = vmatprep.subr.bf16.mxu0 0
    %4194 = vmatpush1.bf16.msra.mxu0 0
    %4195 = vmatprep.subr.bf16.mxu0 0
    %4196 = vmatpush1.bf16.msra.mxu0 0
    %4197 = vmatprep.subr.bf16.mxu0 0
    %4198 = vmatpush1.bf16.msra.mxu0 0
    %4199 = vmatprep.subr.bf16.mxu0 0
    %4200 = vmatpush1.bf16.msra.mxu0 0
    %4201 = vmatprep.subr.bf16.mxu0 0
    %4202 = vmatpush1.bf16.msra.mxu0 0
    %4203 = vmatprep.mubr.bf16.mxu0 0
    %4204 = vmatmul.mubr.bf16.gmra.mrb[0].mxu0 %v4165
    %v4205 = vpop.f32.mrb[0].mxu0
    %v4206 = vadd.f32 0.0, %v4205
    %v4207 = vpop.f32.mrb[0].mxu0
    %v4208 = vpop.f32.mrb[0].mxu0
    %v4209 = vpop.f32.mrb[0].mxu0
    %4210 = vdwg.mxu0
    %v4212 = vsel %vm1238, %v4161, 0
    %v4215 = vsel %vm4167, %v4158, 0
    %4217 = vmatprep.subr.bf16.mxu0 0
    %4218 = vmatpush1.bf16.msra.mxu0 %v4215
    %4219 = vmatprep.subr.bf16.mxu0 0
    %4220 = vmatpush1.bf16.msra.mxu0 0
    %4221 = vmatprep.subr.bf16.mxu0 0
    %4222 = vmatpush1.bf16.msra.mxu0 0
    %4223 = vmatprep.subr.bf16.mxu0 0
    %4224 = vmatpush1.bf16.msra.mxu0 0
    %4225 = vmatprep.subr.bf16.mxu0 0
    %4226 = vmatpush1.bf16.msra.mxu0 0
    %4227 = vmatprep.subr.bf16.mxu0 0
    %4228 = vmatpush1.bf16.msra.mxu0 0
    %4229 = vmatprep.subr.bf16.mxu0 0
    %4230 = vmatpush1.bf16.msra.mxu0 0
    %4231 = vmatprep.subr.bf16.mxu0 0
    %4232 = vmatpush1.bf16.msra.mxu0 0
    %4233 = vmatprep.subr.bf16.mxu0 0
    %4234 = vmatpush1.bf16.msra.mxu0 0
    %4235 = vmatprep.subr.bf16.mxu0 0
    %4236 = vmatpush1.bf16.msra.mxu0 0
    %4237 = vmatprep.subr.bf16.mxu0 0
    %4238 = vmatpush1.bf16.msra.mxu0 0
    %4239 = vmatprep.subr.bf16.mxu0 0
    %4240 = vmatpush1.bf16.msra.mxu0 0
    %4241 = vmatprep.subr.bf16.mxu0 0
    %4242 = vmatpush1.bf16.msra.mxu0 0
    %4243 = vmatprep.subr.bf16.mxu0 0
    %4244 = vmatpush1.bf16.msra.mxu0 0
    %4245 = vmatprep.subr.bf16.mxu0 0
    %4246 = vmatpush1.bf16.msra.mxu0 0
    %4247 = vmatprep.subr.bf16.mxu0 0
    %4248 = vmatpush1.bf16.msra.mxu0 0
    %4249 = vmatprep.mubr.bf16.mxu0 0
    %4250 = vmatmul.mubr.bf16.gmra.mrb[0].mxu0 %v4212
    %v4251 = vpop.f32.mrb[0].mxu0
    %v4252 = vadd.f32 %v4206, %v4251
    %v4253 = vpop.f32.mrb[0].mxu0
    %v4254 = vpop.f32.mrb[0].mxu0
    %v4255 = vpop.f32.mrb[0].mxu0
    %4256 = vdwg.mxu0
    %s4257 = scalar_lea.vmem [#allocation37], 8
    %v4258 = vld [vmem:[%s4257] sm:$0xf]
    %v4260 = vsel %vm1238, %v4258, 0
    %v4263 = vsel %vm4167, %v4160, 0
    %4265 = vmatprep.subr.bf16.mxu0 0
    %4266 = vmatpush1.bf16.msra.mxu0 %v4263
    %4267 = vmatprep.subr.bf16.mxu0 0
    %4268 = vmatpush1.bf16.msra.mxu0 0
    %4269 = vmatprep.subr.bf16.mxu0 0
    %4270 = vmatpush1.bf16.msra.mxu0 0
    %4271 = vmatprep.subr.bf16.mxu0 0
    %4272 = vmatpush1.bf16.msra.mxu0 0
    %4273 = vmatprep.subr.bf16.mxu0 0
    %4274 = vmatpush1.bf16.msra.mxu0 0
    %4275 = vmatprep.subr.bf16.mxu0 0
    %4276 = vmatpush1.bf16.msra.mxu0 0
    %4277 = vmatprep.subr.bf16.mxu0 0
    %4278 = vmatpush1.bf16.msra.mxu0 0
    %4279 = vmatprep.subr.bf16.mxu0 0
    %4280 = vmatpush1.bf16.msra.mxu0 0
    %4281 = vmatprep.subr.bf16.mxu0 0
    %4282 = vmatpush1.bf16.msra.mxu0 0
    %4283 = vmatprep.subr.bf16.mxu0 0
    %4284 = vmatpush1.bf16.msra.mxu0 0
    %4285 = vmatprep.subr.bf16.mxu0 0
    %4286 = vmatpush1.bf16.msra.mxu0 0
    %4287 = vmatprep.subr.bf16.mxu0 0
    %4288 = vmatpush1.bf16.msra.mxu0 0
    %4289 = vmatprep.subr.bf16.mxu0 0
    %4290 = vmatpush1.bf16.msra.mxu0 0
    %4291 = vmatprep.subr.bf16.mxu0 0
    %4292 = vmatpush1.bf16.msra.mxu0 0
    %4293 = vmatprep.subr.bf16.mxu0 0
    %4294 = vmatpush1.bf16.msra.mxu0 0
    %4295 = vmatprep.subr.bf16.mxu0 0
    %4296 = vmatpush1.bf16.msra.mxu0 0
    %4297 = vmatprep.mubr.bf16.mxu0 0
    %4298 = vmatmul.mubr.bf16.gmra.mrb[0].mxu0 %v4260
    %v4299 = vpop.f32.mrb[0].mxu0
    %v4300 = vadd.f32 0.0, %v4299
    %v4301 = vpop.f32.mrb[0].mxu0
    %v4302 = vpop.f32.mrb[0].mxu0
    %v4303 = vpop.f32.mrb[0].mxu0
    %4304 = vdwg.mxu0
    %v4305 = vadd.f32 %v4252, %v4300
    %v4306 = vld [vmem:[#allocation38] sm:$0x1]
    %v4308 = vlaneseq
    %v4309 = vshrl.u32 %v4308, 7
    %v4310 = vsub.s32 0, %v4309
    %v4311 = vrot.slane %v4306, %v4310
    %v4313 = vadd.f32 %v4305, %v4311
    %v4314 = vmax.f32 %v4313, 0.0
    %v4315 = vrot.slane %v4314, 4
    %v4316 = vadd.f32 %v4314, %v4315
    %v4317 = vrot.slane %v4316, 2
    %v4318 = vadd.f32 %v4316, %v4317
    %v4319 = vrot.slane %v4318, 1
    %v4320 = vadd.f32 %v4318, %v4319
    %v4321 = vmul.f32 %v4314, %v4314
    %v4322 = vrot.slane %v4321, 4
    %v4323 = vadd.f32 %v4321, %v4322
    %v4324 = vrot.slane %v4323, 2
    %v4325 = vadd.f32 %v4323, %v4324
    %v4326 = vrot.slane %v4325, 1
    %v4327 = vadd.f32 %v4325, %v4326
    %v4328 = vsel %vm1130, %v4320, %v4327
    %v4329 = vld [vmem:[%s71] sm:$0xff]
    %v4330 = vld [vmem:[%s71 + $0x8] sm:$0xff]
    %v4331 = vld [vmem:[%s71 + $0x10] sm:$0xff]
    %v4332 = vld [vmem:[%s71 + $0x18] sm:$0xff]
    %v4333 = vld [vmem:[%s71 + $0x20] sm:$0xff]
    %v4334 = vld [vmem:[%s71 + $0x28] sm:$0xff]
    %v4335 = vld [vmem:[%s71 + $0x30] sm:$0xff]
    %v4336 = vld [vmem:[%s71 + $0x38] sm:$0xff]
    %v4337 = vld [vmem:[%s71 + $0x40] sm:$0xff]
    %v4338 = vld [vmem:[%s71 + $0x48] sm:$0xff]
    %v4339 = vld [vmem:[%s71 + $0x50] sm:$0xff]
    %v4340 = vld [vmem:[%s71 + $0x58] sm:$0xff]
    %v4341 = vld [vmem:[%s71 + $0x60] sm:$0xff]
    %v4342 = vld [vmem:[%s71 + $0x68] sm:$0xff]
    %v4343 = vld [vmem:[%s71 + $0x70] sm:$0xff]
    %v4344 = vld [vmem:[%s71 + $0x78] sm:$0xff]
    %4345 = vmatprep.subr.mxu0 0.0
    %4346 = vmatpush1.msra.mxu0 %v4329
    %4347 = vmatprep.subr.mxu0 0.0
    %4348 = vmatpush1.msra.mxu0 %v4330
    %4349 = vmatprep.subr.mxu0 0.0
    %4350 = vmatpush1.msra.mxu0 %v4331
    %4351 = vmatprep.subr.mxu0 0.0
    %4352 = vmatpush1.msra.mxu0 %v4332
    %4353 = vmatprep.subr.mxu0 0.0
    %4354 = vmatpush1.msra.mxu0 %v4333
    %4355 = vmatprep.subr.mxu0 0.0
    %4356 = vmatpush1.msra.mxu0 %v4334
    %4357 = vmatprep.subr.mxu0 0.0
    %4358 = vmatpush1.msra.mxu0 %v4335
    %4359 = vmatprep.subr.mxu0 0.0
    %4360 = vmatpush1.msra.mxu0 %v4336
    %4361 = vmatprep.subr.mxu0 0.0
    %4362 = vmatpush1.msra.mxu0 %v4337
    %4363 = vmatprep.subr.mxu0 0.0
    %4364 = vmatpush1.msra.mxu0 %v4338
    %4365 = vmatprep.subr.mxu0 0.0
    %4366 = vmatpush1.msra.mxu0 %v4339
    %4367 = vmatprep.subr.mxu0 0.0
    %4368 = vmatpush1.msra.mxu0 %v4340
    %4369 = vmatprep.subr.mxu0 0.0
    %4370 = vmatpush1.msra.mxu0 %v4341
    %4371 = vmatprep.subr.mxu0 0.0
    %4372 = vmatpush1.msra.mxu0 %v4342
    %4373 = vmatprep.subr.mxu0 0.0
    %4374 = vmatpush1.msra.mxu0 %v4343
    %4375 = vmatprep.subr.mxu0 0.0
    %4376 = vmatpush1.msra.mxu0 %v4344
    %4377 = vmatprep.subr.mxu0 0.0
    %4378 = vmatpush1.msra.mxu0 0.0
    %4379 = vmatprep.subr.mxu0 0.0
    %4380 = vmatpush1.msra.mxu0 0.0
    %4381 = vmatprep.subr.mxu0 0.0
    %4382 = vmatpush1.msra.mxu0 0.0
    %4383 = vmatprep.subr.mxu0 0.0
    %4384 = vmatpush1.msra.mxu0 0.0
    %4385 = vmatprep.subr.mxu0 0.0
    %4386 = vmatpush1.msra.mxu0 0.0
    %4387 = vmatprep.subr.mxu0 0.0
    %4388 = vmatpush1.msra.mxu0 0.0
    %4389 = vmatprep.subr.mxu0 0.0
    %4390 = vmatpush1.msra.mxu0 0.0
    %4391 = vmatprep.subr.mxu0 0.0
    %4392 = vmatpush1.msra.mxu0 0.0
    %4393 = vmatprep.subr.mxu0 0.0
    %4394 = vmatpush1.msra.mxu0 0.0
    %4395 = vmatprep.subr.mxu0 0.0
    %4396 = vmatpush1.msra.mxu0 0.0
    %4397 = vmatprep.subr.mxu0 0.0
    %4398 = vmatpush1.msra.mxu0 0.0
    %4399 = vmatprep.subr.mxu0 0.0
    %4400 = vmatpush1.msra.mxu0 0.0
    %4401 = vmatprep.subr.mxu0 0.0
    %4402 = vmatpush1.msra.mxu0 0.0
    %4403 = vmatprep.subr.mxu0 0.0
    %4404 = vmatpush1.msra.mxu0 0.0
    %4405 = vmatprep.subr.mxu0 0.0
    %4406 = vmatpush1.msra.mxu0 0.0
    %4407 = vmatprep.subr.mxu0 0.0
    %4408 = vmatpush1.msra.mxu0 0.0
    %4409 = vmatprep.mubr.f32.mxu0 0.0
    %4410 = vmatmul.mubr.f32.gmra.mrb[0].mxu0 %v4328
    %v4411 = vpop.f32.mrb[0].mxu0
    %v4412 = vadd.f32 0.0, %v4411
    %v4413 = vpop.f32.mrb[0].mxu0
    %4414 = vdwg.mxu0
    %v4415 = vmul.f32 %v4412, 0.03125
    %v4416 = vmul.f32 %v4415, %v4415
    %v4418 = vrot.slane %v4416, 7
    %v4420 = vsub.f32 %v4415, %v4418
    %v4421 = vld [vmem:[#allocation40] sm:$0x3]
    %v4422 = vadd.f32 %v4420, 1e-05
    %v4423 = vrsqrt.pop %v4422
    %v4425 = vrot.slane %v4423, 1
    %v4427 = vmul.f32 %v4421, %v4425
    %v4428 = vmul.f32 %v4415, %v4427
    %v4430 = vrot.slane %v4428, 7
    %v4432 = vsub.f32 %v4421, %v4430
    %v4433 = vsel %vm1130, %v4427, %v4432
    %v4434 = vld [vmem:[#allocation41] sm:$0xff]
    %v4435 = vld [vmem:[#allocation41 + $0x8] sm:$0xff]
    %v4436 = vld [vmem:[#allocation41 + $0x10] sm:$0xff]
    %v4437 = vld [vmem:[#allocation41 + $0x18] sm:$0xff]
    %v4439 = vsel %vm1617, %v4433, 0
    %4441 = vmatprep.subr.mxu0 0.0
    %4442 = vmatpush1.msra.mxu0 %v4434
    %4443 = vmatprep.subr.mxu0 0.0
    %4444 = vmatpush1.msra.mxu0 %v4435
    %4445 = vmatprep.subr.mxu0 0.0
    %4446 = vmatpush1.msra.mxu0 %v4436
    %4447 = vmatprep.subr.mxu0 0.0
    %4448 = vmatpush1.msra.mxu0 %v4437
    %4449 = vmatprep.subr.mxu0 0.0
    %4450 = vmatpush1.msra.mxu0 0.0
    %4451 = vmatprep.subr.mxu0 0.0
    %4452 = vmatpush1.msra.mxu0 0.0
    %4453 = vmatprep.subr.mxu0 0.0
    %4454 = vmatpush1.msra.mxu0 0.0
    %4455 = vmatprep.subr.mxu0 0.0
    %4456 = vmatpush1.msra.mxu0 0.0
    %4457 = vmatprep.subr.mxu0 0.0
    %4458 = vmatpush1.msra.mxu0 0.0
    %4459 = vmatprep.subr.mxu0 0.0
    %4460 = vmatpush1.msra.mxu0 0.0
    %4461 = vmatprep.subr.mxu0 0.0
    %4462 = vmatpush1.msra.mxu0 0.0
    %4463 = vmatprep.subr.mxu0 0.0
    %4464 = vmatpush1.msra.mxu0 0.0
    %4465 = vmatprep.subr.mxu0 0.0
    %4466 = vmatpush1.msra.mxu0 0.0
    %4467 = vmatprep.subr.mxu0 0.0
    %4468 = vmatpush1.msra.mxu0 0.0
    %4469 = vmatprep.subr.mxu0 0.0
    %4470 = vmatpush1.msra.mxu0 0.0
    %4471 = vmatprep.subr.mxu0 0.0
    %4472 = vmatpush1.msra.mxu0 0.0
    %4473 = vmatprep.subr.mxu0 0.0
    %4474 = vmatpush1.msra.mxu0 0.0
    %4475 = vmatprep.subr.mxu0 0.0
    %4476 = vmatpush1.msra.mxu0 0.0
    %4477 = vmatprep.subr.mxu0 0.0
    %4478 = vmatpush1.msra.mxu0 0.0
    %4479 = vmatprep.subr.mxu0 0.0
    %4480 = vmatpush1.msra.mxu0 0.0
    %4481 = vmatprep.subr.mxu0 0.0
    %4482 = vmatpush1.msra.mxu0 0.0
    %4483 = vmatprep.subr.mxu0 0.0
    %4484 = vmatpush1.msra.mxu0 0.0
    %4485 = vmatprep.subr.mxu0 0.0
    %4486 = vmatpush1.msra.mxu0 0.0
    %4487 = vmatprep.subr.mxu0 0.0
    %4488 = vmatpush1.msra.mxu0 0.0
    %4489 = vmatprep.subr.mxu0 0.0
    %4490 = vmatpush1.msra.mxu0 0.0
    %4491 = vmatprep.subr.mxu0 0.0
    %4492 = vmatpush1.msra.mxu0 0.0
    %4493 = vmatprep.subr.mxu0 0.0
    %4494 = vmatpush1.msra.mxu0 0.0
    %4495 = vmatprep.subr.mxu0 0.0
    %4496 = vmatpush1.msra.mxu0 0.0
    %4497 = vmatprep.subr.mxu0 0.0
    %4498 = vmatpush1.msra.mxu0 0.0
    %4499 = vmatprep.subr.mxu0 0.0
    %4500 = vmatpush1.msra.mxu0 0.0
    %4501 = vmatprep.subr.mxu0 0.0
    %4502 = vmatpush1.msra.mxu0 0.0
    %4503 = vmatprep.subr.mxu0 0.0
    %4504 = vmatpush1.msra.mxu0 0.0
    %4505 = vmatprep.mubr.f32.mxu0 0.0
    %4506 = vmatmul.mubr.f32.gmra.mrb[0].mxu0 %v4439
    %v4507 = vpop.f32.mrb[0].mxu0
    %v4508 = vadd.f32 0.0, %v4507
    %v4509 = vpop.f32.mrb[0].mxu0
    %4510 = vdwg.mxu0
    %v4511 = vlaneseq
    %v4512 = vshrl.u32 %v4511, 7
    %v4513 = vsub.s32 0, %v4512
    %v4514 = vrot.slane %v4508, %v4513
    %v4515 = vmul.f32 %v4314, %v4514
    %v4516 = vlaneseq
    %v4517 = vshrl.u32 %v4516, 7
    %v4518 = vsub.s32 1, %v4517
    %v4519 = vrot.slane %v4508, %v4518
    %v4520 = vadd.f32 %v4515, %v4519
    %v4521 = vpack.c.bf16 %v4520, %v4520
    %v4522 = vld [vmem:[%s75] sm:$0xff]
    %v4523 = vld [vmem:[%s75 + $0x8] sm:$0xf]
    %v4524 = vld [vmem:[%s75 + $0xc] sm:$0xff]
    %v4525 = vld [vmem:[%s75 + $0x14] sm:$0xf]
    %v4526 = vld [vmem:[%s75 + $0x18] sm:$0xff]
    %v4527 = vld [vmem:[%s75 + $0x20] sm:$0xf]
    %v4528 = vld [vmem:[%s75 + $0x24] sm:$0xff]
    %v4529 = vld [vmem:[%s75 + $0x2c] sm:$0xf]
    %v4530 = vld [vmem:[%s75 + $0x30] sm:$0xff]
    %v4531 = vld [vmem:[%s75 + $0x38] sm:$0xf]
    %v4532 = vld [vmem:[%s75 + $0x3c] sm:$0xff]
    %v4533 = vld [vmem:[%s75 + $0x44] sm:$0xf]
    %v4534 = vld [vmem:[%s75 + $0x48] sm:$0xff]
    %v4535 = vld [vmem:[%s75 + $0x50] sm:$0xf]
    %v4536 = vld [vmem:[%s75 + $0x54] sm:$0xff]
    %v4537 = vld [vmem:[%s75 + $0x5c] sm:$0xf]
    %v4538 = vld [vmem:[%s75 + $0x60] sm:$0xff]
    %v4539 = vld [vmem:[%s75 + $0x68] sm:$0xf]
    %v4540 = vld [vmem:[%s75 + $0x6c] sm:$0xff]
    %v4541 = vld [vmem:[%s75 + $0x74] sm:$0xf]
    %v4542 = vld [vmem:[%s75 + $0x78] sm:$0xff]
    %v4543 = vld [vmem:[%s75 + $0x80] sm:$0xf]
    %v4544 = vld [vmem:[%s75 + $0x84] sm:$0xff]
    %v4545 = vld [vmem:[%s75 + $0x8c] sm:$0xf]
    %v4546 = vld [vmem:[%s75 + $0x90] sm:$0xff]
    %v4547 = vld [vmem:[%s75 + $0x98] sm:$0xf]
    %v4548 = vld [vmem:[%s75 + $0x9c] sm:$0xff]
    %v4549 = vld [vmem:[%s75 + $0xa4] sm:$0xf]
    %v4550 = vld [vmem:[%s75 + $0xa8] sm:$0xff]
    %v4551 = vld [vmem:[%s75 + $0xb0] sm:$0xf]
    %v4552 = vld [vmem:[%s75 + $0xb4] sm:$0xff]
    %v4553 = vld [vmem:[%s75 + $0xbc] sm:$0xf]
    %v4586 = vunpack.c.l.b16 %v4522
    %v4587 = vunpack.c.h.b16 %v4522
    %v4588 = vunpack.c.l.b16 %v4523
    %v4589 = vunpack.c.l.b16 %v4524
    %v4590 = vunpack.c.h.b16 %v4524
    %v4591 = vunpack.c.l.b16 %v4525
    %v4592 = vunpack.c.l.b16 %v4526
    %v4593 = vunpack.c.h.b16 %v4526
    %v4594 = vunpack.c.l.b16 %v4527
    %v4595 = vunpack.c.l.b16 %v4528
    %v4596 = vunpack.c.h.b16 %v4528
    %v4597 = vunpack.c.l.b16 %v4529
    %v4598 = vunpack.c.l.b16 %v4530
    %v4599 = vunpack.c.h.b16 %v4530
    %v4600 = vunpack.c.l.b16 %v4531
    %v4601 = vunpack.c.l.b16 %v4532
    %v4602 = vunpack.c.h.b16 %v4532
    %v4603 = vunpack.c.l.b16 %v4533
    %v4604 = vunpack.c.l.b16 %v4534
    %v4605 = vunpack.c.h.b16 %v4534
    %v4606 = vunpack.c.l.b16 %v4535
    %v4607 = vunpack.c.l.b16 %v4536
    %v4608 = vunpack.c.h.b16 %v4536
    %v4609 = vunpack.c.l.b16 %v4537
    %v4610 = vunpack.c.l.b16 %v4538
    %v4611 = vunpack.c.h.b16 %v4538
    %v4612 = vunpack.c.l.b16 %v4539
    %v4613 = vunpack.c.l.b16 %v4540
    %v4614 = vunpack.c.h.b16 %v4540
    %v4615 = vunpack.c.l.b16 %v4541
    %v4616 = vunpack.c.l.b16 %v4542
    %v4617 = vunpack.c.h.b16 %v4542
    %v4618 = vunpack.c.l.b16 %v4543
    %v4619 = vunpack.c.l.b16 %v4544
    %v4620 = vunpack.c.h.b16 %v4544
    %v4621 = vunpack.c.l.b16 %v4545
    %v4622 = vunpack.c.l.b16 %v4546
    %v4623 = vunpack.c.h.b16 %v4546
    %v4624 = vunpack.c.l.b16 %v4547
    %v4625 = vunpack.c.l.b16 %v4548
    %v4626 = vunpack.c.h.b16 %v4548
    %v4627 = vunpack.c.l.b16 %v4549
    %v4628 = vunpack.c.l.b16 %v4550
    %v4629 = vunpack.c.h.b16 %v4550
    %v4630 = vunpack.c.l.b16 %v4551
    %v4631 = vunpack.c.l.b16 %v4552
    %v4632 = vunpack.c.h.b16 %v4552
    %v4633 = vunpack.c.l.b16 %v4553
    %v4634 = vpack.c.b16 %v4589, %v4586
    %v4635 = vpack.c.b16 %v4590, %v4587
    %v4636 = vpack.c.b16 %v4591, %v4588
    %v4637 = vpack.c.b16 %v4595, %v4592
    %v4638 = vpack.c.b16 %v4596, %v4593
    %v4639 = vpack.c.b16 %v4597, %v4594
    %v4640 = vpack.c.b16 %v4601, %v4598
    %v4641 = vpack.c.b16 %v4602, %v4599
    %v4642 = vpack.c.b16 %v4603, %v4600
    %v4643 = vpack.c.b16 %v4607, %v4604
    %v4644 = vpack.c.b16 %v4608, %v4605
    %v4645 = vpack.c.b16 %v4609, %v4606
    %v4646 = vpack.c.b16 %v4613, %v4610
    %v4647 = vpack.c.b16 %v4614, %v4611
    %v4648 = vpack.c.b16 %v4615, %v4612
    %v4649 = vpack.c.b16 %v4619, %v4616
    %v4650 = vpack.c.b16 %v4620, %v4617
    %v4651 = vpack.c.b16 %v4621, %v4618
    %v4652 = vpack.c.b16 %v4625, %v4622
    %v4653 = vpack.c.b16 %v4626, %v4623
    %v4654 = vpack.c.b16 %v4627, %v4624
    %v4655 = vpack.c.b16 %v4631, %v4628
    %v4656 = vpack.c.b16 %v4632, %v4629
    %v4657 = vpack.c.b16 %v4633, %v4630
    %4682 = vmatprep.subr.bf16.mxu0 %v4635
    %4683 = vmatpush1.bf16.msra.mxu0 %v4634
    %4684 = vmatprep.subr.bf16.mxu0 %v4638
    %4685 = vmatpush1.bf16.msra.mxu0 %v4637
    %4686 = vmatprep.subr.bf16.mxu0 %v4641
    %4687 = vmatpush1.bf16.msra.mxu0 %v4640
    %4688 = vmatprep.subr.bf16.mxu0 %v4644
    %4689 = vmatpush1.bf16.msra.mxu0 %v4643
    %4690 = vmatprep.subr.bf16.mxu0 %v4647
    %4691 = vmatpush1.bf16.msra.mxu0 %v4646
    %4692 = vmatprep.subr.bf16.mxu0 %v4650
    %4693 = vmatpush1.bf16.msra.mxu0 %v4649
    %4694 = vmatprep.subr.bf16.mxu0 %v4653
    %4695 = vmatpush1.bf16.msra.mxu0 %v4652
    %4696 = vmatprep.subr.bf16.mxu0 %v4656
    %4697 = vmatpush1.bf16.msra.mxu0 %v4655
    %4698 = vmatprep.subr.bf16.mxu0 0
    %4699 = vmatpush1.bf16.msra.mxu0 0
    %4700 = vmatprep.subr.bf16.mxu0 0
    %4701 = vmatpush1.bf16.msra.mxu0 0
    %4702 = vmatprep.subr.bf16.mxu0 0
    %4703 = vmatpush1.bf16.msra.mxu0 0
    %4704 = vmatprep.subr.bf16.mxu0 0
    %4705 = vmatpush1.bf16.msra.mxu0 0
    %4706 = vmatprep.subr.bf16.mxu0 0
    %4707 = vmatpush1.bf16.msra.mxu0 0
    %4708 = vmatprep.subr.bf16.mxu0 0
    %4709 = vmatpush1.bf16.msra.mxu0 0
    %4710 = vmatprep.subr.bf16.mxu0 0
    %4711 = vmatpush1.bf16.msra.mxu0 0
    %4712 = vmatprep.subr.bf16.mxu0 0
    %4713 = vmatpush1.bf16.msra.mxu0 0
    %4714 = vmatprep.mubr.bf16.mxu0 0
    %4715 = vmatmul.mubr.bf16.gmra.mrb[0].mxu0 %v4521
    %v4716 = vpop.f32.mrb[0].mxu0
    %v4717 = vadd.f32 0.0, %v4716
    %v4718 = vpop.f32.mrb[0].mxu0
    %v4719 = vadd.f32 0.0, %v4718
    %v4720 = vpop.f32.mrb[0].mxu0
    %v4721 = vpop.f32.mrb[0].mxu0
    %4722 = vdwg.mxu0
    %4723 = vmatprep.subr.bf16.mxu0 0
    %4724 = vmatpush1.bf16.msra.mxu0 %v4636
    %4725 = vmatprep.subr.bf16.mxu0 0
    %4726 = vmatpush1.bf16.msra.mxu0 %v4639
    %4727 = vmatprep.subr.bf16.mxu0 0
    %4728 = vmatpush1.bf16.msra.mxu0 %v4642
    %4729 = vmatprep.subr.bf16.mxu0 0
    %4730 = vmatpush1.bf16.msra.mxu0 %v4645
    %4731 = vmatprep.subr.bf16.mxu0 0
    %4732 = vmatpush1.bf16.msra.mxu0 %v4648
    %4733 = vmatprep.subr.bf16.mxu0 0
    %4734 = vmatpush1.bf16.msra.mxu0 %v4651
    %4735 = vmatprep.subr.bf16.mxu0 0
    %4736 = vmatpush1.bf16.msra.mxu0 %v4654
    %4737 = vmatprep.subr.bf16.mxu0 0
    %4738 = vmatpush1.bf16.msra.mxu0 %v4657
    %4739 = vmatprep.subr.bf16.mxu0 0
    %4740 = vmatpush1.bf16.msra.mxu0 0
    %4741 = vmatprep.subr.bf16.mxu0 0
    %4742 = vmatpush1.bf16.msra.mxu0 0
    %4743 = vmatprep.subr.bf16.mxu0 0
    %4744 = vmatpush1.bf16.msra.mxu0 0
    %4745 = vmatprep.subr.bf16.mxu0 0
    %4746 = vmatpush1.bf16.msra.mxu0 0
    %4747 = vmatprep.subr.bf16.mxu0 0
    %4748 = vmatpush1.bf16.msra.mxu0 0
    %4749 = vmatprep.subr.bf16.mxu0 0
    %4750 = vmatpush1.bf16.msra.mxu0 0
    %4751 = vmatprep.subr.bf16.mxu0 0
    %4752 = vmatpush1.bf16.msra.mxu0 0
    %4753 = vmatprep.subr.bf16.mxu0 0
    %4754 = vmatpush1.bf16.msra.mxu0 0
    %4755 = vmatprep.mubr.bf16.mxu0 0
    %4756 = vmatmul.mubr.bf16.gmra.mrb[0].mxu0 %v4521
    %v4757 = vpop.f32.mrb[0].mxu0
    %v4758 = vadd.f32 0.0, %v4757
    %v4759 = vpop.f32.mrb[0].mxu0
    %v4760 = vpop.f32.mrb[0].mxu0
    %v4761 = vpop.f32.mrb[0].mxu0
    %4762 = vdwg.mxu0
    %v4763 = vpack.c.bf16 %v4717, %v4717
    %v4764 = vpack.c.bf16 %v4719, %v4719
    %v4765 = vpack.c.bf16 %v4758, %v4758
    %v4766 = vld [vmem:[#allocation43] sm:$0x3]
    %s4767 = scalar_lea.vmem [#allocation43], 2
    %v4768 = vld [vmem:[%s4767] sm:$0x3]
    %v4770 = vsel %vm1238, %v4768, 0
    %v4773 = vsel %vm4167, %v4764, 0
    %4775 = vmatprep.subr.bf16.mxu0 0
    %4776 = vmatpush1.bf16.msra.mxu0 %v4773
    %4777 = vmatprep.subr.bf16.mxu0 0
    %4778 = vmatpush1.bf16.msra.mxu0 0
    %4779 = vmatprep.subr.bf16.mxu0 0
    %4780 = vmatpush1.bf16.msra.mxu0 0
    %4781 = vmatprep.subr.bf16.mxu0 0
    %4782 = vmatpush1.bf16.msra.mxu0 0
    %4783 = vmatprep.subr.bf16.mxu0 0
    %4784 = vmatpush1.bf16.msra.mxu0 0
    %4785 = vmatprep.subr.bf16.mxu0 0
    %4786 = vmatpush1.bf16.msra.mxu0 0
    %4787 = vmatprep.subr.bf16.mxu0 0
    %4788 = vmatpush1.bf16.msra.mxu0 0
    %4789 = vmatprep.subr.bf16.mxu0 0
    %4790 = vmatpush1.bf16.msra.mxu0 0
    %4791 = vmatprep.subr.bf16.mxu0 0
    %4792 = vmatpush1.bf16.msra.mxu0 0
    %4793 = vmatprep.subr.bf16.mxu0 0
    %4794 = vmatpush1.bf16.msra.mxu0 0
    %4795 = vmatprep.subr.bf16.mxu0 0
    %4796 = vmatpush1.bf16.msra.mxu0 0
    %4797 = vmatprep.subr.bf16.mxu0 0
    %4798 = vmatpush1.bf16.msra.mxu0 0
    %4799 = vmatprep.subr.bf16.mxu0 0
    %4800 = vmatpush1.bf16.msra.mxu0 0
    %4801 = vmatprep.subr.bf16.mxu0 0
    %4802 = vmatpush1.bf16.msra.mxu0 0
    %4803 = vmatprep.subr.bf16.mxu0 0
    %4804 = vmatpush1.bf16.msra.mxu0 0
    %4805 = vmatprep.subr.bf16.mxu0 0
    %4806 = vmatpush1.bf16.msra.mxu0 0
    %4807 = vmatprep.mubr.bf16.mxu0 0
    %4808 = vmatmul.mubr.bf16.gmra.mrb[0].mxu0 %v4770
    %v4809 = vpop.f32.mrb[0].mxu0
    %v4810 = vadd.f32 0.0, %v4809
    %v4811 = vpop.f32.mrb[0].mxu0
    %v4812 = vpop.f32.mrb[0].mxu0
    %v4813 = vpop.f32.mrb[0].mxu0
    %4814 = vdwg.mxu0
    %v4816 = vsel %vm1238, %v4766, 0
    %v4819 = vsel %vm4167, %v4763, 0
    %4821 = vmatprep.subr.bf16.mxu0 0
    %4822 = vmatpush1.bf16.msra.mxu0 %v4819
    %4823 = vmatprep.subr.bf16.mxu0 0
    %4824 = vmatpush1.bf16.msra.mxu0 0
    %4825 = vmatprep.subr.bf16.mxu0 0
    %4826 = vmatpush1.bf16.msra.mxu0 0
    %4827 = vmatprep.subr.bf16.mxu0 0
    %4828 = vmatpush1.bf16.msra.mxu0 0
    %4829 = vmatprep.subr.bf16.mxu0 0
    %4830 = vmatpush1.bf16.msra.mxu0 0
    %4831 = vmatprep.subr.bf16.mxu0 0
    %4832 = vmatpush1.bf16.msra.mxu0 0
    %4833 = vmatprep.subr.bf16.mxu0 0
    %4834 = vmatpush1.bf16.msra.mxu0 0
    %4835 = vmatprep.subr.bf16.mxu0 0
    %4836 = vmatpush1.bf16.msra.mxu0 0
    %4837 = vmatprep.subr.bf16.mxu0 0
    %4838 = vmatpush1.bf16.msra.mxu0 0
    %4839 = vmatprep.subr.bf16.mxu0 0
    %4840 = vmatpush1.bf16.msra.mxu0 0
    %4841 = vmatprep.subr.bf16.mxu0 0
    %4842 = vmatpush1.bf16.msra.mxu0 0
    %4843 = vmatprep.subr.bf16.mxu0 0
    %4844 = vmatpush1.bf16.msra.mxu0 0
    %4845 = vmatprep.subr.bf16.mxu0 0
    %4846 = vmatpush1.bf16.msra.mxu0 0
    %4847 = vmatprep.subr.bf16.mxu0 0
    %4848 = vmatpush1.bf16.msra.mxu0 0
    %4849 = vmatprep.subr.bf16.mxu0 0
    %4850 = vmatpush1.bf16.msra.mxu0 0
    %4851 = vmatprep.subr.bf16.mxu0 0
    %4852 = vmatpush1.bf16.msra.mxu0 0
    %4853 = vmatprep.mubr.bf16.mxu0 0
    %4854 = vmatmul.mubr.bf16.gmra.mrb[0].mxu0 %v4816
    %v4855 = vpop.f32.mrb[0].mxu0
    %v4856 = vadd.f32 %v4810, %v4855
    %v4857 = vpop.f32.mrb[0].mxu0
    %v4858 = vpop.f32.mrb[0].mxu0
    %v4859 = vpop.f32.mrb[0].mxu0
    %4860 = vdwg.mxu0
    %s4861 = scalar_lea.vmem [#allocation43], 4
    %v4862 = vld [vmem:[%s4861] sm:$0x3]
    %v4864 = vsel %vm1238, %v4862, 0
    %v4867 = vsel %vm4167, %v4765, 0
    %4869 = vmatprep.subr.bf16.mxu0 0
    %4870 = vmatpush1.bf16.msra.mxu0 %v4867
    %4871 = vmatprep.subr.bf16.mxu0 0
    %4872 = vmatpush1.bf16.msra.mxu0 0
    %4873 = vmatprep.subr.bf16.mxu0 0
    %4874 = vmatpush1.bf16.msra.mxu0 0
    %4875 = vmatprep.subr.bf16.mxu0 0
    %4876 = vmatpush1.bf16.msra.mxu0 0
    %4877 = vmatprep.subr.bf16.mxu0 0
    %4878 = vmatpush1.bf16.msra.mxu0 0
    %4879 = vmatprep.subr.bf16.mxu0 0
    %4880 = vmatpush1.bf16.msra.mxu0 0
    %4881 = vmatprep.subr.bf16.mxu0 0
    %4882 = vmatpush1.bf16.msra.mxu0 0
    %4883 = vmatprep.subr.bf16.mxu0 0
    %4884 = vmatpush1.bf16.msra.mxu0 0
    %4885 = vmatprep.subr.bf16.mxu0 0
    %4886 = vmatpush1.bf16.msra.mxu0 0
    %4887 = vmatprep.subr.bf16.mxu0 0
    %4888 = vmatpush1.bf16.msra.mxu0 0
    %4889 = vmatprep.subr.bf16.mxu0 0
    %4890 = vmatpush1.bf16.msra.mxu0 0
    %4891 = vmatprep.subr.bf16.mxu0 0
    %4892 = vmatpush1.bf16.msra.mxu0 0
    %4893 = vmatprep.subr.bf16.mxu0 0
    %4894 = vmatpush1.bf16.msra.mxu0 0
    %4895 = vmatprep.subr.bf16.mxu0 0
    %4896 = vmatpush1.bf16.msra.mxu0 0
    %4897 = vmatprep.subr.bf16.mxu0 0
    %4898 = vmatpush1.bf16.msra.mxu0 0
    %4899 = vmatprep.subr.bf16.mxu0 0
    %4900 = vmatpush1.bf16.msra.mxu0 0
    %4901 = vmatprep.mubr.bf16.mxu0 0
    %4902 = vmatmul.mubr.bf16.gmra.mrb[0].mxu0 %v4864
    %v4903 = vpop.f32.mrb[0].mxu0
    %v4904 = vadd.f32 0.0, %v4903
    %v4905 = vpop.f32.mrb[0].mxu0
    %v4906 = vpop.f32.mrb[0].mxu0
    %v4907 = vpop.f32.mrb[0].mxu0
    %4908 = vdwg.mxu0
    %v4909 = vadd.f32 %v4856, %v4904
    %v4910 = vld [vmem:[#allocation44] sm:$0x1]
    %v4912 = vlaneseq
    %v4913 = vshrl.u32 %v4912, 7
    %v4914 = vsub.s32 0, %v4913
    %v4915 = vrot.slane %v4910, %v4914
    %v4917 = vadd.f32 %v4909, %v4915
    %v4918 = vmax.f32 %v4917, 0.0
    %v4919 = vsel %vm4167, %v4918, 0.0
    %v4920 = vrot.slane %v4919, 4
    %v4921 = vadd.f32 %v4919, %v4920
    %v4922 = vrot.slane %v4921, 2
    %v4923 = vadd.f32 %v4921, %v4922
    %v4924 = vrot.slane %v4923, 1
    %v4925 = vadd.f32 %v4923, %v4924
    %v4926 = vmul.f32 %v4918, %v4918
    %v4927 = vsel %vm4167, %v4926, 0.0
    %v4928 = vrot.slane %v4927, 4
    %v4929 = vadd.f32 %v4927, %v4928
    %v4930 = vrot.slane %v4929, 2
    %v4931 = vadd.f32 %v4929, %v4930
    %v4932 = vrot.slane %v4931, 1
    %v4933 = vadd.f32 %v4931, %v4932
    %v4934 = vsel %vm1130, %v4925, %v4933
    %v4935 = vld [vmem:[%s83] sm:$0xff]
    %v4936 = vld [vmem:[%s83 + $0x8] sm:$0xff]
    %v4937 = vld [vmem:[%s83 + $0x10] sm:$0xff]
    %v4938 = vld [vmem:[%s83 + $0x18] sm:$0xff]
    %v4939 = vld [vmem:[%s83 + $0x20] sm:$0xff]
    %v4940 = vld [vmem:[%s83 + $0x28] sm:$0xff]
    %v4941 = vld [vmem:[%s83 + $0x30] sm:$0xff]
    %v4942 = vld [vmem:[%s83 + $0x38] sm:$0xff]
    %v4943 = vld [vmem:[%s83 + $0x40] sm:$0xff]
    %v4944 = vld [vmem:[%s83 + $0x48] sm:$0xff]
    %v4945 = vld [vmem:[%s83 + $0x50] sm:$0xff]
    %v4946 = vld [vmem:[%s83 + $0x58] sm:$0xff]
    %v4947 = vld [vmem:[%s83 + $0x60] sm:$0xff]
    %v4948 = vld [vmem:[%s83 + $0x68] sm:$0xff]
    %v4949 = vld [vmem:[%s83 + $0x70] sm:$0xff]
    %v4950 = vld [vmem:[%s83 + $0x78] sm:$0xff]
    %4951 = vmatprep.subr.mxu0 0.0
    %4952 = vmatpush1.msra.mxu0 %v4935
    %4953 = vmatprep.subr.mxu0 0.0
    %4954 = vmatpush1.msra.mxu0 %v4936
    %4955 = vmatprep.subr.mxu0 0.0
    %4956 = vmatpush1.msra.mxu0 %v4937
    %4957 = vmatprep.subr.mxu0 0.0
    %4958 = vmatpush1.msra.mxu0 %v4938
    %4959 = vmatprep.subr.mxu0 0.0
    %4960 = vmatpush1.msra.mxu0 %v4939
    %4961 = vmatprep.subr.mxu0 0.0
    %4962 = vmatpush1.msra.mxu0 %v4940
    %4963 = vmatprep.subr.mxu0 0.0
    %4964 = vmatpush1.msra.mxu0 %v4941
    %4965 = vmatprep.subr.mxu0 0.0
    %4966 = vmatpush1.msra.mxu0 %v4942
    %4967 = vmatprep.subr.mxu0 0.0
    %4968 = vmatpush1.msra.mxu0 %v4943
    %4969 = vmatprep.subr.mxu0 0.0
    %4970 = vmatpush1.msra.mxu0 %v4944
    %4971 = vmatprep.subr.mxu0 0.0
    %4972 = vmatpush1.msra.mxu0 %v4945
    %4973 = vmatprep.subr.mxu0 0.0
    %4974 = vmatpush1.msra.mxu0 %v4946
    %4975 = vmatprep.subr.mxu0 0.0
    %4976 = vmatpush1.msra.mxu0 %v4947
    %4977 = vmatprep.subr.mxu0 0.0
    %4978 = vmatpush1.msra.mxu0 %v4948
    %4979 = vmatprep.subr.mxu0 0.0
    %4980 = vmatpush1.msra.mxu0 %v4949
    %4981 = vmatprep.subr.mxu0 0.0
    %4982 = vmatpush1.msra.mxu0 %v4950
    %4983 = vmatprep.subr.mxu0 0.0
    %4984 = vmatpush1.msra.mxu0 0.0
    %4985 = vmatprep.subr.mxu0 0.0
    %4986 = vmatpush1.msra.mxu0 0.0
    %4987 = vmatprep.subr.mxu0 0.0
    %4988 = vmatpush1.msra.mxu0 0.0
    %4989 = vmatprep.subr.mxu0 0.0
    %4990 = vmatpush1.msra.mxu0 0.0
    %4991 = vmatprep.subr.mxu0 0.0
    %4992 = vmatpush1.msra.mxu0 0.0
    %4993 = vmatprep.subr.mxu0 0.0
    %4994 = vmatpush1.msra.mxu0 0.0
    %4995 = vmatprep.subr.mxu0 0.0
    %4996 = vmatpush1.msra.mxu0 0.0
    %4997 = vmatprep.subr.mxu0 0.0
    %4998 = vmatpush1.msra.mxu0 0.0
    %4999 = vmatprep.subr.mxu0 0.0
    %5000 = vmatpush1.msra.mxu0 0.0
    %5001 = vmatprep.subr.mxu0 0.0
    %5002 = vmatpush1.msra.mxu0 0.0
    %5003 = vmatprep.subr.mxu0 0.0
    %5004 = vmatpush1.msra.mxu0 0.0
    %5005 = vmatprep.subr.mxu0 0.0
    %5006 = vmatpush1.msra.mxu0 0.0
    %5007 = vmatprep.subr.mxu0 0.0
    %5008 = vmatpush1.msra.mxu0 0.0
    %5009 = vmatprep.subr.mxu0 0.0
    %5010 = vmatpush1.msra.mxu0 0.0
    %5011 = vmatprep.subr.mxu0 0.0
    %5012 = vmatpush1.msra.mxu0 0.0
    %5013 = vmatprep.subr.mxu0 0.0
    %5014 = vmatpush1.msra.mxu0 0.0
    %5015 = vmatprep.mubr.f32.mxu0 0.0
    %5016 = vmatmul.mubr.f32.gmra.mrb[0].mxu0 %v4934
    %v5017 = vpop.f32.mrb[0].mxu0
    %v5018 = vadd.f32 0.0, %v5017
    %v5019 = vpop.f32.mrb[0].mxu0
    %5020 = vdwg.mxu0
    %v5021 = vmul.f32 %v5018, 0.125
    %v5022 = vmul.f32 %v5021, %v5021
    %v5024 = vrot.slane %v5022, 7
    %v5026 = vsub.f32 %v5021, %v5024
    %v5027 = vld [vmem:[%s81] sm:$0x3]
    %v5028 = vadd.f32 %v5026, 1e-05
    %v5029 = vrsqrt.pop %v5028
    %v5031 = vrot.slane %v5029, 1
    %v5033 = vmul.f32 %v5027, %v5031
    %v5034 = vmul.f32 %v5021, %v5033
    %v5036 = vrot.slane %v5034, 7
    %v5038 = vsub.f32 %v5027, %v5036
    %v5039 = vsel %vm1130, %v5033, %v5038
    %v5040 = vld [vmem:[#allocation46] sm:$0xff]
    %v5041 = vld [vmem:[#allocation46 + $0x8] sm:$0xff]
    %v5042 = vld [vmem:[#allocation46 + $0x10] sm:$0xff]
    %v5043 = vld [vmem:[#allocation46 + $0x18] sm:$0xff]
    %v5044 = vld [vmem:[#allocation46 + $0x20] sm:$0xff]
    %v5045 = vld [vmem:[#allocation46 + $0x28] sm:$0xff]
    %v5046 = vld [vmem:[#allocation46 + $0x30] sm:$0xff]
    %v5047 = vld [vmem:[#allocation46 + $0x38] sm:$0xff]
    %v5049 = vsel %vm898, %v5039, 0
    %5051 = vmatprep.subr.mxu0 0.0
    %5052 = vmatpush1.msra.mxu0 %v5040
    %5053 = vmatprep.subr.mxu0 0.0
    %5054 = vmatpush1.msra.mxu0 %v5041
    %5055 = vmatprep.subr.mxu0 0.0
    %5056 = vmatpush1.msra.mxu0 %v5042
    %5057 = vmatprep.subr.mxu0 0.0
    %5058 = vmatpush1.msra.mxu0 %v5043
    %5059 = vmatprep.subr.mxu0 0.0
    %5060 = vmatpush1.msra.mxu0 %v5044
    %5061 = vmatprep.subr.mxu0 0.0
    %5062 = vmatpush1.msra.mxu0 %v5045
    %5063 = vmatprep.subr.mxu0 0.0
    %5064 = vmatpush1.msra.mxu0 %v5046
    %5065 = vmatprep.subr.mxu0 0.0
    %5066 = vmatpush1.msra.mxu0 %v5047
    %5067 = vmatprep.subr.mxu0 0.0
    %5068 = vmatpush1.msra.mxu0 0.0
    %5069 = vmatprep.subr.mxu0 0.0
    %5070 = vmatpush1.msra.mxu0 0.0
    %5071 = vmatprep.subr.mxu0 0.0
    %5072 = vmatpush1.msra.mxu0 0.0
    %5073 = vmatprep.subr.mxu0 0.0
    %5074 = vmatpush1.msra.mxu0 0.0
    %5075 = vmatprep.subr.mxu0 0.0
    %5076 = vmatpush1.msra.mxu0 0.0
    %5077 = vmatprep.subr.mxu0 0.0
    %5078 = vmatpush1.msra.mxu0 0.0
    %5079 = vmatprep.subr.mxu0 0.0
    %5080 = vmatpush1.msra.mxu0 0.0
    %5081 = vmatprep.subr.mxu0 0.0
    %5082 = vmatpush1.msra.mxu0 0.0
    %5083 = vmatprep.subr.mxu0 0.0
    %5084 = vmatpush1.msra.mxu0 0.0
    %5085 = vmatprep.subr.mxu0 0.0
    %5086 = vmatpush1.msra.mxu0 0.0
    %5087 = vmatprep.subr.mxu0 0.0
    %5088 = vmatpush1.msra.mxu0 0.0
    %5089 = vmatprep.subr.mxu0 0.0
    %5090 = vmatpush1.msra.mxu0 0.0
    %5091 = vmatprep.subr.mxu0 0.0
    %5092 = vmatpush1.msra.mxu0 0.0
    %5093 = vmatprep.subr.mxu0 0.0
    %5094 = vmatpush1.msra.mxu0 0.0
    %5095 = vmatprep.subr.mxu0 0.0
    %5096 = vmatpush1.msra.mxu0 0.0
    %5097 = vmatprep.subr.mxu0 0.0
    %5098 = vmatpush1.msra.mxu0 0.0
    %5099 = vmatprep.subr.mxu0 0.0
    %5100 = vmatpush1.msra.mxu0 0.0
    %5101 = vmatprep.subr.mxu0 0.0
    %5102 = vmatpush1.msra.mxu0 0.0
    %5103 = vmatprep.subr.mxu0 0.0
    %5104 = vmatpush1.msra.mxu0 0.0
    %5105 = vmatprep.subr.mxu0 0.0
    %5106 = vmatpush1.msra.mxu0 0.0
    %5107 = vmatprep.subr.mxu0 0.0
    %5108 = vmatpush1.msra.mxu0 0.0
    %5109 = vmatprep.subr.mxu0 0.0
    %5110 = vmatpush1.msra.mxu0 0.0
    %5111 = vmatprep.subr.mxu0 0.0
    %5112 = vmatpush1.msra.mxu0 0.0
    %5113 = vmatprep.subr.mxu0 0.0
    %5114 = vmatpush1.msra.mxu0 0.0
    %5115 = vmatprep.mubr.f32.mxu0 0.0
    %5116 = vmatmul.mubr.f32.gmra.mrb[0].mxu0 %v5049
    %v5117 = vpop.f32.mrb[0].mxu0
    %v5118 = vadd.f32 0.0, %v5117
    %v5119 = vpop.f32.mrb[0].mxu0
    %5120 = vdwg.mxu0
    %v5121 = vlaneseq
    %v5122 = vshrl.u32 %v5121, 7
    %v5123 = vsub.s32 0, %v5122
    %v5124 = vrot.slane %v5118, %v5123
    %v5125 = vmul.f32 %v4918, %v5124
    %v5126 = vlaneseq
    %v5127 = vshrl.u32 %v5126, 7
    %v5128 = vsub.s32 1, %v5127
    %v5129 = vrot.slane %v5118, %v5128
    %v5130 = vadd.f32 %v5125, %v5129
    %v5131 = vpack.c.bf16 %v5130, %v5130
    %v5132 = vld [vmem:[#allocation47] sm:$0xff]
    %v5133 = vld [vmem:[#allocation47 + $0x8] sm:$0xf]
    %v5134 = vld [vmem:[#allocation47 + $0xc] sm:$0xff]
    %v5135 = vld [vmem:[#allocation47 + $0x14] sm:$0xf]
    %v5136 = vld [vmem:[#allocation47 + $0x18] sm:$0xff]
    %v5137 = vld [vmem:[#allocation47 + $0x20] sm:$0xf]
    %v5138 = vld [vmem:[#allocation47 + $0x24] sm:$0xff]
    %v5139 = vld [vmem:[#allocation47 + $0x2c] sm:$0xf]
    %v5140 = vld [vmem:[#allocation47 + $0x30] sm:$0xff]
    %v5141 = vld [vmem:[#allocation47 + $0x38] sm:$0xf]
    %v5142 = vld [vmem:[#allocation47 + $0x3c] sm:$0xff]
    %v5143 = vld [vmem:[#allocation47 + $0x44] sm:$0xf]
    %v5144 = vld [vmem:[#allocation47 + $0x48] sm:$0xff]
    %v5145 = vld [vmem:[#allocation47 + $0x50] sm:$0xf]
    %v5146 = vld [vmem:[#allocation47 + $0x54] sm:$0xff]
    %v5147 = vld [vmem:[#allocation47 + $0x5c] sm:$0xf]
    %v5148 = vld [vmem:[#allocation47 + $0x60] sm:$0xff]
    %v5149 = vld [vmem:[#allocation47 + $0x68] sm:$0xf]
    %v5150 = vld [vmem:[#allocation47 + $0x6c] sm:$0xff]
    %v5151 = vld [vmem:[#allocation47 + $0x74] sm:$0xf]
    %v5152 = vld [vmem:[#allocation47 + $0x78] sm:$0xff]
    %v5153 = vld [vmem:[#allocation47 + $0x80] sm:$0xf]
    %v5154 = vld [vmem:[#allocation47 + $0x84] sm:$0xff]
    %v5155 = vld [vmem:[#allocation47 + $0x8c] sm:$0xf]
    %v5156 = vld [vmem:[#allocation47 + $0x90] sm:$0xff]
    %v5157 = vld [vmem:[#allocation47 + $0x98] sm:$0xf]
    %v5158 = vld [vmem:[#allocation47 + $0x9c] sm:$0xff]
    %v5159 = vld [vmem:[#allocation47 + $0xa4] sm:$0xf]
    %v5160 = vld [vmem:[#allocation47 + $0xa8] sm:$0xff]
    %v5161 = vld [vmem:[#allocation47 + $0xb0] sm:$0xf]
    %v5162 = vld [vmem:[#allocation47 + $0xb4] sm:$0xff]
    %v5163 = vld [vmem:[#allocation47 + $0xbc] sm:$0xf]
    %v5196 = vunpack.c.l.b16 %v5132
    %v5197 = vunpack.c.h.b16 %v5132
    %v5198 = vunpack.c.l.b16 %v5133
    %v5199 = vunpack.c.l.b16 %v5134
    %v5200 = vunpack.c.h.b16 %v5134
    %v5201 = vunpack.c.l.b16 %v5135
    %v5202 = vunpack.c.l.b16 %v5136
    %v5203 = vunpack.c.h.b16 %v5136
    %v5204 = vunpack.c.l.b16 %v5137
    %v5205 = vunpack.c.l.b16 %v5138
    %v5206 = vunpack.c.h.b16 %v5138
    %v5207 = vunpack.c.l.b16 %v5139
    %v5208 = vunpack.c.l.b16 %v5140
    %v5209 = vunpack.c.h.b16 %v5140
    %v5210 = vunpack.c.l.b16 %v5141
    %v5211 = vunpack.c.l.b16 %v5142
    %v5212 = vunpack.c.h.b16 %v5142
    %v5213 = vunpack.c.l.b16 %v5143
    %v5214 = vunpack.c.l.b16 %v5144
    %v5215 = vunpack.c.h.b16 %v5144
    %v5216 = vunpack.c.l.b16 %v5145
    %v5217 = vunpack.c.l.b16 %v5146
    %v5218 = vunpack.c.h.b16 %v5146
    %v5219 = vunpack.c.l.b16 %v5147
    %v5220 = vunpack.c.l.b16 %v5148
    %v5221 = vunpack.c.h.b16 %v5148
    %v5222 = vunpack.c.l.b16 %v5149
    %v5223 = vunpack.c.l.b16 %v5150
    %v5224 = vunpack.c.h.b16 %v5150
    %v5225 = vunpack.c.l.b16 %v5151
    %v5226 = vunpack.c.l.b16 %v5152
    %v5227 = vunpack.c.h.b16 %v5152
    %v5228 = vunpack.c.l.b16 %v5153
    %v5229 = vunpack.c.l.b16 %v5154
    %v5230 = vunpack.c.h.b16 %v5154
    %v5231 = vunpack.c.l.b16 %v5155
    %v5232 = vunpack.c.l.b16 %v5156
    %v5233 = vunpack.c.h.b16 %v5156
    %v5234 = vunpack.c.l.b16 %v5157
    %v5235 = vunpack.c.l.b16 %v5158
    %v5236 = vunpack.c.h.b16 %v5158
    %v5237 = vunpack.c.l.b16 %v5159
    %v5238 = vunpack.c.l.b16 %v5160
    %v5239 = vunpack.c.h.b16 %v5160
    %v5240 = vunpack.c.l.b16 %v5161
    %v5241 = vunpack.c.l.b16 %v5162
    %v5242 = vunpack.c.h.b16 %v5162
    %v5243 = vunpack.c.l.b16 %v5163
    %v5244 = vpack.c.b16 %v5199, %v5196
    %v5245 = vpack.c.b16 %v5200, %v5197
    %v5246 = vpack.c.b16 %v5201, %v5198
    %v5247 = vpack.c.b16 %v5205, %v5202
    %v5248 = vpack.c.b16 %v5206, %v5203
    %v5249 = vpack.c.b16 %v5207, %v5204
    %v5250 = vpack.c.b16 %v5211, %v5208
    %v5251 = vpack.c.b16 %v5212, %v5209
    %v5252 = vpack.c.b16 %v5213, %v5210
    %v5253 = vpack.c.b16 %v5217, %v5214
    %v5254 = vpack.c.b16 %v5218, %v5215
    %v5255 = vpack.c.b16 %v5219, %v5216
    %v5256 = vpack.c.b16 %v5223, %v5220
    %v5257 = vpack.c.b16 %v5224, %v5221
    %v5258 = vpack.c.b16 %v5225, %v5222
    %v5259 = vpack.c.b16 %v5229, %v5226
    %v5260 = vpack.c.b16 %v5230, %v5227
    %v5261 = vpack.c.b16 %v5231, %v5228
    %v5262 = vpack.c.b16 %v5235, %v5232
    %v5263 = vpack.c.b16 %v5236, %v5233
    %v5264 = vpack.c.b16 %v5237, %v5234
    %v5265 = vpack.c.b16 %v5241, %v5238
    %v5266 = vpack.c.b16 %v5242, %v5239
    %v5267 = vpack.c.b16 %v5243, %v5240
    %5292 = vmatprep.subr.bf16.mxu0 %v5245
    %5293 = vmatpush1.bf16.msra.mxu0 %v5244
    %5294 = vmatprep.subr.bf16.mxu0 %v5248
    %5295 = vmatpush1.bf16.msra.mxu0 %v5247
    %5296 = vmatprep.subr.bf16.mxu0 %v5251
    %5297 = vmatpush1.bf16.msra.mxu0 %v5250
    %5298 = vmatprep.subr.bf16.mxu0 %v5254
    %5299 = vmatpush1.bf16.msra.mxu0 %v5253
    %5300 = vmatprep.subr.bf16.mxu0 %v5257
    %5301 = vmatpush1.bf16.msra.mxu0 %v5256
    %5302 = vmatprep.subr.bf16.mxu0 %v5260
    %5303 = vmatpush1.bf16.msra.mxu0 %v5259
    %5304 = vmatprep.subr.bf16.mxu0 %v5263
    %5305 = vmatpush1.bf16.msra.mxu0 %v5262
    %5306 = vmatprep.subr.bf16.mxu0 %v5266
    %5307 = vmatpush1.bf16.msra.mxu0 %v5265
    %5308 = vmatprep.subr.bf16.mxu0 0
    %5309 = vmatpush1.bf16.msra.mxu0 0
    %5310 = vmatprep.subr.bf16.mxu0 0
    %5311 = vmatpush1.bf16.msra.mxu0 0
    %5312 = vmatprep.subr.bf16.mxu0 0
    %5313 = vmatpush1.bf16.msra.mxu0 0
    %5314 = vmatprep.subr.bf16.mxu0 0
    %5315 = vmatpush1.bf16.msra.mxu0 0
    %5316 = vmatprep.subr.bf16.mxu0 0
    %5317 = vmatpush1.bf16.msra.mxu0 0
    %5318 = vmatprep.subr.bf16.mxu0 0
    %5319 = vmatpush1.bf16.msra.mxu0 0
    %5320 = vmatprep.subr.bf16.mxu0 0
    %5321 = vmatpush1.bf16.msra.mxu0 0
    %5322 = vmatprep.subr.bf16.mxu0 0
    %5323 = vmatpush1.bf16.msra.mxu0 0
    %5324 = vmatprep.mubr.bf16.mxu0 0
    %5325 = vmatmul.mubr.bf16.gmra.mrb[0].mxu0 %v5131
    %v5326 = vpop.f32.mrb[0].mxu0
    %v5327 = vadd.f32 0.0, %v5326
    %v5328 = vpop.f32.mrb[0].mxu0
    %v5329 = vadd.f32 0.0, %v5328
    %v5330 = vpop.f32.mrb[0].mxu0
    %v5331 = vpop.f32.mrb[0].mxu0
    %5332 = vdwg.mxu0
    %5333 = vmatprep.subr.bf16.mxu0 0
    %5334 = vmatpush1.bf16.msra.mxu0 %v5246
    %5335 = vmatprep.subr.bf16.mxu0 0
    %5336 = vmatpush1.bf16.msra.mxu0 %v5249
    %5337 = vmatprep.subr.bf16.mxu0 0
    %5338 = vmatpush1.bf16.msra.mxu0 %v5252
    %5339 = vmatprep.subr.bf16.mxu0 0
    %5340 = vmatpush1.bf16.msra.mxu0 %v5255
    %5341 = vmatprep.subr.bf16.mxu0 0
    %5342 = vmatpush1.bf16.msra.mxu0 %v5258
    %5343 = vmatprep.subr.bf16.mxu0 0
    %5344 = vmatpush1.bf16.msra.mxu0 %v5261
    %5345 = vmatprep.subr.bf16.mxu0 0
    %5346 = vmatpush1.bf16.msra.mxu0 %v5264
    %5347 = vmatprep.subr.bf16.mxu0 0
    %5348 = vmatpush1.bf16.msra.mxu0 %v5267
    %5349 = vmatprep.subr.bf16.mxu0 0
    %5350 = vmatpush1.bf16.msra.mxu0 0
    %5351 = vmatprep.subr.bf16.mxu0 0
    %5352 = vmatpush1.bf16.msra.mxu0 0
    %5353 = vmatprep.subr.bf16.mxu0 0
    %5354 = vmatpush1.bf16.msra.mxu0 0
    %5355 = vmatprep.subr.bf16.mxu0 0
    %5356 = vmatpush1.bf16.msra.mxu0 0
    %5357 = vmatprep.subr.bf16.mxu0 0
    %5358 = vmatpush1.bf16.msra.mxu0 0
    %5359 = vmatprep.subr.bf16.mxu0 0
    %5360 = vmatpush1.bf16.msra.mxu0 0
    %5361 = vmatprep.subr.bf16.mxu0 0
    %5362 = vmatpush1.bf16.msra.mxu0 0
    %5363 = vmatprep.subr.bf16.mxu0 0
    %5364 = vmatpush1.bf16.msra.mxu0 0
    %5365 = vmatprep.mubr.bf16.mxu0 0
    %5366 = vmatmul.mubr.bf16.gmra.mrb[0].mxu0 %v5131
    %v5367 = vpop.f32.mrb[0].mxu0
    %v5368 = vadd.f32 0.0, %v5367
    %v5369 = vpop.f32.mrb[0].mxu0
    %v5370 = vpop.f32.mrb[0].mxu0
    %v5371 = vpop.f32.mrb[0].mxu0
    %5372 = vdwg.mxu0
    %v5373 = vpack.c.bf16 %v5327, %v5327
    %v5374 = vpack.c.bf16 %v5329, %v5329
    %v5375 = vpack.c.bf16 %v5368, %v5368
    %v5376 = vld [vmem:[%s89] sm:$0x1]
    %s5377 = scalar_lea.vmem %s89, 1
    %v5378 = vld [vmem:[%s5377] sm:$0x1]
    %vm5379 = vcmask 31744
    %v5381 = vsel %vm5379, %v5378, 0
    %vm5383 = vcmask 1041408
    %v5385 = vsel %vm5383, %v5374, 0
    %5387 = vmatprep.subr.bf16.mxu0 0
    %5388 = vmatpush1.bf16.msra.mxu0 %v5385
    %5389 = vmatprep.subr.bf16.mxu0 0
    %5390 = vmatpush1.bf16.msra.mxu0 0
    %5391 = vmatprep.subr.bf16.mxu0 0
    %5392 = vmatpush1.bf16.msra.mxu0 0
    %5393 = vmatprep.subr.bf16.mxu0 0
    %5394 = vmatpush1.bf16.msra.mxu0 0
    %5395 = vmatprep.subr.bf16.mxu0 0
    %5396 = vmatpush1.bf16.msra.mxu0 0
    %5397 = vmatprep.subr.bf16.mxu0 0
    %5398 = vmatpush1.bf16.msra.mxu0 0
    %5399 = vmatprep.subr.bf16.mxu0 0
    %5400 = vmatpush1.bf16.msra.mxu0 0
    %5401 = vmatprep.subr.bf16.mxu0 0
    %5402 = vmatpush1.bf16.msra.mxu0 0
    %5403 = vmatprep.subr.bf16.mxu0 0
    %5404 = vmatpush1.bf16.msra.mxu0 0
    %5405 = vmatprep.subr.bf16.mxu0 0
    %5406 = vmatpush1.bf16.msra.mxu0 0
    %5407 = vmatprep.subr.bf16.mxu0 0
    %5408 = vmatpush1.bf16.msra.mxu0 0
    %5409 = vmatprep.subr.bf16.mxu0 0
    %5410 = vmatpush1.bf16.msra.mxu0 0
    %5411 = vmatprep.subr.bf16.mxu0 0
    %5412 = vmatpush1.bf16.msra.mxu0 0
    %5413 = vmatprep.subr.bf16.mxu0 0
    %5414 = vmatpush1.bf16.msra.mxu0 0
    %5415 = vmatprep.subr.bf16.mxu0 0
    %5416 = vmatpush1.bf16.msra.mxu0 0
    %5417 = vmatprep.subr.bf16.mxu0 0
    %5418 = vmatpush1.bf16.msra.mxu0 0
    %5419 = vmatprep.mubr.bf16.mxu0 0
    %5420 = vmatmul.mubr.bf16.gmra.mrb[0].mxu0 %v5381
    %v5421 = vpop.f32.mrb[0].mxu0
    %v5422 = vadd.f32 0.0, %v5421
    %v5423 = vpop.f32.mrb[0].mxu0
    %v5424 = vpop.f32.mrb[0].mxu0
    %v5425 = vpop.f32.mrb[0].mxu0
    %5426 = vdwg.mxu0
    %v5428 = vsel %vm5379, %v5376, 0
    %v5431 = vsel %vm5383, %v5373, 0
    %5433 = vmatprep.subr.bf16.mxu0 0
    %5434 = vmatpush1.bf16.msra.mxu0 %v5431
    %5435 = vmatprep.subr.bf16.mxu0 0
    %5436 = vmatpush1.bf16.msra.mxu0 0
    %5437 = vmatprep.subr.bf16.mxu0 0
    %5438 = vmatpush1.bf16.msra.mxu0 0
    %5439 = vmatprep.subr.bf16.mxu0 0
    %5440 = vmatpush1.bf16.msra.mxu0 0
    %5441 = vmatprep.subr.bf16.mxu0 0
    %5442 = vmatpush1.bf16.msra.mxu0 0
    %5443 = vmatprep.subr.bf16.mxu0 0
    %5444 = vmatpush1.bf16.msra.mxu0 0
    %5445 = vmatprep.subr.bf16.mxu0 0
    %5446 = vmatpush1.bf16.msra.mxu0 0
    %5447 = vmatprep.subr.bf16.mxu0 0
    %5448 = vmatpush1.bf16.msra.mxu0 0
    %5449 = vmatprep.subr.bf16.mxu0 0
    %5450 = vmatpush1.bf16.msra.mxu0 0
    %5451 = vmatprep.subr.bf16.mxu0 0
    %5452 = vmatpush1.bf16.msra.mxu0 0
    %5453 = vmatprep.subr.bf16.mxu0 0
    %5454 = vmatpush1.bf16.msra.mxu0 0
    %5455 = vmatprep.subr.bf16.mxu0 0
    %5456 = vmatpush1.bf16.msra.mxu0 0
    %5457 = vmatprep.subr.bf16.mxu0 0
    %5458 = vmatpush1.bf16.msra.mxu0 0
    %5459 = vmatprep.subr.bf16.mxu0 0
    %5460 = vmatpush1.bf16.msra.mxu0 0
    %5461 = vmatprep.subr.bf16.mxu0 0
    %5462 = vmatpush1.bf16.msra.mxu0 0
    %5463 = vmatprep.subr.bf16.mxu0 0
    %5464 = vmatpush1.bf16.msra.mxu0 0
    %5465 = vmatprep.mubr.bf16.mxu0 0
    %5466 = vmatmul.mubr.bf16.gmra.mrb[0].mxu0 %v5428
    %v5467 = vpop.f32.mrb[0].mxu0
    %v5468 = vadd.f32 %v5422, %v5467
    %v5469 = vpop.f32.mrb[0].mxu0
    %v5470 = vpop.f32.mrb[0].mxu0
    %v5471 = vpop.f32.mrb[0].mxu0
    %5472 = vdwg.mxu0
    %s5473 = scalar_lea.vmem %s89, 2
    %v5474 = vld [vmem:[%s5473] sm:$0x1]
    %v5476 = vsel %vm5379, %v5474, 0
    %v5479 = vsel %vm5383, %v5375, 0
    %5481 = vmatprep.subr.bf16.mxu0 0
    %5482 = vmatpush1.bf16.msra.mxu0 %v5479
    %5483 = vmatprep.subr.bf16.mxu0 0
    %5484 = vmatpush1.bf16.msra.mxu0 0
    %5485 = vmatprep.subr.bf16.mxu0 0
    %5486 = vmatpush1.bf16.msra.mxu0 0
    %5487 = vmatprep.subr.bf16.mxu0 0
    %5488 = vmatpush1.bf16.msra.mxu0 0
    %5489 = vmatprep.subr.bf16.mxu0 0
    %5490 = vmatpush1.bf16.msra.mxu0 0
    %5491 = vmatprep.subr.bf16.mxu0 0
    %5492 = vmatpush1.bf16.msra.mxu0 0
    %5493 = vmatprep.subr.bf16.mxu0 0
    %5494 = vmatpush1.bf16.msra.mxu0 0
    %5495 = vmatprep.subr.bf16.mxu0 0
    %5496 = vmatpush1.bf16.msra.mxu0 0
    %5497 = vmatprep.subr.bf16.mxu0 0
    %5498 = vmatpush1.bf16.msra.mxu0 0
    %5499 = vmatprep.subr.bf16.mxu0 0
    %5500 = vmatpush1.bf16.msra.mxu0 0
    %5501 = vmatprep.subr.bf16.mxu0 0
    %5502 = vmatpush1.bf16.msra.mxu0 0
    %5503 = vmatprep.subr.bf16.mxu0 0
    %5504 = vmatpush1.bf16.msra.mxu0 0
    %5505 = vmatprep.subr.bf16.mxu0 0
    %5506 = vmatpush1.bf16.msra.mxu0 0
    %5507 = vmatprep.subr.bf16.mxu0 0
    %5508 = vmatpush1.bf16.msra.mxu0 0
    %5509 = vmatprep.subr.bf16.mxu0 0
    %5510 = vmatpush1.bf16.msra.mxu0 0
    %5511 = vmatprep.subr.bf16.mxu0 0
    %5512 = vmatpush1.bf16.msra.mxu0 0
    %5513 = vmatprep.mubr.bf16.mxu0 0
    %5514 = vmatmul.mubr.bf16.gmra.mrb[0].mxu0 %v5476
    %v5515 = vpop.f32.mrb[0].mxu0
    %v5516 = vadd.f32 0.0, %v5515
    %v5517 = vpop.f32.mrb[0].mxu0
    %v5518 = vpop.f32.mrb[0].mxu0
    %v5519 = vpop.f32.mrb[0].mxu0
    %5520 = vdwg.mxu0
    %v5521 = vadd.f32 %v5468, %v5516
    %v5522 = vld [vmem:[%s91] sm:$0x1]
    %v5524 = vlaneseq
    %v5525 = vshrl.u32 %v5524, 7
    %v5526 = vsub.s32 0, %v5525
    %v5527 = vrot.slane %v5522, %v5526
    %v5529 = vadd.f32 %v5521, %v5527
    %5530 = vst [vmem:[#allocation49] sm:$0x3] %v5529
    // Predicated region
    $region306: #{tpu_custom_call.1} parent=1 // pred_check
      _
    $region307: #{tpu_custom_call.1} parent=1 // pred_check_branch
      %5532 = sbr.rel (0) target = $region309
    $region308: #{tpu_custom_call.1} parent=1 // pred_region
      %s5534 = ssub.s32 32, 32
      %5535 = vsyncadd [#allocation4], %s5534
      %s5537 = sshll.u32 [#allocation49], 4
      %s5538 = int_to_ptr.vmem [resolvable:$true] %s5537
      %5540 = dma.vmem_to_hbm [thread:$0]  %s5538, 32, %s93, [#allocation4]
    $region309: #{tpu_custom_call.1} parent=1 // pred_fallthru
      _
    // Predicated region
    $region310: #{tpu_custom_call.1} parent=1 // pred_check
      _
    $region311: #{tpu_custom_call.1} parent=1 // pred_check_branch
      %5542 = sbr.rel (0) target = $region313
    $region312: #{tpu_custom_call.1} parent=1 // pred_region
      %5543 = dma.done [#allocation4], 32
    $region313: #{tpu_custom_call.1} parent=1 // pred_fallthru
      _
    %5544 = vsyncpa [#allocation3], 1
    %5545 = vsyncpa [#allocation6], 1
    %5546 = vsyncpa [#allocation9], 1
    %5547 = vsyncpa [#allocation12], 1
    %5548 = vsyncpa [#allocation15], 1
    %5549 = vsyncpa [#allocation18], 1
    %5550 = vsyncpa [#allocation21], 1
    %5551 = vsyncpa [#allocation24], 1
    %5552 = vsyncpa [#allocation27], 1
    %5553 = vsyncpa [#allocation30], 1
    %5554 = vsyncpa [#allocation33], 1
    %5555 = vsyncpa [#allocation36], 1
    %5556 = vsyncpa [#allocation39], 1
    %5557 = vsyncpa [#allocation42], 1
    %5558 = vsyncpa [#allocation45], 1
    %5559 = vsyncpa [#allocation48], 1
    %5560 = vsyncpa [#allocation4], 1

</llo_original>
